<compile_context>
chip_gen: v5e
topology: v5e:2x2
jax: 0.10.0
libtpu: 0.0.40
codegen_flags: <defaults>
</compile_context>

<pallas_src>
import functools

import jax
import jax.numpy as jnp
from jax import lax
from jax.experimental import pallas as pl
from jax.experimental.pallas import tpu as pltpu


# ----------------------------------------------------------------------------
# Conv kernel (used for both layers): im2col matmul (bf16 x bf16 -> f32) +
# folded-BN affine + ReLU + 2x2 maxpool via contiguous row-slab maxes.
# ----------------------------------------------------------------------------
def conv_bn_relu_pool_kernel(p_ref, w_ref, scale_ref, shift_ref, o_ref, *, Q, Cout):
    # p_ref      : (1, 4*Q, K) bf16 im2col patches; the 4 row slabs are the 2x2
    #              pool-window elements, each slab's rows in (h//2, w//2) order.
    # w_ref      : (K, Cout)   bf16 conv weights, rows ordered (ky, kx, cin).
    # scale/shift: (1, Cout)   f32 folded BN affine (conv bias included).
    # o_ref      : (1, Q, Cout) bf16 pooled output, rows (h//2, w//2).
    y = jnp.dot(p_ref[0], w_ref[...], preferred_element_type=jnp.float32)   # (4Q, Cout)
    y = jnp.maximum(y * scale_ref[...] + shift_ref[...], 0.0)               # BN + ReLU
    y = jnp.maximum(jnp.maximum(y[0:Q], y[Q:2 * Q]),
                    jnp.maximum(y[2 * Q:3 * Q], y[3 * Q:4 * Q]))            # 2x2 maxpool
    o_ref[0] = y.astype(o_ref.dtype)


def conv_bn_relu_pool(patches, w2d, scale, shift):
    """patches: (B, H*W, K) bf16 pool-ordered im2col; w2d: (K, Cout) bf16."""
    B, R, K = patches.shape
    Cout = w2d.shape[-1]
    assert R % 4 == 0, "spatial dims must be even (2x2 pool)"
    Q = R // 4
    kern = functools.partial(conv_bn_relu_pool_kernel, Q=Q, Cout=Cout)
    return pl.pallas_call(
        kern,
        out_shape=jax.ShapeDtypeStruct((B, Q, Cout), jnp.bfloat16),
        grid_spec=pltpu.PrefetchScalarGridSpec(
            num_scalar_prefetch=0,
            grid=(B,),
            in_specs=[
                pl.BlockSpec((1, R, K), lambda b: (b, 0, 0)),
                pl.BlockSpec((K, Cout), lambda b: (0, 0)),
                pl.BlockSpec((1, Cout), lambda b: (0, 0)),
                pl.BlockSpec((1, Cout), lambda b: (0, 0)),
            ],
            out_specs=pl.BlockSpec((1, Q, Cout), lambda b: (b, 0, 0)),
        ),
        compiler_params=pltpu.CompilerParams(dimension_semantics=("parallel",)),
    )(patches, w2d, scale, shift)


def _im2col_3x3_pool_order(x_nhwc):
    """3x3 (pad=1) im2col with rows reordered to (pool_elem, h//2, w//2) so the
    kernel's 2x2 maxpool is a max over 4 contiguous row slabs.
    Returns (B, H*W, 9*C); lane order (ky, kx, cin)."""
    B, H, W, C = x_nhwc.shape
    assert H % 2 == 0 and W % 2 == 0
    xp = jnp.pad(x_nhwc, ((0, 0), (1, 1), (1, 1), (0, 0)))
    cols = jnp.concatenate(
        [xp[:, dy:dy + H, dx:dx + W, :] for dy in range(3) for dx in range(3)],
        axis=-1)                                               # (B, H, W, 9C)
    cols = cols.reshape(B, H // 2, 2, W // 2, 2, 9 * C)
    cols = cols.transpose(0, 2, 4, 1, 3, 5)                    # (B, 2, 2, H/2, W/2, 9C)
    return cols.reshape(B, H * W, 9 * C)


# ----------------------------------------------------------------------------
# MLP kernel: fc1 (bf16-streamed over K, f32 accumulator) + ReLU + fc2 + bias.
# Optional leading "parallel" axis splits fc1/fc2 columns across TensorCores.
# ----------------------------------------------------------------------------
def mlp_kernel(x_ref, w1_ref, b1_ref, w2_ref, b2_ref, o_ref, acc_ref):
    k = pl.program_id(1)

    @pl.when(k == 0)
    def _():
        acc_ref[...] = jnp.zeros_like(acc_ref)

    acc_ref[...] += jnp.dot(x_ref[...], w1_ref[0],
                            preferred_element_type=jnp.float32)

    @pl.when(k == pl.num_programs(1) - 1)
    def _():
        # TODO(synk): dropout(p=0.3) is identity in eval mode; not applied.
        h = jnp.maximum(acc_ref[...] + b1_ref[0], 0.0)
        o_ref[0] = jnp.dot(h, w2_ref[0], preferred_element_type=jnp.float32) + b2_ref[0]


def mlp(x_flat, w1p, b1p, w2p, b2p, *, tk=2048):
    # w1p: (S, K, H/S) bf16 column-split fc1 weight; b1p: (S, 1, H/S) f32;
    # w2p: (S, H/S, NC) f32; b2p: (S, 1, NC) f32 (full fc2 bias only in split 0).
    S, K, Hs = w1p.shape
    B = x_flat.shape[0]
    NC = w2p.shape[-1]
    assert x_flat.shape[1] == K and K % tk == 0
    xb = x_flat.astype(jnp.bfloat16)            # no-op: conv2 already emits bf16
    partial = pl.pallas_call(
        mlp_kernel,
        out_shape=jax.ShapeDtypeStruct((S, B, NC), jnp.float32),
        grid_spec=pltpu.PrefetchScalarGridSpec(
            num_scalar_prefetch=0,
            grid=(S, K // tk),
            in_specs=[
                pl.BlockSpec((B, tk), lambda j, k: (0, k)),
                pl.BlockSpec((1, tk, Hs), lambda j, k: (j, k, 0)),
                pl.BlockSpec((1, 1, Hs), lambda j, k: (j, 0, 0)),
                pl.BlockSpec((1, Hs, NC), lambda j, k: (j, 0, 0)),
                pl.BlockSpec((1, 1, NC), lambda j, k: (j, 0, 0)),
            ],
            out_specs=pl.BlockSpec((1, B, NC), lambda j, k: (j, 0, 0)),
            scratch_shapes=[pltpu.VMEM((B, Hs), jnp.float32)],
        ),
        compiler_params=pltpu.CompilerParams(
            dimension_semantics=("parallel", "arbitrary")),
    )(xb, w1p, b1p, w2p, b2p)
    return partial[0] if S == 1 else partial.sum(axis=0)


# ----------------------------------------------------------------------------
# Parameter prep (one-time), full forward, pure-JAX reference
# ----------------------------------------------------------------------------
def _mlp_column_split():
    """2 on 2-TensorCore chips (v7x) so each core streams half the fc1 weight;
    1 on single-core chips (v5e/v6e)."""
    try:
        kind = jax.devices()[0].device_kind.lower()
    except Exception:
        return 1
    return 2 if ("v7" in kind or "tpu7" in kind) else 1


def _fold_bn(bias, gamma, beta, mean, var, eps):
    scale = gamma / jnp.sqrt(var + eps)
    shift = (bias - mean) * scale + beta
    return (scale.reshape(1, -1).astype(jnp.float32),
            shift.reshape(1, -1).astype(jnp.float32))


def prepare_params(params, *, n_split=None, eps=1e-5):
    """One-time repack: bf16 matmul operands, folded BN affines, fc1 rows
    permuted from PyTorch (c,h,w) to the kernels' (h,w,c) flatten order, and
    fc1/fc2 columns split only when the chip has 2 TensorCores."""
    if n_split is None:
        n_split = _mlp_column_split()
    p = {}
    p["w1"] = params["w_conv1"].reshape(3 * 3 * 3, 32).astype(jnp.bfloat16)
    p["scale1"], p["shift1"] = _fold_bn(params["b_conv1"], params["g1"],
                                        params["be1"], params["m1"], params["v1"], eps)
    p["w2"] = params["w_conv2"].reshape(3 * 3 * 32, 64).astype(jnp.bfloat16)
    p["scale2"], p["shift2"] = _fold_bn(params["b_conv2"], params["g2"],
                                        params["be2"], params["m2"], params["v2"], eps)

    Kdim, Hdim = params["w_fc1"].shape           # (64*16*16, 128)
    C, Hs_, Ws_ = 64, 16, 16
    assert Kdim == C * Hs_ * Ws_ and Hdim % n_split == 0
    w1fc = (params["w_fc1"].reshape(C, Hs_, Ws_, Hdim)
            .transpose(1, 2, 0, 3).reshape(Kdim, Hdim))        # rows -> (h, w, c)
    Hsp = Hdim // n_split
    p["w_fc1_p"] = (w1fc.reshape(Kdim, n_split, Hsp)
                    .transpose(1, 0, 2).astype(jnp.bfloat16))
    p["b_fc1_p"] = params["b_fc1"].reshape(n_split, 1, Hsp)
    NC = params["w_fc2"].shape[1]
    p["w_fc2_p"] = params["w_fc2"].reshape(n_split, Hsp, NC)
    p["b_fc2_p"] = jnp.zeros((n_split, 1, NC), jnp.float32).at[0, 0].set(params["b_fc2"])
    return p


def chess_cnn_forward(x_nchw, prep):
    x = jnp.transpose(x_nchw, (0, 2, 3, 1)).astype(jnp.bfloat16)   # NCHW -> NHWC, bf16
    B, H, W, _ = x.shape
    assert H % 4 == 0 and W % 4 == 0
    a1 = conv_bn_relu_pool(_im2col_3x3_pool_order(x),
                           prep["w1"], prep["scale1"], prep["shift1"])
    a1 = a1.reshape(B, H // 2, W // 2, 32)                         # (h, w, c); free reshape
    a2 = conv_bn_relu_pool(_im2col_3x3_pool_order(a1),
                           prep["w2"], prep["scale2"], prep["shift2"])
    x_flat = a2.reshape(B, -1)                   # bf16, (h, w, c) order; fc1 rows pre-permuted
    return mlp(x_flat, prep["w_fc1_p"], prep["b_fc1_p"],
               prep["w_fc2_p"], prep["b_fc2_p"])


def reference_forward(x_nchw, params, eps=1e-5):
    """Pure-JAX reference; mirrors the kernels' bf16 MXU-operand / bf16
    activation rounding (all accumulation in f32)."""
    hi = lax.Precision.HIGHEST

    def rnd(a):
        return a.astype(jnp.bfloat16).astype(jnp.float32)

    def block(x, w_hwio, bias, g, be, m, v):
        y = lax.conv_general_dilated(rnd(x), rnd(w_hwio), (1, 1), "SAME",
                                     dimension_numbers=("NHWC", "HWIO", "NHWC"),
                                     precision=hi)
        y = y + bias
        y = (y - m) / jnp.sqrt(v + eps) * g + be
        y = jnp.maximum(y, 0.0)
        y = lax.reduce_window(y, -jnp.inf, lax.max,
                              (1, 2, 2, 1), (1, 2, 2, 1), "VALID")
        return rnd(y)                            # kernels store pooled activations as bf16

    x = jnp.transpose(x_nchw, (0, 2, 3, 1))
    x = block(x, params["w_conv1"], params["b_conv1"],
              params["g1"], params["be1"], params["m1"], params["v1"])
    x = block(x, params["w_conv2"], params["b_conv2"],
              params["g2"], params["be2"], params["m2"], params["v2"])
    B = x.shape[0]
    x_flat = jnp.transpose(x, (0, 3, 1, 2)).reshape(B, 64 * 16 * 16)   # PyTorch (c,h,w) order
    h = jnp.maximum(jnp.dot(x_flat, rnd(params["w_fc1"]), precision=hi)
                    + params["b_fc1"], 0.0)
    return jnp.dot(h, params["w_fc2"], precision=hi) + params["b_fc2"]


def init_params(key, num_classes=13):
    ks = jax.random.split(key, 16)
    p = {}
    p["w_conv1"] = jax.random.normal(ks[0], (3, 3, 3, 32), jnp.float32) * 0.1
    p["b_conv1"] = jax.random.normal(ks[1], (32,), jnp.float32) * 0.05
    p["g1"] = 1.0 + 0.1 * jax.random.normal(ks[2], (32,), jnp.float32)
    p["be1"] = 0.05 * jax.random.normal(ks[3], (32,), jnp.float32)
    p["m1"] = 0.1 * jax.random.normal(ks[4], (32,), jnp.float32)
    p["v1"] = jax.random.uniform(ks[5], (32,), jnp.float32, 0.5, 1.5)

    p["w_conv2"] = jax.random.normal(ks[6], (3, 3, 32, 64), jnp.float32) * 0.05
    p["b_conv2"] = jax.random.normal(ks[7], (64,), jnp.float32) * 0.05
    p["g2"] = 1.0 + 0.1 * jax.random.normal(ks[8], (64,), jnp.float32)
    p["be2"] = 0.05 * jax.random.normal(ks[9], (64,), jnp.float32)
    p["m2"] = 0.1 * jax.random.normal(ks[10], (64,), jnp.float32)
    p["v2"] = jax.random.uniform(ks[11], (64,), jnp.float32, 0.5, 1.5)

    p["w_fc1"] = jax.random.normal(ks[12], (64 * 16 * 16, 128), jnp.float32) * 0.01
    p["b_fc1"] = jax.random.normal(ks[13], (128,), jnp.float32) * 0.05
    p["w_fc2"] = jax.random.normal(ks[14], (128, num_classes), jnp.float32) * 0.05
    p["b_fc2"] = jax.random.normal(ks[15], (num_classes,), jnp.float32) * 0.05
    return p


if __name__ == "__main__":
    key = jax.random.PRNGKey(0)
    kx, kp = jax.random.split(key)
    # Input must be (B, 3, 64, 64): two 2x2 pools give the 16x16x64 flatten fc1 expects.
    x = jax.random.normal(kx, (2, 3, 64, 64), jnp.float32)
    params = init_params(kp, num_classes=13)
    prepared = prepare_params(params)            # one-time parameter repack

    out = jax.block_until_ready(jax.jit(chess_cnn_forward)(x, prepared))
    ref = jax.block_until_ready(jax.jit(reference_forward)(x, params))

    assert out.shape == (2, 13), out.shape
    err = float(jnp.max(jnp.abs(out - ref)))
    assert jnp.allclose(out, ref, rtol=2e-3, atol=2e-3), err
    print("KERNEL_OK")
</pallas_src>

<mosaic_0001>
module attributes {stable_mosaic.version = 11 : i64} {
  func.func @conv_bn_relu_pool_kernel(%arg0: i32, %arg1: memref<1x4096x27xbf16, #tpu.memory_space<vmem>>, %arg2: memref<27x32xbf16, #tpu.memory_space<vmem>>, %arg3: memref<1x32xf32, #tpu.memory_space<vmem>>, %arg4: memref<1x32xf32, #tpu.memory_space<vmem>>, %arg5: memref<1x1024x32xbf16, #tpu.memory_space<vmem>>) attributes {dimension_semantics = [#tpu.dimension_semantics<parallel>], iteration_bounds = array<i64: 2>, scalar_prefetch = 0 : i64, scratch_operands = 0 : i64, tpu.core_type = #tpu.core_type<tc>, window_params = [{transform_indices = @transform_0, window_bounds = array<i64: 1, 4096, 27>}, {pipeline_mode = #tpu.pipeline_mode<synchronous>, transform_indices = @transform_1, window_bounds = array<i64: 27, 32>}, {pipeline_mode = #tpu.pipeline_mode<synchronous>, transform_indices = @transform_2, window_bounds = array<i64: 1, 32>}, {pipeline_mode = #tpu.pipeline_mode<synchronous>, transform_indices = @transform_3, window_bounds = array<i64: 1, 32>}, {transform_indices = @transform_4, window_bounds = array<i64: 1, 1024, 32>}]} {
    %c0 = arith.constant 0 : index
    %c0_0 = arith.constant 0 : index
    %c0_1 = arith.constant 0 : index
    %0 = vector.load %arg1[%c0, %c0_0, %c0_1] : memref<1x4096x27xbf16, #tpu.memory_space<vmem>>, vector<1x4096x27xbf16>
    %1 = vector.shape_cast %0 : vector<1x4096x27xbf16> to vector<4096x27xbf16>
    %c0_2 = arith.constant 0 : index
    %c0_3 = arith.constant 0 : index
    %2 = vector.load %arg2[%c0_2, %c0_3] : memref<27x32xbf16, #tpu.memory_space<vmem>>, vector<27x32xbf16>
    %cst = arith.constant dense<0.000000e+00> : vector<4096x32xf32>
    %3 = tpu.matmul %1, %2, %cst {dimension_numbers = #tpu.dot_dimension_numbers<[1], [0], [0], [1], [0, 0, 1, 1], [], []>} : vector<4096x27xbf16>, vector<27x32xbf16>, vector<4096x32xf32> -> vector<4096x32xf32>
    %c0_4 = arith.constant 0 : index
    %c0_5 = arith.constant 0 : index
    %4 = vector.load %arg3[%c0_4, %c0_5] : memref<1x32xf32, #tpu.memory_space<vmem>>, vector<1x32xf32>
    %5 = vector.broadcast %4 : vector<1x32xf32> to vector<4096x32xf32>
    %6 = arith.mulf %3, %5 : vector<4096x32xf32>
    %c0_6 = arith.constant 0 : index
    %c0_7 = arith.constant 0 : index
    %7 = vector.load %arg4[%c0_6, %c0_7] : memref<1x32xf32, #tpu.memory_space<vmem>>, vector<1x32xf32>
    %8 = vector.broadcast %7 : vector<1x32xf32> to vector<4096x32xf32>
    %9 = arith.addf %6, %8 : vector<4096x32xf32>
    %cst_8 = arith.constant 0.000000e+00 : f32
    %10 = vector.broadcast %cst_8 : f32 to vector<4096x32xf32>
    %11 = arith.maximumf %9, %10 : vector<4096x32xf32>
    %12 = vector.extract_strided_slice %11 {offsets = [0, 0], sizes = [1024, 32], strides = [1, 1]} : vector<4096x32xf32> to vector<1024x32xf32>
    %13 = vector.extract_strided_slice %11 {offsets = [1024, 0], sizes = [1024, 32], strides = [1, 1]} : vector<4096x32xf32> to vector<1024x32xf32>
    %14 = arith.maximumf %12, %13 : vector<1024x32xf32>
    %15 = vector.extract_strided_slice %11 {offsets = [2048, 0], sizes = [1024, 32], strides = [1, 1]} : vector<4096x32xf32> to vector<1024x32xf32>
    %16 = vector.extract_strided_slice %11 {offsets = [3072, 0], sizes = [1024, 32], strides = [1, 1]} : vector<4096x32xf32> to vector<1024x32xf32>
    %17 = arith.maximumf %15, %16 : vector<1024x32xf32>
    %18 = arith.maximumf %14, %17 : vector<1024x32xf32>
    %19 = arith.truncf %18 : vector<1024x32xf32> to vector<1024x32xbf16>
    %c0_9 = arith.constant 0 : index
    %c0_10 = arith.constant 0 : index
    %c0_11 = arith.constant 0 : index
    %20 = vector.load %arg5[%c0_9, %c0_10, %c0_11] : memref<1x1024x32xbf16, #tpu.memory_space<vmem>>, vector<1x1024x32xbf16>
    %21 = vector.shape_cast %20 : vector<1x1024x32xbf16> to vector<1024x32xbf16>
    %22 = vector.shape_cast %19 : vector<1024x32xbf16> to vector<1x1024x32xbf16>
    tpu.vector_store %arg5[%c0_9, %c0_10, %c0_11], %22 {strides = array<i32>} : memref<1x1024x32xbf16, #tpu.memory_space<vmem>>, vector<1x1024x32xbf16>,
    return
  }
  func.func @transform_0(%arg0: i32) -> (i32, i32, i32) {
    %c0_i32 = arith.constant 0 : i32
    %c0_i32_0 = arith.constant 0 : i32
    %c0_i32_1 = arith.constant 0 : i32
    return %arg0, %c0_i32, %c0_i32_0 : i32, i32, i32
  }
  func.func @transform_1(%arg0: i32) -> (i32, i32) {
    %c0_i32 = arith.constant 0 : i32
    %c0_i32_0 = arith.constant 0 : i32
    %c0_i32_1 = arith.constant 0 : i32
    return %c0_i32, %c0_i32_0 : i32, i32
  }
  func.func @transform_2(%arg0: i32) -> (i32, i32) {
    %c0_i32 = arith.constant 0 : i32
    %c0_i32_0 = arith.constant 0 : i32
    %c0_i32_1 = arith.constant 0 : i32
    return %c0_i32, %c0_i32_0 : i32, i32
  }
  func.func @transform_3(%arg0: i32) -> (i32, i32) {
    %c0_i32 = arith.constant 0 : i32
    %c0_i32_0 = arith.constant 0 : i32
    %c0_i32_1 = arith.constant 0 : i32
    return %c0_i32, %c0_i32_0 : i32, i32
  }
  func.func @transform_4(%arg0: i32) -> (i32, i32, i32) {
    %c0_i32 = arith.constant 0 : i32
    %c0_i32_0 = arith.constant 0 : i32
    %c0_i32_1 = arith.constant 0 : i32
    return %arg0, %c0_i32, %c0_i32_0 : i32, i32, i32
  }
}

module attributes {stable_mosaic.version = 11 : i64} {
  func.func @conv_bn_relu_pool_kernel(%arg0: i32, %arg1: memref<1x1024x288xbf16, #tpu.memory_space<vmem>>, %arg2: memref<288x64xbf16, #tpu.memory_space<vmem>>, %arg3: memref<1x64xf32, #tpu.memory_space<vmem>>, %arg4: memref<1x64xf32, #tpu.memory_space<vmem>>, %arg5: memref<1x256x64xbf16, #tpu.memory_space<vmem>>) attributes {dimension_semantics = [#tpu.dimension_semantics<parallel>], iteration_bounds = array<i64: 2>, scalar_prefetch = 0 : i64, scratch_operands = 0 : i64, tpu.core_type = #tpu.core_type<tc>, window_params = [{transform_indices = @transform_0, window_bounds = array<i64: 1, 1024, 288>}, {pipeline_mode = #tpu.pipeline_mode<synchronous>, transform_indices = @transform_1, window_bounds = array<i64: 288, 64>}, {pipeline_mode = #tpu.pipeline_mode<synchronous>, transform_indices = @transform_2, window_bounds = array<i64: 1, 64>}, {pipeline_mode = #tpu.pipeline_mode<synchronous>, transform_indices = @transform_3, window_bounds = array<i64: 1, 64>}, {transform_indices = @transform_4, window_bounds = array<i64: 1, 256, 64>}]} {
    %c0 = arith.constant 0 : index
    %c0_0 = arith.constant 0 : index
    %c0_1 = arith.constant 0 : index
    %0 = vector.load %arg1[%c0, %c0_0, %c0_1] : memref<1x1024x288xbf16, #tpu.memory_space<vmem>>, vector<1x1024x288xbf16>
    %1 = vector.shape_cast %0 : vector<1x1024x288xbf16> to vector<1024x288xbf16>
    %c0_2 = arith.constant 0 : index
    %c0_3 = arith.constant 0 : index
    %2 = vector.load %arg2[%c0_2, %c0_3] : memref<288x64xbf16, #tpu.memory_space<vmem>>, vector<288x64xbf16>
    %cst = arith.constant dense<0.000000e+00> : vector<1024x64xf32>
    %3 = tpu.matmul %1, %2, %cst {dimension_numbers = #tpu.dot_dimension_numbers<[1], [0], [0], [1], [0, 0, 1, 1], [], []>} : vector<1024x288xbf16>, vector<288x64xbf16>, vector<1024x64xf32> -> vector<1024x64xf32>
    %c0_4 = arith.constant 0 : index
    %c0_5 = arith.constant 0 : index
    %4 = vector.load %arg3[%c0_4, %c0_5] : memref<1x64xf32, #tpu.memory_space<vmem>>, vector<1x64xf32>
    %5 = vector.broadcast %4 : vector<1x64xf32> to vector<1024x64xf32>
    %6 = arith.mulf %3, %5 : vector<1024x64xf32>
    %c0_6 = arith.constant 0 : index
    %c0_7 = arith.constant 0 : index
    %7 = vector.load %arg4[%c0_6, %c0_7] : memref<1x64xf32, #tpu.memory_space<vmem>>, vector<1x64xf32>
    %8 = vector.broadcast %7 : vector<1x64xf32> to vector<1024x64xf32>
    %9 = arith.addf %6, %8 : vector<1024x64xf32>
    %cst_8 = arith.constant 0.000000e+00 : f32
    %10 = vector.broadcast %cst_8 : f32 to vector<1024x64xf32>
    %11 = arith.maximumf %9, %10 : vector<1024x64xf32>
    %12 = vector.extract_strided_slice %11 {offsets = [0, 0], sizes = [256, 64], strides = [1, 1]} : vector<1024x64xf32> to vector<256x64xf32>
    %13 = vector.extract_strided_slice %11 {offsets = [256, 0], sizes = [256, 64], strides = [1, 1]} : vector<1024x64xf32> to vector<256x64xf32>
    %14 = arith.maximumf %12, %13 : vector<256x64xf32>
    %15 = vector.extract_strided_slice %11 {offsets = [512, 0], sizes = [256, 64], strides = [1, 1]} : vector<1024x64xf32> to vector<256x64xf32>
    %16 = vector.extract_strided_slice %11 {offsets = [768, 0], sizes = [256, 64], strides = [1, 1]} : vector<1024x64xf32> to vector<256x64xf32>
    %17 = arith.maximumf %15, %16 : vector<256x64xf32>
    %18 = arith.maximumf %14, %17 : vector<256x64xf32>
    %19 = arith.truncf %18 : vector<256x64xf32> to vector<256x64xbf16>
    %c0_9 = arith.constant 0 : index
    %c0_10 = arith.constant 0 : index
    %c0_11 = arith.constant 0 : index
    %20 = vector.load %arg5[%c0_9, %c0_10, %c0_11] : memref<1x256x64xbf16, #tpu.memory_space<vmem>>, vector<1x256x64xbf16>
    %21 = vector.shape_cast %20 : vector<1x256x64xbf16> to vector<256x64xbf16>
    %22 = vector.shape_cast %19 : vector<256x64xbf16> to vector<1x256x64xbf16>
    tpu.vector_store %arg5[%c0_9, %c0_10, %c0_11], %22 {strides = array<i32>} : memref<1x256x64xbf16, #tpu.memory_space<vmem>>, vector<1x256x64xbf16>,
    return
  }
  func.func @transform_0(%arg0: i32) -> (i32, i32, i32) {
    %c0_i32 = arith.constant 0 : i32
    %c0_i32_0 = arith.constant 0 : i32
    %c0_i32_1 = arith.constant 0 : i32
    return %arg0, %c0_i32, %c0_i32_0 : i32, i32, i32
  }
  func.func @transform_1(%arg0: i32) -> (i32, i32) {
    %c0_i32 = arith.constant 0 : i32
    %c0_i32_0 = arith.constant 0 : i32
    %c0_i32_1 = arith.constant 0 : i32
    return %c0_i32, %c0_i32_0 : i32, i32
  }
  func.func @transform_2(%arg0: i32) -> (i32, i32) {
    %c0_i32 = arith.constant 0 : i32
    %c0_i32_0 = arith.constant 0 : i32
    %c0_i32_1 = arith.constant 0 : i32
    return %c0_i32, %c0_i32_0 : i32, i32
  }
  func.func @transform_3(%arg0: i32) -> (i32, i32) {
    %c0_i32 = arith.constant 0 : i32
    %c0_i32_0 = arith.constant 0 : i32
    %c0_i32_1 = arith.constant 0 : i32
    return %c0_i32, %c0_i32_0 : i32, i32
  }
  func.func @transform_4(%arg0: i32) -> (i32, i32, i32) {
    %c0_i32 = arith.constant 0 : i32
    %c0_i32_0 = arith.constant 0 : i32
    %c0_i32_1 = arith.constant 0 : i32
    return %arg0, %c0_i32, %c0_i32_0 : i32, i32, i32
  }
}

module attributes {stable_mosaic.version = 11 : i64} {
  func.func @mlp_kernel(%arg0: i32, %arg1: i32, %arg2: memref<2x2048xbf16, #tpu.memory_space<vmem>>, %arg3: memref<1x2048x128xbf16, #tpu.memory_space<vmem>>, %arg4: memref<1x1x128xf32, #tpu.memory_space<vmem>>, %arg5: memref<1x128x13xf32, #tpu.memory_space<vmem>>, %arg6: memref<1x1x13xf32, #tpu.memory_space<vmem>>, %arg7: memref<1x2x13xf32, #tpu.memory_space<vmem>>, %arg8: memref<2x128xf32, #tpu.memory_space<vmem>>) attributes {dimension_semantics = [#tpu.dimension_semantics<parallel>, #tpu.dimension_semantics<arbitrary>], iteration_bounds = array<i64: 1, 8>, scalar_prefetch = 0 : i64, scratch_operands = 1 : i64, tpu.core_type = #tpu.core_type<tc>, window_params = [{transform_indices = @transform_0, window_bounds = array<i64: 2, 2048>}, {transform_indices = @transform_1, window_bounds = array<i64: 1, 2048, 128>}, {transform_indices = @transform_2, window_bounds = array<i64: 1, 1, 128>}, {transform_indices = @transform_3, window_bounds = array<i64: 1, 128, 13>}, {transform_indices = @transform_4, window_bounds = array<i64: 1, 1, 13>}, {transform_indices = @transform_5, window_bounds = array<i64: 1, 2, 13>}]} {
    %c0_i32 = arith.constant 0 : i32
    %0 = arith.cmpi eq, %arg1, %c0_i32 : i32
    %1 = arith.extui %0 : i1 to i32
    %c0_i32_0 = arith.constant 0 : i32
    %2 = arith.cmpi ne, %1, %c0_i32_0 : i32
    scf.if %2 {
      %cst_10 = arith.constant 0.000000e+00 : f32
      %13 = vector.broadcast %cst_10 : f32 to vector<2x128xf32>
      %c0_11 = arith.constant 0 : index
      %c0_12 = arith.constant 0 : index
      %14 = vector.load %arg8[%c0_11, %c0_12] : memref<2x128xf32, #tpu.memory_space<vmem>>, vector<2x128xf32>
      tpu.vector_store %arg8[%c0_11, %c0_12], %13 {strides = array<i32>} : memref<2x128xf32, #tpu.memory_space<vmem>>, vector<2x128xf32>,
    } else {
    }
    %c0 = arith.constant 0 : index
    %c0_1 = arith.constant 0 : index
    %3 = vector.load %arg8[%c0, %c0_1] : memref<2x128xf32, #tpu.memory_space<vmem>>, vector<2x128xf32>
    %c0_2 = arith.constant 0 : index
    %c0_3 = arith.constant 0 : index
    %4 = vector.load %arg2[%c0_2, %c0_3] : memref<2x2048xbf16, #tpu.memory_space<vmem>>, vector<2x2048xbf16>
    %c0_4 = arith.constant 0 : index
    %c0_5 = arith.constant 0 : index
    %c0_6 = arith.constant 0 : index
    %5 = vector.load %arg3[%c0_4, %c0_5, %c0_6] : memref<1x2048x128xbf16, #tpu.memory_space<vmem>>, vector<1x2048x128xbf16>
    %6 = vector.shape_cast %5 : vector<1x2048x128xbf16> to vector<2048x128xbf16>
    %cst = arith.constant dense<0.000000e+00> : vector<2x128xf32>
    %7 = tpu.matmul %4, %6, %cst {dimension_numbers = #tpu.dot_dimension_numbers<[1], [0], [0], [1], [0, 0, 1, 1], [], []>} : vector<2x2048xbf16>, vector<2048x128xbf16>, vector<2x128xf32> -> vector<2x128xf32>
    %8 = arith.addf %3, %7 : vector<2x128xf32>
    %c0_7 = arith.constant 0 : index
    %c0_8 = arith.constant 0 : index
    %9 = vector.load %arg8[%c0_7, %c0_8] : memref<2x128xf32, #tpu.memory_space<vmem>>, vector<2x128xf32>
    tpu.vector_store %arg8[%c0_7, %c0_8], %8 {strides = array<i32>} : memref<2x128xf32, #tpu.memory_space<vmem>>, vector<2x128xf32>,
    %c7_i32 = arith.constant 7 : i32
    %10 = arith.cmpi eq, %arg1, %c7_i32 : i32
    %11 = arith.extui %10 : i1 to i32
    %c0_i32_9 = arith.constant 0 : i32
    %12 = arith.cmpi ne, %11, %c0_i32_9 : i32
    scf.if %12 {
      %c0_10 = arith.constant 0 : index
      %c0_11 = arith.constant 0 : index
      %13 = vector.load %arg8[%c0_10, %c0_11] : memref<2x128xf32, #tpu.memory_space<vmem>>, vector<2x128xf32>
      %c0_12 = arith.constant 0 : index
      %c0_13 = arith.constant 0 : index
      %c0_14 = arith.constant 0 : index
      %14 = vector.load %arg4[%c0_12, %c0_13, %c0_14] : memref<1x1x128xf32, #tpu.memory_space<vmem>>, vector<1x1x128xf32>
      %15 = vector.shape_cast %14 : vector<1x1x128xf32> to vector<1x128xf32>
      %16 = vector.broadcast %15 : vector<1x128xf32> to vector<2x128xf32>
      %17 = arith.addf %13, %16 : vector<2x128xf32>
      %cst_15 = arith.constant 0.000000e+00 : f32
      %18 = vector.broadcast %cst_15 : f32 to vector<2x128xf32>
      %19 = arith.maximumf %17, %18 : vector<2x128xf32>
      %c0_16 = arith.constant 0 : index
      %c0_17 = arith.constant 0 : index
      %c0_18 = arith.constant 0 : index
      %20 = vector.load %arg5[%c0_16, %c0_17, %c0_18] : memref<1x128x13xf32, #tpu.memory_space<vmem>>, vector<1x128x13xf32>
      %21 = vector.shape_cast %20 : vector<1x128x13xf32> to vector<128x13xf32>
      %cst_19 = arith.constant dense<0.000000e+00> : vector<2x13xf32>
      %22 = tpu.matmul %19, %21, %cst_19 {dimension_numbers = #tpu.dot_dimension_numbers<[1], [0], [0], [1], [0, 0, 1, 1], [], []>} : vector<2x128xf32>, vector<128x13xf32>, vector<2x13xf32> -> vector<2x13xf32>
      %c0_20 = arith.constant 0 : index
      %c0_21 = arith.constant 0 : index
      %c0_22 = arith.constant 0 : index
      %23 = vector.load %arg6[%c0_20, %c0_21, %c0_22] : memref<1x1x13xf32, #tpu.memory_space<vmem>>, vector<1x1x13xf32>
      %24 = vector.shape_cast %23 : vector<1x1x13xf32> to vector<1x13xf32>
      %25 = vector.broadcast %24 : vector<1x13xf32> to vector<2x13xf32>
      %26 = arith.addf %22, %25 : vector<2x13xf32>
      %c0_23 = arith.constant 0 : index
      %c0_24 = arith.constant 0 : index
      %c0_25 = arith.constant 0 : index
      %27 = vector.load %arg7[%c0_23, %c0_24, %c0_25] : memref<1x2x13xf32, #tpu.memory_space<vmem>>, vector<1x2x13xf32>
      %28 = vector.shape_cast %27 : vector<1x2x13xf32> to vector<2x13xf32>
      %29 = vector.shape_cast %26 : vector<2x13xf32> to vector<1x2x13xf32>
      tpu.vector_store %arg7[%c0_23, %c0_24, %c0_25], %29 {strides = array<i32>} : memref<1x2x13xf32, #tpu.memory_space<vmem>>, vector<1x2x13xf32>,
    } else {
    }
    return
  }
  func.func @transform_0(%arg0: i32, %arg1: i32) -> (i32, i32) {
    %c0_i32 = arith.constant 0 : i32
    %c0_i32_0 = arith.constant 0 : i32
    return %c0_i32, %arg1 : i32, i32
  }
  func.func @transform_1(%arg0: i32, %arg1: i32) -> (i32, i32, i32) {
    %c0_i32 = arith.constant 0 : i32
    %c0_i32_0 = arith.constant 0 : i32
    return %arg0, %arg1, %c0_i32 : i32, i32, i32
  }
  func.func @transform_2(%arg0: i32, %arg1: i32) -> (i32, i32, i32) {
    %c0_i32 = arith.constant 0 : i32
    %c0_i32_0 = arith.constant 0 : i32
    %c0_i32_1 = arith.constant 0 : i32
    return %arg0, %c0_i32, %c0_i32_0 : i32, i32, i32
  }
  func.func @transform_3(%arg0: i32, %arg1: i32) -> (i32, i32, i32) {
    %c0_i32 = arith.constant 0 : i32
    %c0_i32_0 = arith.constant 0 : i32
    %c0_i32_1 = arith.constant 0 : i32
    return %arg0, %c0_i32, %c0_i32_0 : i32, i32, i32
  }
  func.func @transform_4(%arg0: i32, %arg1: i32) -> (i32, i32, i32) {
    %c0_i32 = arith.constant 0 : i32
    %c0_i32_0 = arith.constant 0 : i32
    %c0_i32_1 = arith.constant 0 : i32
    return %arg0, %c0_i32, %c0_i32_0 : i32, i32, i32
  }
  func.func @transform_5(%arg0: i32, %arg1: i32) -> (i32, i32, i32) {
    %c0_i32 = arith.constant 0 : i32
    %c0_i32_0 = arith.constant 0 : i32
    %c0_i32_1 = arith.constant 0 : i32
    return %arg0, %c0_i32, %c0_i32_0 : i32, i32, i32
  }
}

</mosaic_0001>

<llo_original>
// kernel: chess_cnn_forward.3
$region0: #{chess_cnn_forward.3}
  #allocation0 [shape = 'u32[]', space=smem, size = 0x4, offset = 0x4, fixed_abs, tag = 'smem constant byte address 0x4 - core index']
  #allocation1 [shape = 'u32[72,128]{1,0:T(1,128)}', space=vmem, size = 0x9000, scoped, tag = 'internal scratch']
  %s0 = inlined_call_operand.vmem [shape: bf16[2,4096,27], index: 0, kind: input, shape index: {}]
  %s1 = inlined_call_operand.vmem [shape: bf16[27,32], index: 1, kind: input, shape index: {}]
  %s2 = inlined_call_operand.vmem [shape: f32[1,32], index: 2, kind: input, shape index: {}]
  %s3 = inlined_call_operand.vmem [shape: f32[1,32], index: 3, kind: input, shape index: {}]
  %s4 = inlined_call_operand.vmem [shape: bf16[2,1024,32], index: 4, kind: output, shape index: {}]
  %s5 = sld [smem:[#allocation0]]
  $region49: #{chess_cnn_forward.3} parent=0
    _
  %s7 = ssub.s32 1, %s5
  %s8 = scalar_select 0, %s7, %s5
  loop: start=0, step=1, limit=4
  $region2: #{chess_cnn_forward.3} parent=0 // loop_pre_header
    _
  $region3: #{chess_cnn_forward.3} parent=0 // loop_header
    %s10 = sphi 0, %s14
    %p11 = scmp.ge.s32.totalorder %s10, 4
    %s20 = sphi 0, %s22
    %s23 = sphi 0, %s20
    %s24 = sphi 0, %s23
    %s40 = sphi 0, %s24
    %s44 = sphi 0, %s44
    %s46 = sphi 0, %s44
    %s47 = sphi 0, %s46
    %s61 = sphi 0, %s47
    %s65 = sphi 0, %s65
    %s67 = sphi 0, %s65
    %s68 = sphi 0, %s67
    %s82 = sphi 0, %s68
    %s86 = sphi 0, %s86
    %s88 = sphi 0, %s86
    %s89 = sphi 0, %s88
    %s103 = sphi 0, %s89
    %s109 = sphi 0, %s111
    %s112 = sphi 0, %s109
    %s113 = sphi 0, %s112
    %s129 = sphi 0, %s113
  $region4: #{chess_cnn_forward.3} parent=0 // loop_header_branch
    %13 = sbr.rel (%p11) target = $region8
  $region5: #{chess_cnn_forward.3} parent=0 // loop_body
    %s15 = ssub.s32 %s10, 1
    %s16 = ssub.s32 %s10, 2
    %s17 = sadd.s32 %s10, 1
    %s18 = ssub.s32 %s10, %s17
    %p19 = scmp.eq.s32.totalorder %s18, 0
    %s21 = sadd.s32 %s20, 1
    %s22 = scalar_select %p19, %s20, %s21
    %p25 = pneg %p19
    %p26 = scmp.eq.s32.totalorder %s10, 1
    %p27 = por %p25, %p26
    %p28 = scmp.ne.s32.totalorder %s20, %s23
    %p29 = scmp.eq.s32.totalorder %s10, 0
    %p30 = por %p28, %p29
    %p31 = scmp.ne.s32.totalorder %s20, %s23
    %p32 = scmp.eq.s32.totalorder %s15, 1
    %p33 = por %p31, %p32
    %p34 = scmp.ne.s32.totalorder %s23, %s24
    %p35 = scmp.eq.s32.totalorder %s15, 0
    %p36 = por %p34, %p35
    %p37 = scmp.ne.s32.totalorder %s23, %s24
    %p38 = scmp.eq.s32.totalorder %s16, 1
    %p39 = por %p37, %p38
    %p41 = scmp.ne.s32.totalorder %s24, %s40
    %p42 = scmp.eq.s32.totalorder %s16, 0
    %p43 = por %p41, %p42
    %s45 = sadd.s32 %s44, 1
    %p48 = scmp.eq.s32.totalorder %s10, 1
    %p49 = scmp.ne.s32.totalorder %s44, %s46
    %p50 = scmp.eq.s32.totalorder %s10, 0
    %p51 = por %p49, %p50
    %p52 = scmp.ne.s32.totalorder %s44, %s46
    %p53 = scmp.eq.s32.totalorder %s15, 1
    %p54 = por %p52, %p53
    %p55 = scmp.ne.s32.totalorder %s46, %s47
    %p56 = scmp.eq.s32.totalorder %s15, 0
    %p57 = por %p55, %p56
    %p58 = scmp.ne.s32.totalorder %s46, %s47
    %p59 = scmp.eq.s32.totalorder %s16, 1
    %p60 = por %p58, %p59
    %p62 = scmp.ne.s32.totalorder %s47, %s61
    %p63 = scmp.eq.s32.totalorder %s16, 0
    %p64 = por %p62, %p63
    %s66 = sadd.s32 %s65, 1
    %p69 = scmp.eq.s32.totalorder %s10, 1
    %p70 = scmp.ne.s32.totalorder %s65, %s67
    %p71 = scmp.eq.s32.totalorder %s10, 0
    %p72 = por %p70, %p71
    %p73 = scmp.ne.s32.totalorder %s65, %s67
    %p74 = scmp.eq.s32.totalorder %s15, 1
    %p75 = por %p73, %p74
    %p76 = scmp.ne.s32.totalorder %s67, %s68
    %p77 = scmp.eq.s32.totalorder %s15, 0
    %p78 = por %p76, %p77
    %p79 = scmp.ne.s32.totalorder %s67, %s68
    %p80 = scmp.eq.s32.totalorder %s16, 1
    %p81 = por %p79, %p80
    %p83 = scmp.ne.s32.totalorder %s68, %s82
    %p84 = scmp.eq.s32.totalorder %s16, 0
    %p85 = por %p83, %p84
    %s87 = sadd.s32 %s86, 1
    %p90 = scmp.eq.s32.totalorder %s10, 1
    %p91 = scmp.ne.s32.totalorder %s86, %s88
    %p92 = scmp.eq.s32.totalorder %s10, 0
    %p93 = por %p91, %p92
    %p94 = scmp.ne.s32.totalorder %s86, %s88
    %p95 = scmp.eq.s32.totalorder %s15, 1
    %p96 = por %p94, %p95
    %p97 = scmp.ne.s32.totalorder %s88, %s89
    %p98 = scmp.eq.s32.totalorder %s15, 0
    %p99 = por %p97, %p98
    %p100 = scmp.ne.s32.totalorder %s88, %s89
    %p101 = scmp.eq.s32.totalorder %s16, 1
    %p102 = por %p100, %p101
    %p104 = scmp.ne.s32.totalorder %s89, %s103
    %p105 = scmp.eq.s32.totalorder %s16, 0
    %p106 = por %p104, %p105
    %s107 = ssub.s32 %s10, %s17
    %p108 = scmp.eq.s32.totalorder %s107, 0
    %s110 = sadd.s32 %s109, 1
    %s111 = scalar_select %p108, %s109, %s110
    %p114 = pneg %p108
    %p115 = scmp.eq.s32.totalorder %s10, 1
    %p116 = por %p114, %p115
    %p117 = scmp.ne.s32.totalorder %s109, %s112
    %p118 = scmp.eq.s32.totalorder %s10, 0
    %p119 = por %p117, %p118
    %p120 = scmp.ne.s32.totalorder %s109, %s112
    %p121 = scmp.eq.s32.totalorder %s15, 1
    %p122 = por %p120, %p121
    %p123 = scmp.ne.s32.totalorder %s112, %s113
    %p124 = scmp.eq.s32.totalorder %s15, 0
    %p125 = por %p123, %p124
    %p126 = scmp.ne.s32.totalorder %s112, %s113
    %p127 = scmp.eq.s32.totalorder %s16, 1
    %p128 = por %p126, %p127
    %p130 = scmp.ne.s32.totalorder %s113, %s129
    %p131 = scmp.eq.s32.totalorder %s16, 0
    %p132 = por %p130, %p131
    %p133 = scmp.le.s32.totalorder 1, %s10
    %p134 = scmp.lt.s32.totalorder %s10, 3
    %p135 = pnand %p133, %p134
    %p136 = pneg %p135
    // Predicated region
    $region9: #{chess_cnn_forward.3} parent=5 // pred_check
      _
    $region10: #{chess_cnn_forward.3} parent=5 // pred_check_branch
      %138 = sbr.rel (%p135) target = $region12
    $region11: #{chess_cnn_forward.3} parent=5 // pred_region
      %s139 = ssub.s32 %s10, 1
      // Predicated region
      $region13: #{chess_cnn_forward.3} parent=11 // pred_check
        %p140 = pneg %p57
      $region14: #{chess_cnn_forward.3} parent=11 // pred_check_branch
        %142 = sbr.rel (%p140) target = $region16
      $region15: #{chess_cnn_forward.3} parent=11 // pred_region
        _
      $region16: #{chess_cnn_forward.3} parent=11 // pred_fallthru
        _
      // Predicated region
      $region17: #{chess_cnn_forward.3} parent=11 // pred_check
        %p143 = pneg %p78
      $region18: #{chess_cnn_forward.3} parent=11 // pred_check_branch
        %145 = sbr.rel (%p143) target = $region20
      $region19: #{chess_cnn_forward.3} parent=11 // pred_region
        _
      $region20: #{chess_cnn_forward.3} parent=11 // pred_fallthru
        _
      // Predicated region
      $region21: #{chess_cnn_forward.3} parent=11 // pred_check
        %p146 = pneg %p99
      $region22: #{chess_cnn_forward.3} parent=11 // pred_check_branch
        %148 = sbr.rel (%p146) target = $region24
      $region23: #{chess_cnn_forward.3} parent=11 // pred_region
        _
      $region24: #{chess_cnn_forward.3} parent=11 // pred_fallthru
        _
    $region12: #{chess_cnn_forward.3} parent=5 // pred_fallthru
      _
    %p149 = scmp.lt.s32.totalorder %s10, 2
    // Predicated region
    $region25: #{chess_cnn_forward.3} parent=5 // pred_check
      %p150 = pneg %p149
    $region26: #{chess_cnn_forward.3} parent=5 // pred_check_branch
      %152 = sbr.rel (%p150) target = $region28
    $region27: #{chess_cnn_forward.3} parent=5 // pred_region
      // Predicated region
      $region29: #{chess_cnn_forward.3} parent=27 // pred_check
        %p153 = pneg %p30
      $region30: #{chess_cnn_forward.3} parent=27 // pred_check_branch
        %155 = sbr.rel (%p153) target = $region32
      $region31: #{chess_cnn_forward.3} parent=27 // pred_region
        %p156 = scmp.lt.s32.totalorder %s10, 1
        %s157 = scalar_select %p156, %s10, 1
        %s158 = smul.addr %s157, 512
        %s159 = smul.addr %s158, 4
        %s160 = scalar_lea.vmem %s0, %s159
      $region32: #{chess_cnn_forward.3} parent=27 // pred_fallthru
        _
    $region28: #{chess_cnn_forward.3} parent=5 // pred_fallthru
      _
    %p161 = scmp.le.s32.totalorder 1, %s10
    %p162 = scmp.lt.s32.totalorder %s10, 3
    %p163 = pnand %p161, %p162
    %p164 = pneg %p163
    // Predicated region
    $region33: #{chess_cnn_forward.3} parent=5 // pred_check
      _
    $region34: #{chess_cnn_forward.3} parent=5 // pred_check_branch
      %166 = sbr.rel (%p163) target = $region36
    $region35: #{chess_cnn_forward.3} parent=5 // pred_region
      %s167 = ssub.s32 %s10, 1
      %p168 = scmp.lt.s32.totalorder %s15, 1
      %s169 = scalar_select %p168, %s15, 1
      %s170 = smul.addr %s169, 512
      %s171 = smul.addr %s170, 4
      %s172 = scalar_lea.vmem %s0, %s171
      %p173 = pneg %p36
      %p174 = pneg %p33
      %p175 = pneg %p57
      %p176 = pneg %p54
      %p177 = pneg %p78
      %p178 = pneg %p75
      %p179 = pneg %p99
      %p180 = pneg %p96
      %p181 = pneg %p125
      %p182 = pneg %p122
      %p183 = scmp.lt.s32.totalorder %s15, 1
      %s184 = scalar_select %p183, %s15, 1
      %s185 = smul.addr %s184, 128
      %s186 = smul.addr %s185, 4
      %s187 = scalar_lea.vmem %s4, %s186
      %p188 = scmp.lt.s32.totalorder %s15, 1
      %s189 = scalar_select %p188, %s15, 1
      %s190 = smul.addr %s189, 512
      %s191 = smul.addr %s190, 4
      %s192 = scalar_lea.vmem %s0, %s191
      %p193 = scmp.lt.s32.totalorder %s15, 1
      %s194 = scalar_select %p193, %s15, 1
      %s195 = smul.addr %s194, 128
      %s196 = smul.addr %s195, 4
      %s197 = scalar_lea.vmem %s4, %s196
      %v199 = vld [vmem:[%s192] sm:$0xf]
      %v200 = vld [vmem:[%s192 + $0x4] sm:$0xf]
      %v201 = vld [vmem:[%s192 + $0x8] sm:$0xf]
      %v202 = vld [vmem:[%s192 + $0xc] sm:$0xf]
      %v203 = vld [vmem:[%s192 + $0x10] sm:$0xf]
      %v204 = vld [vmem:[%s192 + $0x14] sm:$0xf]
      %v205 = vld [vmem:[%s192 + $0x18] sm:$0xf]
      %v206 = vld [vmem:[%s192 + $0x1c] sm:$0xf]
      %v207 = vld [vmem:[%s192 + $0x20] sm:$0xf]
      %v208 = vld [vmem:[%s192 + $0x24] sm:$0xf]
      %v209 = vld [vmem:[%s192 + $0x28] sm:$0xf]
      %v210 = vld [vmem:[%s192 + $0x2c] sm:$0xf]
      %v211 = vld [vmem:[%s192 + $0x30] sm:$0xf]
      %v212 = vld [vmem:[%s192 + $0x34] sm:$0xf]
      %v213 = vld [vmem:[%s192 + $0x38] sm:$0xf]
      %v214 = vld [vmem:[%s192 + $0x3c] sm:$0xf]
      %v215 = vld [vmem:[%s192 + $0x40] sm:$0xf]
      %v216 = vld [vmem:[%s192 + $0x44] sm:$0xf]
      %v217 = vld [vmem:[%s192 + $0x48] sm:$0xf]
      %v218 = vld [vmem:[%s192 + $0x4c] sm:$0xf]
      %v219 = vld [vmem:[%s192 + $0x50] sm:$0xf]
      %v220 = vld [vmem:[%s192 + $0x54] sm:$0xf]
      %v221 = vld [vmem:[%s192 + $0x58] sm:$0xf]
      %v222 = vld [vmem:[%s192 + $0x5c] sm:$0xf]
      %v223 = vld [vmem:[%s192 + $0x60] sm:$0xf]
      %v224 = vld [vmem:[%s192 + $0x64] sm:$0xf]
      %v225 = vld [vmem:[%s192 + $0x68] sm:$0xf]
      %v226 = vld [vmem:[%s192 + $0x6c] sm:$0xf]
      %v227 = vld [vmem:[%s192 + $0x70] sm:$0xf]
      %v228 = vld [vmem:[%s192 + $0x74] sm:$0xf]
      %v229 = vld [vmem:[%s192 + $0x78] sm:$0xf]
      %v230 = vld [vmem:[%s192 + $0x7c] sm:$0xf]
      %v231 = vld [vmem:[%s192 + $0x80] sm:$0xf]
      %v232 = vld [vmem:[%s192 + $0x84] sm:$0xf]
      %v233 = vld [vmem:[%s192 + $0x88] sm:$0xf]
      %v234 = vld [vmem:[%s192 + $0x8c] sm:$0xf]
      %v235 = vld [vmem:[%s192 + $0x90] sm:$0xf]
      %v236 = vld [vmem:[%s192 + $0x94] sm:$0xf]
      %v237 = vld [vmem:[%s192 + $0x98] sm:$0xf]
      %v238 = vld [vmem:[%s192 + $0x9c] sm:$0xf]
      %v239 = vld [vmem:[%s192 + $0xa0] sm:$0xf]
      %v240 = vld [vmem:[%s192 + $0xa4] sm:$0xf]
      %v241 = vld [vmem:[%s192 + $0xa8] sm:$0xf]
      %v242 = vld [vmem:[%s192 + $0xac] sm:$0xf]
      %v243 = vld [vmem:[%s192 + $0xb0] sm:$0xf]
      %v244 = vld [vmem:[%s192 + $0xb4] sm:$0xf]
      %v245 = vld [vmem:[%s192 + $0xb8] sm:$0xf]
      %v246 = vld [vmem:[%s192 + $0xbc] sm:$0xf]
      %v247 = vld [vmem:[%s192 + $0xc0] sm:$0xf]
      %v248 = vld [vmem:[%s192 + $0xc4] sm:$0xf]
      %v249 = vld [vmem:[%s192 + $0xc8] sm:$0xf]
      %v250 = vld [vmem:[%s192 + $0xcc] sm:$0xf]
      %v251 = vld [vmem:[%s192 + $0xd0] sm:$0xf]
      %v252 = vld [vmem:[%s192 + $0xd4] sm:$0xf]
      %v253 = vld [vmem:[%s192 + $0xd8] sm:$0xf]
      %v254 = vld [vmem:[%s192 + $0xdc] sm:$0xf]
      %v255 = vld [vmem:[%s192 + $0xe0] sm:$0xf]
      %v256 = vld [vmem:[%s192 + $0xe4] sm:$0xf]
      %v257 = vld [vmem:[%s192 + $0xe8] sm:$0xf]
      %v258 = vld [vmem:[%s192 + $0xec] sm:$0xf]
      %v259 = vld [vmem:[%s192 + $0xf0] sm:$0xf]
      %v260 = vld [vmem:[%s192 + $0xf4] sm:$0xf]
      %v261 = vld [vmem:[%s192 + $0xf8] sm:$0xf]
      %v262 = vld [vmem:[%s192 + $0xfc] sm:$0xf]
      %v263 = vld [vmem:[%s192 + $0x100] sm:$0xf]
      %v264 = vld [vmem:[%s192 + $0x104] sm:$0xf]
      %v265 = vld [vmem:[%s192 + $0x108] sm:$0xf]
      %v266 = vld [vmem:[%s192 + $0x10c] sm:$0xf]
      %v267 = vld [vmem:[%s192 + $0x110] sm:$0xf]
      %v268 = vld [vmem:[%s192 + $0x114] sm:$0xf]
      %v269 = vld [vmem:[%s192 + $0x118] sm:$0xf]
      %v270 = vld [vmem:[%s192 + $0x11c] sm:$0xf]
      %v271 = vld [vmem:[%s192 + $0x120] sm:$0xf]
      %v272 = vld [vmem:[%s192 + $0x124] sm:$0xf]
      %v273 = vld [vmem:[%s192 + $0x128] sm:$0xf]
      %v274 = vld [vmem:[%s192 + $0x12c] sm:$0xf]
      %v275 = vld [vmem:[%s192 + $0x130] sm:$0xf]
      %v276 = vld [vmem:[%s192 + $0x134] sm:$0xf]
      %v277 = vld [vmem:[%s192 + $0x138] sm:$0xf]
      %v278 = vld [vmem:[%s192 + $0x13c] sm:$0xf]
      %v279 = vld [vmem:[%s192 + $0x140] sm:$0xf]
      %v280 = vld [vmem:[%s192 + $0x144] sm:$0xf]
      %v281 = vld [vmem:[%s192 + $0x148] sm:$0xf]
      %v282 = vld [vmem:[%s192 + $0x14c] sm:$0xf]
      %v283 = vld [vmem:[%s192 + $0x150] sm:$0xf]
      %v284 = vld [vmem:[%s192 + $0x154] sm:$0xf]
      %v285 = vld [vmem:[%s192 + $0x158] sm:$0xf]
      %v286 = vld [vmem:[%s192 + $0x15c] sm:$0xf]
      %v287 = vld [vmem:[%s192 + $0x160] sm:$0xf]
      %v288 = vld [vmem:[%s192 + $0x164] sm:$0xf]
      %v289 = vld [vmem:[%s192 + $0x168] sm:$0xf]
      %v290 = vld [vmem:[%s192 + $0x16c] sm:$0xf]
      %v291 = vld [vmem:[%s192 + $0x170] sm:$0xf]
      %v292 = vld [vmem:[%s192 + $0x174] sm:$0xf]
      %v293 = vld [vmem:[%s192 + $0x178] sm:$0xf]
      %v294 = vld [vmem:[%s192 + $0x17c] sm:$0xf]
      %v295 = vld [vmem:[%s192 + $0x180] sm:$0xf]
      %v296 = vld [vmem:[%s192 + $0x184] sm:$0xf]
      %v297 = vld [vmem:[%s192 + $0x188] sm:$0xf]
      %v298 = vld [vmem:[%s192 + $0x18c] sm:$0xf]
      %v299 = vld [vmem:[%s192 + $0x190] sm:$0xf]
      %v300 = vld [vmem:[%s192 + $0x194] sm:$0xf]
      %v301 = vld [vmem:[%s192 + $0x198] sm:$0xf]
      %v302 = vld [vmem:[%s192 + $0x19c] sm:$0xf]
      %v303 = vld [vmem:[%s192 + $0x1a0] sm:$0xf]
      %v304 = vld [vmem:[%s192 + $0x1a4] sm:$0xf]
      %v305 = vld [vmem:[%s192 + $0x1a8] sm:$0xf]
      %v306 = vld [vmem:[%s192 + $0x1ac] sm:$0xf]
      %v307 = vld [vmem:[%s192 + $0x1b0] sm:$0xf]
      %v308 = vld [vmem:[%s192 + $0x1b4] sm:$0xf]
      %v309 = vld [vmem:[%s192 + $0x1b8] sm:$0xf]
      %v310 = vld [vmem:[%s192 + $0x1bc] sm:$0xf]
      %v311 = vld [vmem:[%s192 + $0x1c0] sm:$0xf]
      %v312 = vld [vmem:[%s192 + $0x1c4] sm:$0xf]
      %v313 = vld [vmem:[%s192 + $0x1c8] sm:$0xf]
      %v314 = vld [vmem:[%s192 + $0x1cc] sm:$0xf]
      %v315 = vld [vmem:[%s192 + $0x1d0] sm:$0xf]
      %v316 = vld [vmem:[%s192 + $0x1d4] sm:$0xf]
      %v317 = vld [vmem:[%s192 + $0x1d8] sm:$0xf]
      %v318 = vld [vmem:[%s192 + $0x1dc] sm:$0xf]
      %v319 = vld [vmem:[%s192 + $0x1e0] sm:$0xf]
      %v320 = vld [vmem:[%s192 + $0x1e4] sm:$0xf]
      %v321 = vld [vmem:[%s192 + $0x1e8] sm:$0xf]
      %v322 = vld [vmem:[%s192 + $0x1ec] sm:$0xf]
      %v323 = vld [vmem:[%s192 + $0x1f0] sm:$0xf]
      %v324 = vld [vmem:[%s192 + $0x1f4] sm:$0xf]
      %v325 = vld [vmem:[%s192 + $0x1f8] sm:$0xf]
      %v326 = vld [vmem:[%s192 + $0x1fc] sm:$0xf]
      %v327 = vld [vmem:[%s192 + $0x200] sm:$0xf]
      %v328 = vld [vmem:[%s192 + $0x204] sm:$0xf]
      %v329 = vld [vmem:[%s192 + $0x208] sm:$0xf]
      %v330 = vld [vmem:[%s192 + $0x20c] sm:$0xf]
      %v331 = vld [vmem:[%s192 + $0x210] sm:$0xf]
      %v332 = vld [vmem:[%s192 + $0x214] sm:$0xf]
      %v333 = vld [vmem:[%s192 + $0x218] sm:$0xf]
      %v334 = vld [vmem:[%s192 + $0x21c] sm:$0xf]
      %v335 = vld [vmem:[%s192 + $0x220] sm:$0xf]
      %v336 = vld [vmem:[%s192 + $0x224] sm:$0xf]
      %v337 = vld [vmem:[%s192 + $0x228] sm:$0xf]
      %v338 = vld [vmem:[%s192 + $0x22c] sm:$0xf]
      %v339 = vld [vmem:[%s192 + $0x230] sm:$0xf]
      %v340 = vld [vmem:[%s192 + $0x234] sm:$0xf]
      %v341 = vld [vmem:[%s192 + $0x238] sm:$0xf]
      %v342 = vld [vmem:[%s192 + $0x23c] sm:$0xf]
      %v343 = vld [vmem:[%s192 + $0x240] sm:$0xf]
      %v344 = vld [vmem:[%s192 + $0x244] sm:$0xf]
      %v345 = vld [vmem:[%s192 + $0x248] sm:$0xf]
      %v346 = vld [vmem:[%s192 + $0x24c] sm:$0xf]
      %v347 = vld [vmem:[%s192 + $0x250] sm:$0xf]
      %v348 = vld [vmem:[%s192 + $0x254] sm:$0xf]
      %v349 = vld [vmem:[%s192 + $0x258] sm:$0xf]
      %v350 = vld [vmem:[%s192 + $0x25c] sm:$0xf]
      %v351 = vld [vmem:[%s192 + $0x260] sm:$0xf]
      %v352 = vld [vmem:[%s192 + $0x264] sm:$0xf]
      %v353 = vld [vmem:[%s192 + $0x268] sm:$0xf]
      %v354 = vld [vmem:[%s192 + $0x26c] sm:$0xf]
      %v355 = vld [vmem:[%s192 + $0x270] sm:$0xf]
      %v356 = vld [vmem:[%s192 + $0x274] sm:$0xf]
      %v357 = vld [vmem:[%s192 + $0x278] sm:$0xf]
      %v358 = vld [vmem:[%s192 + $0x27c] sm:$0xf]
      %v359 = vld [vmem:[%s192 + $0x280] sm:$0xf]
      %v360 = vld [vmem:[%s192 + $0x284] sm:$0xf]
      %v361 = vld [vmem:[%s192 + $0x288] sm:$0xf]
      %v362 = vld [vmem:[%s192 + $0x28c] sm:$0xf]
      %v363 = vld [vmem:[%s192 + $0x290] sm:$0xf]
      %v364 = vld [vmem:[%s192 + $0x294] sm:$0xf]
      %v365 = vld [vmem:[%s192 + $0x298] sm:$0xf]
      %v366 = vld [vmem:[%s192 + $0x29c] sm:$0xf]
      %v367 = vld [vmem:[%s192 + $0x2a0] sm:$0xf]
      %v368 = vld [vmem:[%s192 + $0x2a4] sm:$0xf]
      %v369 = vld [vmem:[%s192 + $0x2a8] sm:$0xf]
      %v370 = vld [vmem:[%s192 + $0x2ac] sm:$0xf]
      %v371 = vld [vmem:[%s192 + $0x2b0] sm:$0xf]
      %v372 = vld [vmem:[%s192 + $0x2b4] sm:$0xf]
      %v373 = vld [vmem:[%s192 + $0x2b8] sm:$0xf]
      %v374 = vld [vmem:[%s192 + $0x2bc] sm:$0xf]
      %v375 = vld [vmem:[%s192 + $0x2c0] sm:$0xf]
      %v376 = vld [vmem:[%s192 + $0x2c4] sm:$0xf]
      %v377 = vld [vmem:[%s192 + $0x2c8] sm:$0xf]
      %v378 = vld [vmem:[%s192 + $0x2cc] sm:$0xf]
      %v379 = vld [vmem:[%s192 + $0x2d0] sm:$0xf]
      %v380 = vld [vmem:[%s192 + $0x2d4] sm:$0xf]
      %v381 = vld [vmem:[%s192 + $0x2d8] sm:$0xf]
      %v382 = vld [vmem:[%s192 + $0x2dc] sm:$0xf]
      %v383 = vld [vmem:[%s192 + $0x2e0] sm:$0xf]
      %v384 = vld [vmem:[%s192 + $0x2e4] sm:$0xf]
      %v385 = vld [vmem:[%s192 + $0x2e8] sm:$0xf]
      %v386 = vld [vmem:[%s192 + $0x2ec] sm:$0xf]
      %v387 = vld [vmem:[%s192 + $0x2f0] sm:$0xf]
      %v388 = vld [vmem:[%s192 + $0x2f4] sm:$0xf]
      %v389 = vld [vmem:[%s192 + $0x2f8] sm:$0xf]
      %v390 = vld [vmem:[%s192 + $0x2fc] sm:$0xf]
      %v391 = vld [vmem:[%s192 + $0x300] sm:$0xf]
      %v392 = vld [vmem:[%s192 + $0x304] sm:$0xf]
      %v393 = vld [vmem:[%s192 + $0x308] sm:$0xf]
      %v394 = vld [vmem:[%s192 + $0x30c] sm:$0xf]
      %v395 = vld [vmem:[%s192 + $0x310] sm:$0xf]
      %v396 = vld [vmem:[%s192 + $0x314] sm:$0xf]
      %v397 = vld [vmem:[%s192 + $0x318] sm:$0xf]
      %v398 = vld [vmem:[%s192 + $0x31c] sm:$0xf]
      %v399 = vld [vmem:[%s192 + $0x320] sm:$0xf]
      %v400 = vld [vmem:[%s192 + $0x324] sm:$0xf]
      %v401 = vld [vmem:[%s192 + $0x328] sm:$0xf]
      %v402 = vld [vmem:[%s192 + $0x32c] sm:$0xf]
      %v403 = vld [vmem:[%s192 + $0x330] sm:$0xf]
      %v404 = vld [vmem:[%s192 + $0x334] sm:$0xf]
      %v405 = vld [vmem:[%s192 + $0x338] sm:$0xf]
      %v406 = vld [vmem:[%s192 + $0x33c] sm:$0xf]
      %v407 = vld [vmem:[%s192 + $0x340] sm:$0xf]
      %v408 = vld [vmem:[%s192 + $0x344] sm:$0xf]
      %v409 = vld [vmem:[%s192 + $0x348] sm:$0xf]
      %v410 = vld [vmem:[%s192 + $0x34c] sm:$0xf]
      %v411 = vld [vmem:[%s192 + $0x350] sm:$0xf]
      %v412 = vld [vmem:[%s192 + $0x354] sm:$0xf]
      %v413 = vld [vmem:[%s192 + $0x358] sm:$0xf]
      %v414 = vld [vmem:[%s192 + $0x35c] sm:$0xf]
      %v415 = vld [vmem:[%s192 + $0x360] sm:$0xf]
      %v416 = vld [vmem:[%s192 + $0x364] sm:$0xf]
      %v417 = vld [vmem:[%s192 + $0x368] sm:$0xf]
      %v418 = vld [vmem:[%s192 + $0x36c] sm:$0xf]
      %v419 = vld [vmem:[%s192 + $0x370] sm:$0xf]
      %v420 = vld [vmem:[%s192 + $0x374] sm:$0xf]
      %v421 = vld [vmem:[%s192 + $0x378] sm:$0xf]
      %v422 = vld [vmem:[%s192 + $0x37c] sm:$0xf]
      %v423 = vld [vmem:[%s192 + $0x380] sm:$0xf]
      %v424 = vld [vmem:[%s192 + $0x384] sm:$0xf]
      %v425 = vld [vmem:[%s192 + $0x388] sm:$0xf]
      %v426 = vld [vmem:[%s192 + $0x38c] sm:$0xf]
      %v427 = vld [vmem:[%s192 + $0x390] sm:$0xf]
      %v428 = vld [vmem:[%s192 + $0x394] sm:$0xf]
      %v429 = vld [vmem:[%s192 + $0x398] sm:$0xf]
      %v430 = vld [vmem:[%s192 + $0x39c] sm:$0xf]
      %v431 = vld [vmem:[%s192 + $0x3a0] sm:$0xf]
      %v432 = vld [vmem:[%s192 + $0x3a4] sm:$0xf]
      %v433 = vld [vmem:[%s192 + $0x3a8] sm:$0xf]
      %v434 = vld [vmem:[%s192 + $0x3ac] sm:$0xf]
      %v435 = vld [vmem:[%s192 + $0x3b0] sm:$0xf]
      %v436 = vld [vmem:[%s192 + $0x3b4] sm:$0xf]
      %v437 = vld [vmem:[%s192 + $0x3b8] sm:$0xf]
      %v438 = vld [vmem:[%s192 + $0x3bc] sm:$0xf]
      %v439 = vld [vmem:[%s192 + $0x3c0] sm:$0xf]
      %v440 = vld [vmem:[%s192 + $0x3c4] sm:$0xf]
      %v441 = vld [vmem:[%s192 + $0x3c8] sm:$0xf]
      %v442 = vld [vmem:[%s192 + $0x3cc] sm:$0xf]
      %v443 = vld [vmem:[%s192 + $0x3d0] sm:$0xf]
      %v444 = vld [vmem:[%s192 + $0x3d4] sm:$0xf]
      %v445 = vld [vmem:[%s192 + $0x3d8] sm:$0xf]
      %v446 = vld [vmem:[%s192 + $0x3dc] sm:$0xf]
      %v447 = vld [vmem:[%s192 + $0x3e0] sm:$0xf]
      %v448 = vld [vmem:[%s192 + $0x3e4] sm:$0xf]
      %v449 = vld [vmem:[%s192 + $0x3e8] sm:$0xf]
      %v450 = vld [vmem:[%s192 + $0x3ec] sm:$0xf]
      %v451 = vld [vmem:[%s192 + $0x3f0] sm:$0xf]
      %v452 = vld [vmem:[%s192 + $0x3f4] sm:$0xf]
      %v453 = vld [vmem:[%s192 + $0x3f8] sm:$0xf]
      %v454 = vld [vmem:[%s192 + $0x3fc] sm:$0xf]
      %v455 = vld [vmem:[%s192 + $0x400] sm:$0xf]
      %v456 = vld [vmem:[%s192 + $0x404] sm:$0xf]
      %v457 = vld [vmem:[%s192 + $0x408] sm:$0xf]
      %v458 = vld [vmem:[%s192 + $0x40c] sm:$0xf]
      %v459 = vld [vmem:[%s192 + $0x410] sm:$0xf]
      %v460 = vld [vmem:[%s192 + $0x414] sm:$0xf]
      %v461 = vld [vmem:[%s192 + $0x418] sm:$0xf]
      %v462 = vld [vmem:[%s192 + $0x41c] sm:$0xf]
      %v463 = vld [vmem:[%s192 + $0x420] sm:$0xf]
      %v464 = vld [vmem:[%s192 + $0x424] sm:$0xf]
      %v465 = vld [vmem:[%s192 + $0x428] sm:$0xf]
      %v466 = vld [vmem:[%s192 + $0x42c] sm:$0xf]
      %v467 = vld [vmem:[%s192 + $0x430] sm:$0xf]
      %v468 = vld [vmem:[%s192 + $0x434] sm:$0xf]
      %v469 = vld [vmem:[%s192 + $0x438] sm:$0xf]
      %v470 = vld [vmem:[%s192 + $0x43c] sm:$0xf]
      %v471 = vld [vmem:[%s192 + $0x440] sm:$0xf]
      %v472 = vld [vmem:[%s192 + $0x444] sm:$0xf]
      %v473 = vld [vmem:[%s192 + $0x448] sm:$0xf]
      %v474 = vld [vmem:[%s192 + $0x44c] sm:$0xf]
      %v475 = vld [vmem:[%s192 + $0x450] sm:$0xf]
      %v476 = vld [vmem:[%s192 + $0x454] sm:$0xf]
      %v477 = vld [vmem:[%s192 + $0x458] sm:$0xf]
      %v478 = vld [vmem:[%s192 + $0x45c] sm:$0xf]
      %v479 = vld [vmem:[%s192 + $0x460] sm:$0xf]
      %v480 = vld [vmem:[%s192 + $0x464] sm:$0xf]
      %v481 = vld [vmem:[%s192 + $0x468] sm:$0xf]
      %v482 = vld [vmem:[%s192 + $0x46c] sm:$0xf]
      %v483 = vld [vmem:[%s192 + $0x470] sm:$0xf]
      %v484 = vld [vmem:[%s192 + $0x474] sm:$0xf]
      %v485 = vld [vmem:[%s192 + $0x478] sm:$0xf]
      %v486 = vld [vmem:[%s192 + $0x47c] sm:$0xf]
      %v487 = vld [vmem:[%s192 + $0x480] sm:$0xf]
      %v488 = vld [vmem:[%s192 + $0x484] sm:$0xf]
      %v489 = vld [vmem:[%s192 + $0x488] sm:$0xf]
      %v490 = vld [vmem:[%s192 + $0x48c] sm:$0xf]
      %v491 = vld [vmem:[%s192 + $0x490] sm:$0xf]
      %v492 = vld [vmem:[%s192 + $0x494] sm:$0xf]
      %v493 = vld [vmem:[%s192 + $0x498] sm:$0xf]
      %v494 = vld [vmem:[%s192 + $0x49c] sm:$0xf]
      %v495 = vld [vmem:[%s192 + $0x4a0] sm:$0xf]
      %v496 = vld [vmem:[%s192 + $0x4a4] sm:$0xf]
      %v497 = vld [vmem:[%s192 + $0x4a8] sm:$0xf]
      %v498 = vld [vmem:[%s192 + $0x4ac] sm:$0xf]
      %v499 = vld [vmem:[%s192 + $0x4b0] sm:$0xf]
      %v500 = vld [vmem:[%s192 + $0x4b4] sm:$0xf]
      %v501 = vld [vmem:[%s192 + $0x4b8] sm:$0xf]
      %v502 = vld [vmem:[%s192 + $0x4bc] sm:$0xf]
      %v503 = vld [vmem:[%s192 + $0x4c0] sm:$0xf]
      %v504 = vld [vmem:[%s192 + $0x4c4] sm:$0xf]
      %v505 = vld [vmem:[%s192 + $0x4c8] sm:$0xf]
      %v506 = vld [vmem:[%s192 + $0x4cc] sm:$0xf]
      %v507 = vld [vmem:[%s192 + $0x4d0] sm:$0xf]
      %v508 = vld [vmem:[%s192 + $0x4d4] sm:$0xf]
      %v509 = vld [vmem:[%s192 + $0x4d8] sm:$0xf]
      %v510 = vld [vmem:[%s192 + $0x4dc] sm:$0xf]
      %v511 = vld [vmem:[%s192 + $0x4e0] sm:$0xf]
      %v512 = vld [vmem:[%s192 + $0x4e4] sm:$0xf]
      %v513 = vld [vmem:[%s192 + $0x4e8] sm:$0xf]
      %v514 = vld [vmem:[%s192 + $0x4ec] sm:$0xf]
      %v515 = vld [vmem:[%s192 + $0x4f0] sm:$0xf]
      %v516 = vld [vmem:[%s192 + $0x4f4] sm:$0xf]
      %v517 = vld [vmem:[%s192 + $0x4f8] sm:$0xf]
      %v518 = vld [vmem:[%s192 + $0x4fc] sm:$0xf]
      %v519 = vld [vmem:[%s192 + $0x500] sm:$0xf]
      %v520 = vld [vmem:[%s192 + $0x504] sm:$0xf]
      %v521 = vld [vmem:[%s192 + $0x508] sm:$0xf]
      %v522 = vld [vmem:[%s192 + $0x50c] sm:$0xf]
      %v523 = vld [vmem:[%s192 + $0x510] sm:$0xf]
      %v524 = vld [vmem:[%s192 + $0x514] sm:$0xf]
      %v525 = vld [vmem:[%s192 + $0x518] sm:$0xf]
      %v526 = vld [vmem:[%s192 + $0x51c] sm:$0xf]
      %v527 = vld [vmem:[%s192 + $0x520] sm:$0xf]
      %v528 = vld [vmem:[%s192 + $0x524] sm:$0xf]
      %v529 = vld [vmem:[%s192 + $0x528] sm:$0xf]
      %v530 = vld [vmem:[%s192 + $0x52c] sm:$0xf]
      %v531 = vld [vmem:[%s192 + $0x530] sm:$0xf]
      %v532 = vld [vmem:[%s192 + $0x534] sm:$0xf]
      %v533 = vld [vmem:[%s192 + $0x538] sm:$0xf]
      %v534 = vld [vmem:[%s192 + $0x53c] sm:$0xf]
      %v535 = vld [vmem:[%s192 + $0x540] sm:$0xf]
      %v536 = vld [vmem:[%s192 + $0x544] sm:$0xf]
      %v537 = vld [vmem:[%s192 + $0x548] sm:$0xf]
      %v538 = vld [vmem:[%s192 + $0x54c] sm:$0xf]
      %v539 = vld [vmem:[%s192 + $0x550] sm:$0xf]
      %v540 = vld [vmem:[%s192 + $0x554] sm:$0xf]
      %v541 = vld [vmem:[%s192 + $0x558] sm:$0xf]
      %v542 = vld [vmem:[%s192 + $0x55c] sm:$0xf]
      %v543 = vld [vmem:[%s192 + $0x560] sm:$0xf]
      %v544 = vld [vmem:[%s192 + $0x564] sm:$0xf]
      %v545 = vld [vmem:[%s192 + $0x568] sm:$0xf]
      %v546 = vld [vmem:[%s192 + $0x56c] sm:$0xf]
      %v547 = vld [vmem:[%s192 + $0x570] sm:$0xf]
      %v548 = vld [vmem:[%s192 + $0x574] sm:$0xf]
      %v549 = vld [vmem:[%s192 + $0x578] sm:$0xf]
      %v550 = vld [vmem:[%s192 + $0x57c] sm:$0xf]
      %v551 = vld [vmem:[%s192 + $0x580] sm:$0xf]
      %v552 = vld [vmem:[%s192 + $0x584] sm:$0xf]
      %v553 = vld [vmem:[%s192 + $0x588] sm:$0xf]
      %v554 = vld [vmem:[%s192 + $0x58c] sm:$0xf]
      %v555 = vld [vmem:[%s192 + $0x590] sm:$0xf]
      %v556 = vld [vmem:[%s192 + $0x594] sm:$0xf]
      %v557 = vld [vmem:[%s192 + $0x598] sm:$0xf]
      %v558 = vld [vmem:[%s192 + $0x59c] sm:$0xf]
      %v559 = vld [vmem:[%s192 + $0x5a0] sm:$0xf]
      %v560 = vld [vmem:[%s192 + $0x5a4] sm:$0xf]
      %v561 = vld [vmem:[%s192 + $0x5a8] sm:$0xf]
      %v562 = vld [vmem:[%s192 + $0x5ac] sm:$0xf]
      %v563 = vld [vmem:[%s192 + $0x5b0] sm:$0xf]
      %v564 = vld [vmem:[%s192 + $0x5b4] sm:$0xf]
      %v565 = vld [vmem:[%s192 + $0x5b8] sm:$0xf]
      %v566 = vld [vmem:[%s192 + $0x5bc] sm:$0xf]
      %v567 = vld [vmem:[%s192 + $0x5c0] sm:$0xf]
      %v568 = vld [vmem:[%s192 + $0x5c4] sm:$0xf]
      %v569 = vld [vmem:[%s192 + $0x5c8] sm:$0xf]
      %v570 = vld [vmem:[%s192 + $0x5cc] sm:$0xf]
      %v571 = vld [vmem:[%s192 + $0x5d0] sm:$0xf]
      %v572 = vld [vmem:[%s192 + $0x5d4] sm:$0xf]
      %v573 = vld [vmem:[%s192 + $0x5d8] sm:$0xf]
      %v574 = vld [vmem:[%s192 + $0x5dc] sm:$0xf]
      %v575 = vld [vmem:[%s192 + $0x5e0] sm:$0xf]
      %v576 = vld [vmem:[%s192 + $0x5e4] sm:$0xf]
      %v577 = vld [vmem:[%s192 + $0x5e8] sm:$0xf]
      %v578 = vld [vmem:[%s192 + $0x5ec] sm:$0xf]
      %v579 = vld [vmem:[%s192 + $0x5f0] sm:$0xf]
      %v580 = vld [vmem:[%s192 + $0x5f4] sm:$0xf]
      %v581 = vld [vmem:[%s192 + $0x5f8] sm:$0xf]
      %v582 = vld [vmem:[%s192 + $0x5fc] sm:$0xf]
      %v583 = vld [vmem:[%s192 + $0x600] sm:$0xf]
      %v584 = vld [vmem:[%s192 + $0x604] sm:$0xf]
      %v585 = vld [vmem:[%s192 + $0x608] sm:$0xf]
      %v586 = vld [vmem:[%s192 + $0x60c] sm:$0xf]
      %v587 = vld [vmem:[%s192 + $0x610] sm:$0xf]
      %v588 = vld [vmem:[%s192 + $0x614] sm:$0xf]
      %v589 = vld [vmem:[%s192 + $0x618] sm:$0xf]
      %v590 = vld [vmem:[%s192 + $0x61c] sm:$0xf]
      %v591 = vld [vmem:[%s192 + $0x620] sm:$0xf]
      %v592 = vld [vmem:[%s192 + $0x624] sm:$0xf]
      %v593 = vld [vmem:[%s192 + $0x628] sm:$0xf]
      %v594 = vld [vmem:[%s192 + $0x62c] sm:$0xf]
      %v595 = vld [vmem:[%s192 + $0x630] sm:$0xf]
      %v596 = vld [vmem:[%s192 + $0x634] sm:$0xf]
      %v597 = vld [vmem:[%s192 + $0x638] sm:$0xf]
      %v598 = vld [vmem:[%s192 + $0x63c] sm:$0xf]
      %v599 = vld [vmem:[%s192 + $0x640] sm:$0xf]
      %v600 = vld [vmem:[%s192 + $0x644] sm:$0xf]
      %v601 = vld [vmem:[%s192 + $0x648] sm:$0xf]
      %v602 = vld [vmem:[%s192 + $0x64c] sm:$0xf]
      %v603 = vld [vmem:[%s192 + $0x650] sm:$0xf]
      %v604 = vld [vmem:[%s192 + $0x654] sm:$0xf]
      %v605 = vld [vmem:[%s192 + $0x658] sm:$0xf]
      %v606 = vld [vmem:[%s192 + $0x65c] sm:$0xf]
      %v607 = vld [vmem:[%s192 + $0x660] sm:$0xf]
      %v608 = vld [vmem:[%s192 + $0x664] sm:$0xf]
      %v609 = vld [vmem:[%s192 + $0x668] sm:$0xf]
      %v610 = vld [vmem:[%s192 + $0x66c] sm:$0xf]
      %v611 = vld [vmem:[%s192 + $0x670] sm:$0xf]
      %v612 = vld [vmem:[%s192 + $0x674] sm:$0xf]
      %v613 = vld [vmem:[%s192 + $0x678] sm:$0xf]
      %v614 = vld [vmem:[%s192 + $0x67c] sm:$0xf]
      %v615 = vld [vmem:[%s192 + $0x680] sm:$0xf]
      %v616 = vld [vmem:[%s192 + $0x684] sm:$0xf]
      %v617 = vld [vmem:[%s192 + $0x688] sm:$0xf]
      %v618 = vld [vmem:[%s192 + $0x68c] sm:$0xf]
      %v619 = vld [vmem:[%s192 + $0x690] sm:$0xf]
      %v620 = vld [vmem:[%s192 + $0x694] sm:$0xf]
      %v621 = vld [vmem:[%s192 + $0x698] sm:$0xf]
      %v622 = vld [vmem:[%s192 + $0x69c] sm:$0xf]
      %v623 = vld [vmem:[%s192 + $0x6a0] sm:$0xf]
      %v624 = vld [vmem:[%s192 + $0x6a4] sm:$0xf]
      %v625 = vld [vmem:[%s192 + $0x6a8] sm:$0xf]
      %v626 = vld [vmem:[%s192 + $0x6ac] sm:$0xf]
      %v627 = vld [vmem:[%s192 + $0x6b0] sm:$0xf]
      %v628 = vld [vmem:[%s192 + $0x6b4] sm:$0xf]
      %v629 = vld [vmem:[%s192 + $0x6b8] sm:$0xf]
      %v630 = vld [vmem:[%s192 + $0x6bc] sm:$0xf]
      %v631 = vld [vmem:[%s192 + $0x6c0] sm:$0xf]
      %v632 = vld [vmem:[%s192 + $0x6c4] sm:$0xf]
      %v633 = vld [vmem:[%s192 + $0x6c8] sm:$0xf]
      %v634 = vld [vmem:[%s192 + $0x6cc] sm:$0xf]
      %v635 = vld [vmem:[%s192 + $0x6d0] sm:$0xf]
      %v636 = vld [vmem:[%s192 + $0x6d4] sm:$0xf]
      %v637 = vld [vmem:[%s192 + $0x6d8] sm:$0xf]
      %v638 = vld [vmem:[%s192 + $0x6dc] sm:$0xf]
      %v639 = vld [vmem:[%s192 + $0x6e0] sm:$0xf]
      %v640 = vld [vmem:[%s192 + $0x6e4] sm:$0xf]
      %v641 = vld [vmem:[%s192 + $0x6e8] sm:$0xf]
      %v642 = vld [vmem:[%s192 + $0x6ec] sm:$0xf]
      %v643 = vld [vmem:[%s192 + $0x6f0] sm:$0xf]
      %v644 = vld [vmem:[%s192 + $0x6f4] sm:$0xf]
      %v645 = vld [vmem:[%s192 + $0x6f8] sm:$0xf]
      %v646 = vld [vmem:[%s192 + $0x6fc] sm:$0xf]
      %v647 = vld [vmem:[%s192 + $0x700] sm:$0xf]
      %v648 = vld [vmem:[%s192 + $0x704] sm:$0xf]
      %v649 = vld [vmem:[%s192 + $0x708] sm:$0xf]
      %v650 = vld [vmem:[%s192 + $0x70c] sm:$0xf]
      %v651 = vld [vmem:[%s192 + $0x710] sm:$0xf]
      %v652 = vld [vmem:[%s192 + $0x714] sm:$0xf]
      %v653 = vld [vmem:[%s192 + $0x718] sm:$0xf]
      %v654 = vld [vmem:[%s192 + $0x71c] sm:$0xf]
      %v655 = vld [vmem:[%s192 + $0x720] sm:$0xf]
      %v656 = vld [vmem:[%s192 + $0x724] sm:$0xf]
      %v657 = vld [vmem:[%s192 + $0x728] sm:$0xf]
      %v658 = vld [vmem:[%s192 + $0x72c] sm:$0xf]
      %v659 = vld [vmem:[%s192 + $0x730] sm:$0xf]
      %v660 = vld [vmem:[%s192 + $0x734] sm:$0xf]
      %v661 = vld [vmem:[%s192 + $0x738] sm:$0xf]
      %v662 = vld [vmem:[%s192 + $0x73c] sm:$0xf]
      %v663 = vld [vmem:[%s192 + $0x740] sm:$0xf]
      %v664 = vld [vmem:[%s192 + $0x744] sm:$0xf]
      %v665 = vld [vmem:[%s192 + $0x748] sm:$0xf]
      %v666 = vld [vmem:[%s192 + $0x74c] sm:$0xf]
      %v667 = vld [vmem:[%s192 + $0x750] sm:$0xf]
      %v668 = vld [vmem:[%s192 + $0x754] sm:$0xf]
      %v669 = vld [vmem:[%s192 + $0x758] sm:$0xf]
      %v670 = vld [vmem:[%s192 + $0x75c] sm:$0xf]
      %v671 = vld [vmem:[%s192 + $0x760] sm:$0xf]
      %v672 = vld [vmem:[%s192 + $0x764] sm:$0xf]
      %v673 = vld [vmem:[%s192 + $0x768] sm:$0xf]
      %v674 = vld [vmem:[%s192 + $0x76c] sm:$0xf]
      %v675 = vld [vmem:[%s192 + $0x770] sm:$0xf]
      %v676 = vld [vmem:[%s192 + $0x774] sm:$0xf]
      %v677 = vld [vmem:[%s192 + $0x778] sm:$0xf]
      %v678 = vld [vmem:[%s192 + $0x77c] sm:$0xf]
      %v679 = vld [vmem:[%s192 + $0x780] sm:$0xf]
      %v680 = vld [vmem:[%s192 + $0x784] sm:$0xf]
      %v681 = vld [vmem:[%s192 + $0x788] sm:$0xf]
      %v682 = vld [vmem:[%s192 + $0x78c] sm:$0xf]
      %v683 = vld [vmem:[%s192 + $0x790] sm:$0xf]
      %v684 = vld [vmem:[%s192 + $0x794] sm:$0xf]
      %v685 = vld [vmem:[%s192 + $0x798] sm:$0xf]
      %v686 = vld [vmem:[%s192 + $0x79c] sm:$0xf]
      %v687 = vld [vmem:[%s192 + $0x7a0] sm:$0xf]
      %v688 = vld [vmem:[%s192 + $0x7a4] sm:$0xf]
      %v689 = vld [vmem:[%s192 + $0x7a8] sm:$0xf]
      %v690 = vld [vmem:[%s192 + $0x7ac] sm:$0xf]
      %v691 = vld [vmem:[%s192 + $0x7b0] sm:$0xf]
      %v692 = vld [vmem:[%s192 + $0x7b4] sm:$0xf]
      %v693 = vld [vmem:[%s192 + $0x7b8] sm:$0xf]
      %v694 = vld [vmem:[%s192 + $0x7bc] sm:$0xf]
      %v695 = vld [vmem:[%s192 + $0x7c0] sm:$0xf]
      %v696 = vld [vmem:[%s192 + $0x7c4] sm:$0xf]
      %v697 = vld [vmem:[%s192 + $0x7c8] sm:$0xf]
      %v698 = vld [vmem:[%s192 + $0x7cc] sm:$0xf]
      %v699 = vld [vmem:[%s192 + $0x7d0] sm:$0xf]
      %v700 = vld [vmem:[%s192 + $0x7d4] sm:$0xf]
      %v701 = vld [vmem:[%s192 + $0x7d8] sm:$0xf]
      %v702 = vld [vmem:[%s192 + $0x7dc] sm:$0xf]
      %v703 = vld [vmem:[%s192 + $0x7e0] sm:$0xf]
      %v704 = vld [vmem:[%s192 + $0x7e4] sm:$0xf]
      %v705 = vld [vmem:[%s192 + $0x7e8] sm:$0xf]
      %v706 = vld [vmem:[%s192 + $0x7ec] sm:$0xf]
      %v707 = vld [vmem:[%s192 + $0x7f0] sm:$0xf]
      %v708 = vld [vmem:[%s192 + $0x7f4] sm:$0xf]
      %v709 = vld [vmem:[%s192 + $0x7f8] sm:$0xf]
      %v710 = vld [vmem:[%s192 + $0x7fc] sm:$0xf]
      %v711 = vld [vmem:[%s1] sm:$0xf]
      %v712 = vld [vmem:[%s1 + $0x4] sm:$0xf]
      %v713 = vld [vmem:[%s1 + $0x8] sm:$0xf]
      %v714 = vld [vmem:[%s1 + $0xc] sm:$0x3]
      %v1227 = vunpack.c.l.b16 %v199
      %v1228 = vunpack.c.l.b16 %v200
      %v1229 = vunpack.c.l.b16 %v201
      %v1230 = vunpack.c.l.b16 %v202
      %v1231 = vunpack.c.l.b16 %v203
      %v1232 = vunpack.c.l.b16 %v204
      %v1233 = vunpack.c.l.b16 %v205
      %v1234 = vunpack.c.l.b16 %v206
      %v1235 = vunpack.c.l.b16 %v207
      %v1236 = vunpack.c.l.b16 %v208
      %v1237 = vunpack.c.l.b16 %v209
      %v1238 = vunpack.c.l.b16 %v210
      %v1239 = vunpack.c.l.b16 %v211
      %v1240 = vunpack.c.l.b16 %v212
      %v1241 = vunpack.c.l.b16 %v213
      %v1242 = vunpack.c.l.b16 %v214
      %v1243 = vunpack.c.l.b16 %v215
      %v1244 = vunpack.c.l.b16 %v216
      %v1245 = vunpack.c.l.b16 %v217
      %v1246 = vunpack.c.l.b16 %v218
      %v1247 = vunpack.c.l.b16 %v219
      %v1248 = vunpack.c.l.b16 %v220
      %v1249 = vunpack.c.l.b16 %v221
      %v1250 = vunpack.c.l.b16 %v222
      %v1251 = vunpack.c.l.b16 %v223
      %v1252 = vunpack.c.l.b16 %v224
      %v1253 = vunpack.c.l.b16 %v225
      %v1254 = vunpack.c.l.b16 %v226
      %v1255 = vunpack.c.l.b16 %v227
      %v1256 = vunpack.c.l.b16 %v228
      %v1257 = vunpack.c.l.b16 %v229
      %v1258 = vunpack.c.l.b16 %v230
      %v1259 = vunpack.c.l.b16 %v231
      %v1260 = vunpack.c.l.b16 %v232
      %v1261 = vunpack.c.l.b16 %v233
      %v1262 = vunpack.c.l.b16 %v234
      %v1263 = vunpack.c.l.b16 %v235
      %v1264 = vunpack.c.l.b16 %v236
      %v1265 = vunpack.c.l.b16 %v237
      %v1266 = vunpack.c.l.b16 %v238
      %v1267 = vunpack.c.l.b16 %v239
      %v1268 = vunpack.c.l.b16 %v240
      %v1269 = vunpack.c.l.b16 %v241
      %v1270 = vunpack.c.l.b16 %v242
      %v1271 = vunpack.c.l.b16 %v243
      %v1272 = vunpack.c.l.b16 %v244
      %v1273 = vunpack.c.l.b16 %v245
      %v1274 = vunpack.c.l.b16 %v246
      %v1275 = vunpack.c.l.b16 %v247
      %v1276 = vunpack.c.l.b16 %v248
      %v1277 = vunpack.c.l.b16 %v249
      %v1278 = vunpack.c.l.b16 %v250
      %v1279 = vunpack.c.l.b16 %v251
      %v1280 = vunpack.c.l.b16 %v252
      %v1281 = vunpack.c.l.b16 %v253
      %v1282 = vunpack.c.l.b16 %v254
      %v1283 = vunpack.c.l.b16 %v255
      %v1284 = vunpack.c.l.b16 %v256
      %v1285 = vunpack.c.l.b16 %v257
      %v1286 = vunpack.c.l.b16 %v258
      %v1287 = vunpack.c.l.b16 %v259
      %v1288 = vunpack.c.l.b16 %v260
      %v1289 = vunpack.c.l.b16 %v261
      %v1290 = vunpack.c.l.b16 %v262
      %v1291 = vunpack.c.l.b16 %v263
      %v1292 = vunpack.c.l.b16 %v264
      %v1293 = vunpack.c.l.b16 %v265
      %v1294 = vunpack.c.l.b16 %v266
      %v1295 = vunpack.c.l.b16 %v267
      %v1296 = vunpack.c.l.b16 %v268
      %v1297 = vunpack.c.l.b16 %v269
      %v1298 = vunpack.c.l.b16 %v270
      %v1299 = vunpack.c.l.b16 %v271
      %v1300 = vunpack.c.l.b16 %v272
      %v1301 = vunpack.c.l.b16 %v273
      %v1302 = vunpack.c.l.b16 %v274
      %v1303 = vunpack.c.l.b16 %v275
      %v1304 = vunpack.c.l.b16 %v276
      %v1305 = vunpack.c.l.b16 %v277
      %v1306 = vunpack.c.l.b16 %v278
      %v1307 = vunpack.c.l.b16 %v279
      %v1308 = vunpack.c.l.b16 %v280
      %v1309 = vunpack.c.l.b16 %v281
      %v1310 = vunpack.c.l.b16 %v282
      %v1311 = vunpack.c.l.b16 %v283
      %v1312 = vunpack.c.l.b16 %v284
      %v1313 = vunpack.c.l.b16 %v285
      %v1314 = vunpack.c.l.b16 %v286
      %v1315 = vunpack.c.l.b16 %v287
      %v1316 = vunpack.c.l.b16 %v288
      %v1317 = vunpack.c.l.b16 %v289
      %v1318 = vunpack.c.l.b16 %v290
      %v1319 = vunpack.c.l.b16 %v291
      %v1320 = vunpack.c.l.b16 %v292
      %v1321 = vunpack.c.l.b16 %v293
      %v1322 = vunpack.c.l.b16 %v294
      %v1323 = vunpack.c.l.b16 %v295
      %v1324 = vunpack.c.l.b16 %v296
      %v1325 = vunpack.c.l.b16 %v297
      %v1326 = vunpack.c.l.b16 %v298
      %v1327 = vunpack.c.l.b16 %v299
      %v1328 = vunpack.c.l.b16 %v300
      %v1329 = vunpack.c.l.b16 %v301
      %v1330 = vunpack.c.l.b16 %v302
      %v1331 = vunpack.c.l.b16 %v303
      %v1332 = vunpack.c.l.b16 %v304
      %v1333 = vunpack.c.l.b16 %v305
      %v1334 = vunpack.c.l.b16 %v306
      %v1335 = vunpack.c.l.b16 %v307
      %v1336 = vunpack.c.l.b16 %v308
      %v1337 = vunpack.c.l.b16 %v309
      %v1338 = vunpack.c.l.b16 %v310
      %v1339 = vunpack.c.l.b16 %v311
      %v1340 = vunpack.c.l.b16 %v312
      %v1341 = vunpack.c.l.b16 %v313
      %v1342 = vunpack.c.l.b16 %v314
      %v1343 = vunpack.c.l.b16 %v315
      %v1344 = vunpack.c.l.b16 %v316
      %v1345 = vunpack.c.l.b16 %v317
      %v1346 = vunpack.c.l.b16 %v318
      %v1347 = vunpack.c.l.b16 %v319
      %v1348 = vunpack.c.l.b16 %v320
      %v1349 = vunpack.c.l.b16 %v321
      %v1350 = vunpack.c.l.b16 %v322
      %v1351 = vunpack.c.l.b16 %v323
      %v1352 = vunpack.c.l.b16 %v324
      %v1353 = vunpack.c.l.b16 %v325
      %v1354 = vunpack.c.l.b16 %v326
      %v1355 = vunpack.c.l.b16 %v327
      %v1356 = vunpack.c.l.b16 %v328
      %v1357 = vunpack.c.l.b16 %v329
      %v1358 = vunpack.c.l.b16 %v330
      %v1359 = vunpack.c.l.b16 %v331
      %v1360 = vunpack.c.l.b16 %v332
      %v1361 = vunpack.c.l.b16 %v333
      %v1362 = vunpack.c.l.b16 %v334
      %v1363 = vunpack.c.l.b16 %v335
      %v1364 = vunpack.c.l.b16 %v336
      %v1365 = vunpack.c.l.b16 %v337
      %v1366 = vunpack.c.l.b16 %v338
      %v1367 = vunpack.c.l.b16 %v339
      %v1368 = vunpack.c.l.b16 %v340
      %v1369 = vunpack.c.l.b16 %v341
      %v1370 = vunpack.c.l.b16 %v342
      %v1371 = vunpack.c.l.b16 %v343
      %v1372 = vunpack.c.l.b16 %v344
      %v1373 = vunpack.c.l.b16 %v345
      %v1374 = vunpack.c.l.b16 %v346
      %v1375 = vunpack.c.l.b16 %v347
      %v1376 = vunpack.c.l.b16 %v348
      %v1377 = vunpack.c.l.b16 %v349
      %v1378 = vunpack.c.l.b16 %v350
      %v1379 = vunpack.c.l.b16 %v351
      %v1380 = vunpack.c.l.b16 %v352
      %v1381 = vunpack.c.l.b16 %v353
      %v1382 = vunpack.c.l.b16 %v354
      %v1383 = vunpack.c.l.b16 %v355
      %v1384 = vunpack.c.l.b16 %v356
      %v1385 = vunpack.c.l.b16 %v357
      %v1386 = vunpack.c.l.b16 %v358
      %v1387 = vunpack.c.l.b16 %v359
      %v1388 = vunpack.c.l.b16 %v360
      %v1389 = vunpack.c.l.b16 %v361
      %v1390 = vunpack.c.l.b16 %v362
      %v1391 = vunpack.c.l.b16 %v363
      %v1392 = vunpack.c.l.b16 %v364
      %v1393 = vunpack.c.l.b16 %v365
      %v1394 = vunpack.c.l.b16 %v366
      %v1395 = vunpack.c.l.b16 %v367
      %v1396 = vunpack.c.l.b16 %v368
      %v1397 = vunpack.c.l.b16 %v369
      %v1398 = vunpack.c.l.b16 %v370
      %v1399 = vunpack.c.l.b16 %v371
      %v1400 = vunpack.c.l.b16 %v372
      %v1401 = vunpack.c.l.b16 %v373
      %v1402 = vunpack.c.l.b16 %v374
      %v1403 = vunpack.c.l.b16 %v375
      %v1404 = vunpack.c.l.b16 %v376
      %v1405 = vunpack.c.l.b16 %v377
      %v1406 = vunpack.c.l.b16 %v378
      %v1407 = vunpack.c.l.b16 %v379
      %v1408 = vunpack.c.l.b16 %v380
      %v1409 = vunpack.c.l.b16 %v381
      %v1410 = vunpack.c.l.b16 %v382
      %v1411 = vunpack.c.l.b16 %v383
      %v1412 = vunpack.c.l.b16 %v384
      %v1413 = vunpack.c.l.b16 %v385
      %v1414 = vunpack.c.l.b16 %v386
      %v1415 = vunpack.c.l.b16 %v387
      %v1416 = vunpack.c.l.b16 %v388
      %v1417 = vunpack.c.l.b16 %v389
      %v1418 = vunpack.c.l.b16 %v390
      %v1419 = vunpack.c.l.b16 %v391
      %v1420 = vunpack.c.l.b16 %v392
      %v1421 = vunpack.c.l.b16 %v393
      %v1422 = vunpack.c.l.b16 %v394
      %v1423 = vunpack.c.l.b16 %v395
      %v1424 = vunpack.c.l.b16 %v396
      %v1425 = vunpack.c.l.b16 %v397
      %v1426 = vunpack.c.l.b16 %v398
      %v1427 = vunpack.c.l.b16 %v399
      %v1428 = vunpack.c.l.b16 %v400
      %v1429 = vunpack.c.l.b16 %v401
      %v1430 = vunpack.c.l.b16 %v402
      %v1431 = vunpack.c.l.b16 %v403
      %v1432 = vunpack.c.l.b16 %v404
      %v1433 = vunpack.c.l.b16 %v405
      %v1434 = vunpack.c.l.b16 %v406
      %v1435 = vunpack.c.l.b16 %v407
      %v1436 = vunpack.c.l.b16 %v408
      %v1437 = vunpack.c.l.b16 %v409
      %v1438 = vunpack.c.l.b16 %v410
      %v1439 = vunpack.c.l.b16 %v411
      %v1440 = vunpack.c.l.b16 %v412
      %v1441 = vunpack.c.l.b16 %v413
      %v1442 = vunpack.c.l.b16 %v414
      %v1443 = vunpack.c.l.b16 %v415
      %v1444 = vunpack.c.l.b16 %v416
      %v1445 = vunpack.c.l.b16 %v417
      %v1446 = vunpack.c.l.b16 %v418
      %v1447 = vunpack.c.l.b16 %v419
      %v1448 = vunpack.c.l.b16 %v420
      %v1449 = vunpack.c.l.b16 %v421
      %v1450 = vunpack.c.l.b16 %v422
      %v1451 = vunpack.c.l.b16 %v423
      %v1452 = vunpack.c.l.b16 %v424
      %v1453 = vunpack.c.l.b16 %v425
      %v1454 = vunpack.c.l.b16 %v426
      %v1455 = vunpack.c.l.b16 %v427
      %v1456 = vunpack.c.l.b16 %v428
      %v1457 = vunpack.c.l.b16 %v429
      %v1458 = vunpack.c.l.b16 %v430
      %v1459 = vunpack.c.l.b16 %v431
      %v1460 = vunpack.c.l.b16 %v432
      %v1461 = vunpack.c.l.b16 %v433
      %v1462 = vunpack.c.l.b16 %v434
      %v1463 = vunpack.c.l.b16 %v435
      %v1464 = vunpack.c.l.b16 %v436
      %v1465 = vunpack.c.l.b16 %v437
      %v1466 = vunpack.c.l.b16 %v438
      %v1467 = vunpack.c.l.b16 %v439
      %v1468 = vunpack.c.l.b16 %v440
      %v1469 = vunpack.c.l.b16 %v441
      %v1470 = vunpack.c.l.b16 %v442
      %v1471 = vunpack.c.l.b16 %v443
      %v1472 = vunpack.c.l.b16 %v444
      %v1473 = vunpack.c.l.b16 %v445
      %v1474 = vunpack.c.l.b16 %v446
      %v1475 = vunpack.c.l.b16 %v447
      %v1476 = vunpack.c.l.b16 %v448
      %v1477 = vunpack.c.l.b16 %v449
      %v1478 = vunpack.c.l.b16 %v450
      %v1479 = vunpack.c.l.b16 %v451
      %v1480 = vunpack.c.l.b16 %v452
      %v1481 = vunpack.c.l.b16 %v453
      %v1482 = vunpack.c.l.b16 %v454
      %v1483 = vunpack.c.l.b16 %v455
      %v1484 = vunpack.c.l.b16 %v456
      %v1485 = vunpack.c.l.b16 %v457
      %v1486 = vunpack.c.l.b16 %v458
      %v1487 = vunpack.c.l.b16 %v459
      %v1488 = vunpack.c.l.b16 %v460
      %v1489 = vunpack.c.l.b16 %v461
      %v1490 = vunpack.c.l.b16 %v462
      %v1491 = vunpack.c.l.b16 %v463
      %v1492 = vunpack.c.l.b16 %v464
      %v1493 = vunpack.c.l.b16 %v465
      %v1494 = vunpack.c.l.b16 %v466
      %v1495 = vunpack.c.l.b16 %v467
      %v1496 = vunpack.c.l.b16 %v468
      %v1497 = vunpack.c.l.b16 %v469
      %v1498 = vunpack.c.l.b16 %v470
      %v1499 = vunpack.c.l.b16 %v471
      %v1500 = vunpack.c.l.b16 %v472
      %v1501 = vunpack.c.l.b16 %v473
      %v1502 = vunpack.c.l.b16 %v474
      %v1503 = vunpack.c.l.b16 %v475
      %v1504 = vunpack.c.l.b16 %v476
      %v1505 = vunpack.c.l.b16 %v477
      %v1506 = vunpack.c.l.b16 %v478
      %v1507 = vunpack.c.l.b16 %v479
      %v1508 = vunpack.c.l.b16 %v480
      %v1509 = vunpack.c.l.b16 %v481
      %v1510 = vunpack.c.l.b16 %v482
      %v1511 = vunpack.c.l.b16 %v483
      %v1512 = vunpack.c.l.b16 %v484
      %v1513 = vunpack.c.l.b16 %v485
      %v1514 = vunpack.c.l.b16 %v486
      %v1515 = vunpack.c.l.b16 %v487
      %v1516 = vunpack.c.l.b16 %v488
      %v1517 = vunpack.c.l.b16 %v489
      %v1518 = vunpack.c.l.b16 %v490
      %v1519 = vunpack.c.l.b16 %v491
      %v1520 = vunpack.c.l.b16 %v492
      %v1521 = vunpack.c.l.b16 %v493
      %v1522 = vunpack.c.l.b16 %v494
      %v1523 = vunpack.c.l.b16 %v495
      %v1524 = vunpack.c.l.b16 %v496
      %v1525 = vunpack.c.l.b16 %v497
      %v1526 = vunpack.c.l.b16 %v498
      %v1527 = vunpack.c.l.b16 %v499
      %v1528 = vunpack.c.l.b16 %v500
      %v1529 = vunpack.c.l.b16 %v501
      %v1530 = vunpack.c.l.b16 %v502
      %v1531 = vunpack.c.l.b16 %v503
      %v1532 = vunpack.c.l.b16 %v504
      %v1533 = vunpack.c.l.b16 %v505
      %v1534 = vunpack.c.l.b16 %v506
      %v1535 = vunpack.c.l.b16 %v507
      %v1536 = vunpack.c.l.b16 %v508
      %v1537 = vunpack.c.l.b16 %v509
      %v1538 = vunpack.c.l.b16 %v510
      %v1539 = vunpack.c.l.b16 %v511
      %v1540 = vunpack.c.l.b16 %v512
      %v1541 = vunpack.c.l.b16 %v513
      %v1542 = vunpack.c.l.b16 %v514
      %v1543 = vunpack.c.l.b16 %v515
      %v1544 = vunpack.c.l.b16 %v516
      %v1545 = vunpack.c.l.b16 %v517
      %v1546 = vunpack.c.l.b16 %v518
      %v1547 = vunpack.c.l.b16 %v519
      %v1548 = vunpack.c.l.b16 %v520
      %v1549 = vunpack.c.l.b16 %v521
      %v1550 = vunpack.c.l.b16 %v522
      %v1551 = vunpack.c.l.b16 %v523
      %v1552 = vunpack.c.l.b16 %v524
      %v1553 = vunpack.c.l.b16 %v525
      %v1554 = vunpack.c.l.b16 %v526
      %v1555 = vunpack.c.l.b16 %v527
      %v1556 = vunpack.c.l.b16 %v528
      %v1557 = vunpack.c.l.b16 %v529
      %v1558 = vunpack.c.l.b16 %v530
      %v1559 = vunpack.c.l.b16 %v531
      %v1560 = vunpack.c.l.b16 %v532
      %v1561 = vunpack.c.l.b16 %v533
      %v1562 = vunpack.c.l.b16 %v534
      %v1563 = vunpack.c.l.b16 %v535
      %v1564 = vunpack.c.l.b16 %v536
      %v1565 = vunpack.c.l.b16 %v537
      %v1566 = vunpack.c.l.b16 %v538
      %v1567 = vunpack.c.l.b16 %v539
      %v1568 = vunpack.c.l.b16 %v540
      %v1569 = vunpack.c.l.b16 %v541
      %v1570 = vunpack.c.l.b16 %v542
      %v1571 = vunpack.c.l.b16 %v543
      %v1572 = vunpack.c.l.b16 %v544
      %v1573 = vunpack.c.l.b16 %v545
      %v1574 = vunpack.c.l.b16 %v546
      %v1575 = vunpack.c.l.b16 %v547
      %v1576 = vunpack.c.l.b16 %v548
      %v1577 = vunpack.c.l.b16 %v549
      %v1578 = vunpack.c.l.b16 %v550
      %v1579 = vunpack.c.l.b16 %v551
      %v1580 = vunpack.c.l.b16 %v552
      %v1581 = vunpack.c.l.b16 %v553
      %v1582 = vunpack.c.l.b16 %v554
      %v1583 = vunpack.c.l.b16 %v555
      %v1584 = vunpack.c.l.b16 %v556
      %v1585 = vunpack.c.l.b16 %v557
      %v1586 = vunpack.c.l.b16 %v558
      %v1587 = vunpack.c.l.b16 %v559
      %v1588 = vunpack.c.l.b16 %v560
      %v1589 = vunpack.c.l.b16 %v561
      %v1590 = vunpack.c.l.b16 %v562
      %v1591 = vunpack.c.l.b16 %v563
      %v1592 = vunpack.c.l.b16 %v564
      %v1593 = vunpack.c.l.b16 %v565
      %v1594 = vunpack.c.l.b16 %v566
      %v1595 = vunpack.c.l.b16 %v567
      %v1596 = vunpack.c.l.b16 %v568
      %v1597 = vunpack.c.l.b16 %v569
      %v1598 = vunpack.c.l.b16 %v570
      %v1599 = vunpack.c.l.b16 %v571
      %v1600 = vunpack.c.l.b16 %v572
      %v1601 = vunpack.c.l.b16 %v573
      %v1602 = vunpack.c.l.b16 %v574
      %v1603 = vunpack.c.l.b16 %v575
      %v1604 = vunpack.c.l.b16 %v576
      %v1605 = vunpack.c.l.b16 %v577
      %v1606 = vunpack.c.l.b16 %v578
      %v1607 = vunpack.c.l.b16 %v579
      %v1608 = vunpack.c.l.b16 %v580
      %v1609 = vunpack.c.l.b16 %v581
      %v1610 = vunpack.c.l.b16 %v582
      %v1611 = vunpack.c.l.b16 %v583
      %v1612 = vunpack.c.l.b16 %v584
      %v1613 = vunpack.c.l.b16 %v585
      %v1614 = vunpack.c.l.b16 %v586
      %v1615 = vunpack.c.l.b16 %v587
      %v1616 = vunpack.c.l.b16 %v588
      %v1617 = vunpack.c.l.b16 %v589
      %v1618 = vunpack.c.l.b16 %v590
      %v1619 = vunpack.c.l.b16 %v591
      %v1620 = vunpack.c.l.b16 %v592
      %v1621 = vunpack.c.l.b16 %v593
      %v1622 = vunpack.c.l.b16 %v594
      %v1623 = vunpack.c.l.b16 %v595
      %v1624 = vunpack.c.l.b16 %v596
      %v1625 = vunpack.c.l.b16 %v597
      %v1626 = vunpack.c.l.b16 %v598
      %v1627 = vunpack.c.l.b16 %v599
      %v1628 = vunpack.c.l.b16 %v600
      %v1629 = vunpack.c.l.b16 %v601
      %v1630 = vunpack.c.l.b16 %v602
      %v1631 = vunpack.c.l.b16 %v603
      %v1632 = vunpack.c.l.b16 %v604
      %v1633 = vunpack.c.l.b16 %v605
      %v1634 = vunpack.c.l.b16 %v606
      %v1635 = vunpack.c.l.b16 %v607
      %v1636 = vunpack.c.l.b16 %v608
      %v1637 = vunpack.c.l.b16 %v609
      %v1638 = vunpack.c.l.b16 %v610
      %v1639 = vunpack.c.l.b16 %v611
      %v1640 = vunpack.c.l.b16 %v612
      %v1641 = vunpack.c.l.b16 %v613
      %v1642 = vunpack.c.l.b16 %v614
      %v1643 = vunpack.c.l.b16 %v615
      %v1644 = vunpack.c.l.b16 %v616
      %v1645 = vunpack.c.l.b16 %v617
      %v1646 = vunpack.c.l.b16 %v618
      %v1647 = vunpack.c.l.b16 %v619
      %v1648 = vunpack.c.l.b16 %v620
      %v1649 = vunpack.c.l.b16 %v621
      %v1650 = vunpack.c.l.b16 %v622
      %v1651 = vunpack.c.l.b16 %v623
      %v1652 = vunpack.c.l.b16 %v624
      %v1653 = vunpack.c.l.b16 %v625
      %v1654 = vunpack.c.l.b16 %v626
      %v1655 = vunpack.c.l.b16 %v627
      %v1656 = vunpack.c.l.b16 %v628
      %v1657 = vunpack.c.l.b16 %v629
      %v1658 = vunpack.c.l.b16 %v630
      %v1659 = vunpack.c.l.b16 %v631
      %v1660 = vunpack.c.l.b16 %v632
      %v1661 = vunpack.c.l.b16 %v633
      %v1662 = vunpack.c.l.b16 %v634
      %v1663 = vunpack.c.l.b16 %v635
      %v1664 = vunpack.c.l.b16 %v636
      %v1665 = vunpack.c.l.b16 %v637
      %v1666 = vunpack.c.l.b16 %v638
      %v1667 = vunpack.c.l.b16 %v639
      %v1668 = vunpack.c.l.b16 %v640
      %v1669 = vunpack.c.l.b16 %v641
      %v1670 = vunpack.c.l.b16 %v642
      %v1671 = vunpack.c.l.b16 %v643
      %v1672 = vunpack.c.l.b16 %v644
      %v1673 = vunpack.c.l.b16 %v645
      %v1674 = vunpack.c.l.b16 %v646
      %v1675 = vunpack.c.l.b16 %v647
      %v1676 = vunpack.c.l.b16 %v648
      %v1677 = vunpack.c.l.b16 %v649
      %v1678 = vunpack.c.l.b16 %v650
      %v1679 = vunpack.c.l.b16 %v651
      %v1680 = vunpack.c.l.b16 %v652
      %v1681 = vunpack.c.l.b16 %v653
      %v1682 = vunpack.c.l.b16 %v654
      %v1683 = vunpack.c.l.b16 %v655
      %v1684 = vunpack.c.l.b16 %v656
      %v1685 = vunpack.c.l.b16 %v657
      %v1686 = vunpack.c.l.b16 %v658
      %v1687 = vunpack.c.l.b16 %v659
      %v1688 = vunpack.c.l.b16 %v660
      %v1689 = vunpack.c.l.b16 %v661
      %v1690 = vunpack.c.l.b16 %v662
      %v1691 = vunpack.c.l.b16 %v663
      %v1692 = vunpack.c.l.b16 %v664
      %v1693 = vunpack.c.l.b16 %v665
      %v1694 = vunpack.c.l.b16 %v666
      %v1695 = vunpack.c.l.b16 %v667
      %v1696 = vunpack.c.l.b16 %v668
      %v1697 = vunpack.c.l.b16 %v669
      %v1698 = vunpack.c.l.b16 %v670
      %v1699 = vunpack.c.l.b16 %v671
      %v1700 = vunpack.c.l.b16 %v672
      %v1701 = vunpack.c.l.b16 %v673
      %v1702 = vunpack.c.l.b16 %v674
      %v1703 = vunpack.c.l.b16 %v675
      %v1704 = vunpack.c.l.b16 %v676
      %v1705 = vunpack.c.l.b16 %v677
      %v1706 = vunpack.c.l.b16 %v678
      %v1707 = vunpack.c.l.b16 %v679
      %v1708 = vunpack.c.l.b16 %v680
      %v1709 = vunpack.c.l.b16 %v681
      %v1710 = vunpack.c.l.b16 %v682
      %v1711 = vunpack.c.l.b16 %v683
      %v1712 = vunpack.c.l.b16 %v684
      %v1713 = vunpack.c.l.b16 %v685
      %v1714 = vunpack.c.l.b16 %v686
      %v1715 = vunpack.c.l.b16 %v687
      %v1716 = vunpack.c.l.b16 %v688
      %v1717 = vunpack.c.l.b16 %v689
      %v1718 = vunpack.c.l.b16 %v690
      %v1719 = vunpack.c.l.b16 %v691
      %v1720 = vunpack.c.l.b16 %v692
      %v1721 = vunpack.c.l.b16 %v693
      %v1722 = vunpack.c.l.b16 %v694
      %v1723 = vunpack.c.l.b16 %v695
      %v1724 = vunpack.c.l.b16 %v696
      %v1725 = vunpack.c.l.b16 %v697
      %v1726 = vunpack.c.l.b16 %v698
      %v1727 = vunpack.c.l.b16 %v699
      %v1728 = vunpack.c.l.b16 %v700
      %v1729 = vunpack.c.l.b16 %v701
      %v1730 = vunpack.c.l.b16 %v702
      %v1731 = vunpack.c.l.b16 %v703
      %v1732 = vunpack.c.l.b16 %v704
      %v1733 = vunpack.c.l.b16 %v705
      %v1734 = vunpack.c.l.b16 %v706
      %v1735 = vunpack.c.l.b16 %v707
      %v1736 = vunpack.c.l.b16 %v708
      %v1737 = vunpack.c.l.b16 %v709
      %v1738 = vunpack.c.l.b16 %v710
      %v1739 = vpack.c.b16 %v1228, %v1227
      %v1740 = vpack.c.b16 %v1230, %v1229
      %v1741 = vpack.c.b16 %v1232, %v1231
      %v1742 = vpack.c.b16 %v1234, %v1233
      %v1743 = vpack.c.b16 %v1236, %v1235
      %v1744 = vpack.c.b16 %v1238, %v1237
      %v1745 = vpack.c.b16 %v1240, %v1239
      %v1746 = vpack.c.b16 %v1242, %v1241
      %v1747 = vpack.c.b16 %v1244, %v1243
      %v1748 = vpack.c.b16 %v1246, %v1245
      %v1749 = vpack.c.b16 %v1248, %v1247
      %v1750 = vpack.c.b16 %v1250, %v1249
      %v1751 = vpack.c.b16 %v1252, %v1251
      %v1752 = vpack.c.b16 %v1254, %v1253
      %v1753 = vpack.c.b16 %v1256, %v1255
      %v1754 = vpack.c.b16 %v1258, %v1257
      %v1755 = vpack.c.b16 %v1260, %v1259
      %v1756 = vpack.c.b16 %v1262, %v1261
      %v1757 = vpack.c.b16 %v1264, %v1263
      %v1758 = vpack.c.b16 %v1266, %v1265
      %v1759 = vpack.c.b16 %v1268, %v1267
      %v1760 = vpack.c.b16 %v1270, %v1269
      %v1761 = vpack.c.b16 %v1272, %v1271
      %v1762 = vpack.c.b16 %v1274, %v1273
      %v1763 = vpack.c.b16 %v1276, %v1275
      %v1764 = vpack.c.b16 %v1278, %v1277
      %v1765 = vpack.c.b16 %v1280, %v1279
      %v1766 = vpack.c.b16 %v1282, %v1281
      %v1767 = vpack.c.b16 %v1284, %v1283
      %v1768 = vpack.c.b16 %v1286, %v1285
      %v1769 = vpack.c.b16 %v1288, %v1287
      %v1770 = vpack.c.b16 %v1290, %v1289
      %v1771 = vpack.c.b16 %v1292, %v1291
      %v1772 = vpack.c.b16 %v1294, %v1293
      %v1773 = vpack.c.b16 %v1296, %v1295
      %v1774 = vpack.c.b16 %v1298, %v1297
      %v1775 = vpack.c.b16 %v1300, %v1299
      %v1776 = vpack.c.b16 %v1302, %v1301
      %v1777 = vpack.c.b16 %v1304, %v1303
      %v1778 = vpack.c.b16 %v1306, %v1305
      %v1779 = vpack.c.b16 %v1308, %v1307
      %v1780 = vpack.c.b16 %v1310, %v1309
      %v1781 = vpack.c.b16 %v1312, %v1311
      %v1782 = vpack.c.b16 %v1314, %v1313
      %v1783 = vpack.c.b16 %v1316, %v1315
      %v1784 = vpack.c.b16 %v1318, %v1317
      %v1785 = vpack.c.b16 %v1320, %v1319
      %v1786 = vpack.c.b16 %v1322, %v1321
      %v1787 = vpack.c.b16 %v1324, %v1323
      %v1788 = vpack.c.b16 %v1326, %v1325
      %v1789 = vpack.c.b16 %v1328, %v1327
      %v1790 = vpack.c.b16 %v1330, %v1329
      %v1791 = vpack.c.b16 %v1332, %v1331
      %v1792 = vpack.c.b16 %v1334, %v1333
      %v1793 = vpack.c.b16 %v1336, %v1335
      %v1794 = vpack.c.b16 %v1338, %v1337
      %v1795 = vpack.c.b16 %v1340, %v1339
      %v1796 = vpack.c.b16 %v1342, %v1341
      %v1797 = vpack.c.b16 %v1344, %v1343
      %v1798 = vpack.c.b16 %v1346, %v1345
      %v1799 = vpack.c.b16 %v1348, %v1347
      %v1800 = vpack.c.b16 %v1350, %v1349
      %v1801 = vpack.c.b16 %v1352, %v1351
      %v1802 = vpack.c.b16 %v1354, %v1353
      %v1803 = vpack.c.b16 %v1356, %v1355
      %v1804 = vpack.c.b16 %v1358, %v1357
      %v1805 = vpack.c.b16 %v1360, %v1359
      %v1806 = vpack.c.b16 %v1362, %v1361
      %v1807 = vpack.c.b16 %v1364, %v1363
      %v1808 = vpack.c.b16 %v1366, %v1365
      %v1809 = vpack.c.b16 %v1368, %v1367
      %v1810 = vpack.c.b16 %v1370, %v1369
      %v1811 = vpack.c.b16 %v1372, %v1371
      %v1812 = vpack.c.b16 %v1374, %v1373
      %v1813 = vpack.c.b16 %v1376, %v1375
      %v1814 = vpack.c.b16 %v1378, %v1377
      %v1815 = vpack.c.b16 %v1380, %v1379
      %v1816 = vpack.c.b16 %v1382, %v1381
      %v1817 = vpack.c.b16 %v1384, %v1383
      %v1818 = vpack.c.b16 %v1386, %v1385
      %v1819 = vpack.c.b16 %v1388, %v1387
      %v1820 = vpack.c.b16 %v1390, %v1389
      %v1821 = vpack.c.b16 %v1392, %v1391
      %v1822 = vpack.c.b16 %v1394, %v1393
      %v1823 = vpack.c.b16 %v1396, %v1395
      %v1824 = vpack.c.b16 %v1398, %v1397
      %v1825 = vpack.c.b16 %v1400, %v1399
      %v1826 = vpack.c.b16 %v1402, %v1401
      %v1827 = vpack.c.b16 %v1404, %v1403
      %v1828 = vpack.c.b16 %v1406, %v1405
      %v1829 = vpack.c.b16 %v1408, %v1407
      %v1830 = vpack.c.b16 %v1410, %v1409
      %v1831 = vpack.c.b16 %v1412, %v1411
      %v1832 = vpack.c.b16 %v1414, %v1413
      %v1833 = vpack.c.b16 %v1416, %v1415
      %v1834 = vpack.c.b16 %v1418, %v1417
      %v1835 = vpack.c.b16 %v1420, %v1419
      %v1836 = vpack.c.b16 %v1422, %v1421
      %v1837 = vpack.c.b16 %v1424, %v1423
      %v1838 = vpack.c.b16 %v1426, %v1425
      %v1839 = vpack.c.b16 %v1428, %v1427
      %v1840 = vpack.c.b16 %v1430, %v1429
      %v1841 = vpack.c.b16 %v1432, %v1431
      %v1842 = vpack.c.b16 %v1434, %v1433
      %v1843 = vpack.c.b16 %v1436, %v1435
      %v1844 = vpack.c.b16 %v1438, %v1437
      %v1845 = vpack.c.b16 %v1440, %v1439
      %v1846 = vpack.c.b16 %v1442, %v1441
      %v1847 = vpack.c.b16 %v1444, %v1443
      %v1848 = vpack.c.b16 %v1446, %v1445
      %v1849 = vpack.c.b16 %v1448, %v1447
      %v1850 = vpack.c.b16 %v1450, %v1449
      %v1851 = vpack.c.b16 %v1452, %v1451
      %v1852 = vpack.c.b16 %v1454, %v1453
      %v1853 = vpack.c.b16 %v1456, %v1455
      %v1854 = vpack.c.b16 %v1458, %v1457
      %v1855 = vpack.c.b16 %v1460, %v1459
      %v1856 = vpack.c.b16 %v1462, %v1461
      %v1857 = vpack.c.b16 %v1464, %v1463
      %v1858 = vpack.c.b16 %v1466, %v1465
      %v1859 = vpack.c.b16 %v1468, %v1467
      %v1860 = vpack.c.b16 %v1470, %v1469
      %v1861 = vpack.c.b16 %v1472, %v1471
      %v1862 = vpack.c.b16 %v1474, %v1473
      %v1863 = vpack.c.b16 %v1476, %v1475
      %v1864 = vpack.c.b16 %v1478, %v1477
      %v1865 = vpack.c.b16 %v1480, %v1479
      %v1866 = vpack.c.b16 %v1482, %v1481
      %v1867 = vpack.c.b16 %v1484, %v1483
      %v1868 = vpack.c.b16 %v1486, %v1485
      %v1869 = vpack.c.b16 %v1488, %v1487
      %v1870 = vpack.c.b16 %v1490, %v1489
      %v1871 = vpack.c.b16 %v1492, %v1491
      %v1872 = vpack.c.b16 %v1494, %v1493
      %v1873 = vpack.c.b16 %v1496, %v1495
      %v1874 = vpack.c.b16 %v1498, %v1497
      %v1875 = vpack.c.b16 %v1500, %v1499
      %v1876 = vpack.c.b16 %v1502, %v1501
      %v1877 = vpack.c.b16 %v1504, %v1503
      %v1878 = vpack.c.b16 %v1506, %v1505
      %v1879 = vpack.c.b16 %v1508, %v1507
      %v1880 = vpack.c.b16 %v1510, %v1509
      %v1881 = vpack.c.b16 %v1512, %v1511
      %v1882 = vpack.c.b16 %v1514, %v1513
      %v1883 = vpack.c.b16 %v1516, %v1515
      %v1884 = vpack.c.b16 %v1518, %v1517
      %v1885 = vpack.c.b16 %v1520, %v1519
      %v1886 = vpack.c.b16 %v1522, %v1521
      %v1887 = vpack.c.b16 %v1524, %v1523
      %v1888 = vpack.c.b16 %v1526, %v1525
      %v1889 = vpack.c.b16 %v1528, %v1527
      %v1890 = vpack.c.b16 %v1530, %v1529
      %v1891 = vpack.c.b16 %v1532, %v1531
      %v1892 = vpack.c.b16 %v1534, %v1533
      %v1893 = vpack.c.b16 %v1536, %v1535
      %v1894 = vpack.c.b16 %v1538, %v1537
      %v1895 = vpack.c.b16 %v1540, %v1539
      %v1896 = vpack.c.b16 %v1542, %v1541
      %v1897 = vpack.c.b16 %v1544, %v1543
      %v1898 = vpack.c.b16 %v1546, %v1545
      %v1899 = vpack.c.b16 %v1548, %v1547
      %v1900 = vpack.c.b16 %v1550, %v1549
      %v1901 = vpack.c.b16 %v1552, %v1551
      %v1902 = vpack.c.b16 %v1554, %v1553
      %v1903 = vpack.c.b16 %v1556, %v1555
      %v1904 = vpack.c.b16 %v1558, %v1557
      %v1905 = vpack.c.b16 %v1560, %v1559
      %v1906 = vpack.c.b16 %v1562, %v1561
      %v1907 = vpack.c.b16 %v1564, %v1563
      %v1908 = vpack.c.b16 %v1566, %v1565
      %v1909 = vpack.c.b16 %v1568, %v1567
      %v1910 = vpack.c.b16 %v1570, %v1569
      %v1911 = vpack.c.b16 %v1572, %v1571
      %v1912 = vpack.c.b16 %v1574, %v1573
      %v1913 = vpack.c.b16 %v1576, %v1575
      %v1914 = vpack.c.b16 %v1578, %v1577
      %v1915 = vpack.c.b16 %v1580, %v1579
      %v1916 = vpack.c.b16 %v1582, %v1581
      %v1917 = vpack.c.b16 %v1584, %v1583
      %v1918 = vpack.c.b16 %v1586, %v1585
      %v1919 = vpack.c.b16 %v1588, %v1587
      %v1920 = vpack.c.b16 %v1590, %v1589
      %v1921 = vpack.c.b16 %v1592, %v1591
      %v1922 = vpack.c.b16 %v1594, %v1593
      %v1923 = vpack.c.b16 %v1596, %v1595
      %v1924 = vpack.c.b16 %v1598, %v1597
      %v1925 = vpack.c.b16 %v1600, %v1599
      %v1926 = vpack.c.b16 %v1602, %v1601
      %v1927 = vpack.c.b16 %v1604, %v1603
      %v1928 = vpack.c.b16 %v1606, %v1605
      %v1929 = vpack.c.b16 %v1608, %v1607
      %v1930 = vpack.c.b16 %v1610, %v1609
      %v1931 = vpack.c.b16 %v1612, %v1611
      %v1932 = vpack.c.b16 %v1614, %v1613
      %v1933 = vpack.c.b16 %v1616, %v1615
      %v1934 = vpack.c.b16 %v1618, %v1617
      %v1935 = vpack.c.b16 %v1620, %v1619
      %v1936 = vpack.c.b16 %v1622, %v1621
      %v1937 = vpack.c.b16 %v1624, %v1623
      %v1938 = vpack.c.b16 %v1626, %v1625
      %v1939 = vpack.c.b16 %v1628, %v1627
      %v1940 = vpack.c.b16 %v1630, %v1629
      %v1941 = vpack.c.b16 %v1632, %v1631
      %v1942 = vpack.c.b16 %v1634, %v1633
      %v1943 = vpack.c.b16 %v1636, %v1635
      %v1944 = vpack.c.b16 %v1638, %v1637
      %v1945 = vpack.c.b16 %v1640, %v1639
      %v1946 = vpack.c.b16 %v1642, %v1641
      %v1947 = vpack.c.b16 %v1644, %v1643
      %v1948 = vpack.c.b16 %v1646, %v1645
      %v1949 = vpack.c.b16 %v1648, %v1647
      %v1950 = vpack.c.b16 %v1650, %v1649
      %v1951 = vpack.c.b16 %v1652, %v1651
      %v1952 = vpack.c.b16 %v1654, %v1653
      %v1953 = vpack.c.b16 %v1656, %v1655
      %v1954 = vpack.c.b16 %v1658, %v1657
      %v1955 = vpack.c.b16 %v1660, %v1659
      %v1956 = vpack.c.b16 %v1662, %v1661
      %v1957 = vpack.c.b16 %v1664, %v1663
      %v1958 = vpack.c.b16 %v1666, %v1665
      %v1959 = vpack.c.b16 %v1668, %v1667
      %v1960 = vpack.c.b16 %v1670, %v1669
      %v1961 = vpack.c.b16 %v1672, %v1671
      %v1962 = vpack.c.b16 %v1674, %v1673
      %v1963 = vpack.c.b16 %v1676, %v1675
      %v1964 = vpack.c.b16 %v1678, %v1677
      %v1965 = vpack.c.b16 %v1680, %v1679
      %v1966 = vpack.c.b16 %v1682, %v1681
      %v1967 = vpack.c.b16 %v1684, %v1683
      %v1968 = vpack.c.b16 %v1686, %v1685
      %v1969 = vpack.c.b16 %v1688, %v1687
      %v1970 = vpack.c.b16 %v1690, %v1689
      %v1971 = vpack.c.b16 %v1692, %v1691
      %v1972 = vpack.c.b16 %v1694, %v1693
      %v1973 = vpack.c.b16 %v1696, %v1695
      %v1974 = vpack.c.b16 %v1698, %v1697
      %v1975 = vpack.c.b16 %v1700, %v1699
      %v1976 = vpack.c.b16 %v1702, %v1701
      %v1977 = vpack.c.b16 %v1704, %v1703
      %v1978 = vpack.c.b16 %v1706, %v1705
      %v1979 = vpack.c.b16 %v1708, %v1707
      %v1980 = vpack.c.b16 %v1710, %v1709
      %v1981 = vpack.c.b16 %v1712, %v1711
      %v1982 = vpack.c.b16 %v1714, %v1713
      %v1983 = vpack.c.b16 %v1716, %v1715
      %v1984 = vpack.c.b16 %v1718, %v1717
      %v1985 = vpack.c.b16 %v1720, %v1719
      %v1986 = vpack.c.b16 %v1722, %v1721
      %v1987 = vpack.c.b16 %v1724, %v1723
      %v1988 = vpack.c.b16 %v1726, %v1725
      %v1989 = vpack.c.b16 %v1728, %v1727
      %v1990 = vpack.c.b16 %v1730, %v1729
      %v1991 = vpack.c.b16 %v1732, %v1731
      %v1992 = vpack.c.b16 %v1734, %v1733
      %v1993 = vpack.c.b16 %v1736, %v1735
      %v1994 = vpack.c.b16 %v1738, %v1737
      %v1999 = vunpack.c.l.b16 %v711
      %v2000 = vunpack.c.l.b16 %v712
      %v2001 = vunpack.c.l.b16 %v713
      %v2002 = vunpack.c.l.b16 %v714
      %v2003 = vpack.c.b16 %v2000, %v1999
      %v2004 = vpack.c.b16 %v2002, %v2001
      %vm2006 = vcmask 220160
      %v2008 = vsel %vm2006, %v1739, 0
      %v2011 = vsel %vm2006, %v1740, 0
      %v2014 = vsel %vm2006, %v1741, 0
      %v2017 = vsel %vm2006, %v1742, 0
      %v2020 = vsel %vm2006, %v1743, 0
      %v2023 = vsel %vm2006, %v1744, 0
      %v2026 = vsel %vm2006, %v1745, 0
      %v2029 = vsel %vm2006, %v1746, 0
      %v2032 = vsel %vm2006, %v1747, 0
      %v2035 = vsel %vm2006, %v1748, 0
      %v2038 = vsel %vm2006, %v1749, 0
      %v2041 = vsel %vm2006, %v1750, 0
      %v2044 = vsel %vm2006, %v1751, 0
      %v2047 = vsel %vm2006, %v1752, 0
      %v2050 = vsel %vm2006, %v1753, 0
      %v2053 = vsel %vm2006, %v1754, 0
      %v2056 = vsel %vm2006, %v1755, 0
      %v2059 = vsel %vm2006, %v1756, 0
      %v2062 = vsel %vm2006, %v1757, 0
      %v2065 = vsel %vm2006, %v1758, 0
      %v2068 = vsel %vm2006, %v1759, 0
      %v2071 = vsel %vm2006, %v1760, 0
      %v2074 = vsel %vm2006, %v1761, 0
      %v2077 = vsel %vm2006, %v1762, 0
      %v2080 = vsel %vm2006, %v1763, 0
      %v2083 = vsel %vm2006, %v1764, 0
      %v2086 = vsel %vm2006, %v1765, 0
      %v2089 = vsel %vm2006, %v1766, 0
      %v2092 = vsel %vm2006, %v1767, 0
      %v2095 = vsel %vm2006, %v1768, 0
      %v2098 = vsel %vm2006, %v1769, 0
      %v2101 = vsel %vm2006, %v1770, 0
      %v2104 = vsel %vm2006, %v1771, 0
      %v2107 = vsel %vm2006, %v1772, 0
      %v2110 = vsel %vm2006, %v1773, 0
      %v2113 = vsel %vm2006, %v1774, 0
      %v2116 = vsel %vm2006, %v1775, 0
      %v2119 = vsel %vm2006, %v1776, 0
      %v2122 = vsel %vm2006, %v1777, 0
      %v2125 = vsel %vm2006, %v1778, 0
      %v2128 = vsel %vm2006, %v1779, 0
      %v2131 = vsel %vm2006, %v1780, 0
      %v2134 = vsel %vm2006, %v1781, 0
      %v2137 = vsel %vm2006, %v1782, 0
      %v2140 = vsel %vm2006, %v1783, 0
      %v2143 = vsel %vm2006, %v1784, 0
      %v2146 = vsel %vm2006, %v1785, 0
      %v2149 = vsel %vm2006, %v1786, 0
      %v2152 = vsel %vm2006, %v1787, 0
      %v2155 = vsel %vm2006, %v1788, 0
      %v2158 = vsel %vm2006, %v1789, 0
      %v2161 = vsel %vm2006, %v1790, 0
      %v2164 = vsel %vm2006, %v1791, 0
      %v2167 = vsel %vm2006, %v1792, 0
      %v2170 = vsel %vm2006, %v1793, 0
      %v2173 = vsel %vm2006, %v1794, 0
      %v2176 = vsel %vm2006, %v1795, 0
      %v2179 = vsel %vm2006, %v1796, 0
      %v2182 = vsel %vm2006, %v1797, 0
      %v2185 = vsel %vm2006, %v1798, 0
      %v2188 = vsel %vm2006, %v1799, 0
      %v2191 = vsel %vm2006, %v1800, 0
      %v2194 = vsel %vm2006, %v1801, 0
      %v2197 = vsel %vm2006, %v1802, 0
      %v2200 = vsel %vm2006, %v1803, 0
      %v2203 = vsel %vm2006, %v1804, 0
      %v2206 = vsel %vm2006, %v1805, 0
      %v2209 = vsel %vm2006, %v1806, 0
      %v2212 = vsel %vm2006, %v1807, 0
      %v2215 = vsel %vm2006, %v1808, 0
      %v2218 = vsel %vm2006, %v1809, 0
      %v2221 = vsel %vm2006, %v1810, 0
      %v2224 = vsel %vm2006, %v1811, 0
      %v2227 = vsel %vm2006, %v1812, 0
      %v2230 = vsel %vm2006, %v1813, 0
      %v2233 = vsel %vm2006, %v1814, 0
      %v2236 = vsel %vm2006, %v1815, 0
      %v2239 = vsel %vm2006, %v1816, 0
      %v2242 = vsel %vm2006, %v1817, 0
      %v2245 = vsel %vm2006, %v1818, 0
      %v2248 = vsel %vm2006, %v1819, 0
      %v2251 = vsel %vm2006, %v1820, 0
      %v2254 = vsel %vm2006, %v1821, 0
      %v2257 = vsel %vm2006, %v1822, 0
      %v2260 = vsel %vm2006, %v1823, 0
      %v2263 = vsel %vm2006, %v1824, 0
      %v2266 = vsel %vm2006, %v1825, 0
      %v2269 = vsel %vm2006, %v1826, 0
      %v2272 = vsel %vm2006, %v1827, 0
      %v2275 = vsel %vm2006, %v1828, 0
      %v2278 = vsel %vm2006, %v1829, 0
      %v2281 = vsel %vm2006, %v1830, 0
      %v2284 = vsel %vm2006, %v1831, 0
      %v2287 = vsel %vm2006, %v1832, 0
      %v2290 = vsel %vm2006, %v1833, 0
      %v2293 = vsel %vm2006, %v1834, 0
      %v2296 = vsel %vm2006, %v1835, 0
      %v2299 = vsel %vm2006, %v1836, 0
      %v2302 = vsel %vm2006, %v1837, 0
      %v2305 = vsel %vm2006, %v1838, 0
      %v2308 = vsel %vm2006, %v1839, 0
      %v2311 = vsel %vm2006, %v1840, 0
      %v2314 = vsel %vm2006, %v1841, 0
      %v2317 = vsel %vm2006, %v1842, 0
      %v2320 = vsel %vm2006, %v1843, 0
      %v2323 = vsel %vm2006, %v1844, 0
      %v2326 = vsel %vm2006, %v1845, 0
      %v2329 = vsel %vm2006, %v1846, 0
      %v2332 = vsel %vm2006, %v1847, 0
      %v2335 = vsel %vm2006, %v1848, 0
      %v2338 = vsel %vm2006, %v1849, 0
      %v2341 = vsel %vm2006, %v1850, 0
      %v2344 = vsel %vm2006, %v1851, 0
      %v2347 = vsel %vm2006, %v1852, 0
      %v2350 = vsel %vm2006, %v1853, 0
      %v2353 = vsel %vm2006, %v1854, 0
      %v2356 = vsel %vm2006, %v1855, 0
      %v2359 = vsel %vm2006, %v1856, 0
      %v2362 = vsel %vm2006, %v1857, 0
      %v2365 = vsel %vm2006, %v1858, 0
      %v2368 = vsel %vm2006, %v1859, 0
      %v2371 = vsel %vm2006, %v1860, 0
      %v2374 = vsel %vm2006, %v1861, 0
      %v2377 = vsel %vm2006, %v1862, 0
      %v2380 = vsel %vm2006, %v1863, 0
      %v2383 = vsel %vm2006, %v1864, 0
      %v2386 = vsel %vm2006, %v1865, 0
      %v2389 = vsel %vm2006, %v1866, 0
      %v2392 = vsel %vm2006, %v1867, 0
      %v2395 = vsel %vm2006, %v1868, 0
      %v2398 = vsel %vm2006, %v1869, 0
      %v2401 = vsel %vm2006, %v1870, 0
      %v2404 = vsel %vm2006, %v1871, 0
      %v2407 = vsel %vm2006, %v1872, 0
      %v2410 = vsel %vm2006, %v1873, 0
      %v2413 = vsel %vm2006, %v1874, 0
      %v2416 = vsel %vm2006, %v1875, 0
      %v2419 = vsel %vm2006, %v1876, 0
      %v2422 = vsel %vm2006, %v1877, 0
      %v2425 = vsel %vm2006, %v1878, 0
      %v2428 = vsel %vm2006, %v1879, 0
      %v2431 = vsel %vm2006, %v1880, 0
      %v2434 = vsel %vm2006, %v1881, 0
      %v2437 = vsel %vm2006, %v1882, 0
      %v2440 = vsel %vm2006, %v1883, 0
      %v2443 = vsel %vm2006, %v1884, 0
      %v2446 = vsel %vm2006, %v1885, 0
      %v2449 = vsel %vm2006, %v1886, 0
      %v2452 = vsel %vm2006, %v1887, 0
      %v2455 = vsel %vm2006, %v1888, 0
      %v2458 = vsel %vm2006, %v1889, 0
      %v2461 = vsel %vm2006, %v1890, 0
      %v2464 = vsel %vm2006, %v1891, 0
      %v2467 = vsel %vm2006, %v1892, 0
      %v2470 = vsel %vm2006, %v1893, 0
      %v2473 = vsel %vm2006, %v1894, 0
      %v2476 = vsel %vm2006, %v1895, 0
      %v2479 = vsel %vm2006, %v1896, 0
      %v2482 = vsel %vm2006, %v1897, 0
      %v2485 = vsel %vm2006, %v1898, 0
      %v2488 = vsel %vm2006, %v1899, 0
      %v2491 = vsel %vm2006, %v1900, 0
      %v2494 = vsel %vm2006, %v1901, 0
      %v2497 = vsel %vm2006, %v1902, 0
      %v2500 = vsel %vm2006, %v1903, 0
      %v2503 = vsel %vm2006, %v1904, 0
      %v2506 = vsel %vm2006, %v1905, 0
      %v2509 = vsel %vm2006, %v1906, 0
      %v2512 = vsel %vm2006, %v1907, 0
      %v2515 = vsel %vm2006, %v1908, 0
      %v2518 = vsel %vm2006, %v1909, 0
      %v2521 = vsel %vm2006, %v1910, 0
      %v2524 = vsel %vm2006, %v1911, 0
      %v2527 = vsel %vm2006, %v1912, 0
      %v2530 = vsel %vm2006, %v1913, 0
      %v2533 = vsel %vm2006, %v1914, 0
      %v2536 = vsel %vm2006, %v1915, 0
      %v2539 = vsel %vm2006, %v1916, 0
      %v2542 = vsel %vm2006, %v1917, 0
      %v2545 = vsel %vm2006, %v1918, 0
      %v2548 = vsel %vm2006, %v1919, 0
      %v2551 = vsel %vm2006, %v1920, 0
      %v2554 = vsel %vm2006, %v1921, 0
      %v2557 = vsel %vm2006, %v1922, 0
      %v2560 = vsel %vm2006, %v1923, 0
      %v2563 = vsel %vm2006, %v1924, 0
      %v2566 = vsel %vm2006, %v1925, 0
      %v2569 = vsel %vm2006, %v1926, 0
      %v2572 = vsel %vm2006, %v1927, 0
      %v2575 = vsel %vm2006, %v1928, 0
      %v2578 = vsel %vm2006, %v1929, 0
      %v2581 = vsel %vm2006, %v1930, 0
      %v2584 = vsel %vm2006, %v1931, 0
      %v2587 = vsel %vm2006, %v1932, 0
      %v2590 = vsel %vm2006, %v1933, 0
      %v2593 = vsel %vm2006, %v1934, 0
      %v2596 = vsel %vm2006, %v1935, 0
      %v2599 = vsel %vm2006, %v1936, 0
      %v2602 = vsel %vm2006, %v1937, 0
      %v2605 = vsel %vm2006, %v1938, 0
      %v2608 = vsel %vm2006, %v1939, 0
      %v2611 = vsel %vm2006, %v1940, 0
      %v2614 = vsel %vm2006, %v1941, 0
      %v2617 = vsel %vm2006, %v1942, 0
      %v2620 = vsel %vm2006, %v1943, 0
      %v2623 = vsel %vm2006, %v1944, 0
      %v2626 = vsel %vm2006, %v1945, 0
      %v2629 = vsel %vm2006, %v1946, 0
      %v2632 = vsel %vm2006, %v1947, 0
      %v2635 = vsel %vm2006, %v1948, 0
      %v2638 = vsel %vm2006, %v1949, 0
      %v2641 = vsel %vm2006, %v1950, 0
      %v2644 = vsel %vm2006, %v1951, 0
      %v2647 = vsel %vm2006, %v1952, 0
      %v2650 = vsel %vm2006, %v1953, 0
      %v2653 = vsel %vm2006, %v1954, 0
      %v2656 = vsel %vm2006, %v1955, 0
      %v2659 = vsel %vm2006, %v1956, 0
      %v2662 = vsel %vm2006, %v1957, 0
      %v2665 = vsel %vm2006, %v1958, 0
      %v2668 = vsel %vm2006, %v1959, 0
      %v2671 = vsel %vm2006, %v1960, 0
      %v2674 = vsel %vm2006, %v1961, 0
      %v2677 = vsel %vm2006, %v1962, 0
      %v2680 = vsel %vm2006, %v1963, 0
      %v2683 = vsel %vm2006, %v1964, 0
      %v2686 = vsel %vm2006, %v1965, 0
      %v2689 = vsel %vm2006, %v1966, 0
      %v2692 = vsel %vm2006, %v1967, 0
      %v2695 = vsel %vm2006, %v1968, 0
      %v2698 = vsel %vm2006, %v1969, 0
      %v2701 = vsel %vm2006, %v1970, 0
      %v2704 = vsel %vm2006, %v1971, 0
      %v2707 = vsel %vm2006, %v1972, 0
      %v2710 = vsel %vm2006, %v1973, 0
      %v2713 = vsel %vm2006, %v1974, 0
      %v2716 = vsel %vm2006, %v1975, 0
      %v2719 = vsel %vm2006, %v1976, 0
      %v2722 = vsel %vm2006, %v1977, 0
      %v2725 = vsel %vm2006, %v1978, 0
      %v2728 = vsel %vm2006, %v1979, 0
      %v2731 = vsel %vm2006, %v1980, 0
      %v2734 = vsel %vm2006, %v1981, 0
      %v2737 = vsel %vm2006, %v1982, 0
      %v2740 = vsel %vm2006, %v1983, 0
      %v2743 = vsel %vm2006, %v1984, 0
      %v2746 = vsel %vm2006, %v1985, 0
      %v2749 = vsel %vm2006, %v1986, 0
      %v2752 = vsel %vm2006, %v1987, 0
      %v2755 = vsel %vm2006, %v1988, 0
      %v2758 = vsel %vm2006, %v1989, 0
      %v2761 = vsel %vm2006, %v1990, 0
      %v2764 = vsel %vm2006, %v1991, 0
      %v2767 = vsel %vm2006, %v1992, 0
      %v2770 = vsel %vm2006, %v1993, 0
      %v2773 = vsel %vm2006, %v1994, 0
      %vm2775 = vcmask 1044480
      %vm2776 = vcmask 1045504
      %v2777 = vsel %vm2775, 4294967295, 65535
      %v2778 = vsel %vm2776, %v2777, 0
      %v2780 = vand.u32 %v2004, %v2778
      %2782 = vmatpush.bf16.msra.mxu0 0
      %2783 = vmatpush.bf16.msra.mxu0 0
      %2784 = vmatpush.bf16.msra.mxu0 0
      %2785 = vmatpush.bf16.msra.mxu0 0
      %2786 = vmatpush.bf16.msra.mxu0 0
      %2787 = vmatpush.bf16.msra.mxu0 0
      %2788 = vmatpush.bf16.msra.mxu0 %v2780
      %2789 = vmatpush.bf16.msra.mxu0 %v2003
      %2790 = vmatmul.bf16.gmra.mxu0 %v2008
      %v2791 = vpop.f32.mrf.mxu0
      %v2792 = vadd.f32 0.0, %v2791
      %v2793 = vpop.f32.mrf.mxu0
      %v2794 = vadd.f32 0.0, %v2793
      %2795 = vmatmul.bf16.gmra.mxu0 %v2011
      %v2796 = vpop.f32.mrf.mxu0
      %v2797 = vadd.f32 0.0, %v2796
      %v2798 = vpop.f32.mrf.mxu0
      %v2799 = vadd.f32 0.0, %v2798
      %2800 = vmatmul.bf16.gmra.mxu0 %v2014
      %v2801 = vpop.f32.mrf.mxu0
      %v2802 = vadd.f32 0.0, %v2801
      %v2803 = vpop.f32.mrf.mxu0
      %v2804 = vadd.f32 0.0, %v2803
      %2805 = vmatmul.bf16.gmra.mxu0 %v2017
      %v2806 = vpop.f32.mrf.mxu0
      %v2807 = vadd.f32 0.0, %v2806
      %v2808 = vpop.f32.mrf.mxu0
      %v2809 = vadd.f32 0.0, %v2808
      %2810 = vmatmul.bf16.gmra.mxu0 %v2020
      %v2811 = vpop.f32.mrf.mxu0
      %v2812 = vadd.f32 0.0, %v2811
      %v2813 = vpop.f32.mrf.mxu0
      %v2814 = vadd.f32 0.0, %v2813
      %2815 = vmatmul.bf16.gmra.mxu0 %v2023
      %v2816 = vpop.f32.mrf.mxu0
      %v2817 = vadd.f32 0.0, %v2816
      %v2818 = vpop.f32.mrf.mxu0
      %v2819 = vadd.f32 0.0, %v2818
      %2820 = vmatmul.bf16.gmra.mxu0 %v2026
      %v2821 = vpop.f32.mrf.mxu0
      %v2822 = vadd.f32 0.0, %v2821
      %v2823 = vpop.f32.mrf.mxu0
      %v2824 = vadd.f32 0.0, %v2823
      %2825 = vmatmul.bf16.gmra.mxu0 %v2029
      %v2826 = vpop.f32.mrf.mxu0
      %v2827 = vadd.f32 0.0, %v2826
      %v2828 = vpop.f32.mrf.mxu0
      %v2829 = vadd.f32 0.0, %v2828
      %2830 = vmatmul.bf16.gmra.mxu0 %v2032
      %v2831 = vpop.f32.mrf.mxu0
      %v2832 = vadd.f32 0.0, %v2831
      %v2833 = vpop.f32.mrf.mxu0
      %v2834 = vadd.f32 0.0, %v2833
      %2835 = vmatmul.bf16.gmra.mxu0 %v2035
      %v2836 = vpop.f32.mrf.mxu0
      %v2837 = vadd.f32 0.0, %v2836
      %v2838 = vpop.f32.mrf.mxu0
      %v2839 = vadd.f32 0.0, %v2838
      %2840 = vmatmul.bf16.gmra.mxu0 %v2038
      %v2841 = vpop.f32.mrf.mxu0
      %v2842 = vadd.f32 0.0, %v2841
      %v2843 = vpop.f32.mrf.mxu0
      %v2844 = vadd.f32 0.0, %v2843
      %2845 = vmatmul.bf16.gmra.mxu0 %v2041
      %v2846 = vpop.f32.mrf.mxu0
      %v2847 = vadd.f32 0.0, %v2846
      %v2848 = vpop.f32.mrf.mxu0
      %v2849 = vadd.f32 0.0, %v2848
      %2850 = vmatmul.bf16.gmra.mxu0 %v2044
      %v2851 = vpop.f32.mrf.mxu0
      %v2852 = vadd.f32 0.0, %v2851
      %v2853 = vpop.f32.mrf.mxu0
      %v2854 = vadd.f32 0.0, %v2853
      %2855 = vmatmul.bf16.gmra.mxu0 %v2047
      %v2856 = vpop.f32.mrf.mxu0
      %v2857 = vadd.f32 0.0, %v2856
      %v2858 = vpop.f32.mrf.mxu0
      %v2859 = vadd.f32 0.0, %v2858
      %2860 = vmatmul.bf16.gmra.mxu0 %v2050
      %v2861 = vpop.f32.mrf.mxu0
      %v2862 = vadd.f32 0.0, %v2861
      %v2863 = vpop.f32.mrf.mxu0
      %v2864 = vadd.f32 0.0, %v2863
      %2865 = vmatmul.bf16.gmra.mxu0 %v2053
      %v2866 = vpop.f32.mrf.mxu0
      %v2867 = vadd.f32 0.0, %v2866
      %v2868 = vpop.f32.mrf.mxu0
      %v2869 = vadd.f32 0.0, %v2868
      %2870 = vmatmul.bf16.gmra.mxu0 %v2056
      %v2871 = vpop.f32.mrf.mxu0
      %v2872 = vadd.f32 0.0, %v2871
      %v2873 = vpop.f32.mrf.mxu0
      %v2874 = vadd.f32 0.0, %v2873
      %2875 = vmatmul.bf16.gmra.mxu0 %v2059
      %v2876 = vpop.f32.mrf.mxu0
      %v2877 = vadd.f32 0.0, %v2876
      %v2878 = vpop.f32.mrf.mxu0
      %v2879 = vadd.f32 0.0, %v2878
      %2880 = vmatmul.bf16.gmra.mxu0 %v2062
      %v2881 = vpop.f32.mrf.mxu0
      %v2882 = vadd.f32 0.0, %v2881
      %v2883 = vpop.f32.mrf.mxu0
      %v2884 = vadd.f32 0.0, %v2883
      %2885 = vmatmul.bf16.gmra.mxu0 %v2065
      %v2886 = vpop.f32.mrf.mxu0
      %v2887 = vadd.f32 0.0, %v2886
      %v2888 = vpop.f32.mrf.mxu0
      %v2889 = vadd.f32 0.0, %v2888
      %2890 = vmatmul.bf16.gmra.mxu0 %v2068
      %v2891 = vpop.f32.mrf.mxu0
      %v2892 = vadd.f32 0.0, %v2891
      %v2893 = vpop.f32.mrf.mxu0
      %v2894 = vadd.f32 0.0, %v2893
      %2895 = vmatmul.bf16.gmra.mxu0 %v2071
      %v2896 = vpop.f32.mrf.mxu0
      %v2897 = vadd.f32 0.0, %v2896
      %v2898 = vpop.f32.mrf.mxu0
      %v2899 = vadd.f32 0.0, %v2898
      %2900 = vmatmul.bf16.gmra.mxu0 %v2074
      %v2901 = vpop.f32.mrf.mxu0
      %v2902 = vadd.f32 0.0, %v2901
      %v2903 = vpop.f32.mrf.mxu0
      %v2904 = vadd.f32 0.0, %v2903
      %2905 = vmatmul.bf16.gmra.mxu0 %v2077
      %v2906 = vpop.f32.mrf.mxu0
      %v2907 = vadd.f32 0.0, %v2906
      %v2908 = vpop.f32.mrf.mxu0
      %v2909 = vadd.f32 0.0, %v2908
      %2910 = vmatmul.bf16.gmra.mxu0 %v2080
      %v2911 = vpop.f32.mrf.mxu0
      %v2912 = vadd.f32 0.0, %v2911
      %v2913 = vpop.f32.mrf.mxu0
      %v2914 = vadd.f32 0.0, %v2913
      %2915 = vmatmul.bf16.gmra.mxu0 %v2083
      %v2916 = vpop.f32.mrf.mxu0
      %v2917 = vadd.f32 0.0, %v2916
      %v2918 = vpop.f32.mrf.mxu0
      %v2919 = vadd.f32 0.0, %v2918
      %2920 = vmatmul.bf16.gmra.mxu0 %v2086
      %v2921 = vpop.f32.mrf.mxu0
      %v2922 = vadd.f32 0.0, %v2921
      %v2923 = vpop.f32.mrf.mxu0
      %v2924 = vadd.f32 0.0, %v2923
      %2925 = vmatmul.bf16.gmra.mxu0 %v2089
      %v2926 = vpop.f32.mrf.mxu0
      %v2927 = vadd.f32 0.0, %v2926
      %v2928 = vpop.f32.mrf.mxu0
      %v2929 = vadd.f32 0.0, %v2928
      %2930 = vmatmul.bf16.gmra.mxu0 %v2092
      %v2931 = vpop.f32.mrf.mxu0
      %v2932 = vadd.f32 0.0, %v2931
      %v2933 = vpop.f32.mrf.mxu0
      %v2934 = vadd.f32 0.0, %v2933
      %2935 = vmatmul.bf16.gmra.mxu0 %v2095
      %v2936 = vpop.f32.mrf.mxu0
      %v2937 = vadd.f32 0.0, %v2936
      %v2938 = vpop.f32.mrf.mxu0
      %v2939 = vadd.f32 0.0, %v2938
      %2940 = vmatmul.bf16.gmra.mxu0 %v2098
      %v2941 = vpop.f32.mrf.mxu0
      %v2942 = vadd.f32 0.0, %v2941
      %v2943 = vpop.f32.mrf.mxu0
      %v2944 = vadd.f32 0.0, %v2943
      %2945 = vmatmul.bf16.gmra.mxu0 %v2101
      %v2946 = vpop.f32.mrf.mxu0
      %v2947 = vadd.f32 0.0, %v2946
      %v2948 = vpop.f32.mrf.mxu0
      %v2949 = vadd.f32 0.0, %v2948
      %2950 = vmatmul.bf16.gmra.mxu0 %v2104
      %v2951 = vpop.f32.mrf.mxu0
      %v2952 = vadd.f32 0.0, %v2951
      %v2953 = vpop.f32.mrf.mxu0
      %v2954 = vadd.f32 0.0, %v2953
      %2955 = vmatmul.bf16.gmra.mxu0 %v2107
      %v2956 = vpop.f32.mrf.mxu0
      %v2957 = vadd.f32 0.0, %v2956
      %v2958 = vpop.f32.mrf.mxu0
      %v2959 = vadd.f32 0.0, %v2958
      %2960 = vmatmul.bf16.gmra.mxu0 %v2110
      %v2961 = vpop.f32.mrf.mxu0
      %v2962 = vadd.f32 0.0, %v2961
      %v2963 = vpop.f32.mrf.mxu0
      %v2964 = vadd.f32 0.0, %v2963
      %2965 = vmatmul.bf16.gmra.mxu0 %v2113
      %v2966 = vpop.f32.mrf.mxu0
      %v2967 = vadd.f32 0.0, %v2966
      %v2968 = vpop.f32.mrf.mxu0
      %v2969 = vadd.f32 0.0, %v2968
      %2970 = vmatmul.bf16.gmra.mxu0 %v2116
      %v2971 = vpop.f32.mrf.mxu0
      %v2972 = vadd.f32 0.0, %v2971
      %v2973 = vpop.f32.mrf.mxu0
      %v2974 = vadd.f32 0.0, %v2973
      %2975 = vmatmul.bf16.gmra.mxu0 %v2119
      %v2976 = vpop.f32.mrf.mxu0
      %v2977 = vadd.f32 0.0, %v2976
      %v2978 = vpop.f32.mrf.mxu0
      %v2979 = vadd.f32 0.0, %v2978
      %2980 = vmatmul.bf16.gmra.mxu0 %v2122
      %v2981 = vpop.f32.mrf.mxu0
      %v2982 = vadd.f32 0.0, %v2981
      %v2983 = vpop.f32.mrf.mxu0
      %v2984 = vadd.f32 0.0, %v2983
      %2985 = vmatmul.bf16.gmra.mxu0 %v2125
      %v2986 = vpop.f32.mrf.mxu0
      %v2987 = vadd.f32 0.0, %v2986
      %v2988 = vpop.f32.mrf.mxu0
      %v2989 = vadd.f32 0.0, %v2988
      %2990 = vmatmul.bf16.gmra.mxu0 %v2128
      %v2991 = vpop.f32.mrf.mxu0
      %v2992 = vadd.f32 0.0, %v2991
      %v2993 = vpop.f32.mrf.mxu0
      %v2994 = vadd.f32 0.0, %v2993
      %2995 = vmatmul.bf16.gmra.mxu0 %v2131
      %v2996 = vpop.f32.mrf.mxu0
      %v2997 = vadd.f32 0.0, %v2996
      %v2998 = vpop.f32.mrf.mxu0
      %v2999 = vadd.f32 0.0, %v2998
      %3000 = vmatmul.bf16.gmra.mxu0 %v2134
      %v3001 = vpop.f32.mrf.mxu0
      %v3002 = vadd.f32 0.0, %v3001
      %v3003 = vpop.f32.mrf.mxu0
      %v3004 = vadd.f32 0.0, %v3003
      %3005 = vmatmul.bf16.gmra.mxu0 %v2137
      %v3006 = vpop.f32.mrf.mxu0
      %v3007 = vadd.f32 0.0, %v3006
      %v3008 = vpop.f32.mrf.mxu0
      %v3009 = vadd.f32 0.0, %v3008
      %3010 = vmatmul.bf16.gmra.mxu0 %v2140
      %v3011 = vpop.f32.mrf.mxu0
      %v3012 = vadd.f32 0.0, %v3011
      %v3013 = vpop.f32.mrf.mxu0
      %v3014 = vadd.f32 0.0, %v3013
      %3015 = vmatmul.bf16.gmra.mxu0 %v2143
      %v3016 = vpop.f32.mrf.mxu0
      %v3017 = vadd.f32 0.0, %v3016
      %v3018 = vpop.f32.mrf.mxu0
      %v3019 = vadd.f32 0.0, %v3018
      %3020 = vmatmul.bf16.gmra.mxu0 %v2146
      %v3021 = vpop.f32.mrf.mxu0
      %v3022 = vadd.f32 0.0, %v3021
      %v3023 = vpop.f32.mrf.mxu0
      %v3024 = vadd.f32 0.0, %v3023
      %3025 = vmatmul.bf16.gmra.mxu0 %v2149
      %v3026 = vpop.f32.mrf.mxu0
      %v3027 = vadd.f32 0.0, %v3026
      %v3028 = vpop.f32.mrf.mxu0
      %v3029 = vadd.f32 0.0, %v3028
      %3030 = vmatmul.bf16.gmra.mxu0 %v2152
      %v3031 = vpop.f32.mrf.mxu0
      %v3032 = vadd.f32 0.0, %v3031
      %v3033 = vpop.f32.mrf.mxu0
      %v3034 = vadd.f32 0.0, %v3033
      %3035 = vmatmul.bf16.gmra.mxu0 %v2155
      %v3036 = vpop.f32.mrf.mxu0
      %v3037 = vadd.f32 0.0, %v3036
      %v3038 = vpop.f32.mrf.mxu0
      %v3039 = vadd.f32 0.0, %v3038
      %3040 = vmatmul.bf16.gmra.mxu0 %v2158
      %v3041 = vpop.f32.mrf.mxu0
      %v3042 = vadd.f32 0.0, %v3041
      %v3043 = vpop.f32.mrf.mxu0
      %v3044 = vadd.f32 0.0, %v3043
      %3045 = vmatmul.bf16.gmra.mxu0 %v2161
      %v3046 = vpop.f32.mrf.mxu0
      %v3047 = vadd.f32 0.0, %v3046
      %v3048 = vpop.f32.mrf.mxu0
      %v3049 = vadd.f32 0.0, %v3048
      %3050 = vmatmul.bf16.gmra.mxu0 %v2164
      %v3051 = vpop.f32.mrf.mxu0
      %v3052 = vadd.f32 0.0, %v3051
      %v3053 = vpop.f32.mrf.mxu0
      %v3054 = vadd.f32 0.0, %v3053
      %3055 = vmatmul.bf16.gmra.mxu0 %v2167
      %v3056 = vpop.f32.mrf.mxu0
      %v3057 = vadd.f32 0.0, %v3056
      %v3058 = vpop.f32.mrf.mxu0
      %v3059 = vadd.f32 0.0, %v3058
      %3060 = vmatmul.bf16.gmra.mxu0 %v2170
      %v3061 = vpop.f32.mrf.mxu0
      %v3062 = vadd.f32 0.0, %v3061
      %v3063 = vpop.f32.mrf.mxu0
      %v3064 = vadd.f32 0.0, %v3063
      %3065 = vmatmul.bf16.gmra.mxu0 %v2173
      %v3066 = vpop.f32.mrf.mxu0
      %v3067 = vadd.f32 0.0, %v3066
      %v3068 = vpop.f32.mrf.mxu0
      %v3069 = vadd.f32 0.0, %v3068
      %3070 = vmatmul.bf16.gmra.mxu0 %v2176
      %v3071 = vpop.f32.mrf.mxu0
      %v3072 = vadd.f32 0.0, %v3071
      %v3073 = vpop.f32.mrf.mxu0
      %v3074 = vadd.f32 0.0, %v3073
      %3075 = vmatmul.bf16.gmra.mxu0 %v2179
      %v3076 = vpop.f32.mrf.mxu0
      %v3077 = vadd.f32 0.0, %v3076
      %v3078 = vpop.f32.mrf.mxu0
      %v3079 = vadd.f32 0.0, %v3078
      %3080 = vmatmul.bf16.gmra.mxu0 %v2182
      %v3081 = vpop.f32.mrf.mxu0
      %v3082 = vadd.f32 0.0, %v3081
      %v3083 = vpop.f32.mrf.mxu0
      %v3084 = vadd.f32 0.0, %v3083
      %3085 = vmatmul.bf16.gmra.mxu0 %v2185
      %v3086 = vpop.f32.mrf.mxu0
      %v3087 = vadd.f32 0.0, %v3086
      %v3088 = vpop.f32.mrf.mxu0
      %v3089 = vadd.f32 0.0, %v3088
      %3090 = vmatmul.bf16.gmra.mxu0 %v2188
      %v3091 = vpop.f32.mrf.mxu0
      %v3092 = vadd.f32 0.0, %v3091
      %v3093 = vpop.f32.mrf.mxu0
      %v3094 = vadd.f32 0.0, %v3093
      %3095 = vmatmul.bf16.gmra.mxu0 %v2191
      %v3096 = vpop.f32.mrf.mxu0
      %v3097 = vadd.f32 0.0, %v3096
      %v3098 = vpop.f32.mrf.mxu0
      %v3099 = vadd.f32 0.0, %v3098
      %3100 = vmatmul.bf16.gmra.mxu0 %v2194
      %v3101 = vpop.f32.mrf.mxu0
      %v3102 = vadd.f32 0.0, %v3101
      %v3103 = vpop.f32.mrf.mxu0
      %v3104 = vadd.f32 0.0, %v3103
      %3105 = vmatmul.bf16.gmra.mxu0 %v2197
      %v3106 = vpop.f32.mrf.mxu0
      %v3107 = vadd.f32 0.0, %v3106
      %v3108 = vpop.f32.mrf.mxu0
      %v3109 = vadd.f32 0.0, %v3108
      %3110 = vmatmul.bf16.gmra.mxu0 %v2200
      %v3111 = vpop.f32.mrf.mxu0
      %v3112 = vadd.f32 0.0, %v3111
      %v3113 = vpop.f32.mrf.mxu0
      %v3114 = vadd.f32 0.0, %v3113
      %3115 = vmatmul.bf16.gmra.mxu0 %v2203
      %v3116 = vpop.f32.mrf.mxu0
      %v3117 = vadd.f32 0.0, %v3116
      %v3118 = vpop.f32.mrf.mxu0
      %v3119 = vadd.f32 0.0, %v3118
      %3120 = vmatmul.bf16.gmra.mxu0 %v2206
      %v3121 = vpop.f32.mrf.mxu0
      %v3122 = vadd.f32 0.0, %v3121
      %v3123 = vpop.f32.mrf.mxu0
      %v3124 = vadd.f32 0.0, %v3123
      %3125 = vmatmul.bf16.gmra.mxu0 %v2209
      %v3126 = vpop.f32.mrf.mxu0
      %v3127 = vadd.f32 0.0, %v3126
      %v3128 = vpop.f32.mrf.mxu0
      %v3129 = vadd.f32 0.0, %v3128
      %3130 = vmatmul.bf16.gmra.mxu0 %v2212
      %v3131 = vpop.f32.mrf.mxu0
      %v3132 = vadd.f32 0.0, %v3131
      %v3133 = vpop.f32.mrf.mxu0
      %v3134 = vadd.f32 0.0, %v3133
      %3135 = vmatmul.bf16.gmra.mxu0 %v2215
      %v3136 = vpop.f32.mrf.mxu0
      %v3137 = vadd.f32 0.0, %v3136
      %v3138 = vpop.f32.mrf.mxu0
      %v3139 = vadd.f32 0.0, %v3138
      %3140 = vmatmul.bf16.gmra.mxu0 %v2218
      %v3141 = vpop.f32.mrf.mxu0
      %v3142 = vadd.f32 0.0, %v3141
      %v3143 = vpop.f32.mrf.mxu0
      %v3144 = vadd.f32 0.0, %v3143
      %3145 = vmatmul.bf16.gmra.mxu0 %v2221
      %v3146 = vpop.f32.mrf.mxu0
      %v3147 = vadd.f32 0.0, %v3146
      %v3148 = vpop.f32.mrf.mxu0
      %v3149 = vadd.f32 0.0, %v3148
      %3150 = vmatmul.bf16.gmra.mxu0 %v2224
      %v3151 = vpop.f32.mrf.mxu0
      %v3152 = vadd.f32 0.0, %v3151
      %v3153 = vpop.f32.mrf.mxu0
      %v3154 = vadd.f32 0.0, %v3153
      %3155 = vmatmul.bf16.gmra.mxu0 %v2227
      %v3156 = vpop.f32.mrf.mxu0
      %v3157 = vadd.f32 0.0, %v3156
      %v3158 = vpop.f32.mrf.mxu0
      %v3159 = vadd.f32 0.0, %v3158
      %3160 = vmatmul.bf16.gmra.mxu0 %v2230
      %v3161 = vpop.f32.mrf.mxu0
      %v3162 = vadd.f32 0.0, %v3161
      %v3163 = vpop.f32.mrf.mxu0
      %v3164 = vadd.f32 0.0, %v3163
      %3165 = vmatmul.bf16.gmra.mxu0 %v2233
      %v3166 = vpop.f32.mrf.mxu0
      %v3167 = vadd.f32 0.0, %v3166
      %v3168 = vpop.f32.mrf.mxu0
      %v3169 = vadd.f32 0.0, %v3168
      %3170 = vmatmul.bf16.gmra.mxu0 %v2236
      %v3171 = vpop.f32.mrf.mxu0
      %v3172 = vadd.f32 0.0, %v3171
      %v3173 = vpop.f32.mrf.mxu0
      %v3174 = vadd.f32 0.0, %v3173
      %3175 = vmatmul.bf16.gmra.mxu0 %v2239
      %v3176 = vpop.f32.mrf.mxu0
      %v3177 = vadd.f32 0.0, %v3176
      %v3178 = vpop.f32.mrf.mxu0
      %v3179 = vadd.f32 0.0, %v3178
      %3180 = vmatmul.bf16.gmra.mxu0 %v2242
      %v3181 = vpop.f32.mrf.mxu0
      %v3182 = vadd.f32 0.0, %v3181
      %v3183 = vpop.f32.mrf.mxu0
      %v3184 = vadd.f32 0.0, %v3183
      %3185 = vmatmul.bf16.gmra.mxu0 %v2245
      %v3186 = vpop.f32.mrf.mxu0
      %v3187 = vadd.f32 0.0, %v3186
      %v3188 = vpop.f32.mrf.mxu0
      %v3189 = vadd.f32 0.0, %v3188
      %3190 = vmatmul.bf16.gmra.mxu0 %v2248
      %v3191 = vpop.f32.mrf.mxu0
      %v3192 = vadd.f32 0.0, %v3191
      %v3193 = vpop.f32.mrf.mxu0
      %v3194 = vadd.f32 0.0, %v3193
      %3195 = vmatmul.bf16.gmra.mxu0 %v2251
      %v3196 = vpop.f32.mrf.mxu0
      %v3197 = vadd.f32 0.0, %v3196
      %v3198 = vpop.f32.mrf.mxu0
      %v3199 = vadd.f32 0.0, %v3198
      %3200 = vmatmul.bf16.gmra.mxu0 %v2254
      %v3201 = vpop.f32.mrf.mxu0
      %v3202 = vadd.f32 0.0, %v3201
      %v3203 = vpop.f32.mrf.mxu0
      %v3204 = vadd.f32 0.0, %v3203
      %3205 = vmatmul.bf16.gmra.mxu0 %v2257
      %v3206 = vpop.f32.mrf.mxu0
      %v3207 = vadd.f32 0.0, %v3206
      %v3208 = vpop.f32.mrf.mxu0
      %v3209 = vadd.f32 0.0, %v3208
      %3210 = vmatmul.bf16.gmra.mxu0 %v2260
      %v3211 = vpop.f32.mrf.mxu0
      %v3212 = vadd.f32 0.0, %v3211
      %v3213 = vpop.f32.mrf.mxu0
      %v3214 = vadd.f32 0.0, %v3213
      %3215 = vmatmul.bf16.gmra.mxu0 %v2263
      %v3216 = vpop.f32.mrf.mxu0
      %v3217 = vadd.f32 0.0, %v3216
      %v3218 = vpop.f32.mrf.mxu0
      %v3219 = vadd.f32 0.0, %v3218
      %3220 = vmatmul.bf16.gmra.mxu0 %v2266
      %v3221 = vpop.f32.mrf.mxu0
      %v3222 = vadd.f32 0.0, %v3221
      %v3223 = vpop.f32.mrf.mxu0
      %v3224 = vadd.f32 0.0, %v3223
      %3225 = vmatmul.bf16.gmra.mxu0 %v2269
      %v3226 = vpop.f32.mrf.mxu0
      %v3227 = vadd.f32 0.0, %v3226
      %v3228 = vpop.f32.mrf.mxu0
      %v3229 = vadd.f32 0.0, %v3228
      %3230 = vmatmul.bf16.gmra.mxu0 %v2272
      %v3231 = vpop.f32.mrf.mxu0
      %v3232 = vadd.f32 0.0, %v3231
      %v3233 = vpop.f32.mrf.mxu0
      %v3234 = vadd.f32 0.0, %v3233
      %3235 = vmatmul.bf16.gmra.mxu0 %v2275
      %v3236 = vpop.f32.mrf.mxu0
      %v3237 = vadd.f32 0.0, %v3236
      %v3238 = vpop.f32.mrf.mxu0
      %v3239 = vadd.f32 0.0, %v3238
      %3240 = vmatmul.bf16.gmra.mxu0 %v2278
      %v3241 = vpop.f32.mrf.mxu0
      %v3242 = vadd.f32 0.0, %v3241
      %v3243 = vpop.f32.mrf.mxu0
      %v3244 = vadd.f32 0.0, %v3243
      %3245 = vmatmul.bf16.gmra.mxu0 %v2281
      %v3246 = vpop.f32.mrf.mxu0
      %v3247 = vadd.f32 0.0, %v3246
      %v3248 = vpop.f32.mrf.mxu0
      %v3249 = vadd.f32 0.0, %v3248
      %3250 = vmatmul.bf16.gmra.mxu0 %v2284
      %v3251 = vpop.f32.mrf.mxu0
      %v3252 = vadd.f32 0.0, %v3251
      %v3253 = vpop.f32.mrf.mxu0
      %v3254 = vadd.f32 0.0, %v3253
      %3255 = vmatmul.bf16.gmra.mxu0 %v2287
      %v3256 = vpop.f32.mrf.mxu0
      %v3257 = vadd.f32 0.0, %v3256
      %v3258 = vpop.f32.mrf.mxu0
      %v3259 = vadd.f32 0.0, %v3258
      %3260 = vmatmul.bf16.gmra.mxu0 %v2290
      %v3261 = vpop.f32.mrf.mxu0
      %v3262 = vadd.f32 0.0, %v3261
      %v3263 = vpop.f32.mrf.mxu0
      %v3264 = vadd.f32 0.0, %v3263
      %3265 = vmatmul.bf16.gmra.mxu0 %v2293
      %v3266 = vpop.f32.mrf.mxu0
      %v3267 = vadd.f32 0.0, %v3266
      %v3268 = vpop.f32.mrf.mxu0
      %v3269 = vadd.f32 0.0, %v3268
      %3270 = vmatmul.bf16.gmra.mxu0 %v2296
      %v3271 = vpop.f32.mrf.mxu0
      %v3272 = vadd.f32 0.0, %v3271
      %v3273 = vpop.f32.mrf.mxu0
      %v3274 = vadd.f32 0.0, %v3273
      %3275 = vmatmul.bf16.gmra.mxu0 %v2299
      %v3276 = vpop.f32.mrf.mxu0
      %v3277 = vadd.f32 0.0, %v3276
      %v3278 = vpop.f32.mrf.mxu0
      %v3279 = vadd.f32 0.0, %v3278
      %3280 = vmatmul.bf16.gmra.mxu0 %v2302
      %v3281 = vpop.f32.mrf.mxu0
      %v3282 = vadd.f32 0.0, %v3281
      %v3283 = vpop.f32.mrf.mxu0
      %v3284 = vadd.f32 0.0, %v3283
      %3285 = vmatmul.bf16.gmra.mxu0 %v2305
      %v3286 = vpop.f32.mrf.mxu0
      %v3287 = vadd.f32 0.0, %v3286
      %v3288 = vpop.f32.mrf.mxu0
      %v3289 = vadd.f32 0.0, %v3288
      %3290 = vmatmul.bf16.gmra.mxu0 %v2308
      %v3291 = vpop.f32.mrf.mxu0
      %v3292 = vadd.f32 0.0, %v3291
      %v3293 = vpop.f32.mrf.mxu0
      %v3294 = vadd.f32 0.0, %v3293
      %3295 = vmatmul.bf16.gmra.mxu0 %v2311
      %v3296 = vpop.f32.mrf.mxu0
      %v3297 = vadd.f32 0.0, %v3296
      %v3298 = vpop.f32.mrf.mxu0
      %v3299 = vadd.f32 0.0, %v3298
      %3300 = vmatmul.bf16.gmra.mxu0 %v2314
      %v3301 = vpop.f32.mrf.mxu0
      %v3302 = vadd.f32 0.0, %v3301
      %v3303 = vpop.f32.mrf.mxu0
      %v3304 = vadd.f32 0.0, %v3303
      %3305 = vmatmul.bf16.gmra.mxu0 %v2317
      %v3306 = vpop.f32.mrf.mxu0
      %v3307 = vadd.f32 0.0, %v3306
      %v3308 = vpop.f32.mrf.mxu0
      %v3309 = vadd.f32 0.0, %v3308
      %3310 = vmatmul.bf16.gmra.mxu0 %v2320
      %v3311 = vpop.f32.mrf.mxu0
      %v3312 = vadd.f32 0.0, %v3311
      %v3313 = vpop.f32.mrf.mxu0
      %v3314 = vadd.f32 0.0, %v3313
      %3315 = vmatmul.bf16.gmra.mxu0 %v2323
      %v3316 = vpop.f32.mrf.mxu0
      %v3317 = vadd.f32 0.0, %v3316
      %v3318 = vpop.f32.mrf.mxu0
      %v3319 = vadd.f32 0.0, %v3318
      %3320 = vmatmul.bf16.gmra.mxu0 %v2326
      %v3321 = vpop.f32.mrf.mxu0
      %v3322 = vadd.f32 0.0, %v3321
      %v3323 = vpop.f32.mrf.mxu0
      %v3324 = vadd.f32 0.0, %v3323
      %3325 = vmatmul.bf16.gmra.mxu0 %v2329
      %v3326 = vpop.f32.mrf.mxu0
      %v3327 = vadd.f32 0.0, %v3326
      %v3328 = vpop.f32.mrf.mxu0
      %v3329 = vadd.f32 0.0, %v3328
      %3330 = vmatmul.bf16.gmra.mxu0 %v2332
      %v3331 = vpop.f32.mrf.mxu0
      %v3332 = vadd.f32 0.0, %v3331
      %v3333 = vpop.f32.mrf.mxu0
      %v3334 = vadd.f32 0.0, %v3333
      %3335 = vmatmul.bf16.gmra.mxu0 %v2335
      %v3336 = vpop.f32.mrf.mxu0
      %v3337 = vadd.f32 0.0, %v3336
      %v3338 = vpop.f32.mrf.mxu0
      %v3339 = vadd.f32 0.0, %v3338
      %3340 = vmatmul.bf16.gmra.mxu0 %v2338
      %v3341 = vpop.f32.mrf.mxu0
      %v3342 = vadd.f32 0.0, %v3341
      %v3343 = vpop.f32.mrf.mxu0
      %v3344 = vadd.f32 0.0, %v3343
      %3345 = vmatmul.bf16.gmra.mxu0 %v2341
      %v3346 = vpop.f32.mrf.mxu0
      %v3347 = vadd.f32 0.0, %v3346
      %v3348 = vpop.f32.mrf.mxu0
      %v3349 = vadd.f32 0.0, %v3348
      %3350 = vmatmul.bf16.gmra.mxu0 %v2344
      %v3351 = vpop.f32.mrf.mxu0
      %v3352 = vadd.f32 0.0, %v3351
      %v3353 = vpop.f32.mrf.mxu0
      %v3354 = vadd.f32 0.0, %v3353
      %3355 = vmatmul.bf16.gmra.mxu0 %v2347
      %v3356 = vpop.f32.mrf.mxu0
      %v3357 = vadd.f32 0.0, %v3356
      %v3358 = vpop.f32.mrf.mxu0
      %v3359 = vadd.f32 0.0, %v3358
      %3360 = vmatmul.bf16.gmra.mxu0 %v2350
      %v3361 = vpop.f32.mrf.mxu0
      %v3362 = vadd.f32 0.0, %v3361
      %v3363 = vpop.f32.mrf.mxu0
      %v3364 = vadd.f32 0.0, %v3363
      %3365 = vmatmul.bf16.gmra.mxu0 %v2353
      %v3366 = vpop.f32.mrf.mxu0
      %v3367 = vadd.f32 0.0, %v3366
      %v3368 = vpop.f32.mrf.mxu0
      %v3369 = vadd.f32 0.0, %v3368
      %3370 = vmatmul.bf16.gmra.mxu0 %v2356
      %v3371 = vpop.f32.mrf.mxu0
      %v3372 = vadd.f32 0.0, %v3371
      %v3373 = vpop.f32.mrf.mxu0
      %v3374 = vadd.f32 0.0, %v3373
      %3375 = vmatmul.bf16.gmra.mxu0 %v2359
      %v3376 = vpop.f32.mrf.mxu0
      %v3377 = vadd.f32 0.0, %v3376
      %v3378 = vpop.f32.mrf.mxu0
      %v3379 = vadd.f32 0.0, %v3378
      %3380 = vmatmul.bf16.gmra.mxu0 %v2362
      %v3381 = vpop.f32.mrf.mxu0
      %v3382 = vadd.f32 0.0, %v3381
      %v3383 = vpop.f32.mrf.mxu0
      %v3384 = vadd.f32 0.0, %v3383
      %3385 = vmatmul.bf16.gmra.mxu0 %v2365
      %v3386 = vpop.f32.mrf.mxu0
      %v3387 = vadd.f32 0.0, %v3386
      %v3388 = vpop.f32.mrf.mxu0
      %v3389 = vadd.f32 0.0, %v3388
      %3390 = vmatmul.bf16.gmra.mxu0 %v2368
      %v3391 = vpop.f32.mrf.mxu0
      %v3392 = vadd.f32 0.0, %v3391
      %v3393 = vpop.f32.mrf.mxu0
      %v3394 = vadd.f32 0.0, %v3393
      %3395 = vmatmul.bf16.gmra.mxu0 %v2371
      %v3396 = vpop.f32.mrf.mxu0
      %v3397 = vadd.f32 0.0, %v3396
      %v3398 = vpop.f32.mrf.mxu0
      %v3399 = vadd.f32 0.0, %v3398
      %3400 = vmatmul.bf16.gmra.mxu0 %v2374
      %v3401 = vpop.f32.mrf.mxu0
      %v3402 = vadd.f32 0.0, %v3401
      %v3403 = vpop.f32.mrf.mxu0
      %v3404 = vadd.f32 0.0, %v3403
      %3405 = vmatmul.bf16.gmra.mxu0 %v2377
      %v3406 = vpop.f32.mrf.mxu0
      %v3407 = vadd.f32 0.0, %v3406
      %v3408 = vpop.f32.mrf.mxu0
      %v3409 = vadd.f32 0.0, %v3408
      %3410 = vmatmul.bf16.gmra.mxu0 %v2380
      %v3411 = vpop.f32.mrf.mxu0
      %v3412 = vadd.f32 0.0, %v3411
      %v3413 = vpop.f32.mrf.mxu0
      %v3414 = vadd.f32 0.0, %v3413
      %3415 = vmatmul.bf16.gmra.mxu0 %v2383
      %v3416 = vpop.f32.mrf.mxu0
      %v3417 = vadd.f32 0.0, %v3416
      %v3418 = vpop.f32.mrf.mxu0
      %v3419 = vadd.f32 0.0, %v3418
      %3420 = vmatmul.bf16.gmra.mxu0 %v2386
      %v3421 = vpop.f32.mrf.mxu0
      %v3422 = vadd.f32 0.0, %v3421
      %v3423 = vpop.f32.mrf.mxu0
      %v3424 = vadd.f32 0.0, %v3423
      %3425 = vmatmul.bf16.gmra.mxu0 %v2389
      %v3426 = vpop.f32.mrf.mxu0
      %v3427 = vadd.f32 0.0, %v3426
      %v3428 = vpop.f32.mrf.mxu0
      %v3429 = vadd.f32 0.0, %v3428
      %3430 = vmatmul.bf16.gmra.mxu0 %v2392
      %v3431 = vpop.f32.mrf.mxu0
      %v3432 = vadd.f32 0.0, %v3431
      %v3433 = vpop.f32.mrf.mxu0
      %v3434 = vadd.f32 0.0, %v3433
      %3435 = vmatmul.bf16.gmra.mxu0 %v2395
      %v3436 = vpop.f32.mrf.mxu0
      %v3437 = vadd.f32 0.0, %v3436
      %v3438 = vpop.f32.mrf.mxu0
      %v3439 = vadd.f32 0.0, %v3438
      %3440 = vmatmul.bf16.gmra.mxu0 %v2398
      %v3441 = vpop.f32.mrf.mxu0
      %v3442 = vadd.f32 0.0, %v3441
      %v3443 = vpop.f32.mrf.mxu0
      %v3444 = vadd.f32 0.0, %v3443
      %3445 = vmatmul.bf16.gmra.mxu0 %v2401
      %v3446 = vpop.f32.mrf.mxu0
      %v3447 = vadd.f32 0.0, %v3446
      %v3448 = vpop.f32.mrf.mxu0
      %v3449 = vadd.f32 0.0, %v3448
      %3450 = vmatmul.bf16.gmra.mxu0 %v2404
      %v3451 = vpop.f32.mrf.mxu0
      %v3452 = vadd.f32 0.0, %v3451
      %v3453 = vpop.f32.mrf.mxu0
      %v3454 = vadd.f32 0.0, %v3453
      %3455 = vmatmul.bf16.gmra.mxu0 %v2407
      %v3456 = vpop.f32.mrf.mxu0
      %v3457 = vadd.f32 0.0, %v3456
      %v3458 = vpop.f32.mrf.mxu0
      %v3459 = vadd.f32 0.0, %v3458
      %3460 = vmatmul.bf16.gmra.mxu0 %v2410
      %v3461 = vpop.f32.mrf.mxu0
      %v3462 = vadd.f32 0.0, %v3461
      %v3463 = vpop.f32.mrf.mxu0
      %v3464 = vadd.f32 0.0, %v3463
      %3465 = vmatmul.bf16.gmra.mxu0 %v2413
      %v3466 = vpop.f32.mrf.mxu0
      %v3467 = vadd.f32 0.0, %v3466
      %v3468 = vpop.f32.mrf.mxu0
      %v3469 = vadd.f32 0.0, %v3468
      %3470 = vmatmul.bf16.gmra.mxu0 %v2416
      %v3471 = vpop.f32.mrf.mxu0
      %v3472 = vadd.f32 0.0, %v3471
      %v3473 = vpop.f32.mrf.mxu0
      %v3474 = vadd.f32 0.0, %v3473
      %3475 = vmatmul.bf16.gmra.mxu0 %v2419
      %v3476 = vpop.f32.mrf.mxu0
      %v3477 = vadd.f32 0.0, %v3476
      %v3478 = vpop.f32.mrf.mxu0
      %v3479 = vadd.f32 0.0, %v3478
      %3480 = vmatmul.bf16.gmra.mxu0 %v2422
      %v3481 = vpop.f32.mrf.mxu0
      %v3482 = vadd.f32 0.0, %v3481
      %v3483 = vpop.f32.mrf.mxu0
      %v3484 = vadd.f32 0.0, %v3483
      %3485 = vmatmul.bf16.gmra.mxu0 %v2425
      %v3486 = vpop.f32.mrf.mxu0
      %v3487 = vadd.f32 0.0, %v3486
      %v3488 = vpop.f32.mrf.mxu0
      %v3489 = vadd.f32 0.0, %v3488
      %3490 = vmatmul.bf16.gmra.mxu0 %v2428
      %v3491 = vpop.f32.mrf.mxu0
      %v3492 = vadd.f32 0.0, %v3491
      %v3493 = vpop.f32.mrf.mxu0
      %v3494 = vadd.f32 0.0, %v3493
      %3495 = vmatmul.bf16.gmra.mxu0 %v2431
      %v3496 = vpop.f32.mrf.mxu0
      %v3497 = vadd.f32 0.0, %v3496
      %v3498 = vpop.f32.mrf.mxu0
      %v3499 = vadd.f32 0.0, %v3498
      %3500 = vmatmul.bf16.gmra.mxu0 %v2434
      %v3501 = vpop.f32.mrf.mxu0
      %v3502 = vadd.f32 0.0, %v3501
      %v3503 = vpop.f32.mrf.mxu0
      %v3504 = vadd.f32 0.0, %v3503
      %3505 = vmatmul.bf16.gmra.mxu0 %v2437
      %v3506 = vpop.f32.mrf.mxu0
      %v3507 = vadd.f32 0.0, %v3506
      %v3508 = vpop.f32.mrf.mxu0
      %v3509 = vadd.f32 0.0, %v3508
      %3510 = vmatmul.bf16.gmra.mxu0 %v2440
      %v3511 = vpop.f32.mrf.mxu0
      %v3512 = vadd.f32 0.0, %v3511
      %v3513 = vpop.f32.mrf.mxu0
      %v3514 = vadd.f32 0.0, %v3513
      %3515 = vmatmul.bf16.gmra.mxu0 %v2443
      %v3516 = vpop.f32.mrf.mxu0
      %v3517 = vadd.f32 0.0, %v3516
      %v3518 = vpop.f32.mrf.mxu0
      %v3519 = vadd.f32 0.0, %v3518
      %3520 = vmatmul.bf16.gmra.mxu0 %v2446
      %v3521 = vpop.f32.mrf.mxu0
      %v3522 = vadd.f32 0.0, %v3521
      %v3523 = vpop.f32.mrf.mxu0
      %v3524 = vadd.f32 0.0, %v3523
      %3525 = vmatmul.bf16.gmra.mxu0 %v2449
      %v3526 = vpop.f32.mrf.mxu0
      %v3527 = vadd.f32 0.0, %v3526
      %v3528 = vpop.f32.mrf.mxu0
      %v3529 = vadd.f32 0.0, %v3528
      %3530 = vmatmul.bf16.gmra.mxu0 %v2452
      %v3531 = vpop.f32.mrf.mxu0
      %v3532 = vadd.f32 0.0, %v3531
      %v3533 = vpop.f32.mrf.mxu0
      %v3534 = vadd.f32 0.0, %v3533
      %3535 = vmatmul.bf16.gmra.mxu0 %v2455
      %v3536 = vpop.f32.mrf.mxu0
      %v3537 = vadd.f32 0.0, %v3536
      %v3538 = vpop.f32.mrf.mxu0
      %v3539 = vadd.f32 0.0, %v3538
      %3540 = vmatmul.bf16.gmra.mxu0 %v2458
      %v3541 = vpop.f32.mrf.mxu0
      %v3542 = vadd.f32 0.0, %v3541
      %v3543 = vpop.f32.mrf.mxu0
      %v3544 = vadd.f32 0.0, %v3543
      %3545 = vmatmul.bf16.gmra.mxu0 %v2461
      %v3546 = vpop.f32.mrf.mxu0
      %v3547 = vadd.f32 0.0, %v3546
      %v3548 = vpop.f32.mrf.mxu0
      %v3549 = vadd.f32 0.0, %v3548
      %3550 = vmatmul.bf16.gmra.mxu0 %v2464
      %v3551 = vpop.f32.mrf.mxu0
      %v3552 = vadd.f32 0.0, %v3551
      %v3553 = vpop.f32.mrf.mxu0
      %v3554 = vadd.f32 0.0, %v3553
      %3555 = vmatmul.bf16.gmra.mxu0 %v2467
      %v3556 = vpop.f32.mrf.mxu0
      %v3557 = vadd.f32 0.0, %v3556
      %v3558 = vpop.f32.mrf.mxu0
      %v3559 = vadd.f32 0.0, %v3558
      %3560 = vmatmul.bf16.gmra.mxu0 %v2470
      %v3561 = vpop.f32.mrf.mxu0
      %v3562 = vadd.f32 0.0, %v3561
      %v3563 = vpop.f32.mrf.mxu0
      %v3564 = vadd.f32 0.0, %v3563
      %3565 = vmatmul.bf16.gmra.mxu0 %v2473
      %v3566 = vpop.f32.mrf.mxu0
      %v3567 = vadd.f32 0.0, %v3566
      %v3568 = vpop.f32.mrf.mxu0
      %v3569 = vadd.f32 0.0, %v3568
      %3570 = vmatmul.bf16.gmra.mxu0 %v2476
      %v3571 = vpop.f32.mrf.mxu0
      %v3572 = vadd.f32 0.0, %v3571
      %v3573 = vpop.f32.mrf.mxu0
      %v3574 = vadd.f32 0.0, %v3573
      %3575 = vmatmul.bf16.gmra.mxu0 %v2479
      %v3576 = vpop.f32.mrf.mxu0
      %v3577 = vadd.f32 0.0, %v3576
      %v3578 = vpop.f32.mrf.mxu0
      %v3579 = vadd.f32 0.0, %v3578
      %3580 = vmatmul.bf16.gmra.mxu0 %v2482
      %v3581 = vpop.f32.mrf.mxu0
      %v3582 = vadd.f32 0.0, %v3581
      %v3583 = vpop.f32.mrf.mxu0
      %v3584 = vadd.f32 0.0, %v3583
      %3585 = vmatmul.bf16.gmra.mxu0 %v2485
      %v3586 = vpop.f32.mrf.mxu0
      %v3587 = vadd.f32 0.0, %v3586
      %v3588 = vpop.f32.mrf.mxu0
      %v3589 = vadd.f32 0.0, %v3588
      %3590 = vmatmul.bf16.gmra.mxu0 %v2488
      %v3591 = vpop.f32.mrf.mxu0
      %v3592 = vadd.f32 0.0, %v3591
      %v3593 = vpop.f32.mrf.mxu0
      %v3594 = vadd.f32 0.0, %v3593
      %3595 = vmatmul.bf16.gmra.mxu0 %v2491
      %v3596 = vpop.f32.mrf.mxu0
      %v3597 = vadd.f32 0.0, %v3596
      %v3598 = vpop.f32.mrf.mxu0
      %v3599 = vadd.f32 0.0, %v3598
      %3600 = vmatmul.bf16.gmra.mxu0 %v2494
      %v3601 = vpop.f32.mrf.mxu0
      %v3602 = vadd.f32 0.0, %v3601
      %v3603 = vpop.f32.mrf.mxu0
      %v3604 = vadd.f32 0.0, %v3603
      %3605 = vmatmul.bf16.gmra.mxu0 %v2497
      %v3606 = vpop.f32.mrf.mxu0
      %v3607 = vadd.f32 0.0, %v3606
      %v3608 = vpop.f32.mrf.mxu0
      %v3609 = vadd.f32 0.0, %v3608
      %3610 = vmatmul.bf16.gmra.mxu0 %v2500
      %v3611 = vpop.f32.mrf.mxu0
      %v3612 = vadd.f32 0.0, %v3611
      %v3613 = vpop.f32.mrf.mxu0
      %v3614 = vadd.f32 0.0, %v3613
      %3615 = vmatmul.bf16.gmra.mxu0 %v2503
      %v3616 = vpop.f32.mrf.mxu0
      %v3617 = vadd.f32 0.0, %v3616
      %v3618 = vpop.f32.mrf.mxu0
      %v3619 = vadd.f32 0.0, %v3618
      %3620 = vmatmul.bf16.gmra.mxu0 %v2506
      %v3621 = vpop.f32.mrf.mxu0
      %v3622 = vadd.f32 0.0, %v3621
      %v3623 = vpop.f32.mrf.mxu0
      %v3624 = vadd.f32 0.0, %v3623
      %3625 = vmatmul.bf16.gmra.mxu0 %v2509
      %v3626 = vpop.f32.mrf.mxu0
      %v3627 = vadd.f32 0.0, %v3626
      %v3628 = vpop.f32.mrf.mxu0
      %v3629 = vadd.f32 0.0, %v3628
      %3630 = vmatmul.bf16.gmra.mxu0 %v2512
      %v3631 = vpop.f32.mrf.mxu0
      %v3632 = vadd.f32 0.0, %v3631
      %v3633 = vpop.f32.mrf.mxu0
      %v3634 = vadd.f32 0.0, %v3633
      %3635 = vmatmul.bf16.gmra.mxu0 %v2515
      %v3636 = vpop.f32.mrf.mxu0
      %v3637 = vadd.f32 0.0, %v3636
      %v3638 = vpop.f32.mrf.mxu0
      %v3639 = vadd.f32 0.0, %v3638
      %3640 = vmatmul.bf16.gmra.mxu0 %v2518
      %v3641 = vpop.f32.mrf.mxu0
      %v3642 = vadd.f32 0.0, %v3641
      %v3643 = vpop.f32.mrf.mxu0
      %v3644 = vadd.f32 0.0, %v3643
      %3645 = vmatmul.bf16.gmra.mxu0 %v2521
      %v3646 = vpop.f32.mrf.mxu0
      %v3647 = vadd.f32 0.0, %v3646
      %v3648 = vpop.f32.mrf.mxu0
      %v3649 = vadd.f32 0.0, %v3648
      %3650 = vmatmul.bf16.gmra.mxu0 %v2524
      %v3651 = vpop.f32.mrf.mxu0
      %v3652 = vadd.f32 0.0, %v3651
      %v3653 = vpop.f32.mrf.mxu0
      %v3654 = vadd.f32 0.0, %v3653
      %3655 = vmatmul.bf16.gmra.mxu0 %v2527
      %v3656 = vpop.f32.mrf.mxu0
      %v3657 = vadd.f32 0.0, %v3656
      %v3658 = vpop.f32.mrf.mxu0
      %v3659 = vadd.f32 0.0, %v3658
      %3660 = vmatmul.bf16.gmra.mxu0 %v2530
      %v3661 = vpop.f32.mrf.mxu0
      %v3662 = vadd.f32 0.0, %v3661
      %v3663 = vpop.f32.mrf.mxu0
      %v3664 = vadd.f32 0.0, %v3663
      %3665 = vmatmul.bf16.gmra.mxu0 %v2533
      %v3666 = vpop.f32.mrf.mxu0
      %v3667 = vadd.f32 0.0, %v3666
      %v3668 = vpop.f32.mrf.mxu0
      %v3669 = vadd.f32 0.0, %v3668
      %3670 = vmatmul.bf16.gmra.mxu0 %v2536
      %v3671 = vpop.f32.mrf.mxu0
      %v3672 = vadd.f32 0.0, %v3671
      %v3673 = vpop.f32.mrf.mxu0
      %v3674 = vadd.f32 0.0, %v3673
      %3675 = vmatmul.bf16.gmra.mxu0 %v2539
      %v3676 = vpop.f32.mrf.mxu0
      %v3677 = vadd.f32 0.0, %v3676
      %v3678 = vpop.f32.mrf.mxu0
      %v3679 = vadd.f32 0.0, %v3678
      %3680 = vmatmul.bf16.gmra.mxu0 %v2542
      %v3681 = vpop.f32.mrf.mxu0
      %v3682 = vadd.f32 0.0, %v3681
      %v3683 = vpop.f32.mrf.mxu0
      %v3684 = vadd.f32 0.0, %v3683
      %3685 = vmatmul.bf16.gmra.mxu0 %v2545
      %v3686 = vpop.f32.mrf.mxu0
      %v3687 = vadd.f32 0.0, %v3686
      %v3688 = vpop.f32.mrf.mxu0
      %v3689 = vadd.f32 0.0, %v3688
      %3690 = vmatmul.bf16.gmra.mxu0 %v2548
      %v3691 = vpop.f32.mrf.mxu0
      %v3692 = vadd.f32 0.0, %v3691
      %v3693 = vpop.f32.mrf.mxu0
      %v3694 = vadd.f32 0.0, %v3693
      %3695 = vmatmul.bf16.gmra.mxu0 %v2551
      %v3696 = vpop.f32.mrf.mxu0
      %v3697 = vadd.f32 0.0, %v3696
      %v3698 = vpop.f32.mrf.mxu0
      %v3699 = vadd.f32 0.0, %v3698
      %3700 = vmatmul.bf16.gmra.mxu0 %v2554
      %v3701 = vpop.f32.mrf.mxu0
      %v3702 = vadd.f32 0.0, %v3701
      %v3703 = vpop.f32.mrf.mxu0
      %v3704 = vadd.f32 0.0, %v3703
      %3705 = vmatmul.bf16.gmra.mxu0 %v2557
      %v3706 = vpop.f32.mrf.mxu0
      %v3707 = vadd.f32 0.0, %v3706
      %v3708 = vpop.f32.mrf.mxu0
      %v3709 = vadd.f32 0.0, %v3708
      %3710 = vmatmul.bf16.gmra.mxu0 %v2560
      %v3711 = vpop.f32.mrf.mxu0
      %v3712 = vadd.f32 0.0, %v3711
      %v3713 = vpop.f32.mrf.mxu0
      %v3714 = vadd.f32 0.0, %v3713
      %3715 = vmatmul.bf16.gmra.mxu0 %v2563
      %v3716 = vpop.f32.mrf.mxu0
      %v3717 = vadd.f32 0.0, %v3716
      %v3718 = vpop.f32.mrf.mxu0
      %v3719 = vadd.f32 0.0, %v3718
      %3720 = vmatmul.bf16.gmra.mxu0 %v2566
      %v3721 = vpop.f32.mrf.mxu0
      %v3722 = vadd.f32 0.0, %v3721
      %v3723 = vpop.f32.mrf.mxu0
      %v3724 = vadd.f32 0.0, %v3723
      %3725 = vmatmul.bf16.gmra.mxu0 %v2569
      %v3726 = vpop.f32.mrf.mxu0
      %v3727 = vadd.f32 0.0, %v3726
      %v3728 = vpop.f32.mrf.mxu0
      %v3729 = vadd.f32 0.0, %v3728
      %3730 = vmatmul.bf16.gmra.mxu0 %v2572
      %v3731 = vpop.f32.mrf.mxu0
      %v3732 = vadd.f32 0.0, %v3731
      %v3733 = vpop.f32.mrf.mxu0
      %v3734 = vadd.f32 0.0, %v3733
      %3735 = vmatmul.bf16.gmra.mxu0 %v2575
      %v3736 = vpop.f32.mrf.mxu0
      %v3737 = vadd.f32 0.0, %v3736
      %v3738 = vpop.f32.mrf.mxu0
      %v3739 = vadd.f32 0.0, %v3738
      %3740 = vmatmul.bf16.gmra.mxu0 %v2578
      %v3741 = vpop.f32.mrf.mxu0
      %v3742 = vadd.f32 0.0, %v3741
      %v3743 = vpop.f32.mrf.mxu0
      %v3744 = vadd.f32 0.0, %v3743
      %3745 = vmatmul.bf16.gmra.mxu0 %v2581
      %v3746 = vpop.f32.mrf.mxu0
      %v3747 = vadd.f32 0.0, %v3746
      %v3748 = vpop.f32.mrf.mxu0
      %v3749 = vadd.f32 0.0, %v3748
      %3750 = vmatmul.bf16.gmra.mxu0 %v2584
      %v3751 = vpop.f32.mrf.mxu0
      %v3752 = vadd.f32 0.0, %v3751
      %v3753 = vpop.f32.mrf.mxu0
      %v3754 = vadd.f32 0.0, %v3753
      %3755 = vmatmul.bf16.gmra.mxu0 %v2587
      %v3756 = vpop.f32.mrf.mxu0
      %v3757 = vadd.f32 0.0, %v3756
      %v3758 = vpop.f32.mrf.mxu0
      %v3759 = vadd.f32 0.0, %v3758
      %3760 = vmatmul.bf16.gmra.mxu0 %v2590
      %v3761 = vpop.f32.mrf.mxu0
      %v3762 = vadd.f32 0.0, %v3761
      %v3763 = vpop.f32.mrf.mxu0
      %v3764 = vadd.f32 0.0, %v3763
      %3765 = vmatmul.bf16.gmra.mxu0 %v2593
      %v3766 = vpop.f32.mrf.mxu0
      %v3767 = vadd.f32 0.0, %v3766
      %v3768 = vpop.f32.mrf.mxu0
      %v3769 = vadd.f32 0.0, %v3768
      %3770 = vmatmul.bf16.gmra.mxu0 %v2596
      %v3771 = vpop.f32.mrf.mxu0
      %v3772 = vadd.f32 0.0, %v3771
      %v3773 = vpop.f32.mrf.mxu0
      %v3774 = vadd.f32 0.0, %v3773
      %3775 = vmatmul.bf16.gmra.mxu0 %v2599
      %v3776 = vpop.f32.mrf.mxu0
      %v3777 = vadd.f32 0.0, %v3776
      %v3778 = vpop.f32.mrf.mxu0
      %v3779 = vadd.f32 0.0, %v3778
      %3780 = vmatmul.bf16.gmra.mxu0 %v2602
      %v3781 = vpop.f32.mrf.mxu0
      %v3782 = vadd.f32 0.0, %v3781
      %v3783 = vpop.f32.mrf.mxu0
      %v3784 = vadd.f32 0.0, %v3783
      %3785 = vmatmul.bf16.gmra.mxu0 %v2605
      %v3786 = vpop.f32.mrf.mxu0
      %v3787 = vadd.f32 0.0, %v3786
      %v3788 = vpop.f32.mrf.mxu0
      %v3789 = vadd.f32 0.0, %v3788
      %3790 = vmatmul.bf16.gmra.mxu0 %v2608
      %v3791 = vpop.f32.mrf.mxu0
      %v3792 = vadd.f32 0.0, %v3791
      %v3793 = vpop.f32.mrf.mxu0
      %v3794 = vadd.f32 0.0, %v3793
      %3795 = vmatmul.bf16.gmra.mxu0 %v2611
      %v3796 = vpop.f32.mrf.mxu0
      %v3797 = vadd.f32 0.0, %v3796
      %v3798 = vpop.f32.mrf.mxu0
      %v3799 = vadd.f32 0.0, %v3798
      %3800 = vmatmul.bf16.gmra.mxu0 %v2614
      %v3801 = vpop.f32.mrf.mxu0
      %v3802 = vadd.f32 0.0, %v3801
      %v3803 = vpop.f32.mrf.mxu0
      %v3804 = vadd.f32 0.0, %v3803
      %3805 = vmatmul.bf16.gmra.mxu0 %v2617
      %v3806 = vpop.f32.mrf.mxu0
      %v3807 = vadd.f32 0.0, %v3806
      %v3808 = vpop.f32.mrf.mxu0
      %v3809 = vadd.f32 0.0, %v3808
      %3810 = vmatmul.bf16.gmra.mxu0 %v2620
      %v3811 = vpop.f32.mrf.mxu0
      %v3812 = vadd.f32 0.0, %v3811
      %v3813 = vpop.f32.mrf.mxu0
      %v3814 = vadd.f32 0.0, %v3813
      %3815 = vmatmul.bf16.gmra.mxu0 %v2623
      %v3816 = vpop.f32.mrf.mxu0
      %v3817 = vadd.f32 0.0, %v3816
      %v3818 = vpop.f32.mrf.mxu0
      %v3819 = vadd.f32 0.0, %v3818
      %3820 = vmatmul.bf16.gmra.mxu0 %v2626
      %v3821 = vpop.f32.mrf.mxu0
      %v3822 = vadd.f32 0.0, %v3821
      %v3823 = vpop.f32.mrf.mxu0
      %v3824 = vadd.f32 0.0, %v3823
      %3825 = vmatmul.bf16.gmra.mxu0 %v2629
      %v3826 = vpop.f32.mrf.mxu0
      %v3827 = vadd.f32 0.0, %v3826
      %v3828 = vpop.f32.mrf.mxu0
      %v3829 = vadd.f32 0.0, %v3828
      %3830 = vmatmul.bf16.gmra.mxu0 %v2632
      %v3831 = vpop.f32.mrf.mxu0
      %v3832 = vadd.f32 0.0, %v3831
      %v3833 = vpop.f32.mrf.mxu0
      %v3834 = vadd.f32 0.0, %v3833
      %3835 = vmatmul.bf16.gmra.mxu0 %v2635
      %v3836 = vpop.f32.mrf.mxu0
      %v3837 = vadd.f32 0.0, %v3836
      %v3838 = vpop.f32.mrf.mxu0
      %v3839 = vadd.f32 0.0, %v3838
      %3840 = vmatmul.bf16.gmra.mxu0 %v2638
      %v3841 = vpop.f32.mrf.mxu0
      %v3842 = vadd.f32 0.0, %v3841
      %v3843 = vpop.f32.mrf.mxu0
      %v3844 = vadd.f32 0.0, %v3843
      %3845 = vmatmul.bf16.gmra.mxu0 %v2641
      %v3846 = vpop.f32.mrf.mxu0
      %v3847 = vadd.f32 0.0, %v3846
      %v3848 = vpop.f32.mrf.mxu0
      %v3849 = vadd.f32 0.0, %v3848
      %3850 = vmatmul.bf16.gmra.mxu0 %v2644
      %v3851 = vpop.f32.mrf.mxu0
      %v3852 = vadd.f32 0.0, %v3851
      %v3853 = vpop.f32.mrf.mxu0
      %v3854 = vadd.f32 0.0, %v3853
      %3855 = vmatmul.bf16.gmra.mxu0 %v2647
      %v3856 = vpop.f32.mrf.mxu0
      %v3857 = vadd.f32 0.0, %v3856
      %v3858 = vpop.f32.mrf.mxu0
      %v3859 = vadd.f32 0.0, %v3858
      %3860 = vmatmul.bf16.gmra.mxu0 %v2650
      %v3861 = vpop.f32.mrf.mxu0
      %v3862 = vadd.f32 0.0, %v3861
      %v3863 = vpop.f32.mrf.mxu0
      %v3864 = vadd.f32 0.0, %v3863
      %3865 = vmatmul.bf16.gmra.mxu0 %v2653
      %v3866 = vpop.f32.mrf.mxu0
      %v3867 = vadd.f32 0.0, %v3866
      %v3868 = vpop.f32.mrf.mxu0
      %v3869 = vadd.f32 0.0, %v3868
      %3870 = vmatmul.bf16.gmra.mxu0 %v2656
      %v3871 = vpop.f32.mrf.mxu0
      %v3872 = vadd.f32 0.0, %v3871
      %v3873 = vpop.f32.mrf.mxu0
      %v3874 = vadd.f32 0.0, %v3873
      %3875 = vmatmul.bf16.gmra.mxu0 %v2659
      %v3876 = vpop.f32.mrf.mxu0
      %v3877 = vadd.f32 0.0, %v3876
      %v3878 = vpop.f32.mrf.mxu0
      %v3879 = vadd.f32 0.0, %v3878
      %3880 = vmatmul.bf16.gmra.mxu0 %v2662
      %v3881 = vpop.f32.mrf.mxu0
      %v3882 = vadd.f32 0.0, %v3881
      %v3883 = vpop.f32.mrf.mxu0
      %v3884 = vadd.f32 0.0, %v3883
      %3885 = vmatmul.bf16.gmra.mxu0 %v2665
      %v3886 = vpop.f32.mrf.mxu0
      %v3887 = vadd.f32 0.0, %v3886
      %v3888 = vpop.f32.mrf.mxu0
      %v3889 = vadd.f32 0.0, %v3888
      %3890 = vmatmul.bf16.gmra.mxu0 %v2668
      %v3891 = vpop.f32.mrf.mxu0
      %v3892 = vadd.f32 0.0, %v3891
      %v3893 = vpop.f32.mrf.mxu0
      %v3894 = vadd.f32 0.0, %v3893
      %3895 = vmatmul.bf16.gmra.mxu0 %v2671
      %v3896 = vpop.f32.mrf.mxu0
      %v3897 = vadd.f32 0.0, %v3896
      %v3898 = vpop.f32.mrf.mxu0
      %v3899 = vadd.f32 0.0, %v3898
      %3900 = vmatmul.bf16.gmra.mxu0 %v2674
      %v3901 = vpop.f32.mrf.mxu0
      %v3902 = vadd.f32 0.0, %v3901
      %v3903 = vpop.f32.mrf.mxu0
      %v3904 = vadd.f32 0.0, %v3903
      %3905 = vmatmul.bf16.gmra.mxu0 %v2677
      %v3906 = vpop.f32.mrf.mxu0
      %v3907 = vadd.f32 0.0, %v3906
      %v3908 = vpop.f32.mrf.mxu0
      %v3909 = vadd.f32 0.0, %v3908
      %3910 = vmatmul.bf16.gmra.mxu0 %v2680
      %v3911 = vpop.f32.mrf.mxu0
      %v3912 = vadd.f32 0.0, %v3911
      %v3913 = vpop.f32.mrf.mxu0
      %v3914 = vadd.f32 0.0, %v3913
      %3915 = vmatmul.bf16.gmra.mxu0 %v2683
      %v3916 = vpop.f32.mrf.mxu0
      %v3917 = vadd.f32 0.0, %v3916
      %v3918 = vpop.f32.mrf.mxu0
      %v3919 = vadd.f32 0.0, %v3918
      %3920 = vmatmul.bf16.gmra.mxu0 %v2686
      %v3921 = vpop.f32.mrf.mxu0
      %v3922 = vadd.f32 0.0, %v3921
      %v3923 = vpop.f32.mrf.mxu0
      %v3924 = vadd.f32 0.0, %v3923
      %3925 = vmatmul.bf16.gmra.mxu0 %v2689
      %v3926 = vpop.f32.mrf.mxu0
      %v3927 = vadd.f32 0.0, %v3926
      %v3928 = vpop.f32.mrf.mxu0
      %v3929 = vadd.f32 0.0, %v3928
      %3930 = vmatmul.bf16.gmra.mxu0 %v2692
      %v3931 = vpop.f32.mrf.mxu0
      %v3932 = vadd.f32 0.0, %v3931
      %v3933 = vpop.f32.mrf.mxu0
      %v3934 = vadd.f32 0.0, %v3933
      %3935 = vmatmul.bf16.gmra.mxu0 %v2695
      %v3936 = vpop.f32.mrf.mxu0
      %v3937 = vadd.f32 0.0, %v3936
      %v3938 = vpop.f32.mrf.mxu0
      %v3939 = vadd.f32 0.0, %v3938
      %3940 = vmatmul.bf16.gmra.mxu0 %v2698
      %v3941 = vpop.f32.mrf.mxu0
      %v3942 = vadd.f32 0.0, %v3941
      %v3943 = vpop.f32.mrf.mxu0
      %v3944 = vadd.f32 0.0, %v3943
      %3945 = vmatmul.bf16.gmra.mxu0 %v2701
      %v3946 = vpop.f32.mrf.mxu0
      %v3947 = vadd.f32 0.0, %v3946
      %v3948 = vpop.f32.mrf.mxu0
      %v3949 = vadd.f32 0.0, %v3948
      %3950 = vmatmul.bf16.gmra.mxu0 %v2704
      %v3951 = vpop.f32.mrf.mxu0
      %v3952 = vadd.f32 0.0, %v3951
      %v3953 = vpop.f32.mrf.mxu0
      %v3954 = vadd.f32 0.0, %v3953
      %3955 = vmatmul.bf16.gmra.mxu0 %v2707
      %v3956 = vpop.f32.mrf.mxu0
      %v3957 = vadd.f32 0.0, %v3956
      %v3958 = vpop.f32.mrf.mxu0
      %v3959 = vadd.f32 0.0, %v3958
      %3960 = vmatmul.bf16.gmra.mxu0 %v2710
      %v3961 = vpop.f32.mrf.mxu0
      %v3962 = vadd.f32 0.0, %v3961
      %v3963 = vpop.f32.mrf.mxu0
      %v3964 = vadd.f32 0.0, %v3963
      %3965 = vmatmul.bf16.gmra.mxu0 %v2713
      %v3966 = vpop.f32.mrf.mxu0
      %v3967 = vadd.f32 0.0, %v3966
      %v3968 = vpop.f32.mrf.mxu0
      %v3969 = vadd.f32 0.0, %v3968
      %3970 = vmatmul.bf16.gmra.mxu0 %v2716
      %v3971 = vpop.f32.mrf.mxu0
      %v3972 = vadd.f32 0.0, %v3971
      %v3973 = vpop.f32.mrf.mxu0
      %v3974 = vadd.f32 0.0, %v3973
      %3975 = vmatmul.bf16.gmra.mxu0 %v2719
      %v3976 = vpop.f32.mrf.mxu0
      %v3977 = vadd.f32 0.0, %v3976
      %v3978 = vpop.f32.mrf.mxu0
      %v3979 = vadd.f32 0.0, %v3978
      %3980 = vmatmul.bf16.gmra.mxu0 %v2722
      %v3981 = vpop.f32.mrf.mxu0
      %v3982 = vadd.f32 0.0, %v3981
      %v3983 = vpop.f32.mrf.mxu0
      %v3984 = vadd.f32 0.0, %v3983
      %3985 = vmatmul.bf16.gmra.mxu0 %v2725
      %v3986 = vpop.f32.mrf.mxu0
      %v3987 = vadd.f32 0.0, %v3986
      %v3988 = vpop.f32.mrf.mxu0
      %v3989 = vadd.f32 0.0, %v3988
      %3990 = vmatmul.bf16.gmra.mxu0 %v2728
      %v3991 = vpop.f32.mrf.mxu0
      %v3992 = vadd.f32 0.0, %v3991
      %v3993 = vpop.f32.mrf.mxu0
      %v3994 = vadd.f32 0.0, %v3993
      %3995 = vmatmul.bf16.gmra.mxu0 %v2731
      %v3996 = vpop.f32.mrf.mxu0
      %v3997 = vadd.f32 0.0, %v3996
      %v3998 = vpop.f32.mrf.mxu0
      %v3999 = vadd.f32 0.0, %v3998
      %4000 = vmatmul.bf16.gmra.mxu0 %v2734
      %v4001 = vpop.f32.mrf.mxu0
      %v4002 = vadd.f32 0.0, %v4001
      %v4003 = vpop.f32.mrf.mxu0
      %v4004 = vadd.f32 0.0, %v4003
      %4005 = vmatmul.bf16.gmra.mxu0 %v2737
      %v4006 = vpop.f32.mrf.mxu0
      %v4007 = vadd.f32 0.0, %v4006
      %v4008 = vpop.f32.mrf.mxu0
      %v4009 = vadd.f32 0.0, %v4008
      %4010 = vmatmul.bf16.gmra.mxu0 %v2740
      %v4011 = vpop.f32.mrf.mxu0
      %v4012 = vadd.f32 0.0, %v4011
      %v4013 = vpop.f32.mrf.mxu0
      %v4014 = vadd.f32 0.0, %v4013
      %4015 = vmatmul.bf16.gmra.mxu0 %v2743
      %v4016 = vpop.f32.mrf.mxu0
      %v4017 = vadd.f32 0.0, %v4016
      %v4018 = vpop.f32.mrf.mxu0
      %v4019 = vadd.f32 0.0, %v4018
      %4020 = vmatmul.bf16.gmra.mxu0 %v2746
      %v4021 = vpop.f32.mrf.mxu0
      %v4022 = vadd.f32 0.0, %v4021
      %v4023 = vpop.f32.mrf.mxu0
      %v4024 = vadd.f32 0.0, %v4023
      %4025 = vmatmul.bf16.gmra.mxu0 %v2749
      %v4026 = vpop.f32.mrf.mxu0
      %v4027 = vadd.f32 0.0, %v4026
      %v4028 = vpop.f32.mrf.mxu0
      %v4029 = vadd.f32 0.0, %v4028
      %4030 = vmatmul.bf16.gmra.mxu0 %v2752
      %v4031 = vpop.f32.mrf.mxu0
      %v4032 = vadd.f32 0.0, %v4031
      %v4033 = vpop.f32.mrf.mxu0
      %v4034 = vadd.f32 0.0, %v4033
      %4035 = vmatmul.bf16.gmra.mxu0 %v2755
      %v4036 = vpop.f32.mrf.mxu0
      %v4037 = vadd.f32 0.0, %v4036
      %v4038 = vpop.f32.mrf.mxu0
      %v4039 = vadd.f32 0.0, %v4038
      %4040 = vmatmul.bf16.gmra.mxu0 %v2758
      %v4041 = vpop.f32.mrf.mxu0
      %v4042 = vadd.f32 0.0, %v4041
      %v4043 = vpop.f32.mrf.mxu0
      %v4044 = vadd.f32 0.0, %v4043
      %4045 = vmatmul.bf16.gmra.mxu0 %v2761
      %v4046 = vpop.f32.mrf.mxu0
      %v4047 = vadd.f32 0.0, %v4046
      %v4048 = vpop.f32.mrf.mxu0
      %v4049 = vadd.f32 0.0, %v4048
      %4050 = vmatmul.bf16.gmra.mxu0 %v2764
      %v4051 = vpop.f32.mrf.mxu0
      %v4052 = vadd.f32 0.0, %v4051
      %v4053 = vpop.f32.mrf.mxu0
      %v4054 = vadd.f32 0.0, %v4053
      %4055 = vmatmul.bf16.gmra.mxu0 %v2767
      %v4056 = vpop.f32.mrf.mxu0
      %v4057 = vadd.f32 0.0, %v4056
      %v4058 = vpop.f32.mrf.mxu0
      %v4059 = vadd.f32 0.0, %v4058
      %4060 = vmatmul.bf16.gmra.mxu0 %v2770
      %v4061 = vpop.f32.mrf.mxu0
      %v4062 = vadd.f32 0.0, %v4061
      %v4063 = vpop.f32.mrf.mxu0
      %v4064 = vadd.f32 0.0, %v4063
      %4065 = vmatmul.bf16.gmra.mxu0 %v2773
      %v4066 = vpop.f32.mrf.mxu0
      %v4067 = vadd.f32 0.0, %v4066
      %v4068 = vpop.f32.mrf.mxu0
      %v4069 = vadd.f32 0.0, %v4068
      %4070 = vdwg.mxu0
      %v4071 = vld [vmem:[%s2] sm:$0x1]
      %v4073 = vperm.slane %v4071, 0
      %v4075 = vmul.f32 %v2792, %v4073
      %v4076 = vmul.f32 %v2794, %v4073
      %v4077 = vmul.f32 %v2797, %v4073
      %v4078 = vmul.f32 %v2799, %v4073
      %v4079 = vmul.f32 %v2802, %v4073
      %v4080 = vmul.f32 %v2804, %v4073
      %v4081 = vmul.f32 %v2807, %v4073
      %v4082 = vmul.f32 %v2809, %v4073
      %v4083 = vmul.f32 %v2812, %v4073
      %v4084 = vmul.f32 %v2814, %v4073
      %v4085 = vmul.f32 %v2817, %v4073
      %v4086 = vmul.f32 %v2819, %v4073
      %v4087 = vmul.f32 %v2822, %v4073
      %v4088 = vmul.f32 %v2824, %v4073
      %v4089 = vmul.f32 %v2827, %v4073
      %v4090 = vmul.f32 %v2829, %v4073
      %v4091 = vmul.f32 %v2832, %v4073
      %v4092 = vmul.f32 %v2834, %v4073
      %v4093 = vmul.f32 %v2837, %v4073
      %v4094 = vmul.f32 %v2839, %v4073
      %v4095 = vmul.f32 %v2842, %v4073
      %v4096 = vmul.f32 %v2844, %v4073
      %v4097 = vmul.f32 %v2847, %v4073
      %v4098 = vmul.f32 %v2849, %v4073
      %v4099 = vmul.f32 %v2852, %v4073
      %v4100 = vmul.f32 %v2854, %v4073
      %v4101 = vmul.f32 %v2857, %v4073
      %v4102 = vmul.f32 %v2859, %v4073
      %v4103 = vmul.f32 %v2862, %v4073
      %v4104 = vmul.f32 %v2864, %v4073
      %v4105 = vmul.f32 %v2867, %v4073
      %v4106 = vmul.f32 %v2869, %v4073
      %v4107 = vmul.f32 %v2872, %v4073
      %v4108 = vmul.f32 %v2874, %v4073
      %v4109 = vmul.f32 %v2877, %v4073
      %v4110 = vmul.f32 %v2879, %v4073
      %v4111 = vmul.f32 %v2882, %v4073
      %v4112 = vmul.f32 %v2884, %v4073
      %v4113 = vmul.f32 %v2887, %v4073
      %v4114 = vmul.f32 %v2889, %v4073
      %v4115 = vmul.f32 %v2892, %v4073
      %v4116 = vmul.f32 %v2894, %v4073
      %v4117 = vmul.f32 %v2897, %v4073
      %v4118 = vmul.f32 %v2899, %v4073
      %v4119 = vmul.f32 %v2902, %v4073
      %v4120 = vmul.f32 %v2904, %v4073
      %v4121 = vmul.f32 %v2907, %v4073
      %v4122 = vmul.f32 %v2909, %v4073
      %v4123 = vmul.f32 %v2912, %v4073
      %v4124 = vmul.f32 %v2914, %v4073
      %v4125 = vmul.f32 %v2917, %v4073
      %v4126 = vmul.f32 %v2919, %v4073
      %v4127 = vmul.f32 %v2922, %v4073
      %v4128 = vmul.f32 %v2924, %v4073
      %v4129 = vmul.f32 %v2927, %v4073
      %v4130 = vmul.f32 %v2929, %v4073
      %v4131 = vmul.f32 %v2932, %v4073
      %v4132 = vmul.f32 %v2934, %v4073
      %v4133 = vmul.f32 %v2937, %v4073
      %v4134 = vmul.f32 %v2939, %v4073
      %v4135 = vmul.f32 %v2942, %v4073
      %v4136 = vmul.f32 %v2944, %v4073
      %v4137 = vmul.f32 %v2947, %v4073
      %v4138 = vmul.f32 %v2949, %v4073
      %v4139 = vmul.f32 %v2952, %v4073
      %v4140 = vmul.f32 %v2954, %v4073
      %v4141 = vmul.f32 %v2957, %v4073
      %v4142 = vmul.f32 %v2959, %v4073
      %v4143 = vmul.f32 %v2962, %v4073
      %v4144 = vmul.f32 %v2964, %v4073
      %v4145 = vmul.f32 %v2967, %v4073
      %v4146 = vmul.f32 %v2969, %v4073
      %v4147 = vmul.f32 %v2972, %v4073
      %v4148 = vmul.f32 %v2974, %v4073
      %v4149 = vmul.f32 %v2977, %v4073
      %v4150 = vmul.f32 %v2979, %v4073
      %v4151 = vmul.f32 %v2982, %v4073
      %v4152 = vmul.f32 %v2984, %v4073
      %v4153 = vmul.f32 %v2987, %v4073
      %v4154 = vmul.f32 %v2989, %v4073
      %v4155 = vmul.f32 %v2992, %v4073
      %v4156 = vmul.f32 %v2994, %v4073
      %v4157 = vmul.f32 %v2997, %v4073
      %v4158 = vmul.f32 %v2999, %v4073
      %v4159 = vmul.f32 %v3002, %v4073
      %v4160 = vmul.f32 %v3004, %v4073
      %v4161 = vmul.f32 %v3007, %v4073
      %v4162 = vmul.f32 %v3009, %v4073
      %v4163 = vmul.f32 %v3012, %v4073
      %v4164 = vmul.f32 %v3014, %v4073
      %v4165 = vmul.f32 %v3017, %v4073
      %v4166 = vmul.f32 %v3019, %v4073
      %v4167 = vmul.f32 %v3022, %v4073
      %v4168 = vmul.f32 %v3024, %v4073
      %v4169 = vmul.f32 %v3027, %v4073
      %v4170 = vmul.f32 %v3029, %v4073
      %v4171 = vmul.f32 %v3032, %v4073
      %v4172 = vmul.f32 %v3034, %v4073
      %v4173 = vmul.f32 %v3037, %v4073
      %v4174 = vmul.f32 %v3039, %v4073
      %v4175 = vmul.f32 %v3042, %v4073
      %v4176 = vmul.f32 %v3044, %v4073
      %v4177 = vmul.f32 %v3047, %v4073
      %v4178 = vmul.f32 %v3049, %v4073
      %v4179 = vmul.f32 %v3052, %v4073
      %v4180 = vmul.f32 %v3054, %v4073
      %v4181 = vmul.f32 %v3057, %v4073
      %v4182 = vmul.f32 %v3059, %v4073
      %v4183 = vmul.f32 %v3062, %v4073
      %v4184 = vmul.f32 %v3064, %v4073
      %v4185 = vmul.f32 %v3067, %v4073
      %v4186 = vmul.f32 %v3069, %v4073
      %v4187 = vmul.f32 %v3072, %v4073
      %v4188 = vmul.f32 %v3074, %v4073
      %v4189 = vmul.f32 %v3077, %v4073
      %v4190 = vmul.f32 %v3079, %v4073
      %v4191 = vmul.f32 %v3082, %v4073
      %v4192 = vmul.f32 %v3084, %v4073
      %v4193 = vmul.f32 %v3087, %v4073
      %v4194 = vmul.f32 %v3089, %v4073
      %v4195 = vmul.f32 %v3092, %v4073
      %v4196 = vmul.f32 %v3094, %v4073
      %v4197 = vmul.f32 %v3097, %v4073
      %v4198 = vmul.f32 %v3099, %v4073
      %v4199 = vmul.f32 %v3102, %v4073
      %v4200 = vmul.f32 %v3104, %v4073
      %v4201 = vmul.f32 %v3107, %v4073
      %v4202 = vmul.f32 %v3109, %v4073
      %v4203 = vmul.f32 %v3112, %v4073
      %v4204 = vmul.f32 %v3114, %v4073
      %v4205 = vmul.f32 %v3117, %v4073
      %v4206 = vmul.f32 %v3119, %v4073
      %v4207 = vmul.f32 %v3122, %v4073
      %v4208 = vmul.f32 %v3124, %v4073
      %v4209 = vmul.f32 %v3127, %v4073
      %v4210 = vmul.f32 %v3129, %v4073
      %v4211 = vmul.f32 %v3132, %v4073
      %v4212 = vmul.f32 %v3134, %v4073
      %v4213 = vmul.f32 %v3137, %v4073
      %v4214 = vmul.f32 %v3139, %v4073
      %v4215 = vmul.f32 %v3142, %v4073
      %v4216 = vmul.f32 %v3144, %v4073
      %v4217 = vmul.f32 %v3147, %v4073
      %v4218 = vmul.f32 %v3149, %v4073
      %v4219 = vmul.f32 %v3152, %v4073
      %v4220 = vmul.f32 %v3154, %v4073
      %v4221 = vmul.f32 %v3157, %v4073
      %v4222 = vmul.f32 %v3159, %v4073
      %v4223 = vmul.f32 %v3162, %v4073
      %v4224 = vmul.f32 %v3164, %v4073
      %v4225 = vmul.f32 %v3167, %v4073
      %v4226 = vmul.f32 %v3169, %v4073
      %v4227 = vmul.f32 %v3172, %v4073
      %v4228 = vmul.f32 %v3174, %v4073
      %v4229 = vmul.f32 %v3177, %v4073
      %v4230 = vmul.f32 %v3179, %v4073
      %v4231 = vmul.f32 %v3182, %v4073
      %v4232 = vmul.f32 %v3184, %v4073
      %v4233 = vmul.f32 %v3187, %v4073
      %v4234 = vmul.f32 %v3189, %v4073
      %v4235 = vmul.f32 %v3192, %v4073
      %v4236 = vmul.f32 %v3194, %v4073
      %v4237 = vmul.f32 %v3197, %v4073
      %v4238 = vmul.f32 %v3199, %v4073
      %v4239 = vmul.f32 %v3202, %v4073
      %v4240 = vmul.f32 %v3204, %v4073
      %v4241 = vmul.f32 %v3207, %v4073
      %v4242 = vmul.f32 %v3209, %v4073
      %v4243 = vmul.f32 %v3212, %v4073
      %v4244 = vmul.f32 %v3214, %v4073
      %v4245 = vmul.f32 %v3217, %v4073
      %v4246 = vmul.f32 %v3219, %v4073
      %v4247 = vmul.f32 %v3222, %v4073
      %v4248 = vmul.f32 %v3224, %v4073
      %v4249 = vmul.f32 %v3227, %v4073
      %v4250 = vmul.f32 %v3229, %v4073
      %v4251 = vmul.f32 %v3232, %v4073
      %v4252 = vmul.f32 %v3234, %v4073
      %v4253 = vmul.f32 %v3237, %v4073
      %v4254 = vmul.f32 %v3239, %v4073
      %v4255 = vmul.f32 %v3242, %v4073
      %v4256 = vmul.f32 %v3244, %v4073
      %v4257 = vmul.f32 %v3247, %v4073
      %v4258 = vmul.f32 %v3249, %v4073
      %v4259 = vmul.f32 %v3252, %v4073
      %v4260 = vmul.f32 %v3254, %v4073
      %v4261 = vmul.f32 %v3257, %v4073
      %v4262 = vmul.f32 %v3259, %v4073
      %v4263 = vmul.f32 %v3262, %v4073
      %v4264 = vmul.f32 %v3264, %v4073
      %v4265 = vmul.f32 %v3267, %v4073
      %v4266 = vmul.f32 %v3269, %v4073
      %v4267 = vmul.f32 %v3272, %v4073
      %v4268 = vmul.f32 %v3274, %v4073
      %v4269 = vmul.f32 %v3277, %v4073
      %v4270 = vmul.f32 %v3279, %v4073
      %v4271 = vmul.f32 %v3282, %v4073
      %v4272 = vmul.f32 %v3284, %v4073
      %v4273 = vmul.f32 %v3287, %v4073
      %v4274 = vmul.f32 %v3289, %v4073
      %v4275 = vmul.f32 %v3292, %v4073
      %v4276 = vmul.f32 %v3294, %v4073
      %v4277 = vmul.f32 %v3297, %v4073
      %v4278 = vmul.f32 %v3299, %v4073
      %v4279 = vmul.f32 %v3302, %v4073
      %v4280 = vmul.f32 %v3304, %v4073
      %v4281 = vmul.f32 %v3307, %v4073
      %v4282 = vmul.f32 %v3309, %v4073
      %v4283 = vmul.f32 %v3312, %v4073
      %v4284 = vmul.f32 %v3314, %v4073
      %v4285 = vmul.f32 %v3317, %v4073
      %v4286 = vmul.f32 %v3319, %v4073
      %v4287 = vmul.f32 %v3322, %v4073
      %v4288 = vmul.f32 %v3324, %v4073
      %v4289 = vmul.f32 %v3327, %v4073
      %v4290 = vmul.f32 %v3329, %v4073
      %v4291 = vmul.f32 %v3332, %v4073
      %v4292 = vmul.f32 %v3334, %v4073
      %v4293 = vmul.f32 %v3337, %v4073
      %v4294 = vmul.f32 %v3339, %v4073
      %v4295 = vmul.f32 %v3342, %v4073
      %v4296 = vmul.f32 %v3344, %v4073
      %v4297 = vmul.f32 %v3347, %v4073
      %v4298 = vmul.f32 %v3349, %v4073
      %v4299 = vmul.f32 %v3352, %v4073
      %v4300 = vmul.f32 %v3354, %v4073
      %v4301 = vmul.f32 %v3357, %v4073
      %v4302 = vmul.f32 %v3359, %v4073
      %v4303 = vmul.f32 %v3362, %v4073
      %v4304 = vmul.f32 %v3364, %v4073
      %v4305 = vmul.f32 %v3367, %v4073
      %v4306 = vmul.f32 %v3369, %v4073
      %v4307 = vmul.f32 %v3372, %v4073
      %v4308 = vmul.f32 %v3374, %v4073
      %v4309 = vmul.f32 %v3377, %v4073
      %v4310 = vmul.f32 %v3379, %v4073
      %v4311 = vmul.f32 %v3382, %v4073
      %v4312 = vmul.f32 %v3384, %v4073
      %v4313 = vmul.f32 %v3387, %v4073
      %v4314 = vmul.f32 %v3389, %v4073
      %v4315 = vmul.f32 %v3392, %v4073
      %v4316 = vmul.f32 %v3394, %v4073
      %v4317 = vmul.f32 %v3397, %v4073
      %v4318 = vmul.f32 %v3399, %v4073
      %v4319 = vmul.f32 %v3402, %v4073
      %v4320 = vmul.f32 %v3404, %v4073
      %v4321 = vmul.f32 %v3407, %v4073
      %v4322 = vmul.f32 %v3409, %v4073
      %v4323 = vmul.f32 %v3412, %v4073
      %v4324 = vmul.f32 %v3414, %v4073
      %v4325 = vmul.f32 %v3417, %v4073
      %v4326 = vmul.f32 %v3419, %v4073
      %v4327 = vmul.f32 %v3422, %v4073
      %v4328 = vmul.f32 %v3424, %v4073
      %v4329 = vmul.f32 %v3427, %v4073
      %v4330 = vmul.f32 %v3429, %v4073
      %v4331 = vmul.f32 %v3432, %v4073
      %v4332 = vmul.f32 %v3434, %v4073
      %v4333 = vmul.f32 %v3437, %v4073
      %v4334 = vmul.f32 %v3439, %v4073
      %v4335 = vmul.f32 %v3442, %v4073
      %v4336 = vmul.f32 %v3444, %v4073
      %v4337 = vmul.f32 %v3447, %v4073
      %v4338 = vmul.f32 %v3449, %v4073
      %v4339 = vmul.f32 %v3452, %v4073
      %v4340 = vmul.f32 %v3454, %v4073
      %v4341 = vmul.f32 %v3457, %v4073
      %v4342 = vmul.f32 %v3459, %v4073
      %v4343 = vmul.f32 %v3462, %v4073
      %v4344 = vmul.f32 %v3464, %v4073
      %v4345 = vmul.f32 %v3467, %v4073
      %v4346 = vmul.f32 %v3469, %v4073
      %v4347 = vmul.f32 %v3472, %v4073
      %v4348 = vmul.f32 %v3474, %v4073
      %v4349 = vmul.f32 %v3477, %v4073
      %v4350 = vmul.f32 %v3479, %v4073
      %v4351 = vmul.f32 %v3482, %v4073
      %v4352 = vmul.f32 %v3484, %v4073
      %v4353 = vmul.f32 %v3487, %v4073
      %v4354 = vmul.f32 %v3489, %v4073
      %v4355 = vmul.f32 %v3492, %v4073
      %v4356 = vmul.f32 %v3494, %v4073
      %v4357 = vmul.f32 %v3497, %v4073
      %v4358 = vmul.f32 %v3499, %v4073
      %v4359 = vmul.f32 %v3502, %v4073
      %v4360 = vmul.f32 %v3504, %v4073
      %v4361 = vmul.f32 %v3507, %v4073
      %v4362 = vmul.f32 %v3509, %v4073
      %v4363 = vmul.f32 %v3512, %v4073
      %v4364 = vmul.f32 %v3514, %v4073
      %v4365 = vmul.f32 %v3517, %v4073
      %v4366 = vmul.f32 %v3519, %v4073
      %v4367 = vmul.f32 %v3522, %v4073
      %v4368 = vmul.f32 %v3524, %v4073
      %v4369 = vmul.f32 %v3527, %v4073
      %v4370 = vmul.f32 %v3529, %v4073
      %v4371 = vmul.f32 %v3532, %v4073
      %v4372 = vmul.f32 %v3534, %v4073
      %v4373 = vmul.f32 %v3537, %v4073
      %v4374 = vmul.f32 %v3539, %v4073
      %v4375 = vmul.f32 %v3542, %v4073
      %v4376 = vmul.f32 %v3544, %v4073
      %v4377 = vmul.f32 %v3547, %v4073
      %v4378 = vmul.f32 %v3549, %v4073
      %v4379 = vmul.f32 %v3552, %v4073
      %v4380 = vmul.f32 %v3554, %v4073
      %v4381 = vmul.f32 %v3557, %v4073
      %v4382 = vmul.f32 %v3559, %v4073
      %v4383 = vmul.f32 %v3562, %v4073
      %v4384 = vmul.f32 %v3564, %v4073
      %v4385 = vmul.f32 %v3567, %v4073
      %v4386 = vmul.f32 %v3569, %v4073
      %v4387 = vmul.f32 %v3572, %v4073
      %v4388 = vmul.f32 %v3574, %v4073
      %v4389 = vmul.f32 %v3577, %v4073
      %v4390 = vmul.f32 %v3579, %v4073
      %v4391 = vmul.f32 %v3582, %v4073
      %v4392 = vmul.f32 %v3584, %v4073
      %v4393 = vmul.f32 %v3587, %v4073
      %v4394 = vmul.f32 %v3589, %v4073
      %v4395 = vmul.f32 %v3592, %v4073
      %v4396 = vmul.f32 %v3594, %v4073
      %v4397 = vmul.f32 %v3597, %v4073
      %v4398 = vmul.f32 %v3599, %v4073
      %v4399 = vmul.f32 %v3602, %v4073
      %v4400 = vmul.f32 %v3604, %v4073
      %v4401 = vmul.f32 %v3607, %v4073
      %v4402 = vmul.f32 %v3609, %v4073
      %v4403 = vmul.f32 %v3612, %v4073
      %v4404 = vmul.f32 %v3614, %v4073
      %v4405 = vmul.f32 %v3617, %v4073
      %v4406 = vmul.f32 %v3619, %v4073
      %v4407 = vmul.f32 %v3622, %v4073
      %v4408 = vmul.f32 %v3624, %v4073
      %v4409 = vmul.f32 %v3627, %v4073
      %v4410 = vmul.f32 %v3629, %v4073
      %v4411 = vmul.f32 %v3632, %v4073
      %v4412 = vmul.f32 %v3634, %v4073
      %v4413 = vmul.f32 %v3637, %v4073
      %v4414 = vmul.f32 %v3639, %v4073
      %v4415 = vmul.f32 %v3642, %v4073
      %v4416 = vmul.f32 %v3644, %v4073
      %v4417 = vmul.f32 %v3647, %v4073
      %v4418 = vmul.f32 %v3649, %v4073
      %v4419 = vmul.f32 %v3652, %v4073
      %v4420 = vmul.f32 %v3654, %v4073
      %v4421 = vmul.f32 %v3657, %v4073
      %v4422 = vmul.f32 %v3659, %v4073
      %v4423 = vmul.f32 %v3662, %v4073
      %v4424 = vmul.f32 %v3664, %v4073
      %v4425 = vmul.f32 %v3667, %v4073
      %v4426 = vmul.f32 %v3669, %v4073
      %v4427 = vmul.f32 %v3672, %v4073
      %v4428 = vmul.f32 %v3674, %v4073
      %v4429 = vmul.f32 %v3677, %v4073
      %v4430 = vmul.f32 %v3679, %v4073
      %v4431 = vmul.f32 %v3682, %v4073
      %v4432 = vmul.f32 %v3684, %v4073
      %v4433 = vmul.f32 %v3687, %v4073
      %v4434 = vmul.f32 %v3689, %v4073
      %v4435 = vmul.f32 %v3692, %v4073
      %v4436 = vmul.f32 %v3694, %v4073
      %v4437 = vmul.f32 %v3697, %v4073
      %v4438 = vmul.f32 %v3699, %v4073
      %v4439 = vmul.f32 %v3702, %v4073
      %v4440 = vmul.f32 %v3704, %v4073
      %v4441 = vmul.f32 %v3707, %v4073
      %v4442 = vmul.f32 %v3709, %v4073
      %v4443 = vmul.f32 %v3712, %v4073
      %v4444 = vmul.f32 %v3714, %v4073
      %v4445 = vmul.f32 %v3717, %v4073
      %v4446 = vmul.f32 %v3719, %v4073
      %v4447 = vmul.f32 %v3722, %v4073
      %v4448 = vmul.f32 %v3724, %v4073
      %v4449 = vmul.f32 %v3727, %v4073
      %v4450 = vmul.f32 %v3729, %v4073
      %v4451 = vmul.f32 %v3732, %v4073
      %v4452 = vmul.f32 %v3734, %v4073
      %v4453 = vmul.f32 %v3737, %v4073
      %v4454 = vmul.f32 %v3739, %v4073
      %v4455 = vmul.f32 %v3742, %v4073
      %v4456 = vmul.f32 %v3744, %v4073
      %v4457 = vmul.f32 %v3747, %v4073
      %v4458 = vmul.f32 %v3749, %v4073
      %v4459 = vmul.f32 %v3752, %v4073
      %v4460 = vmul.f32 %v3754, %v4073
      %v4461 = vmul.f32 %v3757, %v4073
      %v4462 = vmul.f32 %v3759, %v4073
      %v4463 = vmul.f32 %v3762, %v4073
      %v4464 = vmul.f32 %v3764, %v4073
      %v4465 = vmul.f32 %v3767, %v4073
      %v4466 = vmul.f32 %v3769, %v4073
      %v4467 = vmul.f32 %v3772, %v4073
      %v4468 = vmul.f32 %v3774, %v4073
      %v4469 = vmul.f32 %v3777, %v4073
      %v4470 = vmul.f32 %v3779, %v4073
      %v4471 = vmul.f32 %v3782, %v4073
      %v4472 = vmul.f32 %v3784, %v4073
      %v4473 = vmul.f32 %v3787, %v4073
      %v4474 = vmul.f32 %v3789, %v4073
      %v4475 = vmul.f32 %v3792, %v4073
      %v4476 = vmul.f32 %v3794, %v4073
      %v4477 = vmul.f32 %v3797, %v4073
      %v4478 = vmul.f32 %v3799, %v4073
      %v4479 = vmul.f32 %v3802, %v4073
      %v4480 = vmul.f32 %v3804, %v4073
      %v4481 = vmul.f32 %v3807, %v4073
      %v4482 = vmul.f32 %v3809, %v4073
      %v4483 = vmul.f32 %v3812, %v4073
      %v4484 = vmul.f32 %v3814, %v4073
      %v4485 = vmul.f32 %v3817, %v4073
      %v4486 = vmul.f32 %v3819, %v4073
      %v4487 = vmul.f32 %v3822, %v4073
      %v4488 = vmul.f32 %v3824, %v4073
      %v4489 = vmul.f32 %v3827, %v4073
      %v4490 = vmul.f32 %v3829, %v4073
      %v4491 = vmul.f32 %v3832, %v4073
      %v4492 = vmul.f32 %v3834, %v4073
      %v4493 = vmul.f32 %v3837, %v4073
      %v4494 = vmul.f32 %v3839, %v4073
      %v4495 = vmul.f32 %v3842, %v4073
      %v4496 = vmul.f32 %v3844, %v4073
      %v4497 = vmul.f32 %v3847, %v4073
      %v4498 = vmul.f32 %v3849, %v4073
      %v4499 = vmul.f32 %v3852, %v4073
      %v4500 = vmul.f32 %v3854, %v4073
      %v4501 = vmul.f32 %v3857, %v4073
      %v4502 = vmul.f32 %v3859, %v4073
      %v4503 = vmul.f32 %v3862, %v4073
      %v4504 = vmul.f32 %v3864, %v4073
      %v4505 = vmul.f32 %v3867, %v4073
      %v4506 = vmul.f32 %v3869, %v4073
      %v4507 = vmul.f32 %v3872, %v4073
      %v4508 = vmul.f32 %v3874, %v4073
      %v4509 = vmul.f32 %v3877, %v4073
      %v4510 = vmul.f32 %v3879, %v4073
      %v4511 = vmul.f32 %v3882, %v4073
      %v4512 = vmul.f32 %v3884, %v4073
      %v4513 = vmul.f32 %v3887, %v4073
      %v4514 = vmul.f32 %v3889, %v4073
      %v4515 = vmul.f32 %v3892, %v4073
      %v4516 = vmul.f32 %v3894, %v4073
      %v4517 = vmul.f32 %v3897, %v4073
      %v4518 = vmul.f32 %v3899, %v4073
      %v4519 = vmul.f32 %v3902, %v4073
      %v4520 = vmul.f32 %v3904, %v4073
      %v4521 = vmul.f32 %v3907, %v4073
      %v4522 = vmul.f32 %v3909, %v4073
      %v4523 = vmul.f32 %v3912, %v4073
      %v4524 = vmul.f32 %v3914, %v4073
      %v4525 = vmul.f32 %v3917, %v4073
      %v4526 = vmul.f32 %v3919, %v4073
      %v4527 = vmul.f32 %v3922, %v4073
      %v4528 = vmul.f32 %v3924, %v4073
      %v4529 = vmul.f32 %v3927, %v4073
      %v4530 = vmul.f32 %v3929, %v4073
      %v4531 = vmul.f32 %v3932, %v4073
      %v4532 = vmul.f32 %v3934, %v4073
      %v4533 = vmul.f32 %v3937, %v4073
      %v4534 = vmul.f32 %v3939, %v4073
      %v4535 = vmul.f32 %v3942, %v4073
      %v4536 = vmul.f32 %v3944, %v4073
      %v4537 = vmul.f32 %v3947, %v4073
      %v4538 = vmul.f32 %v3949, %v4073
      %v4539 = vmul.f32 %v3952, %v4073
      %v4540 = vmul.f32 %v3954, %v4073
      %v4541 = vmul.f32 %v3957, %v4073
      %v4542 = vmul.f32 %v3959, %v4073
      %v4543 = vmul.f32 %v3962, %v4073
      %v4544 = vmul.f32 %v3964, %v4073
      %v4545 = vmul.f32 %v3967, %v4073
      %v4546 = vmul.f32 %v3969, %v4073
      %v4547 = vmul.f32 %v3972, %v4073
      %v4548 = vmul.f32 %v3974, %v4073
      %v4549 = vmul.f32 %v3977, %v4073
      %v4550 = vmul.f32 %v3979, %v4073
      %v4551 = vmul.f32 %v3982, %v4073
      %v4552 = vmul.f32 %v3984, %v4073
      %v4553 = vmul.f32 %v3987, %v4073
      %v4554 = vmul.f32 %v3989, %v4073
      %v4555 = vmul.f32 %v3992, %v4073
      %v4556 = vmul.f32 %v3994, %v4073
      %v4557 = vmul.f32 %v3997, %v4073
      %v4558 = vmul.f32 %v3999, %v4073
      %v4559 = vmul.f32 %v4002, %v4073
      %v4560 = vmul.f32 %v4004, %v4073
      %v4561 = vmul.f32 %v4007, %v4073
      %v4562 = vmul.f32 %v4009, %v4073
      %v4563 = vmul.f32 %v4012, %v4073
      %v4564 = vmul.f32 %v4014, %v4073
      %v4565 = vmul.f32 %v4017, %v4073
      %v4566 = vmul.f32 %v4019, %v4073
      %v4567 = vmul.f32 %v4022, %v4073
      %v4568 = vmul.f32 %v4024, %v4073
      %v4569 = vmul.f32 %v4027, %v4073
      %v4570 = vmul.f32 %v4029, %v4073
      %v4571 = vmul.f32 %v4032, %v4073
      %v4572 = vmul.f32 %v4034, %v4073
      %v4573 = vmul.f32 %v4037, %v4073
      %v4574 = vmul.f32 %v4039, %v4073
      %v4575 = vmul.f32 %v4042, %v4073
      %v4576 = vmul.f32 %v4044, %v4073
      %v4577 = vmul.f32 %v4047, %v4073
      %v4578 = vmul.f32 %v4049, %v4073
      %v4579 = vmul.f32 %v4052, %v4073
      %v4580 = vmul.f32 %v4054, %v4073
      %v4581 = vmul.f32 %v4057, %v4073
      %v4582 = vmul.f32 %v4059, %v4073
      %v4583 = vmul.f32 %v4062, %v4073
      %v4584 = vmul.f32 %v4064, %v4073
      %v4585 = vmul.f32 %v4067, %v4073
      %v4586 = vmul.f32 %v4069, %v4073
      %v4587 = vld [vmem:[%s3] sm:$0x1]
      %v4589 = vperm.slane %v4587, 0
      %v4591 = vadd.f32 %v4075, %v4589
      %v4592 = vadd.f32 %v4076, %v4589
      %v4593 = vadd.f32 %v4077, %v4589
      %v4594 = vadd.f32 %v4078, %v4589
      %v4595 = vadd.f32 %v4079, %v4589
      %v4596 = vadd.f32 %v4080, %v4589
      %v4597 = vadd.f32 %v4081, %v4589
      %v4598 = vadd.f32 %v4082, %v4589
      %v4599 = vadd.f32 %v4083, %v4589
      %v4600 = vadd.f32 %v4084, %v4589
      %v4601 = vadd.f32 %v4085, %v4589
      %v4602 = vadd.f32 %v4086, %v4589
      %v4603 = vadd.f32 %v4087, %v4589
      %v4604 = vadd.f32 %v4088, %v4589
      %v4605 = vadd.f32 %v4089, %v4589
      %v4606 = vadd.f32 %v4090, %v4589
      %v4607 = vadd.f32 %v4091, %v4589
      %v4608 = vadd.f32 %v4092, %v4589
      %v4609 = vadd.f32 %v4093, %v4589
      %v4610 = vadd.f32 %v4094, %v4589
      %v4611 = vadd.f32 %v4095, %v4589
      %v4612 = vadd.f32 %v4096, %v4589
      %v4613 = vadd.f32 %v4097, %v4589
      %v4614 = vadd.f32 %v4098, %v4589
      %v4615 = vadd.f32 %v4099, %v4589
      %v4616 = vadd.f32 %v4100, %v4589
      %v4617 = vadd.f32 %v4101, %v4589
      %v4618 = vadd.f32 %v4102, %v4589
      %v4619 = vadd.f32 %v4103, %v4589
      %v4620 = vadd.f32 %v4104, %v4589
      %v4621 = vadd.f32 %v4105, %v4589
      %v4622 = vadd.f32 %v4106, %v4589
      %v4623 = vadd.f32 %v4107, %v4589
      %v4624 = vadd.f32 %v4108, %v4589
      %v4625 = vadd.f32 %v4109, %v4589
      %v4626 = vadd.f32 %v4110, %v4589
      %v4627 = vadd.f32 %v4111, %v4589
      %v4628 = vadd.f32 %v4112, %v4589
      %v4629 = vadd.f32 %v4113, %v4589
      %v4630 = vadd.f32 %v4114, %v4589
      %v4631 = vadd.f32 %v4115, %v4589
      %v4632 = vadd.f32 %v4116, %v4589
      %v4633 = vadd.f32 %v4117, %v4589
      %v4634 = vadd.f32 %v4118, %v4589
      %v4635 = vadd.f32 %v4119, %v4589
      %v4636 = vadd.f32 %v4120, %v4589
      %v4637 = vadd.f32 %v4121, %v4589
      %v4638 = vadd.f32 %v4122, %v4589
      %v4639 = vadd.f32 %v4123, %v4589
      %v4640 = vadd.f32 %v4124, %v4589
      %v4641 = vadd.f32 %v4125, %v4589
      %v4642 = vadd.f32 %v4126, %v4589
      %v4643 = vadd.f32 %v4127, %v4589
      %v4644 = vadd.f32 %v4128, %v4589
      %v4645 = vadd.f32 %v4129, %v4589
      %v4646 = vadd.f32 %v4130, %v4589
      %v4647 = vadd.f32 %v4131, %v4589
      %v4648 = vadd.f32 %v4132, %v4589
      %v4649 = vadd.f32 %v4133, %v4589
      %v4650 = vadd.f32 %v4134, %v4589
      %v4651 = vadd.f32 %v4135, %v4589
      %v4652 = vadd.f32 %v4136, %v4589
      %v4653 = vadd.f32 %v4137, %v4589
      %v4654 = vadd.f32 %v4138, %v4589
      %v4655 = vadd.f32 %v4139, %v4589
      %v4656 = vadd.f32 %v4140, %v4589
      %v4657 = vadd.f32 %v4141, %v4589
      %v4658 = vadd.f32 %v4142, %v4589
      %v4659 = vadd.f32 %v4143, %v4589
      %v4660 = vadd.f32 %v4144, %v4589
      %v4661 = vadd.f32 %v4145, %v4589
      %v4662 = vadd.f32 %v4146, %v4589
      %v4663 = vadd.f32 %v4147, %v4589
      %v4664 = vadd.f32 %v4148, %v4589
      %v4665 = vadd.f32 %v4149, %v4589
      %v4666 = vadd.f32 %v4150, %v4589
      %v4667 = vadd.f32 %v4151, %v4589
      %v4668 = vadd.f32 %v4152, %v4589
      %v4669 = vadd.f32 %v4153, %v4589
      %v4670 = vadd.f32 %v4154, %v4589
      %v4671 = vadd.f32 %v4155, %v4589
      %v4672 = vadd.f32 %v4156, %v4589
      %v4673 = vadd.f32 %v4157, %v4589
      %v4674 = vadd.f32 %v4158, %v4589
      %v4675 = vadd.f32 %v4159, %v4589
      %v4676 = vadd.f32 %v4160, %v4589
      %v4677 = vadd.f32 %v4161, %v4589
      %v4678 = vadd.f32 %v4162, %v4589
      %v4679 = vadd.f32 %v4163, %v4589
      %v4680 = vadd.f32 %v4164, %v4589
      %v4681 = vadd.f32 %v4165, %v4589
      %v4682 = vadd.f32 %v4166, %v4589
      %v4683 = vadd.f32 %v4167, %v4589
      %v4684 = vadd.f32 %v4168, %v4589
      %v4685 = vadd.f32 %v4169, %v4589
      %v4686 = vadd.f32 %v4170, %v4589
      %v4687 = vadd.f32 %v4171, %v4589
      %v4688 = vadd.f32 %v4172, %v4589
      %v4689 = vadd.f32 %v4173, %v4589
      %v4690 = vadd.f32 %v4174, %v4589
      %v4691 = vadd.f32 %v4175, %v4589
      %v4692 = vadd.f32 %v4176, %v4589
      %v4693 = vadd.f32 %v4177, %v4589
      %v4694 = vadd.f32 %v4178, %v4589
      %v4695 = vadd.f32 %v4179, %v4589
      %v4696 = vadd.f32 %v4180, %v4589
      %v4697 = vadd.f32 %v4181, %v4589
      %v4698 = vadd.f32 %v4182, %v4589
      %v4699 = vadd.f32 %v4183, %v4589
      %v4700 = vadd.f32 %v4184, %v4589
      %v4701 = vadd.f32 %v4185, %v4589
      %v4702 = vadd.f32 %v4186, %v4589
      %v4703 = vadd.f32 %v4187, %v4589
      %v4704 = vadd.f32 %v4188, %v4589
      %v4705 = vadd.f32 %v4189, %v4589
      %v4706 = vadd.f32 %v4190, %v4589
      %v4707 = vadd.f32 %v4191, %v4589
      %v4708 = vadd.f32 %v4192, %v4589
      %v4709 = vadd.f32 %v4193, %v4589
      %v4710 = vadd.f32 %v4194, %v4589
      %v4711 = vadd.f32 %v4195, %v4589
      %v4712 = vadd.f32 %v4196, %v4589
      %v4713 = vadd.f32 %v4197, %v4589
      %v4714 = vadd.f32 %v4198, %v4589
      %v4715 = vadd.f32 %v4199, %v4589
      %v4716 = vadd.f32 %v4200, %v4589
      %v4717 = vadd.f32 %v4201, %v4589
      %v4718 = vadd.f32 %v4202, %v4589
      %v4719 = vadd.f32 %v4203, %v4589
      %v4720 = vadd.f32 %v4204, %v4589
      %v4721 = vadd.f32 %v4205, %v4589
      %v4722 = vadd.f32 %v4206, %v4589
      %v4723 = vadd.f32 %v4207, %v4589
      %v4724 = vadd.f32 %v4208, %v4589
      %v4725 = vadd.f32 %v4209, %v4589
      %v4726 = vadd.f32 %v4210, %v4589
      %v4727 = vadd.f32 %v4211, %v4589
      %v4728 = vadd.f32 %v4212, %v4589
      %v4729 = vadd.f32 %v4213, %v4589
      %v4730 = vadd.f32 %v4214, %v4589
      %v4731 = vadd.f32 %v4215, %v4589
      %v4732 = vadd.f32 %v4216, %v4589
      %v4733 = vadd.f32 %v4217, %v4589
      %v4734 = vadd.f32 %v4218, %v4589
      %v4735 = vadd.f32 %v4219, %v4589
      %v4736 = vadd.f32 %v4220, %v4589
      %v4737 = vadd.f32 %v4221, %v4589
      %v4738 = vadd.f32 %v4222, %v4589
      %v4739 = vadd.f32 %v4223, %v4589
      %v4740 = vadd.f32 %v4224, %v4589
      %v4741 = vadd.f32 %v4225, %v4589
      %v4742 = vadd.f32 %v4226, %v4589
      %v4743 = vadd.f32 %v4227, %v4589
      %v4744 = vadd.f32 %v4228, %v4589
      %v4745 = vadd.f32 %v4229, %v4589
      %v4746 = vadd.f32 %v4230, %v4589
      %v4747 = vadd.f32 %v4231, %v4589
      %v4748 = vadd.f32 %v4232, %v4589
      %v4749 = vadd.f32 %v4233, %v4589
      %v4750 = vadd.f32 %v4234, %v4589
      %v4751 = vadd.f32 %v4235, %v4589
      %v4752 = vadd.f32 %v4236, %v4589
      %v4753 = vadd.f32 %v4237, %v4589
      %v4754 = vadd.f32 %v4238, %v4589
      %v4755 = vadd.f32 %v4239, %v4589
      %v4756 = vadd.f32 %v4240, %v4589
      %v4757 = vadd.f32 %v4241, %v4589
      %v4758 = vadd.f32 %v4242, %v4589
      %v4759 = vadd.f32 %v4243, %v4589
      %v4760 = vadd.f32 %v4244, %v4589
      %v4761 = vadd.f32 %v4245, %v4589
      %v4762 = vadd.f32 %v4246, %v4589
      %v4763 = vadd.f32 %v4247, %v4589
      %v4764 = vadd.f32 %v4248, %v4589
      %v4765 = vadd.f32 %v4249, %v4589
      %v4766 = vadd.f32 %v4250, %v4589
      %v4767 = vadd.f32 %v4251, %v4589
      %v4768 = vadd.f32 %v4252, %v4589
      %v4769 = vadd.f32 %v4253, %v4589
      %v4770 = vadd.f32 %v4254, %v4589
      %v4771 = vadd.f32 %v4255, %v4589
      %v4772 = vadd.f32 %v4256, %v4589
      %v4773 = vadd.f32 %v4257, %v4589
      %v4774 = vadd.f32 %v4258, %v4589
      %v4775 = vadd.f32 %v4259, %v4589
      %v4776 = vadd.f32 %v4260, %v4589
      %v4777 = vadd.f32 %v4261, %v4589
      %v4778 = vadd.f32 %v4262, %v4589
      %v4779 = vadd.f32 %v4263, %v4589
      %v4780 = vadd.f32 %v4264, %v4589
      %v4781 = vadd.f32 %v4265, %v4589
      %v4782 = vadd.f32 %v4266, %v4589
      %v4783 = vadd.f32 %v4267, %v4589
      %v4784 = vadd.f32 %v4268, %v4589
      %v4785 = vadd.f32 %v4269, %v4589
      %v4786 = vadd.f32 %v4270, %v4589
      %v4787 = vadd.f32 %v4271, %v4589
      %v4788 = vadd.f32 %v4272, %v4589
      %v4789 = vadd.f32 %v4273, %v4589
      %v4790 = vadd.f32 %v4274, %v4589
      %v4791 = vadd.f32 %v4275, %v4589
      %v4792 = vadd.f32 %v4276, %v4589
      %v4793 = vadd.f32 %v4277, %v4589
      %v4794 = vadd.f32 %v4278, %v4589
      %v4795 = vadd.f32 %v4279, %v4589
      %v4796 = vadd.f32 %v4280, %v4589
      %v4797 = vadd.f32 %v4281, %v4589
      %v4798 = vadd.f32 %v4282, %v4589
      %v4799 = vadd.f32 %v4283, %v4589
      %v4800 = vadd.f32 %v4284, %v4589
      %v4801 = vadd.f32 %v4285, %v4589
      %v4802 = vadd.f32 %v4286, %v4589
      %v4803 = vadd.f32 %v4287, %v4589
      %v4804 = vadd.f32 %v4288, %v4589
      %v4805 = vadd.f32 %v4289, %v4589
      %v4806 = vadd.f32 %v4290, %v4589
      %v4807 = vadd.f32 %v4291, %v4589
      %v4808 = vadd.f32 %v4292, %v4589
      %v4809 = vadd.f32 %v4293, %v4589
      %v4810 = vadd.f32 %v4294, %v4589
      %v4811 = vadd.f32 %v4295, %v4589
      %v4812 = vadd.f32 %v4296, %v4589
      %v4813 = vadd.f32 %v4297, %v4589
      %v4814 = vadd.f32 %v4298, %v4589
      %v4815 = vadd.f32 %v4299, %v4589
      %v4816 = vadd.f32 %v4300, %v4589
      %v4817 = vadd.f32 %v4301, %v4589
      %v4818 = vadd.f32 %v4302, %v4589
      %v4819 = vadd.f32 %v4303, %v4589
      %v4820 = vadd.f32 %v4304, %v4589
      %v4821 = vadd.f32 %v4305, %v4589
      %v4822 = vadd.f32 %v4306, %v4589
      %v4823 = vadd.f32 %v4307, %v4589
      %v4824 = vadd.f32 %v4308, %v4589
      %v4825 = vadd.f32 %v4309, %v4589
      %v4826 = vadd.f32 %v4310, %v4589
      %v4827 = vadd.f32 %v4311, %v4589
      %v4828 = vadd.f32 %v4312, %v4589
      %v4829 = vadd.f32 %v4313, %v4589
      %v4830 = vadd.f32 %v4314, %v4589
      %v4831 = vadd.f32 %v4315, %v4589
      %v4832 = vadd.f32 %v4316, %v4589
      %v4833 = vadd.f32 %v4317, %v4589
      %v4834 = vadd.f32 %v4318, %v4589
      %v4835 = vadd.f32 %v4319, %v4589
      %v4836 = vadd.f32 %v4320, %v4589
      %v4837 = vadd.f32 %v4321, %v4589
      %v4838 = vadd.f32 %v4322, %v4589
      %v4839 = vadd.f32 %v4323, %v4589
      %v4840 = vadd.f32 %v4324, %v4589
      %v4841 = vadd.f32 %v4325, %v4589
      %v4842 = vadd.f32 %v4326, %v4589
      %v4843 = vadd.f32 %v4327, %v4589
      %v4844 = vadd.f32 %v4328, %v4589
      %v4845 = vadd.f32 %v4329, %v4589
      %v4846 = vadd.f32 %v4330, %v4589
      %v4847 = vadd.f32 %v4331, %v4589
      %v4848 = vadd.f32 %v4332, %v4589
      %v4849 = vadd.f32 %v4333, %v4589
      %v4850 = vadd.f32 %v4334, %v4589
      %v4851 = vadd.f32 %v4335, %v4589
      %v4852 = vadd.f32 %v4336, %v4589
      %v4853 = vadd.f32 %v4337, %v4589
      %v4854 = vadd.f32 %v4338, %v4589
      %v4855 = vadd.f32 %v4339, %v4589
      %v4856 = vadd.f32 %v4340, %v4589
      %v4857 = vadd.f32 %v4341, %v4589
      %v4858 = vadd.f32 %v4342, %v4589
      %v4859 = vadd.f32 %v4343, %v4589
      %v4860 = vadd.f32 %v4344, %v4589
      %v4861 = vadd.f32 %v4345, %v4589
      %v4862 = vadd.f32 %v4346, %v4589
      %v4863 = vadd.f32 %v4347, %v4589
      %v4864 = vadd.f32 %v4348, %v4589
      %v4865 = vadd.f32 %v4349, %v4589
      %v4866 = vadd.f32 %v4350, %v4589
      %v4867 = vadd.f32 %v4351, %v4589
      %v4868 = vadd.f32 %v4352, %v4589
      %v4869 = vadd.f32 %v4353, %v4589
      %v4870 = vadd.f32 %v4354, %v4589
      %v4871 = vadd.f32 %v4355, %v4589
      %v4872 = vadd.f32 %v4356, %v4589
      %v4873 = vadd.f32 %v4357, %v4589
      %v4874 = vadd.f32 %v4358, %v4589
      %v4875 = vadd.f32 %v4359, %v4589
      %v4876 = vadd.f32 %v4360, %v4589
      %v4877 = vadd.f32 %v4361, %v4589
      %v4878 = vadd.f32 %v4362, %v4589
      %v4879 = vadd.f32 %v4363, %v4589
      %v4880 = vadd.f32 %v4364, %v4589
      %v4881 = vadd.f32 %v4365, %v4589
      %v4882 = vadd.f32 %v4366, %v4589
      %v4883 = vadd.f32 %v4367, %v4589
      %v4884 = vadd.f32 %v4368, %v4589
      %v4885 = vadd.f32 %v4369, %v4589
      %v4886 = vadd.f32 %v4370, %v4589
      %v4887 = vadd.f32 %v4371, %v4589
      %v4888 = vadd.f32 %v4372, %v4589
      %v4889 = vadd.f32 %v4373, %v4589
      %v4890 = vadd.f32 %v4374, %v4589
      %v4891 = vadd.f32 %v4375, %v4589
      %v4892 = vadd.f32 %v4376, %v4589
      %v4893 = vadd.f32 %v4377, %v4589
      %v4894 = vadd.f32 %v4378, %v4589
      %v4895 = vadd.f32 %v4379, %v4589
      %v4896 = vadd.f32 %v4380, %v4589
      %v4897 = vadd.f32 %v4381, %v4589
      %v4898 = vadd.f32 %v4382, %v4589
      %v4899 = vadd.f32 %v4383, %v4589
      %v4900 = vadd.f32 %v4384, %v4589
      %v4901 = vadd.f32 %v4385, %v4589
      %v4902 = vadd.f32 %v4386, %v4589
      %v4903 = vadd.f32 %v4387, %v4589
      %v4904 = vadd.f32 %v4388, %v4589
      %v4905 = vadd.f32 %v4389, %v4589
      %v4906 = vadd.f32 %v4390, %v4589
      %v4907 = vadd.f32 %v4391, %v4589
      %v4908 = vadd.f32 %v4392, %v4589
      %v4909 = vadd.f32 %v4393, %v4589
      %v4910 = vadd.f32 %v4394, %v4589
      %v4911 = vadd.f32 %v4395, %v4589
      %v4912 = vadd.f32 %v4396, %v4589
      %v4913 = vadd.f32 %v4397, %v4589
      %v4914 = vadd.f32 %v4398, %v4589
      %v4915 = vadd.f32 %v4399, %v4589
      %v4916 = vadd.f32 %v4400, %v4589
      %v4917 = vadd.f32 %v4401, %v4589
      %v4918 = vadd.f32 %v4402, %v4589
      %v4919 = vadd.f32 %v4403, %v4589
      %v4920 = vadd.f32 %v4404, %v4589
      %v4921 = vadd.f32 %v4405, %v4589
      %v4922 = vadd.f32 %v4406, %v4589
      %v4923 = vadd.f32 %v4407, %v4589
      %v4924 = vadd.f32 %v4408, %v4589
      %v4925 = vadd.f32 %v4409, %v4589
      %v4926 = vadd.f32 %v4410, %v4589
      %v4927 = vadd.f32 %v4411, %v4589
      %v4928 = vadd.f32 %v4412, %v4589
      %v4929 = vadd.f32 %v4413, %v4589
      %v4930 = vadd.f32 %v4414, %v4589
      %v4931 = vadd.f32 %v4415, %v4589
      %v4932 = vadd.f32 %v4416, %v4589
      %v4933 = vadd.f32 %v4417, %v4589
      %v4934 = vadd.f32 %v4418, %v4589
      %v4935 = vadd.f32 %v4419, %v4589
      %v4936 = vadd.f32 %v4420, %v4589
      %v4937 = vadd.f32 %v4421, %v4589
      %v4938 = vadd.f32 %v4422, %v4589
      %v4939 = vadd.f32 %v4423, %v4589
      %v4940 = vadd.f32 %v4424, %v4589
      %v4941 = vadd.f32 %v4425, %v4589
      %v4942 = vadd.f32 %v4426, %v4589
      %v4943 = vadd.f32 %v4427, %v4589
      %v4944 = vadd.f32 %v4428, %v4589
      %v4945 = vadd.f32 %v4429, %v4589
      %v4946 = vadd.f32 %v4430, %v4589
      %v4947 = vadd.f32 %v4431, %v4589
      %v4948 = vadd.f32 %v4432, %v4589
      %v4949 = vadd.f32 %v4433, %v4589
      %v4950 = vadd.f32 %v4434, %v4589
      %v4951 = vadd.f32 %v4435, %v4589
      %v4952 = vadd.f32 %v4436, %v4589
      %v4953 = vadd.f32 %v4437, %v4589
      %v4954 = vadd.f32 %v4438, %v4589
      %v4955 = vadd.f32 %v4439, %v4589
      %v4956 = vadd.f32 %v4440, %v4589
      %v4957 = vadd.f32 %v4441, %v4589
      %v4958 = vadd.f32 %v4442, %v4589
      %v4959 = vadd.f32 %v4443, %v4589
      %v4960 = vadd.f32 %v4444, %v4589
      %v4961 = vadd.f32 %v4445, %v4589
      %v4962 = vadd.f32 %v4446, %v4589
      %v4963 = vadd.f32 %v4447, %v4589
      %v4964 = vadd.f32 %v4448, %v4589
      %v4965 = vadd.f32 %v4449, %v4589
      %v4966 = vadd.f32 %v4450, %v4589
      %v4967 = vadd.f32 %v4451, %v4589
      %v4968 = vadd.f32 %v4452, %v4589
      %v4969 = vadd.f32 %v4453, %v4589
      %v4970 = vadd.f32 %v4454, %v4589
      %v4971 = vadd.f32 %v4455, %v4589
      %v4972 = vadd.f32 %v4456, %v4589
      %v4973 = vadd.f32 %v4457, %v4589
      %v4974 = vadd.f32 %v4458, %v4589
      %v4975 = vadd.f32 %v4459, %v4589
      %v4976 = vadd.f32 %v4460, %v4589
      %v4977 = vadd.f32 %v4461, %v4589
      %v4978 = vadd.f32 %v4462, %v4589
      %v4979 = vadd.f32 %v4463, %v4589
      %v4980 = vadd.f32 %v4464, %v4589
      %v4981 = vadd.f32 %v4465, %v4589
      %v4982 = vadd.f32 %v4466, %v4589
      %v4983 = vadd.f32 %v4467, %v4589
      %v4984 = vadd.f32 %v4468, %v4589
      %v4985 = vadd.f32 %v4469, %v4589
      %v4986 = vadd.f32 %v4470, %v4589
      %v4987 = vadd.f32 %v4471, %v4589
      %v4988 = vadd.f32 %v4472, %v4589
      %v4989 = vadd.f32 %v4473, %v4589
      %v4990 = vadd.f32 %v4474, %v4589
      %v4991 = vadd.f32 %v4475, %v4589
      %v4992 = vadd.f32 %v4476, %v4589
      %v4993 = vadd.f32 %v4477, %v4589
      %v4994 = vadd.f32 %v4478, %v4589
      %v4995 = vadd.f32 %v4479, %v4589
      %v4996 = vadd.f32 %v4480, %v4589
      %v4997 = vadd.f32 %v4481, %v4589
      %v4998 = vadd.f32 %v4482, %v4589
      %v4999 = vadd.f32 %v4483, %v4589
      %v5000 = vadd.f32 %v4484, %v4589
      %v5001 = vadd.f32 %v4485, %v4589
      %v5002 = vadd.f32 %v4486, %v4589
      %v5003 = vadd.f32 %v4487, %v4589
      %v5004 = vadd.f32 %v4488, %v4589
      %v5005 = vadd.f32 %v4489, %v4589
      %v5006 = vadd.f32 %v4490, %v4589
      %v5007 = vadd.f32 %v4491, %v4589
      %v5008 = vadd.f32 %v4492, %v4589
      %v5009 = vadd.f32 %v4493, %v4589
      %v5010 = vadd.f32 %v4494, %v4589
      %v5011 = vadd.f32 %v4495, %v4589
      %v5012 = vadd.f32 %v4496, %v4589
      %v5013 = vadd.f32 %v4497, %v4589
      %v5014 = vadd.f32 %v4498, %v4589
      %v5015 = vadd.f32 %v4499, %v4589
      %v5016 = vadd.f32 %v4500, %v4589
      %v5017 = vadd.f32 %v4501, %v4589
      %v5018 = vadd.f32 %v4502, %v4589
      %v5019 = vadd.f32 %v4503, %v4589
      %v5020 = vadd.f32 %v4504, %v4589
      %v5021 = vadd.f32 %v4505, %v4589
      %v5022 = vadd.f32 %v4506, %v4589
      %v5023 = vadd.f32 %v4507, %v4589
      %v5024 = vadd.f32 %v4508, %v4589
      %v5025 = vadd.f32 %v4509, %v4589
      %v5026 = vadd.f32 %v4510, %v4589
      %v5027 = vadd.f32 %v4511, %v4589
      %v5028 = vadd.f32 %v4512, %v4589
      %v5029 = vadd.f32 %v4513, %v4589
      %v5030 = vadd.f32 %v4514, %v4589
      %v5031 = vadd.f32 %v4515, %v4589
      %v5032 = vadd.f32 %v4516, %v4589
      %v5033 = vadd.f32 %v4517, %v4589
      %v5034 = vadd.f32 %v4518, %v4589
      %v5035 = vadd.f32 %v4519, %v4589
      %v5036 = vadd.f32 %v4520, %v4589
      %v5037 = vadd.f32 %v4521, %v4589
      %v5038 = vadd.f32 %v4522, %v4589
      %v5039 = vadd.f32 %v4523, %v4589
      %v5040 = vadd.f32 %v4524, %v4589
      %v5041 = vadd.f32 %v4525, %v4589
      %v5042 = vadd.f32 %v4526, %v4589
      %v5043 = vadd.f32 %v4527, %v4589
      %v5044 = vadd.f32 %v4528, %v4589
      %v5045 = vadd.f32 %v4529, %v4589
      %v5046 = vadd.f32 %v4530, %v4589
      %v5047 = vadd.f32 %v4531, %v4589
      %v5048 = vadd.f32 %v4532, %v4589
      %v5049 = vadd.f32 %v4533, %v4589
      %v5050 = vadd.f32 %v4534, %v4589
      %v5051 = vadd.f32 %v4535, %v4589
      %v5052 = vadd.f32 %v4536, %v4589
      %v5053 = vadd.f32 %v4537, %v4589
      %v5054 = vadd.f32 %v4538, %v4589
      %v5055 = vadd.f32 %v4539, %v4589
      %v5056 = vadd.f32 %v4540, %v4589
      %v5057 = vadd.f32 %v4541, %v4589
      %v5058 = vadd.f32 %v4542, %v4589
      %v5059 = vadd.f32 %v4543, %v4589
      %v5060 = vadd.f32 %v4544, %v4589
      %v5061 = vadd.f32 %v4545, %v4589
      %v5062 = vadd.f32 %v4546, %v4589
      %v5063 = vadd.f32 %v4547, %v4589
      %v5064 = vadd.f32 %v4548, %v4589
      %v5065 = vadd.f32 %v4549, %v4589
      %v5066 = vadd.f32 %v4550, %v4589
      %v5067 = vadd.f32 %v4551, %v4589
      %v5068 = vadd.f32 %v4552, %v4589
      %v5069 = vadd.f32 %v4553, %v4589
      %v5070 = vadd.f32 %v4554, %v4589
      %v5071 = vadd.f32 %v4555, %v4589
      %v5072 = vadd.f32 %v4556, %v4589
      %v5073 = vadd.f32 %v4557, %v4589
      %v5074 = vadd.f32 %v4558, %v4589
      %v5075 = vadd.f32 %v4559, %v4589
      %v5076 = vadd.f32 %v4560, %v4589
      %v5077 = vadd.f32 %v4561, %v4589
      %v5078 = vadd.f32 %v4562, %v4589
      %v5079 = vadd.f32 %v4563, %v4589
      %v5080 = vadd.f32 %v4564, %v4589
      %v5081 = vadd.f32 %v4565, %v4589
      %v5082 = vadd.f32 %v4566, %v4589
      %v5083 = vadd.f32 %v4567, %v4589
      %v5084 = vadd.f32 %v4568, %v4589
      %v5085 = vadd.f32 %v4569, %v4589
      %v5086 = vadd.f32 %v4570, %v4589
      %v5087 = vadd.f32 %v4571, %v4589
      %v5088 = vadd.f32 %v4572, %v4589
      %v5089 = vadd.f32 %v4573, %v4589
      %v5090 = vadd.f32 %v4574, %v4589
      %v5091 = vadd.f32 %v4575, %v4589
      %v5092 = vadd.f32 %v4576, %v4589
      %v5093 = vadd.f32 %v4577, %v4589
      %v5094 = vadd.f32 %v4578, %v4589
      %v5095 = vadd.f32 %v4579, %v4589
      %v5096 = vadd.f32 %v4580, %v4589
      %v5097 = vadd.f32 %v4581, %v4589
      %v5098 = vadd.f32 %v4582, %v4589
      %v5099 = vadd.f32 %v4583, %v4589
      %v5100 = vadd.f32 %v4584, %v4589
      %v5101 = vadd.f32 %v4585, %v4589
      %v5102 = vadd.f32 %v4586, %v4589
      %v5103 = vmax.f32 %v4591, 0.0
      %v5104 = vmax.f32 %v4592, 0.0
      %v5105 = vmax.f32 %v4593, 0.0
      %v5106 = vmax.f32 %v4594, 0.0
      %v5107 = vmax.f32 %v4595, 0.0
      %v5108 = vmax.f32 %v4596, 0.0
      %v5109 = vmax.f32 %v4597, 0.0
      %v5110 = vmax.f32 %v4598, 0.0
      %v5111 = vmax.f32 %v4599, 0.0
      %v5112 = vmax.f32 %v4600, 0.0
      %v5113 = vmax.f32 %v4601, 0.0
      %v5114 = vmax.f32 %v4602, 0.0
      %v5115 = vmax.f32 %v4603, 0.0
      %v5116 = vmax.f32 %v4604, 0.0
      %v5117 = vmax.f32 %v4605, 0.0
      %v5118 = vmax.f32 %v4606, 0.0
      %v5119 = vmax.f32 %v4607, 0.0
      %v5120 = vmax.f32 %v4608, 0.0
      %v5121 = vmax.f32 %v4609, 0.0
      %v5122 = vmax.f32 %v4610, 0.0
      %v5123 = vmax.f32 %v4611, 0.0
      %v5124 = vmax.f32 %v4612, 0.0
      %v5125 = vmax.f32 %v4613, 0.0
      %v5126 = vmax.f32 %v4614, 0.0
      %v5127 = vmax.f32 %v4615, 0.0
      %v5128 = vmax.f32 %v4616, 0.0
      %v5129 = vmax.f32 %v4617, 0.0
      %v5130 = vmax.f32 %v4618, 0.0
      %v5131 = vmax.f32 %v4619, 0.0
      %v5132 = vmax.f32 %v4620, 0.0
      %v5133 = vmax.f32 %v4621, 0.0
      %v5134 = vmax.f32 %v4622, 0.0
      %v5135 = vmax.f32 %v4623, 0.0
      %v5136 = vmax.f32 %v4624, 0.0
      %v5137 = vmax.f32 %v4625, 0.0
      %v5138 = vmax.f32 %v4626, 0.0
      %v5139 = vmax.f32 %v4627, 0.0
      %v5140 = vmax.f32 %v4628, 0.0
      %v5141 = vmax.f32 %v4629, 0.0
      %v5142 = vmax.f32 %v4630, 0.0
      %v5143 = vmax.f32 %v4631, 0.0
      %v5144 = vmax.f32 %v4632, 0.0
      %v5145 = vmax.f32 %v4633, 0.0
      %v5146 = vmax.f32 %v4634, 0.0
      %v5147 = vmax.f32 %v4635, 0.0
      %v5148 = vmax.f32 %v4636, 0.0
      %v5149 = vmax.f32 %v4637, 0.0
      %v5150 = vmax.f32 %v4638, 0.0
      %v5151 = vmax.f32 %v4639, 0.0
      %v5152 = vmax.f32 %v4640, 0.0
      %v5153 = vmax.f32 %v4641, 0.0
      %v5154 = vmax.f32 %v4642, 0.0
      %v5155 = vmax.f32 %v4643, 0.0
      %v5156 = vmax.f32 %v4644, 0.0
      %v5157 = vmax.f32 %v4645, 0.0
      %v5158 = vmax.f32 %v4646, 0.0
      %v5159 = vmax.f32 %v4647, 0.0
      %v5160 = vmax.f32 %v4648, 0.0
      %v5161 = vmax.f32 %v4649, 0.0
      %v5162 = vmax.f32 %v4650, 0.0
      %v5163 = vmax.f32 %v4651, 0.0
      %v5164 = vmax.f32 %v4652, 0.0
      %v5165 = vmax.f32 %v4653, 0.0
      %v5166 = vmax.f32 %v4654, 0.0
      %v5167 = vmax.f32 %v4655, 0.0
      %v5168 = vmax.f32 %v4656, 0.0
      %v5169 = vmax.f32 %v4657, 0.0
      %v5170 = vmax.f32 %v4658, 0.0
      %v5171 = vmax.f32 %v4659, 0.0
      %v5172 = vmax.f32 %v4660, 0.0
      %v5173 = vmax.f32 %v4661, 0.0
      %v5174 = vmax.f32 %v4662, 0.0
      %v5175 = vmax.f32 %v4663, 0.0
      %v5176 = vmax.f32 %v4664, 0.0
      %v5177 = vmax.f32 %v4665, 0.0
      %v5178 = vmax.f32 %v4666, 0.0
      %v5179 = vmax.f32 %v4667, 0.0
      %v5180 = vmax.f32 %v4668, 0.0
      %v5181 = vmax.f32 %v4669, 0.0
      %v5182 = vmax.f32 %v4670, 0.0
      %v5183 = vmax.f32 %v4671, 0.0
      %v5184 = vmax.f32 %v4672, 0.0
      %v5185 = vmax.f32 %v4673, 0.0
      %v5186 = vmax.f32 %v4674, 0.0
      %v5187 = vmax.f32 %v4675, 0.0
      %v5188 = vmax.f32 %v4676, 0.0
      %v5189 = vmax.f32 %v4677, 0.0
      %v5190 = vmax.f32 %v4678, 0.0
      %v5191 = vmax.f32 %v4679, 0.0
      %v5192 = vmax.f32 %v4680, 0.0
      %v5193 = vmax.f32 %v4681, 0.0
      %v5194 = vmax.f32 %v4682, 0.0
      %v5195 = vmax.f32 %v4683, 0.0
      %v5196 = vmax.f32 %v4684, 0.0
      %v5197 = vmax.f32 %v4685, 0.0
      %v5198 = vmax.f32 %v4686, 0.0
      %v5199 = vmax.f32 %v4687, 0.0
      %v5200 = vmax.f32 %v4688, 0.0
      %v5201 = vmax.f32 %v4689, 0.0
      %v5202 = vmax.f32 %v4690, 0.0
      %v5203 = vmax.f32 %v4691, 0.0
      %v5204 = vmax.f32 %v4692, 0.0
      %v5205 = vmax.f32 %v4693, 0.0
      %v5206 = vmax.f32 %v4694, 0.0
      %v5207 = vmax.f32 %v4695, 0.0
      %v5208 = vmax.f32 %v4696, 0.0
      %v5209 = vmax.f32 %v4697, 0.0
      %v5210 = vmax.f32 %v4698, 0.0
      %v5211 = vmax.f32 %v4699, 0.0
      %v5212 = vmax.f32 %v4700, 0.0
      %v5213 = vmax.f32 %v4701, 0.0
      %v5214 = vmax.f32 %v4702, 0.0
      %v5215 = vmax.f32 %v4703, 0.0
      %v5216 = vmax.f32 %v4704, 0.0
      %v5217 = vmax.f32 %v4705, 0.0
      %v5218 = vmax.f32 %v4706, 0.0
      %v5219 = vmax.f32 %v4707, 0.0
      %v5220 = vmax.f32 %v4708, 0.0
      %v5221 = vmax.f32 %v4709, 0.0
      %v5222 = vmax.f32 %v4710, 0.0
      %v5223 = vmax.f32 %v4711, 0.0
      %v5224 = vmax.f32 %v4712, 0.0
      %v5225 = vmax.f32 %v4713, 0.0
      %v5226 = vmax.f32 %v4714, 0.0
      %v5227 = vmax.f32 %v4715, 0.0
      %v5228 = vmax.f32 %v4716, 0.0
      %v5229 = vmax.f32 %v4717, 0.0
      %v5230 = vmax.f32 %v4718, 0.0
      %v5231 = vmax.f32 %v4719, 0.0
      %v5232 = vmax.f32 %v4720, 0.0
      %v5233 = vmax.f32 %v4721, 0.0
      %v5234 = vmax.f32 %v4722, 0.0
      %v5235 = vmax.f32 %v4723, 0.0
      %v5236 = vmax.f32 %v4724, 0.0
      %v5237 = vmax.f32 %v4725, 0.0
      %v5238 = vmax.f32 %v4726, 0.0
      %v5239 = vmax.f32 %v4727, 0.0
      %v5240 = vmax.f32 %v4728, 0.0
      %v5241 = vmax.f32 %v4729, 0.0
      %v5242 = vmax.f32 %v4730, 0.0
      %v5243 = vmax.f32 %v4731, 0.0
      %v5244 = vmax.f32 %v4732, 0.0
      %v5245 = vmax.f32 %v4733, 0.0
      %v5246 = vmax.f32 %v4734, 0.0
      %v5247 = vmax.f32 %v4735, 0.0
      %v5248 = vmax.f32 %v4736, 0.0
      %v5249 = vmax.f32 %v4737, 0.0
      %v5250 = vmax.f32 %v4738, 0.0
      %v5251 = vmax.f32 %v4739, 0.0
      %v5252 = vmax.f32 %v4740, 0.0
      %v5253 = vmax.f32 %v4741, 0.0
      %v5254 = vmax.f32 %v4742, 0.0
      %v5255 = vmax.f32 %v4743, 0.0
      %v5256 = vmax.f32 %v4744, 0.0
      %v5257 = vmax.f32 %v4745, 0.0
      %v5258 = vmax.f32 %v4746, 0.0
      %v5259 = vmax.f32 %v4747, 0.0
      %v5260 = vmax.f32 %v4748, 0.0
      %v5261 = vmax.f32 %v4749, 0.0
      %v5262 = vmax.f32 %v4750, 0.0
      %v5263 = vmax.f32 %v4751, 0.0
      %v5264 = vmax.f32 %v4752, 0.0
      %v5265 = vmax.f32 %v4753, 0.0
      %v5266 = vmax.f32 %v4754, 0.0
      %v5267 = vmax.f32 %v4755, 0.0
      %v5268 = vmax.f32 %v4756, 0.0
      %v5269 = vmax.f32 %v4757, 0.0
      %v5270 = vmax.f32 %v4758, 0.0
      %v5271 = vmax.f32 %v4759, 0.0
      %v5272 = vmax.f32 %v4760, 0.0
      %v5273 = vmax.f32 %v4761, 0.0
      %v5274 = vmax.f32 %v4762, 0.0
      %v5275 = vmax.f32 %v4763, 0.0
      %v5276 = vmax.f32 %v4764, 0.0
      %v5277 = vmax.f32 %v4765, 0.0
      %v5278 = vmax.f32 %v4766, 0.0
      %v5279 = vmax.f32 %v4767, 0.0
      %v5280 = vmax.f32 %v4768, 0.0
      %v5281 = vmax.f32 %v4769, 0.0
      %v5282 = vmax.f32 %v4770, 0.0
      %v5283 = vmax.f32 %v4771, 0.0
      %v5284 = vmax.f32 %v4772, 0.0
      %v5285 = vmax.f32 %v4773, 0.0
      %v5286 = vmax.f32 %v4774, 0.0
      %v5287 = vmax.f32 %v4775, 0.0
      %v5288 = vmax.f32 %v4776, 0.0
      %v5289 = vmax.f32 %v4777, 0.0
      %v5290 = vmax.f32 %v4778, 0.0
      %v5291 = vmax.f32 %v4779, 0.0
      %v5292 = vmax.f32 %v4780, 0.0
      %v5293 = vmax.f32 %v4781, 0.0
      %v5294 = vmax.f32 %v4782, 0.0
      %v5295 = vmax.f32 %v4783, 0.0
      %v5296 = vmax.f32 %v4784, 0.0
      %v5297 = vmax.f32 %v4785, 0.0
      %v5298 = vmax.f32 %v4786, 0.0
      %v5299 = vmax.f32 %v4787, 0.0
      %v5300 = vmax.f32 %v4788, 0.0
      %v5301 = vmax.f32 %v4789, 0.0
      %v5302 = vmax.f32 %v4790, 0.0
      %v5303 = vmax.f32 %v4791, 0.0
      %v5304 = vmax.f32 %v4792, 0.0
      %v5305 = vmax.f32 %v4793, 0.0
      %v5306 = vmax.f32 %v4794, 0.0
      %v5307 = vmax.f32 %v4795, 0.0
      %v5308 = vmax.f32 %v4796, 0.0
      %v5309 = vmax.f32 %v4797, 0.0
      %v5310 = vmax.f32 %v4798, 0.0
      %v5311 = vmax.f32 %v4799, 0.0
      %v5312 = vmax.f32 %v4800, 0.0
      %v5313 = vmax.f32 %v4801, 0.0
      %v5314 = vmax.f32 %v4802, 0.0
      %v5315 = vmax.f32 %v4803, 0.0
      %v5316 = vmax.f32 %v4804, 0.0
      %v5317 = vmax.f32 %v4805, 0.0
      %v5318 = vmax.f32 %v4806, 0.0
      %v5319 = vmax.f32 %v4807, 0.0
      %v5320 = vmax.f32 %v4808, 0.0
      %v5321 = vmax.f32 %v4809, 0.0
      %v5322 = vmax.f32 %v4810, 0.0
      %v5323 = vmax.f32 %v4811, 0.0
      %v5324 = vmax.f32 %v4812, 0.0
      %v5325 = vmax.f32 %v4813, 0.0
      %v5326 = vmax.f32 %v4814, 0.0
      %v5327 = vmax.f32 %v4815, 0.0
      %v5328 = vmax.f32 %v4816, 0.0
      %v5329 = vmax.f32 %v4817, 0.0
      %v5330 = vmax.f32 %v4818, 0.0
      %v5331 = vmax.f32 %v4819, 0.0
      %v5332 = vmax.f32 %v4820, 0.0
      %v5333 = vmax.f32 %v4821, 0.0
      %v5334 = vmax.f32 %v4822, 0.0
      %v5335 = vmax.f32 %v4823, 0.0
      %v5336 = vmax.f32 %v4824, 0.0
      %v5337 = vmax.f32 %v4825, 0.0
      %v5338 = vmax.f32 %v4826, 0.0
      %v5339 = vmax.f32 %v4827, 0.0
      %v5340 = vmax.f32 %v4828, 0.0
      %v5341 = vmax.f32 %v4829, 0.0
      %v5342 = vmax.f32 %v4830, 0.0
      %v5343 = vmax.f32 %v4831, 0.0
      %v5344 = vmax.f32 %v4832, 0.0
      %v5345 = vmax.f32 %v4833, 0.0
      %v5346 = vmax.f32 %v4834, 0.0
      %v5347 = vmax.f32 %v4835, 0.0
      %v5348 = vmax.f32 %v4836, 0.0
      %v5349 = vmax.f32 %v4837, 0.0
      %v5350 = vmax.f32 %v4838, 0.0
      %v5351 = vmax.f32 %v4839, 0.0
      %v5352 = vmax.f32 %v4840, 0.0
      %v5353 = vmax.f32 %v4841, 0.0
      %v5354 = vmax.f32 %v4842, 0.0
      %v5355 = vmax.f32 %v4843, 0.0
      %v5356 = vmax.f32 %v4844, 0.0
      %v5357 = vmax.f32 %v4845, 0.0
      %v5358 = vmax.f32 %v4846, 0.0
      %v5359 = vmax.f32 %v4847, 0.0
      %v5360 = vmax.f32 %v4848, 0.0
      %v5361 = vmax.f32 %v4849, 0.0
      %v5362 = vmax.f32 %v4850, 0.0
      %v5363 = vmax.f32 %v4851, 0.0
      %v5364 = vmax.f32 %v4852, 0.0
      %v5365 = vmax.f32 %v4853, 0.0
      %v5366 = vmax.f32 %v4854, 0.0
      %v5367 = vmax.f32 %v4855, 0.0
      %v5368 = vmax.f32 %v4856, 0.0
      %v5369 = vmax.f32 %v4857, 0.0
      %v5370 = vmax.f32 %v4858, 0.0
      %v5371 = vmax.f32 %v4859, 0.0
      %v5372 = vmax.f32 %v4860, 0.0
      %v5373 = vmax.f32 %v4861, 0.0
      %v5374 = vmax.f32 %v4862, 0.0
      %v5375 = vmax.f32 %v4863, 0.0
      %v5376 = vmax.f32 %v4864, 0.0
      %v5377 = vmax.f32 %v4865, 0.0
      %v5378 = vmax.f32 %v4866, 0.0
      %v5379 = vmax.f32 %v4867, 0.0
      %v5380 = vmax.f32 %v4868, 0.0
      %v5381 = vmax.f32 %v4869, 0.0
      %v5382 = vmax.f32 %v4870, 0.0
      %v5383 = vmax.f32 %v4871, 0.0
      %v5384 = vmax.f32 %v4872, 0.0
      %v5385 = vmax.f32 %v4873, 0.0
      %v5386 = vmax.f32 %v4874, 0.0
      %v5387 = vmax.f32 %v4875, 0.0
      %v5388 = vmax.f32 %v4876, 0.0
      %v5389 = vmax.f32 %v4877, 0.0
      %v5390 = vmax.f32 %v4878, 0.0
      %v5391 = vmax.f32 %v4879, 0.0
      %v5392 = vmax.f32 %v4880, 0.0
      %v5393 = vmax.f32 %v4881, 0.0
      %v5394 = vmax.f32 %v4882, 0.0
      %v5395 = vmax.f32 %v4883, 0.0
      %v5396 = vmax.f32 %v4884, 0.0
      %v5397 = vmax.f32 %v4885, 0.0
      %v5398 = vmax.f32 %v4886, 0.0
      %v5399 = vmax.f32 %v4887, 0.0
      %v5400 = vmax.f32 %v4888, 0.0
      %v5401 = vmax.f32 %v4889, 0.0
      %v5402 = vmax.f32 %v4890, 0.0
      %v5403 = vmax.f32 %v4891, 0.0
      %v5404 = vmax.f32 %v4892, 0.0
      %v5405 = vmax.f32 %v4893, 0.0
      %v5406 = vmax.f32 %v4894, 0.0
      %v5407 = vmax.f32 %v4895, 0.0
      %v5408 = vmax.f32 %v4896, 0.0
      %v5409 = vmax.f32 %v4897, 0.0
      %v5410 = vmax.f32 %v4898, 0.0
      %v5411 = vmax.f32 %v4899, 0.0
      %v5412 = vmax.f32 %v4900, 0.0
      %v5413 = vmax.f32 %v4901, 0.0
      %v5414 = vmax.f32 %v4902, 0.0
      %v5415 = vmax.f32 %v4903, 0.0
      %v5416 = vmax.f32 %v4904, 0.0
      %v5417 = vmax.f32 %v4905, 0.0
      %v5418 = vmax.f32 %v4906, 0.0
      %v5419 = vmax.f32 %v4907, 0.0
      %v5420 = vmax.f32 %v4908, 0.0
      %v5421 = vmax.f32 %v4909, 0.0
      %v5422 = vmax.f32 %v4910, 0.0
      %v5423 = vmax.f32 %v4911, 0.0
      %v5424 = vmax.f32 %v4912, 0.0
      %v5425 = vmax.f32 %v4913, 0.0
      %v5426 = vmax.f32 %v4914, 0.0
      %v5427 = vmax.f32 %v4915, 0.0
      %v5428 = vmax.f32 %v4916, 0.0
      %v5429 = vmax.f32 %v4917, 0.0
      %v5430 = vmax.f32 %v4918, 0.0
      %v5431 = vmax.f32 %v4919, 0.0
      %v5432 = vmax.f32 %v4920, 0.0
      %v5433 = vmax.f32 %v4921, 0.0
      %v5434 = vmax.f32 %v4922, 0.0
      %v5435 = vmax.f32 %v4923, 0.0
      %v5436 = vmax.f32 %v4924, 0.0
      %v5437 = vmax.f32 %v4925, 0.0
      %v5438 = vmax.f32 %v4926, 0.0
      %v5439 = vmax.f32 %v4927, 0.0
      %v5440 = vmax.f32 %v4928, 0.0
      %v5441 = vmax.f32 %v4929, 0.0
      %v5442 = vmax.f32 %v4930, 0.0
      %v5443 = vmax.f32 %v4931, 0.0
      %v5444 = vmax.f32 %v4932, 0.0
      %v5445 = vmax.f32 %v4933, 0.0
      %v5446 = vmax.f32 %v4934, 0.0
      %v5447 = vmax.f32 %v4935, 0.0
      %v5448 = vmax.f32 %v4936, 0.0
      %v5449 = vmax.f32 %v4937, 0.0
      %v5450 = vmax.f32 %v4938, 0.0
      %v5451 = vmax.f32 %v4939, 0.0
      %v5452 = vmax.f32 %v4940, 0.0
      %v5453 = vmax.f32 %v4941, 0.0
      %v5454 = vmax.f32 %v4942, 0.0
      %v5455 = vmax.f32 %v4943, 0.0
      %v5456 = vmax.f32 %v4944, 0.0
      %v5457 = vmax.f32 %v4945, 0.0
      %v5458 = vmax.f32 %v4946, 0.0
      %v5459 = vmax.f32 %v4947, 0.0
      %v5460 = vmax.f32 %v4948, 0.0
      %v5461 = vmax.f32 %v4949, 0.0
      %v5462 = vmax.f32 %v4950, 0.0
      %v5463 = vmax.f32 %v4951, 0.0
      %v5464 = vmax.f32 %v4952, 0.0
      %v5465 = vmax.f32 %v4953, 0.0
      %v5466 = vmax.f32 %v4954, 0.0
      %v5467 = vmax.f32 %v4955, 0.0
      %v5468 = vmax.f32 %v4956, 0.0
      %v5469 = vmax.f32 %v4957, 0.0
      %v5470 = vmax.f32 %v4958, 0.0
      %v5471 = vmax.f32 %v4959, 0.0
      %v5472 = vmax.f32 %v4960, 0.0
      %v5473 = vmax.f32 %v4961, 0.0
      %v5474 = vmax.f32 %v4962, 0.0
      %v5475 = vmax.f32 %v4963, 0.0
      %v5476 = vmax.f32 %v4964, 0.0
      %v5477 = vmax.f32 %v4965, 0.0
      %v5478 = vmax.f32 %v4966, 0.0
      %v5479 = vmax.f32 %v4967, 0.0
      %v5480 = vmax.f32 %v4968, 0.0
      %v5481 = vmax.f32 %v4969, 0.0
      %v5482 = vmax.f32 %v4970, 0.0
      %v5483 = vmax.f32 %v4971, 0.0
      %v5484 = vmax.f32 %v4972, 0.0
      %v5485 = vmax.f32 %v4973, 0.0
      %v5486 = vmax.f32 %v4974, 0.0
      %v5487 = vmax.f32 %v4975, 0.0
      %v5488 = vmax.f32 %v4976, 0.0
      %v5489 = vmax.f32 %v4977, 0.0
      %v5490 = vmax.f32 %v4978, 0.0
      %v5491 = vmax.f32 %v4979, 0.0
      %v5492 = vmax.f32 %v4980, 0.0
      %v5493 = vmax.f32 %v4981, 0.0
      %v5494 = vmax.f32 %v4982, 0.0
      %v5495 = vmax.f32 %v4983, 0.0
      %v5496 = vmax.f32 %v4984, 0.0
      %v5497 = vmax.f32 %v4985, 0.0
      %v5498 = vmax.f32 %v4986, 0.0
      %v5499 = vmax.f32 %v4987, 0.0
      %v5500 = vmax.f32 %v4988, 0.0
      %v5501 = vmax.f32 %v4989, 0.0
      %v5502 = vmax.f32 %v4990, 0.0
      %v5503 = vmax.f32 %v4991, 0.0
      %v5504 = vmax.f32 %v4992, 0.0
      %v5505 = vmax.f32 %v4993, 0.0
      %v5506 = vmax.f32 %v4994, 0.0
      %v5507 = vmax.f32 %v4995, 0.0
      %v5508 = vmax.f32 %v4996, 0.0
      %v5509 = vmax.f32 %v4997, 0.0
      %v5510 = vmax.f32 %v4998, 0.0
      %v5511 = vmax.f32 %v4999, 0.0
      %v5512 = vmax.f32 %v5000, 0.0
      %v5513 = vmax.f32 %v5001, 0.0
      %v5514 = vmax.f32 %v5002, 0.0
      %v5515 = vmax.f32 %v5003, 0.0
      %v5516 = vmax.f32 %v5004, 0.0
      %v5517 = vmax.f32 %v5005, 0.0
      %v5518 = vmax.f32 %v5006, 0.0
      %v5519 = vmax.f32 %v5007, 0.0
      %v5520 = vmax.f32 %v5008, 0.0
      %v5521 = vmax.f32 %v5009, 0.0
      %v5522 = vmax.f32 %v5010, 0.0
      %v5523 = vmax.f32 %v5011, 0.0
      %v5524 = vmax.f32 %v5012, 0.0
      %v5525 = vmax.f32 %v5013, 0.0
      %v5526 = vmax.f32 %v5014, 0.0
      %v5527 = vmax.f32 %v5015, 0.0
      %v5528 = vmax.f32 %v5016, 0.0
      %v5529 = vmax.f32 %v5017, 0.0
      %v5530 = vmax.f32 %v5018, 0.0
      %v5531 = vmax.f32 %v5019, 0.0
      %v5532 = vmax.f32 %v5020, 0.0
      %v5533 = vmax.f32 %v5021, 0.0
      %v5534 = vmax.f32 %v5022, 0.0
      %v5535 = vmax.f32 %v5023, 0.0
      %v5536 = vmax.f32 %v5024, 0.0
      %v5537 = vmax.f32 %v5025, 0.0
      %v5538 = vmax.f32 %v5026, 0.0
      %v5539 = vmax.f32 %v5027, 0.0
      %v5540 = vmax.f32 %v5028, 0.0
      %v5541 = vmax.f32 %v5029, 0.0
      %v5542 = vmax.f32 %v5030, 0.0
      %v5543 = vmax.f32 %v5031, 0.0
      %v5544 = vmax.f32 %v5032, 0.0
      %v5545 = vmax.f32 %v5033, 0.0
      %v5546 = vmax.f32 %v5034, 0.0
      %v5547 = vmax.f32 %v5035, 0.0
      %v5548 = vmax.f32 %v5036, 0.0
      %v5549 = vmax.f32 %v5037, 0.0
      %v5550 = vmax.f32 %v5038, 0.0
      %v5551 = vmax.f32 %v5039, 0.0
      %v5552 = vmax.f32 %v5040, 0.0
      %v5553 = vmax.f32 %v5041, 0.0
      %v5554 = vmax.f32 %v5042, 0.0
      %v5555 = vmax.f32 %v5043, 0.0
      %v5556 = vmax.f32 %v5044, 0.0
      %v5557 = vmax.f32 %v5045, 0.0
      %v5558 = vmax.f32 %v5046, 0.0
      %v5559 = vmax.f32 %v5047, 0.0
      %v5560 = vmax.f32 %v5048, 0.0
      %v5561 = vmax.f32 %v5049, 0.0
      %v5562 = vmax.f32 %v5050, 0.0
      %v5563 = vmax.f32 %v5051, 0.0
      %v5564 = vmax.f32 %v5052, 0.0
      %v5565 = vmax.f32 %v5053, 0.0
      %v5566 = vmax.f32 %v5054, 0.0
      %v5567 = vmax.f32 %v5055, 0.0
      %v5568 = vmax.f32 %v5056, 0.0
      %v5569 = vmax.f32 %v5057, 0.0
      %v5570 = vmax.f32 %v5058, 0.0
      %v5571 = vmax.f32 %v5059, 0.0
      %v5572 = vmax.f32 %v5060, 0.0
      %v5573 = vmax.f32 %v5061, 0.0
      %v5574 = vmax.f32 %v5062, 0.0
      %v5575 = vmax.f32 %v5063, 0.0
      %v5576 = vmax.f32 %v5064, 0.0
      %v5577 = vmax.f32 %v5065, 0.0
      %v5578 = vmax.f32 %v5066, 0.0
      %v5579 = vmax.f32 %v5067, 0.0
      %v5580 = vmax.f32 %v5068, 0.0
      %v5581 = vmax.f32 %v5069, 0.0
      %v5582 = vmax.f32 %v5070, 0.0
      %v5583 = vmax.f32 %v5071, 0.0
      %v5584 = vmax.f32 %v5072, 0.0
      %v5585 = vmax.f32 %v5073, 0.0
      %v5586 = vmax.f32 %v5074, 0.0
      %v5587 = vmax.f32 %v5075, 0.0
      %v5588 = vmax.f32 %v5076, 0.0
      %v5589 = vmax.f32 %v5077, 0.0
      %v5590 = vmax.f32 %v5078, 0.0
      %v5591 = vmax.f32 %v5079, 0.0
      %v5592 = vmax.f32 %v5080, 0.0
      %v5593 = vmax.f32 %v5081, 0.0
      %v5594 = vmax.f32 %v5082, 0.0
      %v5595 = vmax.f32 %v5083, 0.0
      %v5596 = vmax.f32 %v5084, 0.0
      %v5597 = vmax.f32 %v5085, 0.0
      %v5598 = vmax.f32 %v5086, 0.0
      %v5599 = vmax.f32 %v5087, 0.0
      %v5600 = vmax.f32 %v5088, 0.0
      %v5601 = vmax.f32 %v5089, 0.0
      %v5602 = vmax.f32 %v5090, 0.0
      %v5603 = vmax.f32 %v5091, 0.0
      %v5604 = vmax.f32 %v5092, 0.0
      %v5605 = vmax.f32 %v5093, 0.0
      %v5606 = vmax.f32 %v5094, 0.0
      %v5607 = vmax.f32 %v5095, 0.0
      %v5608 = vmax.f32 %v5096, 0.0
      %v5609 = vmax.f32 %v5097, 0.0
      %v5610 = vmax.f32 %v5098, 0.0
      %v5611 = vmax.f32 %v5099, 0.0
      %v5612 = vmax.f32 %v5100, 0.0
      %v5613 = vmax.f32 %v5101, 0.0
      %v5614 = vmax.f32 %v5102, 0.0
      %v5615 = vmax.f32 %v5103, %v5231
      %v5616 = vmax.f32 %v5104, %v5232
      %v5617 = vmax.f32 %v5105, %v5233
      %v5618 = vmax.f32 %v5106, %v5234
      %v5619 = vmax.f32 %v5107, %v5235
      %v5620 = vmax.f32 %v5108, %v5236
      %v5621 = vmax.f32 %v5109, %v5237
      %v5622 = vmax.f32 %v5110, %v5238
      %v5623 = vmax.f32 %v5111, %v5239
      %v5624 = vmax.f32 %v5112, %v5240
      %v5625 = vmax.f32 %v5113, %v5241
      %v5626 = vmax.f32 %v5114, %v5242
      %v5627 = vmax.f32 %v5115, %v5243
      %v5628 = vmax.f32 %v5116, %v5244
      %v5629 = vmax.f32 %v5117, %v5245
      %v5630 = vmax.f32 %v5118, %v5246
      %v5631 = vmax.f32 %v5119, %v5247
      %v5632 = vmax.f32 %v5120, %v5248
      %v5633 = vmax.f32 %v5121, %v5249
      %v5634 = vmax.f32 %v5122, %v5250
      %v5635 = vmax.f32 %v5123, %v5251
      %v5636 = vmax.f32 %v5124, %v5252
      %v5637 = vmax.f32 %v5125, %v5253
      %v5638 = vmax.f32 %v5126, %v5254
      %v5639 = vmax.f32 %v5127, %v5255
      %v5640 = vmax.f32 %v5128, %v5256
      %v5641 = vmax.f32 %v5129, %v5257
      %v5642 = vmax.f32 %v5130, %v5258
      %v5643 = vmax.f32 %v5131, %v5259
      %v5644 = vmax.f32 %v5132, %v5260
      %v5645 = vmax.f32 %v5133, %v5261
      %v5646 = vmax.f32 %v5134, %v5262
      %v5647 = vmax.f32 %v5135, %v5263
      %v5648 = vmax.f32 %v5136, %v5264
      %v5649 = vmax.f32 %v5137, %v5265
      %v5650 = vmax.f32 %v5138, %v5266
      %v5651 = vmax.f32 %v5139, %v5267
      %v5652 = vmax.f32 %v5140, %v5268
      %v5653 = vmax.f32 %v5141, %v5269
      %v5654 = vmax.f32 %v5142, %v5270
      %v5655 = vmax.f32 %v5143, %v5271
      %v5656 = vmax.f32 %v5144, %v5272
      %v5657 = vmax.f32 %v5145, %v5273
      %v5658 = vmax.f32 %v5146, %v5274
      %v5659 = vmax.f32 %v5147, %v5275
      %v5660 = vmax.f32 %v5148, %v5276
      %v5661 = vmax.f32 %v5149, %v5277
      %v5662 = vmax.f32 %v5150, %v5278
      %v5663 = vmax.f32 %v5151, %v5279
      %v5664 = vmax.f32 %v5152, %v5280
      %v5665 = vmax.f32 %v5153, %v5281
      %v5666 = vmax.f32 %v5154, %v5282
      %v5667 = vmax.f32 %v5155, %v5283
      %v5668 = vmax.f32 %v5156, %v5284
      %v5669 = vmax.f32 %v5157, %v5285
      %v5670 = vmax.f32 %v5158, %v5286
      %v5671 = vmax.f32 %v5159, %v5287
      %v5672 = vmax.f32 %v5160, %v5288
      %v5673 = vmax.f32 %v5161, %v5289
      %v5674 = vmax.f32 %v5162, %v5290
      %v5675 = vmax.f32 %v5163, %v5291
      %v5676 = vmax.f32 %v5164, %v5292
      %v5677 = vmax.f32 %v5165, %v5293
      %v5678 = vmax.f32 %v5166, %v5294
      %v5679 = vmax.f32 %v5167, %v5295
      %v5680 = vmax.f32 %v5168, %v5296
      %v5681 = vmax.f32 %v5169, %v5297
      %v5682 = vmax.f32 %v5170, %v5298
      %v5683 = vmax.f32 %v5171, %v5299
      %v5684 = vmax.f32 %v5172, %v5300
      %v5685 = vmax.f32 %v5173, %v5301
      %v5686 = vmax.f32 %v5174, %v5302
      %v5687 = vmax.f32 %v5175, %v5303
      %v5688 = vmax.f32 %v5176, %v5304
      %v5689 = vmax.f32 %v5177, %v5305
      %v5690 = vmax.f32 %v5178, %v5306
      %v5691 = vmax.f32 %v5179, %v5307
      %v5692 = vmax.f32 %v5180, %v5308
      %v5693 = vmax.f32 %v5181, %v5309
      %v5694 = vmax.f32 %v5182, %v5310
      %v5695 = vmax.f32 %v5183, %v5311
      %v5696 = vmax.f32 %v5184, %v5312
      %v5697 = vmax.f32 %v5185, %v5313
      %v5698 = vmax.f32 %v5186, %v5314
      %v5699 = vmax.f32 %v5187, %v5315
      %v5700 = vmax.f32 %v5188, %v5316
      %v5701 = vmax.f32 %v5189, %v5317
      %v5702 = vmax.f32 %v5190, %v5318
      %v5703 = vmax.f32 %v5191, %v5319
      %v5704 = vmax.f32 %v5192, %v5320
      %v5705 = vmax.f32 %v5193, %v5321
      %v5706 = vmax.f32 %v5194, %v5322
      %v5707 = vmax.f32 %v5195, %v5323
      %v5708 = vmax.f32 %v5196, %v5324
      %v5709 = vmax.f32 %v5197, %v5325
      %v5710 = vmax.f32 %v5198, %v5326
      %v5711 = vmax.f32 %v5199, %v5327
      %v5712 = vmax.f32 %v5200, %v5328
      %v5713 = vmax.f32 %v5201, %v5329
      %v5714 = vmax.f32 %v5202, %v5330
      %v5715 = vmax.f32 %v5203, %v5331
      %v5716 = vmax.f32 %v5204, %v5332
      %v5717 = vmax.f32 %v5205, %v5333
      %v5718 = vmax.f32 %v5206, %v5334
      %v5719 = vmax.f32 %v5207, %v5335
      %v5720 = vmax.f32 %v5208, %v5336
      %v5721 = vmax.f32 %v5209, %v5337
      %v5722 = vmax.f32 %v5210, %v5338
      %v5723 = vmax.f32 %v5211, %v5339
      %v5724 = vmax.f32 %v5212, %v5340
      %v5725 = vmax.f32 %v5213, %v5341
      %v5726 = vmax.f32 %v5214, %v5342
      %v5727 = vmax.f32 %v5215, %v5343
      %v5728 = vmax.f32 %v5216, %v5344
      %v5729 = vmax.f32 %v5217, %v5345
      %v5730 = vmax.f32 %v5218, %v5346
      %v5731 = vmax.f32 %v5219, %v5347
      %v5732 = vmax.f32 %v5220, %v5348
      %v5733 = vmax.f32 %v5221, %v5349
      %v5734 = vmax.f32 %v5222, %v5350
      %v5735 = vmax.f32 %v5223, %v5351
      %v5736 = vmax.f32 %v5224, %v5352
      %v5737 = vmax.f32 %v5225, %v5353
      %v5738 = vmax.f32 %v5226, %v5354
      %v5739 = vmax.f32 %v5227, %v5355
      %v5740 = vmax.f32 %v5228, %v5356
      %v5741 = vmax.f32 %v5229, %v5357
      %v5742 = vmax.f32 %v5230, %v5358
      %v5743 = vmax.f32 %v5359, %v5487
      %v5744 = vmax.f32 %v5360, %v5488
      %v5745 = vmax.f32 %v5361, %v5489
      %v5746 = vmax.f32 %v5362, %v5490
      %v5747 = vmax.f32 %v5363, %v5491
      %v5748 = vmax.f32 %v5364, %v5492
      %v5749 = vmax.f32 %v5365, %v5493
      %v5750 = vmax.f32 %v5366, %v5494
      %v5751 = vmax.f32 %v5367, %v5495
      %v5752 = vmax.f32 %v5368, %v5496
      %v5753 = vmax.f32 %v5369, %v5497
      %v5754 = vmax.f32 %v5370, %v5498
      %v5755 = vmax.f32 %v5371, %v5499
      %v5756 = vmax.f32 %v5372, %v5500
      %v5757 = vmax.f32 %v5373, %v5501
      %v5758 = vmax.f32 %v5374, %v5502
      %v5759 = vmax.f32 %v5375, %v5503
      %v5760 = vmax.f32 %v5376, %v5504
      %v5761 = vmax.f32 %v5377, %v5505
      %v5762 = vmax.f32 %v5378, %v5506
      %v5763 = vmax.f32 %v5379, %v5507
      %v5764 = vmax.f32 %v5380, %v5508
      %v5765 = vmax.f32 %v5381, %v5509
      %v5766 = vmax.f32 %v5382, %v5510
      %v5767 = vmax.f32 %v5383, %v5511
      %v5768 = vmax.f32 %v5384, %v5512
      %v5769 = vmax.f32 %v5385, %v5513
      %v5770 = vmax.f32 %v5386, %v5514
      %v5771 = vmax.f32 %v5387, %v5515
      %v5772 = vmax.f32 %v5388, %v5516
      %v5773 = vmax.f32 %v5389, %v5517
      %v5774 = vmax.f32 %v5390, %v5518
      %v5775 = vmax.f32 %v5391, %v5519
      %v5776 = vmax.f32 %v5392, %v5520
      %v5777 = vmax.f32 %v5393, %v5521
      %v5778 = vmax.f32 %v5394, %v5522
      %v5779 = vmax.f32 %v5395, %v5523
      %v5780 = vmax.f32 %v5396, %v5524
      %v5781 = vmax.f32 %v5397, %v5525
      %v5782 = vmax.f32 %v5398, %v5526
      %v5783 = vmax.f32 %v5399, %v5527
      %v5784 = vmax.f32 %v5400, %v5528
      %v5785 = vmax.f32 %v5401, %v5529
      %v5786 = vmax.f32 %v5402, %v5530
      %v5787 = vmax.f32 %v5403, %v5531
      %v5788 = vmax.f32 %v5404, %v5532
      %v5789 = vmax.f32 %v5405, %v5533
      %v5790 = vmax.f32 %v5406, %v5534
      %v5791 = vmax.f32 %v5407, %v5535
      %v5792 = vmax.f32 %v5408, %v5536
      %v5793 = vmax.f32 %v5409, %v5537
      %v5794 = vmax.f32 %v5410, %v5538
      %v5795 = vmax.f32 %v5411, %v5539
      %v5796 = vmax.f32 %v5412, %v5540
      %v5797 = vmax.f32 %v5413, %v5541
      %v5798 = vmax.f32 %v5414, %v5542
      %v5799 = vmax.f32 %v5415, %v5543
      %v5800 = vmax.f32 %v5416, %v5544
      %v5801 = vmax.f32 %v5417, %v5545
      %v5802 = vmax.f32 %v5418, %v5546
      %v5803 = vmax.f32 %v5419, %v5547
      %v5804 = vmax.f32 %v5420, %v5548
      %v5805 = vmax.f32 %v5421, %v5549
      %v5806 = vmax.f32 %v5422, %v5550
      %v5807 = vmax.f32 %v5423, %v5551
      %v5808 = vmax.f32 %v5424, %v5552
      %v5809 = vmax.f32 %v5425, %v5553
      %v5810 = vmax.f32 %v5426, %v5554
      %v5811 = vmax.f32 %v5427, %v5555
      %v5812 = vmax.f32 %v5428, %v5556
      %v5813 = vmax.f32 %v5429, %v5557
      %v5814 = vmax.f32 %v5430, %v5558
      %v5815 = vmax.f32 %v5431, %v5559
      %v5816 = vmax.f32 %v5432, %v5560
      %v5817 = vmax.f32 %v5433, %v5561
      %v5818 = vmax.f32 %v5434, %v5562
      %v5819 = vmax.f32 %v5435, %v5563
      %v5820 = vmax.f32 %v5436, %v5564
      %v5821 = vmax.f32 %v5437, %v5565
      %v5822 = vmax.f32 %v5438, %v5566
      %v5823 = vmax.f32 %v5439, %v5567
      %v5824 = vmax.f32 %v5440, %v5568
      %v5825 = vmax.f32 %v5441, %v5569
      %v5826 = vmax.f32 %v5442, %v5570
      %v5827 = vmax.f32 %v5443, %v5571
      %v5828 = vmax.f32 %v5444, %v5572
      %v5829 = vmax.f32 %v5445, %v5573
      %v5830 = vmax.f32 %v5446, %v5574
      %v5831 = vmax.f32 %v5447, %v5575
      %v5832 = vmax.f32 %v5448, %v5576
      %v5833 = vmax.f32 %v5449, %v5577
      %v5834 = vmax.f32 %v5450, %v5578
      %v5835 = vmax.f32 %v5451, %v5579
      %v5836 = vmax.f32 %v5452, %v5580
      %v5837 = vmax.f32 %v5453, %v5581
      %v5838 = vmax.f32 %v5454, %v5582
      %v5839 = vmax.f32 %v5455, %v5583
      %v5840 = vmax.f32 %v5456, %v5584
      %v5841 = vmax.f32 %v5457, %v5585
      %v5842 = vmax.f32 %v5458, %v5586
      %v5843 = vmax.f32 %v5459, %v5587
      %v5844 = vmax.f32 %v5460, %v5588
      %v5845 = vmax.f32 %v5461, %v5589
      %v5846 = vmax.f32 %v5462, %v5590
      %v5847 = vmax.f32 %v5463, %v5591
      %v5848 = vmax.f32 %v5464, %v5592
      %v5849 = vmax.f32 %v5465, %v5593
      %v5850 = vmax.f32 %v5466, %v5594
      %v5851 = vmax.f32 %v5467, %v5595
      %v5852 = vmax.f32 %v5468, %v5596
      %v5853 = vmax.f32 %v5469, %v5597
      %v5854 = vmax.f32 %v5470, %v5598
      %v5855 = vmax.f32 %v5471, %v5599
      %v5856 = vmax.f32 %v5472, %v5600
      %v5857 = vmax.f32 %v5473, %v5601
      %v5858 = vmax.f32 %v5474, %v5602
      %v5859 = vmax.f32 %v5475, %v5603
      %v5860 = vmax.f32 %v5476, %v5604
      %v5861 = vmax.f32 %v5477, %v5605
      %v5862 = vmax.f32 %v5478, %v5606
      %v5863 = vmax.f32 %v5479, %v5607
      %v5864 = vmax.f32 %v5480, %v5608
      %v5865 = vmax.f32 %v5481, %v5609
      %v5866 = vmax.f32 %v5482, %v5610
      %v5867 = vmax.f32 %v5483, %v5611
      %v5868 = vmax.f32 %v5484, %v5612
      %v5869 = vmax.f32 %v5485, %v5613
      %v5870 = vmax.f32 %v5486, %v5614
      %v5871 = vmax.f32 %v5615, %v5743
      %v5872 = vmax.f32 %v5616, %v5744
      %v5873 = vmax.f32 %v5617, %v5745
      %v5874 = vmax.f32 %v5618, %v5746
      %v5875 = vmax.f32 %v5619, %v5747
      %v5876 = vmax.f32 %v5620, %v5748
      %v5877 = vmax.f32 %v5621, %v5749
      %v5878 = vmax.f32 %v5622, %v5750
      %v5879 = vmax.f32 %v5623, %v5751
      %v5880 = vmax.f32 %v5624, %v5752
      %v5881 = vmax.f32 %v5625, %v5753
      %v5882 = vmax.f32 %v5626, %v5754
      %v5883 = vmax.f32 %v5627, %v5755
      %v5884 = vmax.f32 %v5628, %v5756
      %v5885 = vmax.f32 %v5629, %v5757
      %v5886 = vmax.f32 %v5630, %v5758
      %v5887 = vmax.f32 %v5631, %v5759
      %v5888 = vmax.f32 %v5632, %v5760
      %v5889 = vmax.f32 %v5633, %v5761
      %v5890 = vmax.f32 %v5634, %v5762
      %v5891 = vmax.f32 %v5635, %v5763
      %v5892 = vmax.f32 %v5636, %v5764
      %v5893 = vmax.f32 %v5637, %v5765
      %v5894 = vmax.f32 %v5638, %v5766
      %v5895 = vmax.f32 %v5639, %v5767
      %v5896 = vmax.f32 %v5640, %v5768
      %v5897 = vmax.f32 %v5641, %v5769
      %v5898 = vmax.f32 %v5642, %v5770
      %v5899 = vmax.f32 %v5643, %v5771
      %v5900 = vmax.f32 %v5644, %v5772
      %v5901 = vmax.f32 %v5645, %v5773
      %v5902 = vmax.f32 %v5646, %v5774
      %v5903 = vmax.f32 %v5647, %v5775
      %v5904 = vmax.f32 %v5648, %v5776
      %v5905 = vmax.f32 %v5649, %v5777
      %v5906 = vmax.f32 %v5650, %v5778
      %v5907 = vmax.f32 %v5651, %v5779
      %v5908 = vmax.f32 %v5652, %v5780
      %v5909 = vmax.f32 %v5653, %v5781
      %v5910 = vmax.f32 %v5654, %v5782
      %v5911 = vmax.f32 %v5655, %v5783
      %v5912 = vmax.f32 %v5656, %v5784
      %v5913 = vmax.f32 %v5657, %v5785
      %v5914 = vmax.f32 %v5658, %v5786
      %v5915 = vmax.f32 %v5659, %v5787
      %v5916 = vmax.f32 %v5660, %v5788
      %v5917 = vmax.f32 %v5661, %v5789
      %v5918 = vmax.f32 %v5662, %v5790
      %v5919 = vmax.f32 %v5663, %v5791
      %v5920 = vmax.f32 %v5664, %v5792
      %v5921 = vmax.f32 %v5665, %v5793
      %v5922 = vmax.f32 %v5666, %v5794
      %v5923 = vmax.f32 %v5667, %v5795
      %v5924 = vmax.f32 %v5668, %v5796
      %v5925 = vmax.f32 %v5669, %v5797
      %v5926 = vmax.f32 %v5670, %v5798
      %v5927 = vmax.f32 %v5671, %v5799
      %v5928 = vmax.f32 %v5672, %v5800
      %v5929 = vmax.f32 %v5673, %v5801
      %v5930 = vmax.f32 %v5674, %v5802
      %v5931 = vmax.f32 %v5675, %v5803
      %v5932 = vmax.f32 %v5676, %v5804
      %v5933 = vmax.f32 %v5677, %v5805
      %v5934 = vmax.f32 %v5678, %v5806
      %v5935 = vmax.f32 %v5679, %v5807
      %v5936 = vmax.f32 %v5680, %v5808
      %v5937 = vmax.f32 %v5681, %v5809
      %v5938 = vmax.f32 %v5682, %v5810
      %v5939 = vmax.f32 %v5683, %v5811
      %v5940 = vmax.f32 %v5684, %v5812
      %v5941 = vmax.f32 %v5685, %v5813
      %v5942 = vmax.f32 %v5686, %v5814
      %v5943 = vmax.f32 %v5687, %v5815
      %v5944 = vmax.f32 %v5688, %v5816
      %v5945 = vmax.f32 %v5689, %v5817
      %v5946 = vmax.f32 %v5690, %v5818
      %v5947 = vmax.f32 %v5691, %v5819
      %v5948 = vmax.f32 %v5692, %v5820
      %v5949 = vmax.f32 %v5693, %v5821
      %v5950 = vmax.f32 %v5694, %v5822
      %v5951 = vmax.f32 %v5695, %v5823
      %v5952 = vmax.f32 %v5696, %v5824
      %v5953 = vmax.f32 %v5697, %v5825
      %v5954 = vmax.f32 %v5698, %v5826
      %v5955 = vmax.f32 %v5699, %v5827
      %v5956 = vmax.f32 %v5700, %v5828
      %v5957 = vmax.f32 %v5701, %v5829
      %v5958 = vmax.f32 %v5702, %v5830
      %v5959 = vmax.f32 %v5703, %v5831
      %v5960 = vmax.f32 %v5704, %v5832
      %v5961 = vmax.f32 %v5705, %v5833
      %v5962 = vmax.f32 %v5706, %v5834
      %v5963 = vmax.f32 %v5707, %v5835
      %v5964 = vmax.f32 %v5708, %v5836
      %v5965 = vmax.f32 %v5709, %v5837
      %v5966 = vmax.f32 %v5710, %v5838
      %v5967 = vmax.f32 %v5711, %v5839
      %v5968 = vmax.f32 %v5712, %v5840
      %v5969 = vmax.f32 %v5713, %v5841
      %v5970 = vmax.f32 %v5714, %v5842
      %v5971 = vmax.f32 %v5715, %v5843
      %v5972 = vmax.f32 %v5716, %v5844
      %v5973 = vmax.f32 %v5717, %v5845
      %v5974 = vmax.f32 %v5718, %v5846
      %v5975 = vmax.f32 %v5719, %v5847
      %v5976 = vmax.f32 %v5720, %v5848
      %v5977 = vmax.f32 %v5721, %v5849
      %v5978 = vmax.f32 %v5722, %v5850
      %v5979 = vmax.f32 %v5723, %v5851
      %v5980 = vmax.f32 %v5724, %v5852
      %v5981 = vmax.f32 %v5725, %v5853
      %v5982 = vmax.f32 %v5726, %v5854
      %v5983 = vmax.f32 %v5727, %v5855
      %v5984 = vmax.f32 %v5728, %v5856
      %v5985 = vmax.f32 %v5729, %v5857
      %v5986 = vmax.f32 %v5730, %v5858
      %v5987 = vmax.f32 %v5731, %v5859
      %v5988 = vmax.f32 %v5732, %v5860
      %v5989 = vmax.f32 %v5733, %v5861
      %v5990 = vmax.f32 %v5734, %v5862
      %v5991 = vmax.f32 %v5735, %v5863
      %v5992 = vmax.f32 %v5736, %v5864
      %v5993 = vmax.f32 %v5737, %v5865
      %v5994 = vmax.f32 %v5738, %v5866
      %v5995 = vmax.f32 %v5739, %v5867
      %v5996 = vmax.f32 %v5740, %v5868
      %v5997 = vmax.f32 %v5741, %v5869
      %v5998 = vmax.f32 %v5742, %v5870
      %v5999 = vpack.c.bf16 %v5871, %v5871
      %v6000 = vpack.c.bf16 %v5872, %v5872
      %v6001 = vpack.c.bf16 %v5873, %v5873
      %v6002 = vpack.c.bf16 %v5874, %v5874
      %v6003 = vpack.c.bf16 %v5875, %v5875
      %v6004 = vpack.c.bf16 %v5876, %v5876
      %v6005 = vpack.c.bf16 %v5877, %v5877
      %v6006 = vpack.c.bf16 %v5878, %v5878
      %v6007 = vpack.c.bf16 %v5879, %v5879
      %v6008 = vpack.c.bf16 %v5880, %v5880
      %v6009 = vpack.c.bf16 %v5881, %v5881
      %v6010 = vpack.c.bf16 %v5882, %v5882
      %v6011 = vpack.c.bf16 %v5883, %v5883
      %v6012 = vpack.c.bf16 %v5884, %v5884
      %v6013 = vpack.c.bf16 %v5885, %v5885
      %v6014 = vpack.c.bf16 %v5886, %v5886
      %v6015 = vpack.c.bf16 %v5887, %v5887
      %v6016 = vpack.c.bf16 %v5888, %v5888
      %v6017 = vpack.c.bf16 %v5889, %v5889
      %v6018 = vpack.c.bf16 %v5890, %v5890
      %v6019 = vpack.c.bf16 %v5891, %v5891
      %v6020 = vpack.c.bf16 %v5892, %v5892
      %v6021 = vpack.c.bf16 %v5893, %v5893
      %v6022 = vpack.c.bf16 %v5894, %v5894
      %v6023 = vpack.c.bf16 %v5895, %v5895
      %v6024 = vpack.c.bf16 %v5896, %v5896
      %v6025 = vpack.c.bf16 %v5897, %v5897
      %v6026 = vpack.c.bf16 %v5898, %v5898
      %v6027 = vpack.c.bf16 %v5899, %v5899
      %v6028 = vpack.c.bf16 %v5900, %v5900
      %v6029 = vpack.c.bf16 %v5901, %v5901
      %v6030 = vpack.c.bf16 %v5902, %v5902
      %v6031 = vpack.c.bf16 %v5903, %v5903
      %v6032 = vpack.c.bf16 %v5904, %v5904
      %v6033 = vpack.c.bf16 %v5905, %v5905
      %v6034 = vpack.c.bf16 %v5906, %v5906
      %v6035 = vpack.c.bf16 %v5907, %v5907
      %v6036 = vpack.c.bf16 %v5908, %v5908
      %v6037 = vpack.c.bf16 %v5909, %v5909
      %v6038 = vpack.c.bf16 %v5910, %v5910
      %v6039 = vpack.c.bf16 %v5911, %v5911
      %v6040 = vpack.c.bf16 %v5912, %v5912
      %v6041 = vpack.c.bf16 %v5913, %v5913
      %v6042 = vpack.c.bf16 %v5914, %v5914
      %v6043 = vpack.c.bf16 %v5915, %v5915
      %v6044 = vpack.c.bf16 %v5916, %v5916
      %v6045 = vpack.c.bf16 %v5917, %v5917
      %v6046 = vpack.c.bf16 %v5918, %v5918
      %v6047 = vpack.c.bf16 %v5919, %v5919
      %v6048 = vpack.c.bf16 %v5920, %v5920
      %v6049 = vpack.c.bf16 %v5921, %v5921
      %v6050 = vpack.c.bf16 %v5922, %v5922
      %v6051 = vpack.c.bf16 %v5923, %v5923
      %v6052 = vpack.c.bf16 %v5924, %v5924
      %v6053 = vpack.c.bf16 %v5925, %v5925
      %v6054 = vpack.c.bf16 %v5926, %v5926
      %v6055 = vpack.c.bf16 %v5927, %v5927
      %v6056 = vpack.c.bf16 %v5928, %v5928
      %v6057 = vpack.c.bf16 %v5929, %v5929
      %v6058 = vpack.c.bf16 %v5930, %v5930
      %v6059 = vpack.c.bf16 %v5931, %v5931
      %v6060 = vpack.c.bf16 %v5932, %v5932
      %v6061 = vpack.c.bf16 %v5933, %v5933
      %v6062 = vpack.c.bf16 %v5934, %v5934
      %v6063 = vpack.c.bf16 %v5935, %v5935
      %v6064 = vpack.c.bf16 %v5936, %v5936
      %v6065 = vpack.c.bf16 %v5937, %v5937
      %v6066 = vpack.c.bf16 %v5938, %v5938
      %v6067 = vpack.c.bf16 %v5939, %v5939
      %v6068 = vpack.c.bf16 %v5940, %v5940
      %v6069 = vpack.c.bf16 %v5941, %v5941
      %v6070 = vpack.c.bf16 %v5942, %v5942
      %v6071 = vpack.c.bf16 %v5943, %v5943
      %v6072 = vpack.c.bf16 %v5944, %v5944
      %v6073 = vpack.c.bf16 %v5945, %v5945
      %v6074 = vpack.c.bf16 %v5946, %v5946
      %v6075 = vpack.c.bf16 %v5947, %v5947
      %v6076 = vpack.c.bf16 %v5948, %v5948
      %v6077 = vpack.c.bf16 %v5949, %v5949
      %v6078 = vpack.c.bf16 %v5950, %v5950
      %v6079 = vpack.c.bf16 %v5951, %v5951
      %v6080 = vpack.c.bf16 %v5952, %v5952
      %v6081 = vpack.c.bf16 %v5953, %v5953
      %v6082 = vpack.c.bf16 %v5954, %v5954
      %v6083 = vpack.c.bf16 %v5955, %v5955
      %v6084 = vpack.c.bf16 %v5956, %v5956
      %v6085 = vpack.c.bf16 %v5957, %v5957
      %v6086 = vpack.c.bf16 %v5958, %v5958
      %v6087 = vpack.c.bf16 %v5959, %v5959
      %v6088 = vpack.c.bf16 %v5960, %v5960
      %v6089 = vpack.c.bf16 %v5961, %v5961
      %v6090 = vpack.c.bf16 %v5962, %v5962
      %v6091 = vpack.c.bf16 %v5963, %v5963
      %v6092 = vpack.c.bf16 %v5964, %v5964
      %v6093 = vpack.c.bf16 %v5965, %v5965
      %v6094 = vpack.c.bf16 %v5966, %v5966
      %v6095 = vpack.c.bf16 %v5967, %v5967
      %v6096 = vpack.c.bf16 %v5968, %v5968
      %v6097 = vpack.c.bf16 %v5969, %v5969
      %v6098 = vpack.c.bf16 %v5970, %v5970
      %v6099 = vpack.c.bf16 %v5971, %v5971
      %v6100 = vpack.c.bf16 %v5972, %v5972
      %v6101 = vpack.c.bf16 %v5973, %v5973
      %v6102 = vpack.c.bf16 %v5974, %v5974
      %v6103 = vpack.c.bf16 %v5975, %v5975
      %v6104 = vpack.c.bf16 %v5976, %v5976
      %v6105 = vpack.c.bf16 %v5977, %v5977
      %v6106 = vpack.c.bf16 %v5978, %v5978
      %v6107 = vpack.c.bf16 %v5979, %v5979
      %v6108 = vpack.c.bf16 %v5980, %v5980
      %v6109 = vpack.c.bf16 %v5981, %v5981
      %v6110 = vpack.c.bf16 %v5982, %v5982
      %v6111 = vpack.c.bf16 %v5983, %v5983
      %v6112 = vpack.c.bf16 %v5984, %v5984
      %v6113 = vpack.c.bf16 %v5985, %v5985
      %v6114 = vpack.c.bf16 %v5986, %v5986
      %v6115 = vpack.c.bf16 %v5987, %v5987
      %v6116 = vpack.c.bf16 %v5988, %v5988
      %v6117 = vpack.c.bf16 %v5989, %v5989
      %v6118 = vpack.c.bf16 %v5990, %v5990
      %v6119 = vpack.c.bf16 %v5991, %v5991
      %v6120 = vpack.c.bf16 %v5992, %v5992
      %v6121 = vpack.c.bf16 %v5993, %v5993
      %v6122 = vpack.c.bf16 %v5994, %v5994
      %v6123 = vpack.c.bf16 %v5995, %v5995
      %v6124 = vpack.c.bf16 %v5996, %v5996
      %v6125 = vpack.c.bf16 %v5997, %v5997
      %v6126 = vpack.c.bf16 %v5998, %v5998
      %vm6127 = vcmask 257024
      %6128 = vst.msk [vmem:[%s197] sm:$0xf] %vm6127, %v5999
      %6129 = vst.msk [vmem:[%s197 + $0x4] sm:$0xf] %vm6127, %v6000
      %6130 = vst.msk [vmem:[%s197 + $0x8] sm:$0xf] %vm6127, %v6001
      %6131 = vst.msk [vmem:[%s197 + $0xc] sm:$0xf] %vm6127, %v6002
      %6132 = vst.msk [vmem:[%s197 + $0x10] sm:$0xf] %vm6127, %v6003
      %6133 = vst.msk [vmem:[%s197 + $0x14] sm:$0xf] %vm6127, %v6004
      %6134 = vst.msk [vmem:[%s197 + $0x18] sm:$0xf] %vm6127, %v6005
      %6135 = vst.msk [vmem:[%s197 + $0x1c] sm:$0xf] %vm6127, %v6006
      %6136 = vst.msk [vmem:[%s197 + $0x20] sm:$0xf] %vm6127, %v6007
      %6137 = vst.msk [vmem:[%s197 + $0x24] sm:$0xf] %vm6127, %v6008
      %6138 = vst.msk [vmem:[%s197 + $0x28] sm:$0xf] %vm6127, %v6009
      %6139 = vst.msk [vmem:[%s197 + $0x2c] sm:$0xf] %vm6127, %v6010
      %6140 = vst.msk [vmem:[%s197 + $0x30] sm:$0xf] %vm6127, %v6011
      %6141 = vst.msk [vmem:[%s197 + $0x34] sm:$0xf] %vm6127, %v6012
      %6142 = vst.msk [vmem:[%s197 + $0x38] sm:$0xf] %vm6127, %v6013
      %6143 = vst.msk [vmem:[%s197 + $0x3c] sm:$0xf] %vm6127, %v6014
      %6144 = vst.msk [vmem:[%s197 + $0x40] sm:$0xf] %vm6127, %v6015
      %6145 = vst.msk [vmem:[%s197 + $0x44] sm:$0xf] %vm6127, %v6016
      %6146 = vst.msk [vmem:[%s197 + $0x48] sm:$0xf] %vm6127, %v6017
      %6147 = vst.msk [vmem:[%s197 + $0x4c] sm:$0xf] %vm6127, %v6018
      %6148 = vst.msk [vmem:[%s197 + $0x50] sm:$0xf] %vm6127, %v6019
      %6149 = vst.msk [vmem:[%s197 + $0x54] sm:$0xf] %vm6127, %v6020
      %6150 = vst.msk [vmem:[%s197 + $0x58] sm:$0xf] %vm6127, %v6021
      %6151 = vst.msk [vmem:[%s197 + $0x5c] sm:$0xf] %vm6127, %v6022
      %6152 = vst.msk [vmem:[%s197 + $0x60] sm:$0xf] %vm6127, %v6023
      %6153 = vst.msk [vmem:[%s197 + $0x64] sm:$0xf] %vm6127, %v6024
      %6154 = vst.msk [vmem:[%s197 + $0x68] sm:$0xf] %vm6127, %v6025
      %6155 = vst.msk [vmem:[%s197 + $0x6c] sm:$0xf] %vm6127, %v6026
      %6156 = vst.msk [vmem:[%s197 + $0x70] sm:$0xf] %vm6127, %v6027
      %6157 = vst.msk [vmem:[%s197 + $0x74] sm:$0xf] %vm6127, %v6028
      %6158 = vst.msk [vmem:[%s197 + $0x78] sm:$0xf] %vm6127, %v6029
      %6159 = vst.msk [vmem:[%s197 + $0x7c] sm:$0xf] %vm6127, %v6030
      %6160 = vst.msk [vmem:[%s197 + $0x80] sm:$0xf] %vm6127, %v6031
      %6161 = vst.msk [vmem:[%s197 + $0x84] sm:$0xf] %vm6127, %v6032
      %6162 = vst.msk [vmem:[%s197 + $0x88] sm:$0xf] %vm6127, %v6033
      %6163 = vst.msk [vmem:[%s197 + $0x8c] sm:$0xf] %vm6127, %v6034
      %6164 = vst.msk [vmem:[%s197 + $0x90] sm:$0xf] %vm6127, %v6035
      %6165 = vst.msk [vmem:[%s197 + $0x94] sm:$0xf] %vm6127, %v6036
      %6166 = vst.msk [vmem:[%s197 + $0x98] sm:$0xf] %vm6127, %v6037
      %6167 = vst.msk [vmem:[%s197 + $0x9c] sm:$0xf] %vm6127, %v6038
      %6168 = vst.msk [vmem:[%s197 + $0xa0] sm:$0xf] %vm6127, %v6039
      %6169 = vst.msk [vmem:[%s197 + $0xa4] sm:$0xf] %vm6127, %v6040
      %6170 = vst.msk [vmem:[%s197 + $0xa8] sm:$0xf] %vm6127, %v6041
      %6171 = vst.msk [vmem:[%s197 + $0xac] sm:$0xf] %vm6127, %v6042
      %6172 = vst.msk [vmem:[%s197 + $0xb0] sm:$0xf] %vm6127, %v6043
      %6173 = vst.msk [vmem:[%s197 + $0xb4] sm:$0xf] %vm6127, %v6044
      %6174 = vst.msk [vmem:[%s197 + $0xb8] sm:$0xf] %vm6127, %v6045
      %6175 = vst.msk [vmem:[%s197 + $0xbc] sm:$0xf] %vm6127, %v6046
      %6176 = vst.msk [vmem:[%s197 + $0xc0] sm:$0xf] %vm6127, %v6047
      %6177 = vst.msk [vmem:[%s197 + $0xc4] sm:$0xf] %vm6127, %v6048
      %6178 = vst.msk [vmem:[%s197 + $0xc8] sm:$0xf] %vm6127, %v6049
      %6179 = vst.msk [vmem:[%s197 + $0xcc] sm:$0xf] %vm6127, %v6050
      %6180 = vst.msk [vmem:[%s197 + $0xd0] sm:$0xf] %vm6127, %v6051
      %6181 = vst.msk [vmem:[%s197 + $0xd4] sm:$0xf] %vm6127, %v6052
      %6182 = vst.msk [vmem:[%s197 + $0xd8] sm:$0xf] %vm6127, %v6053
      %6183 = vst.msk [vmem:[%s197 + $0xdc] sm:$0xf] %vm6127, %v6054
      %6184 = vst.msk [vmem:[%s197 + $0xe0] sm:$0xf] %vm6127, %v6055
      %6185 = vst.msk [vmem:[%s197 + $0xe4] sm:$0xf] %vm6127, %v6056
      %6186 = vst.msk [vmem:[%s197 + $0xe8] sm:$0xf] %vm6127, %v6057
      %6187 = vst.msk [vmem:[%s197 + $0xec] sm:$0xf] %vm6127, %v6058
      %6188 = vst.msk [vmem:[%s197 + $0xf0] sm:$0xf] %vm6127, %v6059
      %6189 = vst.msk [vmem:[%s197 + $0xf4] sm:$0xf] %vm6127, %v6060
      %6190 = vst.msk [vmem:[%s197 + $0xf8] sm:$0xf] %vm6127, %v6061
      %6191 = vst.msk [vmem:[%s197 + $0xfc] sm:$0xf] %vm6127, %v6062
      %6192 = vst.msk [vmem:[%s197 + $0x100] sm:$0xf] %vm6127, %v6063
      %6193 = vst.msk [vmem:[%s197 + $0x104] sm:$0xf] %vm6127, %v6064
      %6194 = vst.msk [vmem:[%s197 + $0x108] sm:$0xf] %vm6127, %v6065
      %6195 = vst.msk [vmem:[%s197 + $0x10c] sm:$0xf] %vm6127, %v6066
      %6196 = vst.msk [vmem:[%s197 + $0x110] sm:$0xf] %vm6127, %v6067
      %6197 = vst.msk [vmem:[%s197 + $0x114] sm:$0xf] %vm6127, %v6068
      %6198 = vst.msk [vmem:[%s197 + $0x118] sm:$0xf] %vm6127, %v6069
      %6199 = vst.msk [vmem:[%s197 + $0x11c] sm:$0xf] %vm6127, %v6070
      %6200 = vst.msk [vmem:[%s197 + $0x120] sm:$0xf] %vm6127, %v6071
      %6201 = vst.msk [vmem:[%s197 + $0x124] sm:$0xf] %vm6127, %v6072
      %6202 = vst.msk [vmem:[%s197 + $0x128] sm:$0xf] %vm6127, %v6073
      %6203 = vst.msk [vmem:[%s197 + $0x12c] sm:$0xf] %vm6127, %v6074
      %6204 = vst.msk [vmem:[%s197 + $0x130] sm:$0xf] %vm6127, %v6075
      %6205 = vst.msk [vmem:[%s197 + $0x134] sm:$0xf] %vm6127, %v6076
      %6206 = vst.msk [vmem:[%s197 + $0x138] sm:$0xf] %vm6127, %v6077
      %6207 = vst.msk [vmem:[%s197 + $0x13c] sm:$0xf] %vm6127, %v6078
      %6208 = vst.msk [vmem:[%s197 + $0x140] sm:$0xf] %vm6127, %v6079
      %6209 = vst.msk [vmem:[%s197 + $0x144] sm:$0xf] %vm6127, %v6080
      %6210 = vst.msk [vmem:[%s197 + $0x148] sm:$0xf] %vm6127, %v6081
      %6211 = vst.msk [vmem:[%s197 + $0x14c] sm:$0xf] %vm6127, %v6082
      %6212 = vst.msk [vmem:[%s197 + $0x150] sm:$0xf] %vm6127, %v6083
      %6213 = vst.msk [vmem:[%s197 + $0x154] sm:$0xf] %vm6127, %v6084
      %6214 = vst.msk [vmem:[%s197 + $0x158] sm:$0xf] %vm6127, %v6085
      %6215 = vst.msk [vmem:[%s197 + $0x15c] sm:$0xf] %vm6127, %v6086
      %6216 = vst.msk [vmem:[%s197 + $0x160] sm:$0xf] %vm6127, %v6087
      %6217 = vst.msk [vmem:[%s197 + $0x164] sm:$0xf] %vm6127, %v6088
      %6218 = vst.msk [vmem:[%s197 + $0x168] sm:$0xf] %vm6127, %v6089
      %6219 = vst.msk [vmem:[%s197 + $0x16c] sm:$0xf] %vm6127, %v6090
      %6220 = vst.msk [vmem:[%s197 + $0x170] sm:$0xf] %vm6127, %v6091
      %6221 = vst.msk [vmem:[%s197 + $0x174] sm:$0xf] %vm6127, %v6092
      %6222 = vst.msk [vmem:[%s197 + $0x178] sm:$0xf] %vm6127, %v6093
      %6223 = vst.msk [vmem:[%s197 + $0x17c] sm:$0xf] %vm6127, %v6094
      %6224 = vst.msk [vmem:[%s197 + $0x180] sm:$0xf] %vm6127, %v6095
      %6225 = vst.msk [vmem:[%s197 + $0x184] sm:$0xf] %vm6127, %v6096
      %6226 = vst.msk [vmem:[%s197 + $0x188] sm:$0xf] %vm6127, %v6097
      %6227 = vst.msk [vmem:[%s197 + $0x18c] sm:$0xf] %vm6127, %v6098
      %6228 = vst.msk [vmem:[%s197 + $0x190] sm:$0xf] %vm6127, %v6099
      %6229 = vst.msk [vmem:[%s197 + $0x194] sm:$0xf] %vm6127, %v6100
      %6230 = vst.msk [vmem:[%s197 + $0x198] sm:$0xf] %vm6127, %v6101
      %6231 = vst.msk [vmem:[%s197 + $0x19c] sm:$0xf] %vm6127, %v6102
      %6232 = vst.msk [vmem:[%s197 + $0x1a0] sm:$0xf] %vm6127, %v6103
      %6233 = vst.msk [vmem:[%s197 + $0x1a4] sm:$0xf] %vm6127, %v6104
      %6234 = vst.msk [vmem:[%s197 + $0x1a8] sm:$0xf] %vm6127, %v6105
      %6235 = vst.msk [vmem:[%s197 + $0x1ac] sm:$0xf] %vm6127, %v6106
      %6236 = vst.msk [vmem:[%s197 + $0x1b0] sm:$0xf] %vm6127, %v6107
      %6237 = vst.msk [vmem:[%s197 + $0x1b4] sm:$0xf] %vm6127, %v6108
      %6238 = vst.msk [vmem:[%s197 + $0x1b8] sm:$0xf] %vm6127, %v6109
      %6239 = vst.msk [vmem:[%s197 + $0x1bc] sm:$0xf] %vm6127, %v6110
      %6240 = vst.msk [vmem:[%s197 + $0x1c0] sm:$0xf] %vm6127, %v6111
      %6241 = vst.msk [vmem:[%s197 + $0x1c4] sm:$0xf] %vm6127, %v6112
      %6242 = vst.msk [vmem:[%s197 + $0x1c8] sm:$0xf] %vm6127, %v6113
      %6243 = vst.msk [vmem:[%s197 + $0x1cc] sm:$0xf] %vm6127, %v6114
      %6244 = vst.msk [vmem:[%s197 + $0x1d0] sm:$0xf] %vm6127, %v6115
      %6245 = vst.msk [vmem:[%s197 + $0x1d4] sm:$0xf] %vm6127, %v6116
      %6246 = vst.msk [vmem:[%s197 + $0x1d8] sm:$0xf] %vm6127, %v6117
      %6247 = vst.msk [vmem:[%s197 + $0x1dc] sm:$0xf] %vm6127, %v6118
      %6248 = vst.msk [vmem:[%s197 + $0x1e0] sm:$0xf] %vm6127, %v6119
      %6249 = vst.msk [vmem:[%s197 + $0x1e4] sm:$0xf] %vm6127, %v6120
      %6250 = vst.msk [vmem:[%s197 + $0x1e8] sm:$0xf] %vm6127, %v6121
      %6251 = vst.msk [vmem:[%s197 + $0x1ec] sm:$0xf] %vm6127, %v6122
      %6252 = vst.msk [vmem:[%s197 + $0x1f0] sm:$0xf] %vm6127, %v6123
      %6253 = vst.msk [vmem:[%s197 + $0x1f4] sm:$0xf] %vm6127, %v6124
      %6254 = vst.msk [vmem:[%s197 + $0x1f8] sm:$0xf] %vm6127, %v6125
      %6255 = vst.msk [vmem:[%s197 + $0x1fc] sm:$0xf] %vm6127, %v6126
      %p6256 = scmp.lt.s32.totalorder %s15, 1
      %s6257 = scalar_select %p6256, %s15, 1
      %s6258 = smul.addr %s6257, 128
      %s6259 = smul.addr %s6258, 4
      %s6260 = scalar_lea.vmem %s4, %s6259
      // Predicated region
      $region37: #{chess_cnn_forward.3} parent=35 // pred_check
        %p6261 = pneg %p122
      $region38: #{chess_cnn_forward.3} parent=35 // pred_check_branch
        %6263 = sbr.rel (%p6261) target = $region40
      $region39: #{chess_cnn_forward.3} parent=35 // pred_region
        _
      $region40: #{chess_cnn_forward.3} parent=35 // pred_fallthru
        _
    $region36: #{chess_cnn_forward.3} parent=5 // pred_fallthru
      _
    %p6264 = scmp.le.s32.totalorder 2, %s10
    // Predicated region
    $region41: #{chess_cnn_forward.3} parent=5 // pred_check
      %p6265 = pneg %p6264
    $region42: #{chess_cnn_forward.3} parent=5 // pred_check_branch
      %6267 = sbr.rel (%p6265) target = $region44
    $region43: #{chess_cnn_forward.3} parent=5 // pred_region
      %s6268 = ssub.s32 %s10, 2
      // Predicated region
      $region45: #{chess_cnn_forward.3} parent=43 // pred_check
        %p6269 = pneg %p128
      $region46: #{chess_cnn_forward.3} parent=43 // pred_check_branch
        %6271 = sbr.rel (%p6269) target = $region48
      $region47: #{chess_cnn_forward.3} parent=43 // pred_region
        %p6272 = scmp.lt.s32.totalorder %s16, 1
        %s6273 = scalar_select %p6272, %s16, 1
        %s6274 = smul.addr %s6273, 128
        %s6275 = smul.addr %s6274, 4
        %s6276 = scalar_lea.vmem %s4, %s6275
      $region48: #{chess_cnn_forward.3} parent=43 // pred_fallthru
        _
    $region44: #{chess_cnn_forward.3} parent=5 // pred_fallthru
      _
  $region6: #{chess_cnn_forward.3} parent=0 // loop_footer
    %s14 = sadd.s32 1, %s10
  $region7: #{chess_cnn_forward.3} parent=0 // loop_footer_branch
    %9 = sbr.rel target = $region3
  $region8: #{chess_cnn_forward.3} parent=0 // loop_exit
    _

// kernel: chess_cnn_forward.5
$region0: #{chess_cnn_forward.5}
  #allocation0 [shape = 'u32[]', space=smem, size = 0x4, offset = 0x4, fixed_abs, tag = 'smem constant byte address 0x4 - core index']
  #allocation1 [shape = 'u32[72,128]{1,0:T(1,128)}', space=vmem, size = 0x9000, scoped, tag = 'internal scratch']
  #allocation2 [shape = 'f32[2,128]{1,0:T(2,128)}', space=vmem, size = 0x400, scoped, tag = 'scratch operand']
  %s0 = inlined_call_operand.vmem [shape: bf16[2,16384], index: 0, kind: input, shape index: {}]
  %s1 = inlined_call_operand.vmem [shape: bf16[1,16384,128], index: 1, kind: input, shape index: {}]
  %s2 = inlined_call_operand.vmem [shape: f32[1,1,128], index: 2, kind: input, shape index: {}]
  %s3 = inlined_call_operand.vmem [shape: f32[1,128,13], index: 3, kind: input, shape index: {}]
  %s4 = inlined_call_operand.vmem [shape: f32[1,1,13], index: 4, kind: input, shape index: {}]
  %s5 = inlined_call_operand.hbm [shape: f32[1,2,13], index: 5, kind: output, shape index: {}]
  %s6 = sld [smem:[#allocation0]]
  $region61: #{chess_cnn_forward.5} parent=0
    _
  %s8 = ssub.s32 1, %s6
  %s9 = scalar_select 0, %s8, %s6
  $region1: #{chess_cnn_forward.5} parent=0
    #allocation3 [shape = 'u8[1024]{0}', space=vmem, size = 0x400, scoped, tag = 'output window, operand 0, single buffered']
    #allocation4 [shape = 's32[2]{0}', space=sflag, size = 0x8, scoped, tag = 'scoped memory for chess_cnn_forward.5']
    %10 = vsyncpa [#allocation4], 0
    loop: start=0, step=1, limit=10
    $region2: #{chess_cnn_forward.5} parent=1 // loop_pre_header
      _
    $region3: #{chess_cnn_forward.5} parent=1 // loop_header
      %s12 = sphi 0, %s16
      %p13 = scmp.ge.s32.totalorder %s12, 10
      %s19 = sphi 0, %s31
      %s20 = sphi 0, %s27
      %s21 = sphi 0, %s19
      %s22 = sphi 0, %s20
      %s23 = sphi 0, %s21
      %s24 = sphi 0, %s22
      %s34 = sphi 0, %s36
      %s37 = sphi 0, %s34
      %s38 = sphi 0, %s37
      %s54 = sphi 0, %s38
      %s62 = sphi 0, %s64
      %s65 = sphi 0, %s62
      %s66 = sphi 0, %s65
      %s82 = sphi 0, %s66
      %s88 = sphi 0, %s90
      %s91 = sphi 0, %s88
      %s92 = sphi 0, %s91
      %s108 = sphi 0, %s92
      %s114 = sphi 0, %s116
      %s117 = sphi 0, %s114
      %s118 = sphi 0, %s117
      %s134 = sphi 0, %s118
      %s140 = sphi 0, %s142
      %s143 = sphi 0, %s140
      %s144 = sphi 0, %s143
      %s160 = sphi 0, %s144
      %s166 = sphi 0, %s168
      %s169 = sphi 0, %s166
      %s170 = sphi 0, %s169
      %s186 = sphi 0, %s170
    $region4: #{chess_cnn_forward.5} parent=1 // loop_header_branch
      %15 = sbr.rel (%p13) target = $region8
    $region5: #{chess_cnn_forward.5} parent=1 // loop_body
      %s17 = ssub.s32 %s12, 1
      %s18 = ssub.s32 %s12, 2
      %s25 = sadd.s32 1, %s20
      %p26 = scmp.ge.s32.totalorder %s25, 8
      %s27 = scalar_select %p26, 0, %s25
      %s28 = sadd.s32 1, %s19
      %s29 = scalar_select %p26, %s28, %s19
      %p30 = scmp.ge.s32.totalorder %s29, 1
      %s31 = scalar_select %p30, 0, %s29
      %s32 = ssub.s32 %s20, %s27
      %p33 = scmp.eq.s32.totalorder %s32, 0
      %s35 = sadd.s32 %s34, 1
      %s36 = scalar_select %p33, %s34, %s35
      %p39 = pneg %p33
      %p40 = scmp.eq.s32.totalorder %s12, 7
      %p41 = por %p39, %p40
      %p42 = scmp.ne.s32.totalorder %s34, %s37
      %p43 = scmp.eq.s32.totalorder %s12, 0
      %p44 = por %p42, %p43
      %p45 = scmp.ne.s32.totalorder %s34, %s37
      %p46 = scmp.eq.s32.totalorder %s17, 7
      %p47 = por %p45, %p46
      %p48 = scmp.ne.s32.totalorder %s37, %s38
      %p49 = scmp.eq.s32.totalorder %s17, 0
      %p50 = por %p48, %p49
      %p51 = scmp.ne.s32.totalorder %s37, %s38
      %p52 = scmp.eq.s32.totalorder %s18, 7
      %p53 = por %p51, %p52
      %p55 = scmp.ne.s32.totalorder %s38, %s54
      %p56 = scmp.eq.s32.totalorder %s18, 0
      %p57 = por %p55, %p56
      %s58 = ssub.s32 %s19, %s31
      %s59 = ssub.s32 %s20, %s27
      %s60 = sor.u32 %s58, %s59
      %p61 = scmp.eq.s32.totalorder %s60, 0
      %s63 = sadd.s32 %s62, 1
      %s64 = scalar_select %p61, %s62, %s63
      %p67 = pneg %p61
      %p68 = scmp.eq.s32.totalorder %s12, 7
      %p69 = por %p67, %p68
      %p70 = scmp.ne.s32.totalorder %s62, %s65
      %p71 = scmp.eq.s32.totalorder %s12, 0
      %p72 = por %p70, %p71
      %p73 = scmp.ne.s32.totalorder %s62, %s65
      %p74 = scmp.eq.s32.totalorder %s17, 7
      %p75 = por %p73, %p74
      %p76 = scmp.ne.s32.totalorder %s65, %s66
      %p77 = scmp.eq.s32.totalorder %s17, 0
      %p78 = por %p76, %p77
      %p79 = scmp.ne.s32.totalorder %s65, %s66
      %p80 = scmp.eq.s32.totalorder %s18, 7
      %p81 = por %p79, %p80
      %p83 = scmp.ne.s32.totalorder %s66, %s82
      %p84 = scmp.eq.s32.totalorder %s18, 0
      %p85 = por %p83, %p84
      %s86 = ssub.s32 %s19, %s31
      %p87 = scmp.eq.s32.totalorder %s86, 0
      %s89 = sadd.s32 %s88, 1
      %s90 = scalar_select %p87, %s88, %s89
      %p93 = pneg %p87
      %p94 = scmp.eq.s32.totalorder %s12, 7
      %p95 = por %p93, %p94
      %p96 = scmp.ne.s32.totalorder %s88, %s91
      %p97 = scmp.eq.s32.totalorder %s12, 0
      %p98 = por %p96, %p97
      %p99 = scmp.ne.s32.totalorder %s88, %s91
      %p100 = scmp.eq.s32.totalorder %s17, 7
      %p101 = por %p99, %p100
      %p102 = scmp.ne.s32.totalorder %s91, %s92
      %p103 = scmp.eq.s32.totalorder %s17, 0
      %p104 = por %p102, %p103
      %p105 = scmp.ne.s32.totalorder %s91, %s92
      %p106 = scmp.eq.s32.totalorder %s18, 7
      %p107 = por %p105, %p106
      %p109 = scmp.ne.s32.totalorder %s92, %s108
      %p110 = scmp.eq.s32.totalorder %s18, 0
      %p111 = por %p109, %p110
      %s112 = ssub.s32 %s19, %s31
      %p113 = scmp.eq.s32.totalorder %s112, 0
      %s115 = sadd.s32 %s114, 1
      %s116 = scalar_select %p113, %s114, %s115
      %p119 = pneg %p113
      %p120 = scmp.eq.s32.totalorder %s12, 7
      %p121 = por %p119, %p120
      %p122 = scmp.ne.s32.totalorder %s114, %s117
      %p123 = scmp.eq.s32.totalorder %s12, 0
      %p124 = por %p122, %p123
      %p125 = scmp.ne.s32.totalorder %s114, %s117
      %p126 = scmp.eq.s32.totalorder %s17, 7
      %p127 = por %p125, %p126
      %p128 = scmp.ne.s32.totalorder %s117, %s118
      %p129 = scmp.eq.s32.totalorder %s17, 0
      %p130 = por %p128, %p129
      %p131 = scmp.ne.s32.totalorder %s117, %s118
      %p132 = scmp.eq.s32.totalorder %s18, 7
      %p133 = por %p131, %p132
      %p135 = scmp.ne.s32.totalorder %s118, %s134
      %p136 = scmp.eq.s32.totalorder %s18, 0
      %p137 = por %p135, %p136
      %s138 = ssub.s32 %s19, %s31
      %p139 = scmp.eq.s32.totalorder %s138, 0
      %s141 = sadd.s32 %s140, 1
      %s142 = scalar_select %p139, %s140, %s141
      %p145 = pneg %p139
      %p146 = scmp.eq.s32.totalorder %s12, 7
      %p147 = por %p145, %p146
      %p148 = scmp.ne.s32.totalorder %s140, %s143
      %p149 = scmp.eq.s32.totalorder %s12, 0
      %p150 = por %p148, %p149
      %p151 = scmp.ne.s32.totalorder %s140, %s143
      %p152 = scmp.eq.s32.totalorder %s17, 7
      %p153 = por %p151, %p152
      %p154 = scmp.ne.s32.totalorder %s143, %s144
      %p155 = scmp.eq.s32.totalorder %s17, 0
      %p156 = por %p154, %p155
      %p157 = scmp.ne.s32.totalorder %s143, %s144
      %p158 = scmp.eq.s32.totalorder %s18, 7
      %p159 = por %p157, %p158
      %p161 = scmp.ne.s32.totalorder %s144, %s160
      %p162 = scmp.eq.s32.totalorder %s18, 0
      %p163 = por %p161, %p162
      %s164 = ssub.s32 %s19, %s31
      %p165 = scmp.eq.s32.totalorder %s164, 0
      %s167 = sadd.s32 %s166, 1
      %s168 = scalar_select %p165, %s166, %s167
      %p171 = pneg %p165
      %p172 = scmp.eq.s32.totalorder %s12, 7
      %p173 = por %p171, %p172
      %p174 = scmp.ne.s32.totalorder %s166, %s169
      %p175 = scmp.eq.s32.totalorder %s12, 0
      %p176 = por %p174, %p175
      %p177 = scmp.ne.s32.totalorder %s166, %s169
      %p178 = scmp.eq.s32.totalorder %s17, 7
      %p179 = por %p177, %p178
      %p180 = scmp.ne.s32.totalorder %s169, %s170
      %p181 = scmp.eq.s32.totalorder %s17, 0
      %p182 = por %p180, %p181
      %p183 = scmp.ne.s32.totalorder %s169, %s170
      %p184 = scmp.eq.s32.totalorder %s18, 7
      %p185 = por %p183, %p184
      %p187 = scmp.ne.s32.totalorder %s170, %s186
      %p188 = scmp.eq.s32.totalorder %s18, 0
      %p189 = por %p187, %p188
      %p190 = scmp.le.s32.totalorder 1, %s12
      %p191 = scmp.lt.s32.totalorder %s12, 9
      %p192 = pnand %p190, %p191
      %p193 = pneg %p192
      // Predicated region
      $region9: #{chess_cnn_forward.5} parent=5 // pred_check
        _
      $region10: #{chess_cnn_forward.5} parent=5 // pred_check_branch
        %195 = sbr.rel (%p192) target = $region12
      $region11: #{chess_cnn_forward.5} parent=5 // pred_region
        %s196 = ssub.s32 %s12, 1
        // Predicated region
        $region13: #{chess_cnn_forward.5} parent=11 // pred_check
          %p197 = pneg %p104
        $region14: #{chess_cnn_forward.5} parent=11 // pred_check_branch
          %199 = sbr.rel (%p197) target = $region16
        $region15: #{chess_cnn_forward.5} parent=11 // pred_region
          %p200 = scmp.lt.s32.totalorder %s21, 0
          %s201 = scalar_select %p200, %s21, 0
          %s202 = scalar_lea.vmem %s2, %s201
        $region16: #{chess_cnn_forward.5} parent=11 // pred_fallthru
          _
        // Predicated region
        $region17: #{chess_cnn_forward.5} parent=11 // pred_check
          %p203 = pneg %p130
        $region18: #{chess_cnn_forward.5} parent=11 // pred_check_branch
          %205 = sbr.rel (%p203) target = $region20
        $region19: #{chess_cnn_forward.5} parent=11 // pred_region
          %p206 = scmp.lt.s32.totalorder %s21, 0
          %s207 = scalar_select %p206, %s21, 0
          %s208 = smul.addr %s207, 16
          %s209 = smul.addr %s208, 8
          %s210 = scalar_lea.vmem %s3, %s209
        $region20: #{chess_cnn_forward.5} parent=11 // pred_fallthru
          _
        // Predicated region
        $region21: #{chess_cnn_forward.5} parent=11 // pred_check
          %p211 = pneg %p156
        $region22: #{chess_cnn_forward.5} parent=11 // pred_check_branch
          %213 = sbr.rel (%p211) target = $region24
        $region23: #{chess_cnn_forward.5} parent=11 // pred_region
          %p214 = scmp.lt.s32.totalorder %s21, 0
          %s215 = scalar_select %p214, %s21, 0
          %s216 = scalar_lea.vmem %s4, %s215
        $region24: #{chess_cnn_forward.5} parent=11 // pred_fallthru
          _
      $region12: #{chess_cnn_forward.5} parent=5 // pred_fallthru
        _
      %p217 = scmp.lt.s32.totalorder %s12, 8
      // Predicated region
      $region25: #{chess_cnn_forward.5} parent=5 // pred_check
        %p218 = pneg %p217
      $region26: #{chess_cnn_forward.5} parent=5 // pred_check_branch
        %220 = sbr.rel (%p218) target = $region28
      $region27: #{chess_cnn_forward.5} parent=5 // pred_region
        // Predicated region
        $region29: #{chess_cnn_forward.5} parent=27 // pred_check
          %p221 = pneg %p44
        $region30: #{chess_cnn_forward.5} parent=27 // pred_check_branch
          %223 = sbr.rel (%p221) target = $region32
        $region31: #{chess_cnn_forward.5} parent=27 // pred_region
          %s224 = smul.u32 16, %s20
          %p225 = scmp.lt.s32.totalorder %s224, 127
          %s226 = scalar_select %p225, %s224, 127
          %s227 = scalar_lea.vmem %s0, %s226
          %s228 = smul.u32 16, %s20
        $region32: #{chess_cnn_forward.5} parent=27 // pred_fallthru
          _
        // Predicated region
        $region33: #{chess_cnn_forward.5} parent=27 // pred_check
          %p229 = pneg %p72
        $region34: #{chess_cnn_forward.5} parent=27 // pred_check_branch
          %231 = sbr.rel (%p229) target = $region36
        $region35: #{chess_cnn_forward.5} parent=27 // pred_region
          %s232 = smul.u32 256, %s20
          %p233 = scmp.lt.s32.totalorder %s19, 0
          %s234 = scalar_select %p233, %s19, 0
          %p235 = scmp.lt.s32.totalorder %s232, 2047
          %s236 = scalar_select %p235, %s232, 2047
          %s237 = smul.addr %s234, 2048
          %s238 = sadd.s32 %s236, %s237
          %s239 = smul.addr %s238, 4
          %s240 = scalar_lea.vmem %s1, %s239
          %s241 = smul.u32 256, %s20
        $region36: #{chess_cnn_forward.5} parent=27 // pred_fallthru
          _
      $region28: #{chess_cnn_forward.5} parent=5 // pred_fallthru
        _
      %p242 = scmp.le.s32.totalorder 1, %s12
      %p243 = scmp.lt.s32.totalorder %s12, 9
      %p244 = pnand %p242, %p243
      %p245 = pneg %p244
      // Predicated region
      $region37: #{chess_cnn_forward.5} parent=5 // pred_check
        _
      $region38: #{chess_cnn_forward.5} parent=5 // pred_check_branch
        %247 = sbr.rel (%p244) target = $region40
      $region39: #{chess_cnn_forward.5} parent=5 // pred_region
        %s248 = ssub.s32 %s12, 1
        %s249 = smul.u32 16, %s22
        %p250 = scmp.lt.s32.totalorder %s249, 127
        %s251 = scalar_select %p250, %s249, 127
        %s252 = scalar_lea.vmem %s0, %s251
        %p253 = pneg %p50
        %p254 = pneg %p47
        %s255 = smul.u32 256, %s22
        %p256 = scmp.lt.s32.totalorder %s21, 0
        %s257 = scalar_select %p256, %s21, 0
        %p258 = scmp.lt.s32.totalorder %s255, 2047
        %s259 = scalar_select %p258, %s255, 2047
        %s260 = smul.addr %s257, 2048
        %s261 = sadd.s32 %s259, %s260
        %s262 = smul.addr %s261, 4
        %s263 = scalar_lea.vmem %s1, %s262
        %p264 = pneg %p78
        %p265 = pneg %p75
        %p266 = scmp.lt.s32.totalorder %s21, 0
        %s267 = scalar_select %p266, %s21, 0
        %s268 = scalar_lea.vmem %s2, %s267
        %p269 = pneg %p104
        %p270 = pneg %p101
        %p271 = scmp.lt.s32.totalorder %s21, 0
        %s272 = scalar_select %p271, %s21, 0
        %s273 = smul.addr %s272, 16
        %s274 = smul.addr %s273, 8
        %s275 = scalar_lea.vmem %s3, %s274
        %p276 = pneg %p130
        %p277 = pneg %p127
        %p278 = scmp.lt.s32.totalorder %s21, 0
        %s279 = scalar_select %p278, %s21, 0
        %s280 = scalar_lea.vmem %s4, %s279
        %p281 = pneg %p156
        %p282 = pneg %p153
        %p283 = pneg %p182
        %p284 = pneg %p179
        %s285 = smul.u32 16, %s22
        %p286 = scmp.lt.s32.totalorder %s285, 127
        %s287 = scalar_select %p286, %s285, 127
        %s288 = scalar_lea.vmem %s0, %s287
        %s289 = smul.u32 16, %s22
        %s290 = smul.u32 256, %s22
        %p291 = scmp.lt.s32.totalorder %s21, 0
        %s292 = scalar_select %p291, %s21, 0
        %p293 = scmp.lt.s32.totalorder %s290, 2047
        %s294 = scalar_select %p293, %s290, 2047
        %s295 = smul.addr %s292, 2048
        %s296 = sadd.s32 %s294, %s295
        %s297 = smul.addr %s296, 4
        %s298 = scalar_lea.vmem %s1, %s297
        %s299 = smul.u32 256, %s22
        %p300 = scmp.lt.s32.totalorder %s21, 0
        %s301 = scalar_select %p300, %s21, 0
        %s302 = scalar_lea.vmem %s2, %s301
        %p303 = scmp.lt.s32.totalorder %s21, 0
        %s304 = scalar_select %p303, %s21, 0
        %s305 = smul.addr %s304, 16
        %s306 = smul.addr %s305, 8
        %s307 = scalar_lea.vmem %s3, %s306
        %p308 = scmp.lt.s32.totalorder %s21, 0
        %s309 = scalar_select %p308, %s21, 0
        %s310 = scalar_lea.vmem %s4, %s309
        %p311 = scmp.eq.s32.totalorder %s22, 0
        // Predicated region
        $region41: #{chess_cnn_forward.5} parent=39 // pred_check
          %p312 = pneg %p311
        $region42: #{chess_cnn_forward.5} parent=39 // pred_check_branch
          %314 = sbr.rel (%p312) target = $region44
        $region43: #{chess_cnn_forward.5} parent=39 // pred_region
          %315 = vst [vmem:[#allocation2] sm:$0x3] 0.0
        $region44: #{chess_cnn_forward.5} parent=39 // pred_fallthru
          _
        %v316 = vld [vmem:[#allocation2] sm:$0x3]
        %v317 = vld [vmem:[%s288] sm:$0xff]
        %v318 = vld [vmem:[%s288 + $0x8] sm:$0xff]
        %v319 = vld [vmem:[%s298] sm:$0xf]
        %v320 = vld [vmem:[%s298 + $0x4] sm:$0xf]
        %v321 = vld [vmem:[%s298 + $0x8] sm:$0xf]
        %v322 = vld [vmem:[%s298 + $0xc] sm:$0xf]
        %v323 = vld [vmem:[%s298 + $0x10] sm:$0xf]
        %v324 = vld [vmem:[%s298 + $0x14] sm:$0xf]
        %v325 = vld [vmem:[%s298 + $0x18] sm:$0xf]
        %v326 = vld [vmem:[%s298 + $0x1c] sm:$0xf]
        %v327 = vld [vmem:[%s298 + $0x20] sm:$0xf]
        %v328 = vld [vmem:[%s298 + $0x24] sm:$0xf]
        %v329 = vld [vmem:[%s298 + $0x28] sm:$0xf]
        %v330 = vld [vmem:[%s298 + $0x2c] sm:$0xf]
        %v331 = vld [vmem:[%s298 + $0x30] sm:$0xf]
        %v332 = vld [vmem:[%s298 + $0x34] sm:$0xf]
        %v333 = vld [vmem:[%s298 + $0x38] sm:$0xf]
        %v334 = vld [vmem:[%s298 + $0x3c] sm:$0xf]
        %v335 = vld [vmem:[%s298 + $0x40] sm:$0xf]
        %v336 = vld [vmem:[%s298 + $0x44] sm:$0xf]
        %v337 = vld [vmem:[%s298 + $0x48] sm:$0xf]
        %v338 = vld [vmem:[%s298 + $0x4c] sm:$0xf]
        %v339 = vld [vmem:[%s298 + $0x50] sm:$0xf]
        %v340 = vld [vmem:[%s298 + $0x54] sm:$0xf]
        %v341 = vld [vmem:[%s298 + $0x58] sm:$0xf]
        %v342 = vld [vmem:[%s298 + $0x5c] sm:$0xf]
        %v343 = vld [vmem:[%s298 + $0x60] sm:$0xf]
        %v344 = vld [vmem:[%s298 + $0x64] sm:$0xf]
        %v345 = vld [vmem:[%s298 + $0x68] sm:$0xf]
        %v346 = vld [vmem:[%s298 + $0x6c] sm:$0xf]
        %v347 = vld [vmem:[%s298 + $0x70] sm:$0xf]
        %v348 = vld [vmem:[%s298 + $0x74] sm:$0xf]
        %v349 = vld [vmem:[%s298 + $0x78] sm:$0xf]
        %v350 = vld [vmem:[%s298 + $0x7c] sm:$0xf]
        %v351 = vld [vmem:[%s298 + $0x80] sm:$0xf]
        %v352 = vld [vmem:[%s298 + $0x84] sm:$0xf]
        %v353 = vld [vmem:[%s298 + $0x88] sm:$0xf]
        %v354 = vld [vmem:[%s298 + $0x8c] sm:$0xf]
        %v355 = vld [vmem:[%s298 + $0x90] sm:$0xf]
        %v356 = vld [vmem:[%s298 + $0x94] sm:$0xf]
        %v357 = vld [vmem:[%s298 + $0x98] sm:$0xf]
        %v358 = vld [vmem:[%s298 + $0x9c] sm:$0xf]
        %v359 = vld [vmem:[%s298 + $0xa0] sm:$0xf]
        %v360 = vld [vmem:[%s298 + $0xa4] sm:$0xf]
        %v361 = vld [vmem:[%s298 + $0xa8] sm:$0xf]
        %v362 = vld [vmem:[%s298 + $0xac] sm:$0xf]
        %v363 = vld [vmem:[%s298 + $0xb0] sm:$0xf]
        %v364 = vld [vmem:[%s298 + $0xb4] sm:$0xf]
        %v365 = vld [vmem:[%s298 + $0xb8] sm:$0xf]
        %v366 = vld [vmem:[%s298 + $0xbc] sm:$0xf]
        %v367 = vld [vmem:[%s298 + $0xc0] sm:$0xf]
        %v368 = vld [vmem:[%s298 + $0xc4] sm:$0xf]
        %v369 = vld [vmem:[%s298 + $0xc8] sm:$0xf]
        %v370 = vld [vmem:[%s298 + $0xcc] sm:$0xf]
        %v371 = vld [vmem:[%s298 + $0xd0] sm:$0xf]
        %v372 = vld [vmem:[%s298 + $0xd4] sm:$0xf]
        %v373 = vld [vmem:[%s298 + $0xd8] sm:$0xf]
        %v374 = vld [vmem:[%s298 + $0xdc] sm:$0xf]
        %v375 = vld [vmem:[%s298 + $0xe0] sm:$0xf]
        %v376 = vld [vmem:[%s298 + $0xe4] sm:$0xf]
        %v377 = vld [vmem:[%s298 + $0xe8] sm:$0xf]
        %v378 = vld [vmem:[%s298 + $0xec] sm:$0xf]
        %v379 = vld [vmem:[%s298 + $0xf0] sm:$0xf]
        %v380 = vld [vmem:[%s298 + $0xf4] sm:$0xf]
        %v381 = vld [vmem:[%s298 + $0xf8] sm:$0xf]
        %v382 = vld [vmem:[%s298 + $0xfc] sm:$0xf]
        %v383 = vld [vmem:[%s298 + $0x100] sm:$0xf]
        %v384 = vld [vmem:[%s298 + $0x104] sm:$0xf]
        %v385 = vld [vmem:[%s298 + $0x108] sm:$0xf]
        %v386 = vld [vmem:[%s298 + $0x10c] sm:$0xf]
        %v387 = vld [vmem:[%s298 + $0x110] sm:$0xf]
        %v388 = vld [vmem:[%s298 + $0x114] sm:$0xf]
        %v389 = vld [vmem:[%s298 + $0x118] sm:$0xf]
        %v390 = vld [vmem:[%s298 + $0x11c] sm:$0xf]
        %v391 = vld [vmem:[%s298 + $0x120] sm:$0xf]
        %v392 = vld [vmem:[%s298 + $0x124] sm:$0xf]
        %v393 = vld [vmem:[%s298 + $0x128] sm:$0xf]
        %v394 = vld [vmem:[%s298 + $0x12c] sm:$0xf]
        %v395 = vld [vmem:[%s298 + $0x130] sm:$0xf]
        %v396 = vld [vmem:[%s298 + $0x134] sm:$0xf]
        %v397 = vld [vmem:[%s298 + $0x138] sm:$0xf]
        %v398 = vld [vmem:[%s298 + $0x13c] sm:$0xf]
        %v399 = vld [vmem:[%s298 + $0x140] sm:$0xf]
        %v400 = vld [vmem:[%s298 + $0x144] sm:$0xf]
        %v401 = vld [vmem:[%s298 + $0x148] sm:$0xf]
        %v402 = vld [vmem:[%s298 + $0x14c] sm:$0xf]
        %v403 = vld [vmem:[%s298 + $0x150] sm:$0xf]
        %v404 = vld [vmem:[%s298 + $0x154] sm:$0xf]
        %v405 = vld [vmem:[%s298 + $0x158] sm:$0xf]
        %v406 = vld [vmem:[%s298 + $0x15c] sm:$0xf]
        %v407 = vld [vmem:[%s298 + $0x160] sm:$0xf]
        %v408 = vld [vmem:[%s298 + $0x164] sm:$0xf]
        %v409 = vld [vmem:[%s298 + $0x168] sm:$0xf]
        %v410 = vld [vmem:[%s298 + $0x16c] sm:$0xf]
        %v411 = vld [vmem:[%s298 + $0x170] sm:$0xf]
        %v412 = vld [vmem:[%s298 + $0x174] sm:$0xf]
        %v413 = vld [vmem:[%s298 + $0x178] sm:$0xf]
        %v414 = vld [vmem:[%s298 + $0x17c] sm:$0xf]
        %v415 = vld [vmem:[%s298 + $0x180] sm:$0xf]
        %v416 = vld [vmem:[%s298 + $0x184] sm:$0xf]
        %v417 = vld [vmem:[%s298 + $0x188] sm:$0xf]
        %v418 = vld [vmem:[%s298 + $0x18c] sm:$0xf]
        %v419 = vld [vmem:[%s298 + $0x190] sm:$0xf]
        %v420 = vld [vmem:[%s298 + $0x194] sm:$0xf]
        %v421 = vld [vmem:[%s298 + $0x198] sm:$0xf]
        %v422 = vld [vmem:[%s298 + $0x19c] sm:$0xf]
        %v423 = vld [vmem:[%s298 + $0x1a0] sm:$0xf]
        %v424 = vld [vmem:[%s298 + $0x1a4] sm:$0xf]
        %v425 = vld [vmem:[%s298 + $0x1a8] sm:$0xf]
        %v426 = vld [vmem:[%s298 + $0x1ac] sm:$0xf]
        %v427 = vld [vmem:[%s298 + $0x1b0] sm:$0xf]
        %v428 = vld [vmem:[%s298 + $0x1b4] sm:$0xf]
        %v429 = vld [vmem:[%s298 + $0x1b8] sm:$0xf]
        %v430 = vld [vmem:[%s298 + $0x1bc] sm:$0xf]
        %v431 = vld [vmem:[%s298 + $0x1c0] sm:$0xf]
        %v432 = vld [vmem:[%s298 + $0x1c4] sm:$0xf]
        %v433 = vld [vmem:[%s298 + $0x1c8] sm:$0xf]
        %v434 = vld [vmem:[%s298 + $0x1cc] sm:$0xf]
        %v435 = vld [vmem:[%s298 + $0x1d0] sm:$0xf]
        %v436 = vld [vmem:[%s298 + $0x1d4] sm:$0xf]
        %v437 = vld [vmem:[%s298 + $0x1d8] sm:$0xf]
        %v438 = vld [vmem:[%s298 + $0x1dc] sm:$0xf]
        %v439 = vld [vmem:[%s298 + $0x1e0] sm:$0xf]
        %v440 = vld [vmem:[%s298 + $0x1e4] sm:$0xf]
        %v441 = vld [vmem:[%s298 + $0x1e8] sm:$0xf]
        %v442 = vld [vmem:[%s298 + $0x1ec] sm:$0xf]
        %v443 = vld [vmem:[%s298 + $0x1f0] sm:$0xf]
        %v444 = vld [vmem:[%s298 + $0x1f4] sm:$0xf]
        %v445 = vld [vmem:[%s298 + $0x1f8] sm:$0xf]
        %v446 = vld [vmem:[%s298 + $0x1fc] sm:$0xf]
        %v447 = vld [vmem:[%s298 + $0x200] sm:$0xf]
        %v448 = vld [vmem:[%s298 + $0x204] sm:$0xf]
        %v449 = vld [vmem:[%s298 + $0x208] sm:$0xf]
        %v450 = vld [vmem:[%s298 + $0x20c] sm:$0xf]
        %v451 = vld [vmem:[%s298 + $0x210] sm:$0xf]
        %v452 = vld [vmem:[%s298 + $0x214] sm:$0xf]
        %v453 = vld [vmem:[%s298 + $0x218] sm:$0xf]
        %v454 = vld [vmem:[%s298 + $0x21c] sm:$0xf]
        %v455 = vld [vmem:[%s298 + $0x220] sm:$0xf]
        %v456 = vld [vmem:[%s298 + $0x224] sm:$0xf]
        %v457 = vld [vmem:[%s298 + $0x228] sm:$0xf]
        %v458 = vld [vmem:[%s298 + $0x22c] sm:$0xf]
        %v459 = vld [vmem:[%s298 + $0x230] sm:$0xf]
        %v460 = vld [vmem:[%s298 + $0x234] sm:$0xf]
        %v461 = vld [vmem:[%s298 + $0x238] sm:$0xf]
        %v462 = vld [vmem:[%s298 + $0x23c] sm:$0xf]
        %v463 = vld [vmem:[%s298 + $0x240] sm:$0xf]
        %v464 = vld [vmem:[%s298 + $0x244] sm:$0xf]
        %v465 = vld [vmem:[%s298 + $0x248] sm:$0xf]
        %v466 = vld [vmem:[%s298 + $0x24c] sm:$0xf]
        %v467 = vld [vmem:[%s298 + $0x250] sm:$0xf]
        %v468 = vld [vmem:[%s298 + $0x254] sm:$0xf]
        %v469 = vld [vmem:[%s298 + $0x258] sm:$0xf]
        %v470 = vld [vmem:[%s298 + $0x25c] sm:$0xf]
        %v471 = vld [vmem:[%s298 + $0x260] sm:$0xf]
        %v472 = vld [vmem:[%s298 + $0x264] sm:$0xf]
        %v473 = vld [vmem:[%s298 + $0x268] sm:$0xf]
        %v474 = vld [vmem:[%s298 + $0x26c] sm:$0xf]
        %v475 = vld [vmem:[%s298 + $0x270] sm:$0xf]
        %v476 = vld [vmem:[%s298 + $0x274] sm:$0xf]
        %v477 = vld [vmem:[%s298 + $0x278] sm:$0xf]
        %v478 = vld [vmem:[%s298 + $0x27c] sm:$0xf]
        %v479 = vld [vmem:[%s298 + $0x280] sm:$0xf]
        %v480 = vld [vmem:[%s298 + $0x284] sm:$0xf]
        %v481 = vld [vmem:[%s298 + $0x288] sm:$0xf]
        %v482 = vld [vmem:[%s298 + $0x28c] sm:$0xf]
        %v483 = vld [vmem:[%s298 + $0x290] sm:$0xf]
        %v484 = vld [vmem:[%s298 + $0x294] sm:$0xf]
        %v485 = vld [vmem:[%s298 + $0x298] sm:$0xf]
        %v486 = vld [vmem:[%s298 + $0x29c] sm:$0xf]
        %v487 = vld [vmem:[%s298 + $0x2a0] sm:$0xf]
        %v488 = vld [vmem:[%s298 + $0x2a4] sm:$0xf]
        %v489 = vld [vmem:[%s298 + $0x2a8] sm:$0xf]
        %v490 = vld [vmem:[%s298 + $0x2ac] sm:$0xf]
        %v491 = vld [vmem:[%s298 + $0x2b0] sm:$0xf]
        %v492 = vld [vmem:[%s298 + $0x2b4] sm:$0xf]
        %v493 = vld [vmem:[%s298 + $0x2b8] sm:$0xf]
        %v494 = vld [vmem:[%s298 + $0x2bc] sm:$0xf]
        %v495 = vld [vmem:[%s298 + $0x2c0] sm:$0xf]
        %v496 = vld [vmem:[%s298 + $0x2c4] sm:$0xf]
        %v497 = vld [vmem:[%s298 + $0x2c8] sm:$0xf]
        %v498 = vld [vmem:[%s298 + $0x2cc] sm:$0xf]
        %v499 = vld [vmem:[%s298 + $0x2d0] sm:$0xf]
        %v500 = vld [vmem:[%s298 + $0x2d4] sm:$0xf]
        %v501 = vld [vmem:[%s298 + $0x2d8] sm:$0xf]
        %v502 = vld [vmem:[%s298 + $0x2dc] sm:$0xf]
        %v503 = vld [vmem:[%s298 + $0x2e0] sm:$0xf]
        %v504 = vld [vmem:[%s298 + $0x2e4] sm:$0xf]
        %v505 = vld [vmem:[%s298 + $0x2e8] sm:$0xf]
        %v506 = vld [vmem:[%s298 + $0x2ec] sm:$0xf]
        %v507 = vld [vmem:[%s298 + $0x2f0] sm:$0xf]
        %v508 = vld [vmem:[%s298 + $0x2f4] sm:$0xf]
        %v509 = vld [vmem:[%s298 + $0x2f8] sm:$0xf]
        %v510 = vld [vmem:[%s298 + $0x2fc] sm:$0xf]
        %v511 = vld [vmem:[%s298 + $0x300] sm:$0xf]
        %v512 = vld [vmem:[%s298 + $0x304] sm:$0xf]
        %v513 = vld [vmem:[%s298 + $0x308] sm:$0xf]
        %v514 = vld [vmem:[%s298 + $0x30c] sm:$0xf]
        %v515 = vld [vmem:[%s298 + $0x310] sm:$0xf]
        %v516 = vld [vmem:[%s298 + $0x314] sm:$0xf]
        %v517 = vld [vmem:[%s298 + $0x318] sm:$0xf]
        %v518 = vld [vmem:[%s298 + $0x31c] sm:$0xf]
        %v519 = vld [vmem:[%s298 + $0x320] sm:$0xf]
        %v520 = vld [vmem:[%s298 + $0x324] sm:$0xf]
        %v521 = vld [vmem:[%s298 + $0x328] sm:$0xf]
        %v522 = vld [vmem:[%s298 + $0x32c] sm:$0xf]
        %v523 = vld [vmem:[%s298 + $0x330] sm:$0xf]
        %v524 = vld [vmem:[%s298 + $0x334] sm:$0xf]
        %v525 = vld [vmem:[%s298 + $0x338] sm:$0xf]
        %v526 = vld [vmem:[%s298 + $0x33c] sm:$0xf]
        %v527 = vld [vmem:[%s298 + $0x340] sm:$0xf]
        %v528 = vld [vmem:[%s298 + $0x344] sm:$0xf]
        %v529 = vld [vmem:[%s298 + $0x348] sm:$0xf]
        %v530 = vld [vmem:[%s298 + $0x34c] sm:$0xf]
        %v531 = vld [vmem:[%s298 + $0x350] sm:$0xf]
        %v532 = vld [vmem:[%s298 + $0x354] sm:$0xf]
        %v533 = vld [vmem:[%s298 + $0x358] sm:$0xf]
        %v534 = vld [vmem:[%s298 + $0x35c] sm:$0xf]
        %v535 = vld [vmem:[%s298 + $0x360] sm:$0xf]
        %v536 = vld [vmem:[%s298 + $0x364] sm:$0xf]
        %v537 = vld [vmem:[%s298 + $0x368] sm:$0xf]
        %v538 = vld [vmem:[%s298 + $0x36c] sm:$0xf]
        %v539 = vld [vmem:[%s298 + $0x370] sm:$0xf]
        %v540 = vld [vmem:[%s298 + $0x374] sm:$0xf]
        %v541 = vld [vmem:[%s298 + $0x378] sm:$0xf]
        %v542 = vld [vmem:[%s298 + $0x37c] sm:$0xf]
        %v543 = vld [vmem:[%s298 + $0x380] sm:$0xf]
        %v544 = vld [vmem:[%s298 + $0x384] sm:$0xf]
        %v545 = vld [vmem:[%s298 + $0x388] sm:$0xf]
        %v546 = vld [vmem:[%s298 + $0x38c] sm:$0xf]
        %v547 = vld [vmem:[%s298 + $0x390] sm:$0xf]
        %v548 = vld [vmem:[%s298 + $0x394] sm:$0xf]
        %v549 = vld [vmem:[%s298 + $0x398] sm:$0xf]
        %v550 = vld [vmem:[%s298 + $0x39c] sm:$0xf]
        %v551 = vld [vmem:[%s298 + $0x3a0] sm:$0xf]
        %v552 = vld [vmem:[%s298 + $0x3a4] sm:$0xf]
        %v553 = vld [vmem:[%s298 + $0x3a8] sm:$0xf]
        %v554 = vld [vmem:[%s298 + $0x3ac] sm:$0xf]
        %v555 = vld [vmem:[%s298 + $0x3b0] sm:$0xf]
        %v556 = vld [vmem:[%s298 + $0x3b4] sm:$0xf]
        %v557 = vld [vmem:[%s298 + $0x3b8] sm:$0xf]
        %v558 = vld [vmem:[%s298 + $0x3bc] sm:$0xf]
        %v559 = vld [vmem:[%s298 + $0x3c0] sm:$0xf]
        %v560 = vld [vmem:[%s298 + $0x3c4] sm:$0xf]
        %v561 = vld [vmem:[%s298 + $0x3c8] sm:$0xf]
        %v562 = vld [vmem:[%s298 + $0x3cc] sm:$0xf]
        %v563 = vld [vmem:[%s298 + $0x3d0] sm:$0xf]
        %v564 = vld [vmem:[%s298 + $0x3d4] sm:$0xf]
        %v565 = vld [vmem:[%s298 + $0x3d8] sm:$0xf]
        %v566 = vld [vmem:[%s298 + $0x3dc] sm:$0xf]
        %v567 = vld [vmem:[%s298 + $0x3e0] sm:$0xf]
        %v568 = vld [vmem:[%s298 + $0x3e4] sm:$0xf]
        %v569 = vld [vmem:[%s298 + $0x3e8] sm:$0xf]
        %v570 = vld [vmem:[%s298 + $0x3ec] sm:$0xf]
        %v571 = vld [vmem:[%s298 + $0x3f0] sm:$0xf]
        %v572 = vld [vmem:[%s298 + $0x3f4] sm:$0xf]
        %v573 = vld [vmem:[%s298 + $0x3f8] sm:$0xf]
        %v574 = vld [vmem:[%s298 + $0x3fc] sm:$0xf]
        %576 = vst [vmem:[#allocation1] ss:$9 sm:$0xff] %v317
        %v577 = vld [vmem:[#allocation1] sm:$0xff]
        %v578 = vld [vmem:[#allocation1 + $0x9] sm:$0xff]
        %v579 = vld [vmem:[#allocation1 + $0x12] sm:$0xff]
        %v580 = vld [vmem:[#allocation1 + $0x1b] sm:$0xff]
        %v581 = vld [vmem:[#allocation1 + $0x24] sm:$0xff]
        %v582 = vld [vmem:[#allocation1 + $0x2d] sm:$0xff]
        %v583 = vld [vmem:[#allocation1 + $0x36] sm:$0xff]
        %v584 = vld [vmem:[#allocation1 + $0x3f] sm:$0xff]
        %586 = vst [vmem:[#allocation1] ss:$9 sm:$0xff] %v318
        %v587 = vld [vmem:[#allocation1] sm:$0xff]
        %v588 = vld [vmem:[#allocation1 + $0x9] sm:$0xff]
        %v589 = vld [vmem:[#allocation1 + $0x12] sm:$0xff]
        %v590 = vld [vmem:[#allocation1 + $0x1b] sm:$0xff]
        %v591 = vld [vmem:[#allocation1 + $0x24] sm:$0xff]
        %v592 = vld [vmem:[#allocation1 + $0x2d] sm:$0xff]
        %v593 = vld [vmem:[#allocation1 + $0x36] sm:$0xff]
        %v594 = vld [vmem:[#allocation1 + $0x3f] sm:$0xff]
        %v867 = vunpack.c.l.b16 %v319
        %v868 = vunpack.c.l.b16 %v320
        %v869 = vunpack.c.l.b16 %v321
        %v870 = vunpack.c.l.b16 %v322
        %v871 = vunpack.c.l.b16 %v323
        %v872 = vunpack.c.l.b16 %v324
        %v873 = vunpack.c.l.b16 %v325
        %v874 = vunpack.c.l.b16 %v326
        %v875 = vunpack.c.l.b16 %v327
        %v876 = vunpack.c.l.b16 %v328
        %v877 = vunpack.c.l.b16 %v329
        %v878 = vunpack.c.l.b16 %v330
        %v879 = vunpack.c.l.b16 %v331
        %v880 = vunpack.c.l.b16 %v332
        %v881 = vunpack.c.l.b16 %v333
        %v882 = vunpack.c.l.b16 %v334
        %v883 = vunpack.c.l.b16 %v335
        %v884 = vunpack.c.l.b16 %v336
        %v885 = vunpack.c.l.b16 %v337
        %v886 = vunpack.c.l.b16 %v338
        %v887 = vunpack.c.l.b16 %v339
        %v888 = vunpack.c.l.b16 %v340
        %v889 = vunpack.c.l.b16 %v341
        %v890 = vunpack.c.l.b16 %v342
        %v891 = vunpack.c.l.b16 %v343
        %v892 = vunpack.c.l.b16 %v344
        %v893 = vunpack.c.l.b16 %v345
        %v894 = vunpack.c.l.b16 %v346
        %v895 = vunpack.c.l.b16 %v347
        %v896 = vunpack.c.l.b16 %v348
        %v897 = vunpack.c.l.b16 %v349
        %v898 = vunpack.c.l.b16 %v350
        %v899 = vunpack.c.l.b16 %v351
        %v900 = vunpack.c.l.b16 %v352
        %v901 = vunpack.c.l.b16 %v353
        %v902 = vunpack.c.l.b16 %v354
        %v903 = vunpack.c.l.b16 %v355
        %v904 = vunpack.c.l.b16 %v356
        %v905 = vunpack.c.l.b16 %v357
        %v906 = vunpack.c.l.b16 %v358
        %v907 = vunpack.c.l.b16 %v359
        %v908 = vunpack.c.l.b16 %v360
        %v909 = vunpack.c.l.b16 %v361
        %v910 = vunpack.c.l.b16 %v362
        %v911 = vunpack.c.l.b16 %v363
        %v912 = vunpack.c.l.b16 %v364
        %v913 = vunpack.c.l.b16 %v365
        %v914 = vunpack.c.l.b16 %v366
        %v915 = vunpack.c.l.b16 %v367
        %v916 = vunpack.c.l.b16 %v368
        %v917 = vunpack.c.l.b16 %v369
        %v918 = vunpack.c.l.b16 %v370
        %v919 = vunpack.c.l.b16 %v371
        %v920 = vunpack.c.l.b16 %v372
        %v921 = vunpack.c.l.b16 %v373
        %v922 = vunpack.c.l.b16 %v374
        %v923 = vunpack.c.l.b16 %v375
        %v924 = vunpack.c.l.b16 %v376
        %v925 = vunpack.c.l.b16 %v377
        %v926 = vunpack.c.l.b16 %v378
        %v927 = vunpack.c.l.b16 %v379
        %v928 = vunpack.c.l.b16 %v380
        %v929 = vunpack.c.l.b16 %v381
        %v930 = vunpack.c.l.b16 %v382
        %v931 = vunpack.c.l.b16 %v383
        %v932 = vunpack.c.l.b16 %v384
        %v933 = vunpack.c.l.b16 %v385
        %v934 = vunpack.c.l.b16 %v386
        %v935 = vunpack.c.l.b16 %v387
        %v936 = vunpack.c.l.b16 %v388
        %v937 = vunpack.c.l.b16 %v389
        %v938 = vunpack.c.l.b16 %v390
        %v939 = vunpack.c.l.b16 %v391
        %v940 = vunpack.c.l.b16 %v392
        %v941 = vunpack.c.l.b16 %v393
        %v942 = vunpack.c.l.b16 %v394
        %v943 = vunpack.c.l.b16 %v395
        %v944 = vunpack.c.l.b16 %v396
        %v945 = vunpack.c.l.b16 %v397
        %v946 = vunpack.c.l.b16 %v398
        %v947 = vunpack.c.l.b16 %v399
        %v948 = vunpack.c.l.b16 %v400
        %v949 = vunpack.c.l.b16 %v401
        %v950 = vunpack.c.l.b16 %v402
        %v951 = vunpack.c.l.b16 %v403
        %v952 = vunpack.c.l.b16 %v404
        %v953 = vunpack.c.l.b16 %v405
        %v954 = vunpack.c.l.b16 %v406
        %v955 = vunpack.c.l.b16 %v407
        %v956 = vunpack.c.l.b16 %v408
        %v957 = vunpack.c.l.b16 %v409
        %v958 = vunpack.c.l.b16 %v410
        %v959 = vunpack.c.l.b16 %v411
        %v960 = vunpack.c.l.b16 %v412
        %v961 = vunpack.c.l.b16 %v413
        %v962 = vunpack.c.l.b16 %v414
        %v963 = vunpack.c.l.b16 %v415
        %v964 = vunpack.c.l.b16 %v416
        %v965 = vunpack.c.l.b16 %v417
        %v966 = vunpack.c.l.b16 %v418
        %v967 = vunpack.c.l.b16 %v419
        %v968 = vunpack.c.l.b16 %v420
        %v969 = vunpack.c.l.b16 %v421
        %v970 = vunpack.c.l.b16 %v422
        %v971 = vunpack.c.l.b16 %v423
        %v972 = vunpack.c.l.b16 %v424
        %v973 = vunpack.c.l.b16 %v425
        %v974 = vunpack.c.l.b16 %v426
        %v975 = vunpack.c.l.b16 %v427
        %v976 = vunpack.c.l.b16 %v428
        %v977 = vunpack.c.l.b16 %v429
        %v978 = vunpack.c.l.b16 %v430
        %v979 = vunpack.c.l.b16 %v431
        %v980 = vunpack.c.l.b16 %v432
        %v981 = vunpack.c.l.b16 %v433
        %v982 = vunpack.c.l.b16 %v434
        %v983 = vunpack.c.l.b16 %v435
        %v984 = vunpack.c.l.b16 %v436
        %v985 = vunpack.c.l.b16 %v437
        %v986 = vunpack.c.l.b16 %v438
        %v987 = vunpack.c.l.b16 %v439
        %v988 = vunpack.c.l.b16 %v440
        %v989 = vunpack.c.l.b16 %v441
        %v990 = vunpack.c.l.b16 %v442
        %v991 = vunpack.c.l.b16 %v443
        %v992 = vunpack.c.l.b16 %v444
        %v993 = vunpack.c.l.b16 %v445
        %v994 = vunpack.c.l.b16 %v446
        %v995 = vunpack.c.l.b16 %v447
        %v996 = vunpack.c.l.b16 %v448
        %v997 = vunpack.c.l.b16 %v449
        %v998 = vunpack.c.l.b16 %v450
        %v999 = vunpack.c.l.b16 %v451
        %v1000 = vunpack.c.l.b16 %v452
        %v1001 = vunpack.c.l.b16 %v453
        %v1002 = vunpack.c.l.b16 %v454
        %v1003 = vunpack.c.l.b16 %v455
        %v1004 = vunpack.c.l.b16 %v456
        %v1005 = vunpack.c.l.b16 %v457
        %v1006 = vunpack.c.l.b16 %v458
        %v1007 = vunpack.c.l.b16 %v459
        %v1008 = vunpack.c.l.b16 %v460
        %v1009 = vunpack.c.l.b16 %v461
        %v1010 = vunpack.c.l.b16 %v462
        %v1011 = vunpack.c.l.b16 %v463
        %v1012 = vunpack.c.l.b16 %v464
        %v1013 = vunpack.c.l.b16 %v465
        %v1014 = vunpack.c.l.b16 %v466
        %v1015 = vunpack.c.l.b16 %v467
        %v1016 = vunpack.c.l.b16 %v468
        %v1017 = vunpack.c.l.b16 %v469
        %v1018 = vunpack.c.l.b16 %v470
        %v1019 = vunpack.c.l.b16 %v471
        %v1020 = vunpack.c.l.b16 %v472
        %v1021 = vunpack.c.l.b16 %v473
        %v1022 = vunpack.c.l.b16 %v474
        %v1023 = vunpack.c.l.b16 %v475
        %v1024 = vunpack.c.l.b16 %v476
        %v1025 = vunpack.c.l.b16 %v477
        %v1026 = vunpack.c.l.b16 %v478
        %v1027 = vunpack.c.l.b16 %v479
        %v1028 = vunpack.c.l.b16 %v480
        %v1029 = vunpack.c.l.b16 %v481
        %v1030 = vunpack.c.l.b16 %v482
        %v1031 = vunpack.c.l.b16 %v483
        %v1032 = vunpack.c.l.b16 %v484
        %v1033 = vunpack.c.l.b16 %v485
        %v1034 = vunpack.c.l.b16 %v486
        %v1035 = vunpack.c.l.b16 %v487
        %v1036 = vunpack.c.l.b16 %v488
        %v1037 = vunpack.c.l.b16 %v489
        %v1038 = vunpack.c.l.b16 %v490
        %v1039 = vunpack.c.l.b16 %v491
        %v1040 = vunpack.c.l.b16 %v492
        %v1041 = vunpack.c.l.b16 %v493
        %v1042 = vunpack.c.l.b16 %v494
        %v1043 = vunpack.c.l.b16 %v495
        %v1044 = vunpack.c.l.b16 %v496
        %v1045 = vunpack.c.l.b16 %v497
        %v1046 = vunpack.c.l.b16 %v498
        %v1047 = vunpack.c.l.b16 %v499
        %v1048 = vunpack.c.l.b16 %v500
        %v1049 = vunpack.c.l.b16 %v501
        %v1050 = vunpack.c.l.b16 %v502
        %v1051 = vunpack.c.l.b16 %v503
        %v1052 = vunpack.c.l.b16 %v504
        %v1053 = vunpack.c.l.b16 %v505
        %v1054 = vunpack.c.l.b16 %v506
        %v1055 = vunpack.c.l.b16 %v507
        %v1056 = vunpack.c.l.b16 %v508
        %v1057 = vunpack.c.l.b16 %v509
        %v1058 = vunpack.c.l.b16 %v510
        %v1059 = vunpack.c.l.b16 %v511
        %v1060 = vunpack.c.l.b16 %v512
        %v1061 = vunpack.c.l.b16 %v513
        %v1062 = vunpack.c.l.b16 %v514
        %v1063 = vunpack.c.l.b16 %v515
        %v1064 = vunpack.c.l.b16 %v516
        %v1065 = vunpack.c.l.b16 %v517
        %v1066 = vunpack.c.l.b16 %v518
        %v1067 = vunpack.c.l.b16 %v519
        %v1068 = vunpack.c.l.b16 %v520
        %v1069 = vunpack.c.l.b16 %v521
        %v1070 = vunpack.c.l.b16 %v522
        %v1071 = vunpack.c.l.b16 %v523
        %v1072 = vunpack.c.l.b16 %v524
        %v1073 = vunpack.c.l.b16 %v525
        %v1074 = vunpack.c.l.b16 %v526
        %v1075 = vunpack.c.l.b16 %v527
        %v1076 = vunpack.c.l.b16 %v528
        %v1077 = vunpack.c.l.b16 %v529
        %v1078 = vunpack.c.l.b16 %v530
        %v1079 = vunpack.c.l.b16 %v531
        %v1080 = vunpack.c.l.b16 %v532
        %v1081 = vunpack.c.l.b16 %v533
        %v1082 = vunpack.c.l.b16 %v534
        %v1083 = vunpack.c.l.b16 %v535
        %v1084 = vunpack.c.l.b16 %v536
        %v1085 = vunpack.c.l.b16 %v537
        %v1086 = vunpack.c.l.b16 %v538
        %v1087 = vunpack.c.l.b16 %v539
        %v1088 = vunpack.c.l.b16 %v540
        %v1089 = vunpack.c.l.b16 %v541
        %v1090 = vunpack.c.l.b16 %v542
        %v1091 = vunpack.c.l.b16 %v543
        %v1092 = vunpack.c.l.b16 %v544
        %v1093 = vunpack.c.l.b16 %v545
        %v1094 = vunpack.c.l.b16 %v546
        %v1095 = vunpack.c.l.b16 %v547
        %v1096 = vunpack.c.l.b16 %v548
        %v1097 = vunpack.c.l.b16 %v549
        %v1098 = vunpack.c.l.b16 %v550
        %v1099 = vunpack.c.l.b16 %v551
        %v1100 = vunpack.c.l.b16 %v552
        %v1101 = vunpack.c.l.b16 %v553
        %v1102 = vunpack.c.l.b16 %v554
        %v1103 = vunpack.c.l.b16 %v555
        %v1104 = vunpack.c.l.b16 %v556
        %v1105 = vunpack.c.l.b16 %v557
        %v1106 = vunpack.c.l.b16 %v558
        %v1107 = vunpack.c.l.b16 %v559
        %v1108 = vunpack.c.l.b16 %v560
        %v1109 = vunpack.c.l.b16 %v561
        %v1110 = vunpack.c.l.b16 %v562
        %v1111 = vunpack.c.l.b16 %v563
        %v1112 = vunpack.c.l.b16 %v564
        %v1113 = vunpack.c.l.b16 %v565
        %v1114 = vunpack.c.l.b16 %v566
        %v1115 = vunpack.c.l.b16 %v567
        %v1116 = vunpack.c.l.b16 %v568
        %v1117 = vunpack.c.l.b16 %v569
        %v1118 = vunpack.c.l.b16 %v570
        %v1119 = vunpack.c.l.b16 %v571
        %v1120 = vunpack.c.l.b16 %v572
        %v1121 = vunpack.c.l.b16 %v573
        %v1122 = vunpack.c.l.b16 %v574
        %v1123 = vpack.c.b16 %v868, %v867
        %v1124 = vpack.c.b16 %v870, %v869
        %v1125 = vpack.c.b16 %v872, %v871
        %v1126 = vpack.c.b16 %v874, %v873
        %v1127 = vpack.c.b16 %v876, %v875
        %v1128 = vpack.c.b16 %v878, %v877
        %v1129 = vpack.c.b16 %v880, %v879
        %v1130 = vpack.c.b16 %v882, %v881
        %v1131 = vpack.c.b16 %v884, %v883
        %v1132 = vpack.c.b16 %v886, %v885
        %v1133 = vpack.c.b16 %v888, %v887
        %v1134 = vpack.c.b16 %v890, %v889
        %v1135 = vpack.c.b16 %v892, %v891
        %v1136 = vpack.c.b16 %v894, %v893
        %v1137 = vpack.c.b16 %v896, %v895
        %v1138 = vpack.c.b16 %v898, %v897
        %v1139 = vpack.c.b16 %v900, %v899
        %v1140 = vpack.c.b16 %v902, %v901
        %v1141 = vpack.c.b16 %v904, %v903
        %v1142 = vpack.c.b16 %v906, %v905
        %v1143 = vpack.c.b16 %v908, %v907
        %v1144 = vpack.c.b16 %v910, %v909
        %v1145 = vpack.c.b16 %v912, %v911
        %v1146 = vpack.c.b16 %v914, %v913
        %v1147 = vpack.c.b16 %v916, %v915
        %v1148 = vpack.c.b16 %v918, %v917
        %v1149 = vpack.c.b16 %v920, %v919
        %v1150 = vpack.c.b16 %v922, %v921
        %v1151 = vpack.c.b16 %v924, %v923
        %v1152 = vpack.c.b16 %v926, %v925
        %v1153 = vpack.c.b16 %v928, %v927
        %v1154 = vpack.c.b16 %v930, %v929
        %v1155 = vpack.c.b16 %v932, %v931
        %v1156 = vpack.c.b16 %v934, %v933
        %v1157 = vpack.c.b16 %v936, %v935
        %v1158 = vpack.c.b16 %v938, %v937
        %v1159 = vpack.c.b16 %v940, %v939
        %v1160 = vpack.c.b16 %v942, %v941
        %v1161 = vpack.c.b16 %v944, %v943
        %v1162 = vpack.c.b16 %v946, %v945
        %v1163 = vpack.c.b16 %v948, %v947
        %v1164 = vpack.c.b16 %v950, %v949
        %v1165 = vpack.c.b16 %v952, %v951
        %v1166 = vpack.c.b16 %v954, %v953
        %v1167 = vpack.c.b16 %v956, %v955
        %v1168 = vpack.c.b16 %v958, %v957
        %v1169 = vpack.c.b16 %v960, %v959
        %v1170 = vpack.c.b16 %v962, %v961
        %v1171 = vpack.c.b16 %v964, %v963
        %v1172 = vpack.c.b16 %v966, %v965
        %v1173 = vpack.c.b16 %v968, %v967
        %v1174 = vpack.c.b16 %v970, %v969
        %v1175 = vpack.c.b16 %v972, %v971
        %v1176 = vpack.c.b16 %v974, %v973
        %v1177 = vpack.c.b16 %v976, %v975
        %v1178 = vpack.c.b16 %v978, %v977
        %v1179 = vpack.c.b16 %v980, %v979
        %v1180 = vpack.c.b16 %v982, %v981
        %v1181 = vpack.c.b16 %v984, %v983
        %v1182 = vpack.c.b16 %v986, %v985
        %v1183 = vpack.c.b16 %v988, %v987
        %v1184 = vpack.c.b16 %v990, %v989
        %v1185 = vpack.c.b16 %v992, %v991
        %v1186 = vpack.c.b16 %v994, %v993
        %v1187 = vpack.c.b16 %v996, %v995
        %v1188 = vpack.c.b16 %v998, %v997
        %v1189 = vpack.c.b16 %v1000, %v999
        %v1190 = vpack.c.b16 %v1002, %v1001
        %v1191 = vpack.c.b16 %v1004, %v1003
        %v1192 = vpack.c.b16 %v1006, %v1005
        %v1193 = vpack.c.b16 %v1008, %v1007
        %v1194 = vpack.c.b16 %v1010, %v1009
        %v1195 = vpack.c.b16 %v1012, %v1011
        %v1196 = vpack.c.b16 %v1014, %v1013
        %v1197 = vpack.c.b16 %v1016, %v1015
        %v1198 = vpack.c.b16 %v1018, %v1017
        %v1199 = vpack.c.b16 %v1020, %v1019
        %v1200 = vpack.c.b16 %v1022, %v1021
        %v1201 = vpack.c.b16 %v1024, %v1023
        %v1202 = vpack.c.b16 %v1026, %v1025
        %v1203 = vpack.c.b16 %v1028, %v1027
        %v1204 = vpack.c.b16 %v1030, %v1029
        %v1205 = vpack.c.b16 %v1032, %v1031
        %v1206 = vpack.c.b16 %v1034, %v1033
        %v1207 = vpack.c.b16 %v1036, %v1035
        %v1208 = vpack.c.b16 %v1038, %v1037
        %v1209 = vpack.c.b16 %v1040, %v1039
        %v1210 = vpack.c.b16 %v1042, %v1041
        %v1211 = vpack.c.b16 %v1044, %v1043
        %v1212 = vpack.c.b16 %v1046, %v1045
        %v1213 = vpack.c.b16 %v1048, %v1047
        %v1214 = vpack.c.b16 %v1050, %v1049
        %v1215 = vpack.c.b16 %v1052, %v1051
        %v1216 = vpack.c.b16 %v1054, %v1053
        %v1217 = vpack.c.b16 %v1056, %v1055
        %v1218 = vpack.c.b16 %v1058, %v1057
        %v1219 = vpack.c.b16 %v1060, %v1059
        %v1220 = vpack.c.b16 %v1062, %v1061
        %v1221 = vpack.c.b16 %v1064, %v1063
        %v1222 = vpack.c.b16 %v1066, %v1065
        %v1223 = vpack.c.b16 %v1068, %v1067
        %v1224 = vpack.c.b16 %v1070, %v1069
        %v1225 = vpack.c.b16 %v1072, %v1071
        %v1226 = vpack.c.b16 %v1074, %v1073
        %v1227 = vpack.c.b16 %v1076, %v1075
        %v1228 = vpack.c.b16 %v1078, %v1077
        %v1229 = vpack.c.b16 %v1080, %v1079
        %v1230 = vpack.c.b16 %v1082, %v1081
        %v1231 = vpack.c.b16 %v1084, %v1083
        %v1232 = vpack.c.b16 %v1086, %v1085
        %v1233 = vpack.c.b16 %v1088, %v1087
        %v1234 = vpack.c.b16 %v1090, %v1089
        %v1235 = vpack.c.b16 %v1092, %v1091
        %v1236 = vpack.c.b16 %v1094, %v1093
        %v1237 = vpack.c.b16 %v1096, %v1095
        %v1238 = vpack.c.b16 %v1098, %v1097
        %v1239 = vpack.c.b16 %v1100, %v1099
        %v1240 = vpack.c.b16 %v1102, %v1101
        %v1241 = vpack.c.b16 %v1104, %v1103
        %v1242 = vpack.c.b16 %v1106, %v1105
        %v1243 = vpack.c.b16 %v1108, %v1107
        %v1244 = vpack.c.b16 %v1110, %v1109
        %v1245 = vpack.c.b16 %v1112, %v1111
        %v1246 = vpack.c.b16 %v1114, %v1113
        %v1247 = vpack.c.b16 %v1116, %v1115
        %v1248 = vpack.c.b16 %v1118, %v1117
        %v1249 = vpack.c.b16 %v1120, %v1119
        %v1250 = vpack.c.b16 %v1122, %v1121
        %1379 = vmatpush.bf16.msra.mxu0 %v1130
        %1380 = vmatpush.bf16.msra.mxu0 %v1129
        %1381 = vmatpush.bf16.msra.mxu0 %v1128
        %1382 = vmatpush.bf16.msra.mxu0 %v1127
        %1383 = vmatpush.bf16.msra.mxu0 %v1126
        %1384 = vmatpush.bf16.msra.mxu0 %v1125
        %1385 = vmatpush.bf16.msra.mxu0 %v1124
        %1386 = vmatpush.bf16.msra.mxu0 %v1123
        %1387 = vmatmul.bf16.gmra.mxu0 %v577
        %v1388 = vpop.f32.mrf.mxu0
        %v1389 = vadd.f32 0.0, %v1388
        %v1390 = vpop.f32.mrf.mxu0
        %1391 = vdwg.mxu0
        %1392 = vmatpush.bf16.msra.mxu0 %v1138
        %1393 = vmatpush.bf16.msra.mxu0 %v1137
        %1394 = vmatpush.bf16.msra.mxu0 %v1136
        %1395 = vmatpush.bf16.msra.mxu0 %v1135
        %1396 = vmatpush.bf16.msra.mxu0 %v1134
        %1397 = vmatpush.bf16.msra.mxu0 %v1133
        %1398 = vmatpush.bf16.msra.mxu0 %v1132
        %1399 = vmatpush.bf16.msra.mxu0 %v1131
        %1400 = vmatmul.bf16.gmra.mxu0 %v578
        %v1401 = vpop.f32.mrf.mxu0
        %v1402 = vadd.f32 %v1389, %v1401
        %v1403 = vpop.f32.mrf.mxu0
        %1404 = vdwg.mxu0
        %1405 = vmatpush.bf16.msra.mxu0 %v1146
        %1406 = vmatpush.bf16.msra.mxu0 %v1145
        %1407 = vmatpush.bf16.msra.mxu0 %v1144
        %1408 = vmatpush.bf16.msra.mxu0 %v1143
        %1409 = vmatpush.bf16.msra.mxu0 %v1142
        %1410 = vmatpush.bf16.msra.mxu0 %v1141
        %1411 = vmatpush.bf16.msra.mxu0 %v1140
        %1412 = vmatpush.bf16.msra.mxu0 %v1139
        %1413 = vmatmul.bf16.gmra.mxu0 %v579
        %v1414 = vpop.f32.mrf.mxu0
        %v1415 = vadd.f32 %v1402, %v1414
        %v1416 = vpop.f32.mrf.mxu0
        %1417 = vdwg.mxu0
        %1418 = vmatpush.bf16.msra.mxu0 %v1154
        %1419 = vmatpush.bf16.msra.mxu0 %v1153
        %1420 = vmatpush.bf16.msra.mxu0 %v1152
        %1421 = vmatpush.bf16.msra.mxu0 %v1151
        %1422 = vmatpush.bf16.msra.mxu0 %v1150
        %1423 = vmatpush.bf16.msra.mxu0 %v1149
        %1424 = vmatpush.bf16.msra.mxu0 %v1148
        %1425 = vmatpush.bf16.msra.mxu0 %v1147
        %1426 = vmatmul.bf16.gmra.mxu0 %v580
        %v1427 = vpop.f32.mrf.mxu0
        %v1428 = vadd.f32 %v1415, %v1427
        %v1429 = vpop.f32.mrf.mxu0
        %1430 = vdwg.mxu0
        %1431 = vmatpush.bf16.msra.mxu0 %v1162
        %1432 = vmatpush.bf16.msra.mxu0 %v1161
        %1433 = vmatpush.bf16.msra.mxu0 %v1160
        %1434 = vmatpush.bf16.msra.mxu0 %v1159
        %1435 = vmatpush.bf16.msra.mxu0 %v1158
        %1436 = vmatpush.bf16.msra.mxu0 %v1157
        %1437 = vmatpush.bf16.msra.mxu0 %v1156
        %1438 = vmatpush.bf16.msra.mxu0 %v1155
        %1439 = vmatmul.bf16.gmra.mxu0 %v581
        %v1440 = vpop.f32.mrf.mxu0
        %v1441 = vadd.f32 %v1428, %v1440
        %v1442 = vpop.f32.mrf.mxu0
        %1443 = vdwg.mxu0
        %1444 = vmatpush.bf16.msra.mxu0 %v1170
        %1445 = vmatpush.bf16.msra.mxu0 %v1169
        %1446 = vmatpush.bf16.msra.mxu0 %v1168
        %1447 = vmatpush.bf16.msra.mxu0 %v1167
        %1448 = vmatpush.bf16.msra.mxu0 %v1166
        %1449 = vmatpush.bf16.msra.mxu0 %v1165
        %1450 = vmatpush.bf16.msra.mxu0 %v1164
        %1451 = vmatpush.bf16.msra.mxu0 %v1163
        %1452 = vmatmul.bf16.gmra.mxu0 %v582
        %v1453 = vpop.f32.mrf.mxu0
        %v1454 = vadd.f32 %v1441, %v1453
        %v1455 = vpop.f32.mrf.mxu0
        %1456 = vdwg.mxu0
        %1457 = vmatpush.bf16.msra.mxu0 %v1178
        %1458 = vmatpush.bf16.msra.mxu0 %v1177
        %1459 = vmatpush.bf16.msra.mxu0 %v1176
        %1460 = vmatpush.bf16.msra.mxu0 %v1175
        %1461 = vmatpush.bf16.msra.mxu0 %v1174
        %1462 = vmatpush.bf16.msra.mxu0 %v1173
        %1463 = vmatpush.bf16.msra.mxu0 %v1172
        %1464 = vmatpush.bf16.msra.mxu0 %v1171
        %1465 = vmatmul.bf16.gmra.mxu0 %v583
        %v1466 = vpop.f32.mrf.mxu0
        %v1467 = vadd.f32 %v1454, %v1466
        %v1468 = vpop.f32.mrf.mxu0
        %1469 = vdwg.mxu0
        %1470 = vmatpush.bf16.msra.mxu0 %v1186
        %1471 = vmatpush.bf16.msra.mxu0 %v1185
        %1472 = vmatpush.bf16.msra.mxu0 %v1184
        %1473 = vmatpush.bf16.msra.mxu0 %v1183
        %1474 = vmatpush.bf16.msra.mxu0 %v1182
        %1475 = vmatpush.bf16.msra.mxu0 %v1181
        %1476 = vmatpush.bf16.msra.mxu0 %v1180
        %1477 = vmatpush.bf16.msra.mxu0 %v1179
        %1478 = vmatmul.bf16.gmra.mxu0 %v584
        %v1479 = vpop.f32.mrf.mxu0
        %v1480 = vadd.f32 %v1467, %v1479
        %v1481 = vpop.f32.mrf.mxu0
        %1482 = vdwg.mxu0
        %1483 = vmatpush.bf16.msra.mxu0 %v1194
        %1484 = vmatpush.bf16.msra.mxu0 %v1193
        %1485 = vmatpush.bf16.msra.mxu0 %v1192
        %1486 = vmatpush.bf16.msra.mxu0 %v1191
        %1487 = vmatpush.bf16.msra.mxu0 %v1190
        %1488 = vmatpush.bf16.msra.mxu0 %v1189
        %1489 = vmatpush.bf16.msra.mxu0 %v1188
        %1490 = vmatpush.bf16.msra.mxu0 %v1187
        %1491 = vmatmul.bf16.gmra.mxu0 %v587
        %v1492 = vpop.f32.mrf.mxu0
        %v1493 = vadd.f32 %v1480, %v1492
        %v1494 = vpop.f32.mrf.mxu0
        %1495 = vdwg.mxu0
        %1496 = vmatpush.bf16.msra.mxu0 %v1202
        %1497 = vmatpush.bf16.msra.mxu0 %v1201
        %1498 = vmatpush.bf16.msra.mxu0 %v1200
        %1499 = vmatpush.bf16.msra.mxu0 %v1199
        %1500 = vmatpush.bf16.msra.mxu0 %v1198
        %1501 = vmatpush.bf16.msra.mxu0 %v1197
        %1502 = vmatpush.bf16.msra.mxu0 %v1196
        %1503 = vmatpush.bf16.msra.mxu0 %v1195
        %1504 = vmatmul.bf16.gmra.mxu0 %v588
        %v1505 = vpop.f32.mrf.mxu0
        %v1506 = vadd.f32 %v1493, %v1505
        %v1507 = vpop.f32.mrf.mxu0
        %1508 = vdwg.mxu0
        %1509 = vmatpush.bf16.msra.mxu0 %v1210
        %1510 = vmatpush.bf16.msra.mxu0 %v1209
        %1511 = vmatpush.bf16.msra.mxu0 %v1208
        %1512 = vmatpush.bf16.msra.mxu0 %v1207
        %1513 = vmatpush.bf16.msra.mxu0 %v1206
        %1514 = vmatpush.bf16.msra.mxu0 %v1205
        %1515 = vmatpush.bf16.msra.mxu0 %v1204
        %1516 = vmatpush.bf16.msra.mxu0 %v1203
        %1517 = vmatmul.bf16.gmra.mxu0 %v589
        %v1518 = vpop.f32.mrf.mxu0
        %v1519 = vadd.f32 %v1506, %v1518
        %v1520 = vpop.f32.mrf.mxu0
        %1521 = vdwg.mxu0
        %1522 = vmatpush.bf16.msra.mxu0 %v1218
        %1523 = vmatpush.bf16.msra.mxu0 %v1217
        %1524 = vmatpush.bf16.msra.mxu0 %v1216
        %1525 = vmatpush.bf16.msra.mxu0 %v1215
        %1526 = vmatpush.bf16.msra.mxu0 %v1214
        %1527 = vmatpush.bf16.msra.mxu0 %v1213
        %1528 = vmatpush.bf16.msra.mxu0 %v1212
        %1529 = vmatpush.bf16.msra.mxu0 %v1211
        %1530 = vmatmul.bf16.gmra.mxu0 %v590
        %v1531 = vpop.f32.mrf.mxu0
        %v1532 = vadd.f32 %v1519, %v1531
        %v1533 = vpop.f32.mrf.mxu0
        %1534 = vdwg.mxu0
        %1535 = vmatpush.bf16.msra.mxu0 %v1226
        %1536 = vmatpush.bf16.msra.mxu0 %v1225
        %1537 = vmatpush.bf16.msra.mxu0 %v1224
        %1538 = vmatpush.bf16.msra.mxu0 %v1223
        %1539 = vmatpush.bf16.msra.mxu0 %v1222
        %1540 = vmatpush.bf16.msra.mxu0 %v1221
        %1541 = vmatpush.bf16.msra.mxu0 %v1220
        %1542 = vmatpush.bf16.msra.mxu0 %v1219
        %1543 = vmatmul.bf16.gmra.mxu0 %v591
        %v1544 = vpop.f32.mrf.mxu0
        %v1545 = vadd.f32 %v1532, %v1544
        %v1546 = vpop.f32.mrf.mxu0
        %1547 = vdwg.mxu0
        %1548 = vmatpush.bf16.msra.mxu0 %v1234
        %1549 = vmatpush.bf16.msra.mxu0 %v1233
        %1550 = vmatpush.bf16.msra.mxu0 %v1232
        %1551 = vmatpush.bf16.msra.mxu0 %v1231
        %1552 = vmatpush.bf16.msra.mxu0 %v1230
        %1553 = vmatpush.bf16.msra.mxu0 %v1229
        %1554 = vmatpush.bf16.msra.mxu0 %v1228
        %1555 = vmatpush.bf16.msra.mxu0 %v1227
        %1556 = vmatmul.bf16.gmra.mxu0 %v592
        %v1557 = vpop.f32.mrf.mxu0
        %v1558 = vadd.f32 %v1545, %v1557
        %v1559 = vpop.f32.mrf.mxu0
        %1560 = vdwg.mxu0
        %1561 = vmatpush.bf16.msra.mxu0 %v1242
        %1562 = vmatpush.bf16.msra.mxu0 %v1241
        %1563 = vmatpush.bf16.msra.mxu0 %v1240
        %1564 = vmatpush.bf16.msra.mxu0 %v1239
        %1565 = vmatpush.bf16.msra.mxu0 %v1238
        %1566 = vmatpush.bf16.msra.mxu0 %v1237
        %1567 = vmatpush.bf16.msra.mxu0 %v1236
        %1568 = vmatpush.bf16.msra.mxu0 %v1235
        %1569 = vmatmul.bf16.gmra.mxu0 %v593
        %v1570 = vpop.f32.mrf.mxu0
        %v1571 = vadd.f32 %v1558, %v1570
        %v1572 = vpop.f32.mrf.mxu0
        %1573 = vdwg.mxu0
        %1574 = vmatpush.bf16.msra.mxu0 %v1250
        %1575 = vmatpush.bf16.msra.mxu0 %v1249
        %1576 = vmatpush.bf16.msra.mxu0 %v1248
        %1577 = vmatpush.bf16.msra.mxu0 %v1247
        %1578 = vmatpush.bf16.msra.mxu0 %v1246
        %1579 = vmatpush.bf16.msra.mxu0 %v1245
        %1580 = vmatpush.bf16.msra.mxu0 %v1244
        %1581 = vmatpush.bf16.msra.mxu0 %v1243
        %1582 = vmatmul.bf16.gmra.mxu0 %v594
        %v1583 = vpop.f32.mrf.mxu0
        %v1584 = vadd.f32 %v1571, %v1583
        %v1585 = vpop.f32.mrf.mxu0
        %1586 = vdwg.mxu0
        %v1587 = vadd.f32 %v316, %v1584
        %1588 = vst [vmem:[#allocation2] sm:$0x3] %v1587
        %p1589 = scmp.eq.s32.totalorder %s22, 7
        // Predicated region
        $region45: #{chess_cnn_forward.5} parent=39 // pred_check
          %p1590 = pneg %p1589
        $region46: #{chess_cnn_forward.5} parent=39 // pred_check_branch
          %1592 = sbr.rel (%p1590) target = $region48
        $region47: #{chess_cnn_forward.5} parent=39 // pred_region
          %v1593 = vld [vmem:[#allocation2] sm:$0x3]
          %v1594 = vld [vmem:[%s302] sm:$0x1]
          %v1596 = vperm.slane %v1594, 0
          %v1598 = vadd.f32 %v1593, %v1596
          %v1599 = vmax.f32 %v1598, 0.0
          %v1600 = vld [vmem:[%s307] sm:$0xff]
          %v1601 = vld [vmem:[%s307 + $0x8] sm:$0xff]
          %v1602 = vld [vmem:[%s307 + $0x10] sm:$0xff]
          %v1603 = vld [vmem:[%s307 + $0x18] sm:$0xff]
          %v1604 = vld [vmem:[%s307 + $0x20] sm:$0xff]
          %v1605 = vld [vmem:[%s307 + $0x28] sm:$0xff]
          %v1606 = vld [vmem:[%s307 + $0x30] sm:$0xff]
          %v1607 = vld [vmem:[%s307 + $0x38] sm:$0xff]
          %v1608 = vld [vmem:[%s307 + $0x40] sm:$0xff]
          %v1609 = vld [vmem:[%s307 + $0x48] sm:$0xff]
          %v1610 = vld [vmem:[%s307 + $0x50] sm:$0xff]
          %v1611 = vld [vmem:[%s307 + $0x58] sm:$0xff]
          %v1612 = vld [vmem:[%s307 + $0x60] sm:$0xff]
          %v1613 = vld [vmem:[%s307 + $0x68] sm:$0xff]
          %v1614 = vld [vmem:[%s307 + $0x70] sm:$0xff]
          %v1615 = vld [vmem:[%s307 + $0x78] sm:$0xff]
          %v1616 = vld [vmem:[%s310] sm:$0x1]
          %v1618 = vperm.slane %v1616, 0
          %1620 = vmatpush.msra.mxu0 %v1615
          %1621 = vmatpush.msra.mxu0 %v1614
          %1622 = vmatpush.msra.mxu0 %v1613
          %1623 = vmatpush.msra.mxu0 %v1612
          %1624 = vmatpush.msra.mxu0 %v1611
          %1625 = vmatpush.msra.mxu0 %v1610
          %1626 = vmatpush.msra.mxu0 %v1609
          %1627 = vmatpush.msra.mxu0 %v1608
          %1628 = vmatpush.msra.mxu0 %v1607
          %1629 = vmatpush.msra.mxu0 %v1606
          %1630 = vmatpush.msra.mxu0 %v1605
          %1631 = vmatpush.msra.mxu0 %v1604
          %1632 = vmatpush.msra.mxu0 %v1603
          %1633 = vmatpush.msra.mxu0 %v1602
          %1634 = vmatpush.msra.mxu0 %v1601
          %1635 = vmatpush.msra.mxu0 %v1600
          %1636 = vmatmul.f32.gmra.mxu0 %v1599
          %v1637 = vpop.f32.mrf.mxu0
          %v1638 = vadd.f32 %v1618, %v1637
          %1639 = vdwg.mxu0
          %vm1640 = vcmask 99328
          %1641 = vst.msk [vmem:[#allocation3] sm:$0x3] %vm1640, %v1638
        $region48: #{chess_cnn_forward.5} parent=39 // pred_fallthru
          _
        // Predicated region
        $region49: #{chess_cnn_forward.5} parent=39 // pred_check
          %p1642 = pneg %p179
        $region50: #{chess_cnn_forward.5} parent=39 // pred_check_branch
          %1644 = sbr.rel (%p1642) target = $region52
        $region51: #{chess_cnn_forward.5} parent=39 // pred_region
          %1646 = vsyncadd [#allocation4], 0
          %s1647 = smul.addr %s21, 2
          %s1648 = scalar_lea.hbm %s5, %s1647
          %s1650 = sshll.u32 [#allocation3], 4
          %s1651 = int_to_ptr.vmem [resolvable:$true] %s1650
          %s1652 = sshll.u32 %s1648, 4
          %s1653 = int_to_ptr.hbm [resolvable:$true] %s1652
          %1655 = dma.vmem_to_hbm [thread:$0]  %s1651, 32, %s1653, [#allocation4]
        $region52: #{chess_cnn_forward.5} parent=39 // pred_fallthru
          _
        // Predicated region
        $region53: #{chess_cnn_forward.5} parent=39 // pred_check
          %p1656 = pneg %p179
        $region54: #{chess_cnn_forward.5} parent=39 // pred_check_branch
          %1658 = sbr.rel (%p1656) target = $region56
        $region55: #{chess_cnn_forward.5} parent=39 // pred_region
          %1660 = dma.done [#allocation4], 32
        $region56: #{chess_cnn_forward.5} parent=39 // pred_fallthru
          _
      $region40: #{chess_cnn_forward.5} parent=5 // pred_fallthru
        _
      %p1661 = scmp.le.s32.totalorder 2, %s12
      // Predicated region
      $region57: #{chess_cnn_forward.5} parent=5 // pred_check
        %p1662 = pneg %p1661
      $region58: #{chess_cnn_forward.5} parent=5 // pred_check_branch
        %1664 = sbr.rel (%p1662) target = $region60
      $region59: #{chess_cnn_forward.5} parent=5 // pred_region
        %s1665 = ssub.s32 %s12, 2
      $region60: #{chess_cnn_forward.5} parent=5 // pred_fallthru
        _
    $region6: #{chess_cnn_forward.5} parent=1 // loop_footer
      %s16 = sadd.s32 1, %s12
    $region7: #{chess_cnn_forward.5} parent=1 // loop_footer_branch
      %11 = sbr.rel target = $region3
    $region8: #{chess_cnn_forward.5} parent=1 // loop_exit
      _
    %1666 = vsyncpa [#allocation4], 1
    %s1667 = scalar_lea.sflag [#allocation4], 1
    %1668 = vsyncpa %s1667, 1

// kernel: chess_cnn_forward.4
$region0: #{chess_cnn_forward.4}
  #allocation0 [shape = 'u32[]', space=smem, size = 0x4, offset = 0x4, fixed_abs, tag = 'smem constant byte address 0x4 - core index']
  #allocation1 [shape = 'u32[72,128]{1,0:T(1,128)}', space=vmem, size = 0x9000, scoped, tag = 'internal scratch']
  %s0 = inlined_call_operand.vmem [shape: bf16[2,1024,288], index: 0, kind: input, shape index: {}]
  %s1 = inlined_call_operand.vmem [shape: bf16[288,64], index: 1, kind: input, shape index: {}]
  %s2 = inlined_call_operand.vmem [shape: f32[1,64], index: 2, kind: input, shape index: {}]
  %s3 = inlined_call_operand.vmem [shape: f32[1,64], index: 3, kind: input, shape index: {}]
  %s4 = inlined_call_operand.vmem [shape: bf16[2,256,64], index: 4, kind: output, shape index: {}]
  %s5 = sld [smem:[#allocation0]]
  $region49: #{chess_cnn_forward.4} parent=0
    _
  %s7 = ssub.s32 1, %s5
  %s8 = scalar_select 0, %s7, %s5
  loop: start=0, step=1, limit=4
  $region2: #{chess_cnn_forward.4} parent=0 // loop_pre_header
    _
  $region3: #{chess_cnn_forward.4} parent=0 // loop_header
    %s10 = sphi 0, %s14
    %p11 = scmp.ge.s32.totalorder %s10, 4
    %s20 = sphi 0, %s22
    %s23 = sphi 0, %s20
    %s24 = sphi 0, %s23
    %s40 = sphi 0, %s24
    %s44 = sphi 0, %s44
    %s46 = sphi 0, %s44
    %s47 = sphi 0, %s46
    %s61 = sphi 0, %s47
    %s65 = sphi 0, %s65
    %s67 = sphi 0, %s65
    %s68 = sphi 0, %s67
    %s82 = sphi 0, %s68
    %s86 = sphi 0, %s86
    %s88 = sphi 0, %s86
    %s89 = sphi 0, %s88
    %s103 = sphi 0, %s89
    %s109 = sphi 0, %s111
    %s112 = sphi 0, %s109
    %s113 = sphi 0, %s112
    %s129 = sphi 0, %s113
  $region4: #{chess_cnn_forward.4} parent=0 // loop_header_branch
    %13 = sbr.rel (%p11) target = $region8
  $region5: #{chess_cnn_forward.4} parent=0 // loop_body
    %s15 = ssub.s32 %s10, 1
    %s16 = ssub.s32 %s10, 2
    %s17 = sadd.s32 %s10, 1
    %s18 = ssub.s32 %s10, %s17
    %p19 = scmp.eq.s32.totalorder %s18, 0
    %s21 = sadd.s32 %s20, 1
    %s22 = scalar_select %p19, %s20, %s21
    %p25 = pneg %p19
    %p26 = scmp.eq.s32.totalorder %s10, 1
    %p27 = por %p25, %p26
    %p28 = scmp.ne.s32.totalorder %s20, %s23
    %p29 = scmp.eq.s32.totalorder %s10, 0
    %p30 = por %p28, %p29
    %p31 = scmp.ne.s32.totalorder %s20, %s23
    %p32 = scmp.eq.s32.totalorder %s15, 1
    %p33 = por %p31, %p32
    %p34 = scmp.ne.s32.totalorder %s23, %s24
    %p35 = scmp.eq.s32.totalorder %s15, 0
    %p36 = por %p34, %p35
    %p37 = scmp.ne.s32.totalorder %s23, %s24
    %p38 = scmp.eq.s32.totalorder %s16, 1
    %p39 = por %p37, %p38
    %p41 = scmp.ne.s32.totalorder %s24, %s40
    %p42 = scmp.eq.s32.totalorder %s16, 0
    %p43 = por %p41, %p42
    %s45 = sadd.s32 %s44, 1
    %p48 = scmp.eq.s32.totalorder %s10, 1
    %p49 = scmp.ne.s32.totalorder %s44, %s46
    %p50 = scmp.eq.s32.totalorder %s10, 0
    %p51 = por %p49, %p50
    %p52 = scmp.ne.s32.totalorder %s44, %s46
    %p53 = scmp.eq.s32.totalorder %s15, 1
    %p54 = por %p52, %p53
    %p55 = scmp.ne.s32.totalorder %s46, %s47
    %p56 = scmp.eq.s32.totalorder %s15, 0
    %p57 = por %p55, %p56
    %p58 = scmp.ne.s32.totalorder %s46, %s47
    %p59 = scmp.eq.s32.totalorder %s16, 1
    %p60 = por %p58, %p59
    %p62 = scmp.ne.s32.totalorder %s47, %s61
    %p63 = scmp.eq.s32.totalorder %s16, 0
    %p64 = por %p62, %p63
    %s66 = sadd.s32 %s65, 1
    %p69 = scmp.eq.s32.totalorder %s10, 1
    %p70 = scmp.ne.s32.totalorder %s65, %s67
    %p71 = scmp.eq.s32.totalorder %s10, 0
    %p72 = por %p70, %p71
    %p73 = scmp.ne.s32.totalorder %s65, %s67
    %p74 = scmp.eq.s32.totalorder %s15, 1
    %p75 = por %p73, %p74
    %p76 = scmp.ne.s32.totalorder %s67, %s68
    %p77 = scmp.eq.s32.totalorder %s15, 0
    %p78 = por %p76, %p77
    %p79 = scmp.ne.s32.totalorder %s67, %s68
    %p80 = scmp.eq.s32.totalorder %s16, 1
    %p81 = por %p79, %p80
    %p83 = scmp.ne.s32.totalorder %s68, %s82
    %p84 = scmp.eq.s32.totalorder %s16, 0
    %p85 = por %p83, %p84
    %s87 = sadd.s32 %s86, 1
    %p90 = scmp.eq.s32.totalorder %s10, 1
    %p91 = scmp.ne.s32.totalorder %s86, %s88
    %p92 = scmp.eq.s32.totalorder %s10, 0
    %p93 = por %p91, %p92
    %p94 = scmp.ne.s32.totalorder %s86, %s88
    %p95 = scmp.eq.s32.totalorder %s15, 1
    %p96 = por %p94, %p95
    %p97 = scmp.ne.s32.totalorder %s88, %s89
    %p98 = scmp.eq.s32.totalorder %s15, 0
    %p99 = por %p97, %p98
    %p100 = scmp.ne.s32.totalorder %s88, %s89
    %p101 = scmp.eq.s32.totalorder %s16, 1
    %p102 = por %p100, %p101
    %p104 = scmp.ne.s32.totalorder %s89, %s103
    %p105 = scmp.eq.s32.totalorder %s16, 0
    %p106 = por %p104, %p105
    %s107 = ssub.s32 %s10, %s17
    %p108 = scmp.eq.s32.totalorder %s107, 0
    %s110 = sadd.s32 %s109, 1
    %s111 = scalar_select %p108, %s109, %s110
    %p114 = pneg %p108
    %p115 = scmp.eq.s32.totalorder %s10, 1
    %p116 = por %p114, %p115
    %p117 = scmp.ne.s32.totalorder %s109, %s112
    %p118 = scmp.eq.s32.totalorder %s10, 0
    %p119 = por %p117, %p118
    %p120 = scmp.ne.s32.totalorder %s109, %s112
    %p121 = scmp.eq.s32.totalorder %s15, 1
    %p122 = por %p120, %p121
    %p123 = scmp.ne.s32.totalorder %s112, %s113
    %p124 = scmp.eq.s32.totalorder %s15, 0
    %p125 = por %p123, %p124
    %p126 = scmp.ne.s32.totalorder %s112, %s113
    %p127 = scmp.eq.s32.totalorder %s16, 1
    %p128 = por %p126, %p127
    %p130 = scmp.ne.s32.totalorder %s113, %s129
    %p131 = scmp.eq.s32.totalorder %s16, 0
    %p132 = por %p130, %p131
    %p133 = scmp.le.s32.totalorder 1, %s10
    %p134 = scmp.lt.s32.totalorder %s10, 3
    %p135 = pnand %p133, %p134
    %p136 = pneg %p135
    // Predicated region
    $region9: #{chess_cnn_forward.4} parent=5 // pred_check
      _
    $region10: #{chess_cnn_forward.4} parent=5 // pred_check_branch
      %138 = sbr.rel (%p135) target = $region12
    $region11: #{chess_cnn_forward.4} parent=5 // pred_region
      %s139 = ssub.s32 %s10, 1
      // Predicated region
      $region13: #{chess_cnn_forward.4} parent=11 // pred_check
        %p140 = pneg %p57
      $region14: #{chess_cnn_forward.4} parent=11 // pred_check_branch
        %142 = sbr.rel (%p140) target = $region16
      $region15: #{chess_cnn_forward.4} parent=11 // pred_region
        _
      $region16: #{chess_cnn_forward.4} parent=11 // pred_fallthru
        _
      // Predicated region
      $region17: #{chess_cnn_forward.4} parent=11 // pred_check
        %p143 = pneg %p78
      $region18: #{chess_cnn_forward.4} parent=11 // pred_check_branch
        %145 = sbr.rel (%p143) target = $region20
      $region19: #{chess_cnn_forward.4} parent=11 // pred_region
        _
      $region20: #{chess_cnn_forward.4} parent=11 // pred_fallthru
        _
      // Predicated region
      $region21: #{chess_cnn_forward.4} parent=11 // pred_check
        %p146 = pneg %p99
      $region22: #{chess_cnn_forward.4} parent=11 // pred_check_branch
        %148 = sbr.rel (%p146) target = $region24
      $region23: #{chess_cnn_forward.4} parent=11 // pred_region
        _
      $region24: #{chess_cnn_forward.4} parent=11 // pred_fallthru
        _
    $region12: #{chess_cnn_forward.4} parent=5 // pred_fallthru
      _
    %p149 = scmp.lt.s32.totalorder %s10, 2
    // Predicated region
    $region25: #{chess_cnn_forward.4} parent=5 // pred_check
      %p150 = pneg %p149
    $region26: #{chess_cnn_forward.4} parent=5 // pred_check_branch
      %152 = sbr.rel (%p150) target = $region28
    $region27: #{chess_cnn_forward.4} parent=5 // pred_region
      // Predicated region
      $region29: #{chess_cnn_forward.4} parent=27 // pred_check
        %p153 = pneg %p30
      $region30: #{chess_cnn_forward.4} parent=27 // pred_check_branch
        %155 = sbr.rel (%p153) target = $region32
      $region31: #{chess_cnn_forward.4} parent=27 // pred_region
        %p156 = scmp.lt.s32.totalorder %s10, 1
        %s157 = scalar_select %p156, %s10, 1
        %s158 = smul.addr %s157, 384
        %s159 = smul.addr %s158, 4
        %s160 = scalar_lea.vmem %s0, %s159
      $region32: #{chess_cnn_forward.4} parent=27 // pred_fallthru
        _
    $region28: #{chess_cnn_forward.4} parent=5 // pred_fallthru
      _
    %p161 = scmp.le.s32.totalorder 1, %s10
    %p162 = scmp.lt.s32.totalorder %s10, 3
    %p163 = pnand %p161, %p162
    %p164 = pneg %p163
    // Predicated region
    $region33: #{chess_cnn_forward.4} parent=5 // pred_check
      _
    $region34: #{chess_cnn_forward.4} parent=5 // pred_check_branch
      %166 = sbr.rel (%p163) target = $region36
    $region35: #{chess_cnn_forward.4} parent=5 // pred_region
      %s167 = ssub.s32 %s10, 1
      %p168 = scmp.lt.s32.totalorder %s15, 1
      %s169 = scalar_select %p168, %s15, 1
      %s170 = smul.addr %s169, 384
      %s171 = smul.addr %s170, 4
      %s172 = scalar_lea.vmem %s0, %s171
      %p173 = pneg %p36
      %p174 = pneg %p33
      %p175 = pneg %p57
      %p176 = pneg %p54
      %p177 = pneg %p78
      %p178 = pneg %p75
      %p179 = pneg %p99
      %p180 = pneg %p96
      %p181 = pneg %p125
      %p182 = pneg %p122
      %p183 = scmp.lt.s32.totalorder %s15, 1
      %s184 = scalar_select %p183, %s15, 1
      %s185 = smul.addr %s184, 32
      %s186 = smul.addr %s185, 4
      %s187 = scalar_lea.vmem %s4, %s186
      %p188 = scmp.lt.s32.totalorder %s15, 1
      %s189 = scalar_select %p188, %s15, 1
      %s190 = smul.addr %s189, 384
      %s191 = smul.addr %s190, 4
      %s192 = scalar_lea.vmem %s0, %s191
      %p193 = scmp.lt.s32.totalorder %s15, 1
      %s194 = scalar_select %p193, %s15, 1
      %s195 = smul.addr %s194, 32
      %s196 = smul.addr %s195, 4
      %s197 = scalar_lea.vmem %s4, %s196
      %v199 = vld [vmem:[%s192] sm:$0xff]
      %v200 = vld [vmem:[%s192 + $0x8] sm:$0xf]
      %v201 = vld [vmem:[%s192 + $0xc] sm:$0xff]
      %v202 = vld [vmem:[%s192 + $0x14] sm:$0xf]
      %v203 = vld [vmem:[%s192 + $0x18] sm:$0xff]
      %v204 = vld [vmem:[%s192 + $0x20] sm:$0xf]
      %v205 = vld [vmem:[%s192 + $0x24] sm:$0xff]
      %v206 = vld [vmem:[%s192 + $0x2c] sm:$0xf]
      %v207 = vld [vmem:[%s192 + $0x30] sm:$0xff]
      %v208 = vld [vmem:[%s192 + $0x38] sm:$0xf]
      %v209 = vld [vmem:[%s192 + $0x3c] sm:$0xff]
      %v210 = vld [vmem:[%s192 + $0x44] sm:$0xf]
      %v211 = vld [vmem:[%s192 + $0x48] sm:$0xff]
      %v212 = vld [vmem:[%s192 + $0x50] sm:$0xf]
      %v213 = vld [vmem:[%s192 + $0x54] sm:$0xff]
      %v214 = vld [vmem:[%s192 + $0x5c] sm:$0xf]
      %v215 = vld [vmem:[%s192 + $0x60] sm:$0xff]
      %v216 = vld [vmem:[%s192 + $0x68] sm:$0xf]
      %v217 = vld [vmem:[%s192 + $0x6c] sm:$0xff]
      %v218 = vld [vmem:[%s192 + $0x74] sm:$0xf]
      %v219 = vld [vmem:[%s192 + $0x78] sm:$0xff]
      %v220 = vld [vmem:[%s192 + $0x80] sm:$0xf]
      %v221 = vld [vmem:[%s192 + $0x84] sm:$0xff]
      %v222 = vld [vmem:[%s192 + $0x8c] sm:$0xf]
      %v223 = vld [vmem:[%s192 + $0x90] sm:$0xff]
      %v224 = vld [vmem:[%s192 + $0x98] sm:$0xf]
      %v225 = vld [vmem:[%s192 + $0x9c] sm:$0xff]
      %v226 = vld [vmem:[%s192 + $0xa4] sm:$0xf]
      %v227 = vld [vmem:[%s192 + $0xa8] sm:$0xff]
      %v228 = vld [vmem:[%s192 + $0xb0] sm:$0xf]
      %v229 = vld [vmem:[%s192 + $0xb4] sm:$0xff]
      %v230 = vld [vmem:[%s192 + $0xbc] sm:$0xf]
      %v231 = vld [vmem:[%s192 + $0xc0] sm:$0xff]
      %v232 = vld [vmem:[%s192 + $0xc8] sm:$0xf]
      %v233 = vld [vmem:[%s192 + $0xcc] sm:$0xff]
      %v234 = vld [vmem:[%s192 + $0xd4] sm:$0xf]
      %v235 = vld [vmem:[%s192 + $0xd8] sm:$0xff]
      %v236 = vld [vmem:[%s192 + $0xe0] sm:$0xf]
      %v237 = vld [vmem:[%s192 + $0xe4] sm:$0xff]
      %v238 = vld [vmem:[%s192 + $0xec] sm:$0xf]
      %v239 = vld [vmem:[%s192 + $0xf0] sm:$0xff]
      %v240 = vld [vmem:[%s192 + $0xf8] sm:$0xf]
      %v241 = vld [vmem:[%s192 + $0xfc] sm:$0xff]
      %v242 = vld [vmem:[%s192 + $0x104] sm:$0xf]
      %v243 = vld [vmem:[%s192 + $0x108] sm:$0xff]
      %v244 = vld [vmem:[%s192 + $0x110] sm:$0xf]
      %v245 = vld [vmem:[%s192 + $0x114] sm:$0xff]
      %v246 = vld [vmem:[%s192 + $0x11c] sm:$0xf]
      %v247 = vld [vmem:[%s192 + $0x120] sm:$0xff]
      %v248 = vld [vmem:[%s192 + $0x128] sm:$0xf]
      %v249 = vld [vmem:[%s192 + $0x12c] sm:$0xff]
      %v250 = vld [vmem:[%s192 + $0x134] sm:$0xf]
      %v251 = vld [vmem:[%s192 + $0x138] sm:$0xff]
      %v252 = vld [vmem:[%s192 + $0x140] sm:$0xf]
      %v253 = vld [vmem:[%s192 + $0x144] sm:$0xff]
      %v254 = vld [vmem:[%s192 + $0x14c] sm:$0xf]
      %v255 = vld [vmem:[%s192 + $0x150] sm:$0xff]
      %v256 = vld [vmem:[%s192 + $0x158] sm:$0xf]
      %v257 = vld [vmem:[%s192 + $0x15c] sm:$0xff]
      %v258 = vld [vmem:[%s192 + $0x164] sm:$0xf]
      %v259 = vld [vmem:[%s192 + $0x168] sm:$0xff]
      %v260 = vld [vmem:[%s192 + $0x170] sm:$0xf]
      %v261 = vld [vmem:[%s192 + $0x174] sm:$0xff]
      %v262 = vld [vmem:[%s192 + $0x17c] sm:$0xf]
      %v263 = vld [vmem:[%s192 + $0x180] sm:$0xff]
      %v264 = vld [vmem:[%s192 + $0x188] sm:$0xf]
      %v265 = vld [vmem:[%s192 + $0x18c] sm:$0xff]
      %v266 = vld [vmem:[%s192 + $0x194] sm:$0xf]
      %v267 = vld [vmem:[%s192 + $0x198] sm:$0xff]
      %v268 = vld [vmem:[%s192 + $0x1a0] sm:$0xf]
      %v269 = vld [vmem:[%s192 + $0x1a4] sm:$0xff]
      %v270 = vld [vmem:[%s192 + $0x1ac] sm:$0xf]
      %v271 = vld [vmem:[%s192 + $0x1b0] sm:$0xff]
      %v272 = vld [vmem:[%s192 + $0x1b8] sm:$0xf]
      %v273 = vld [vmem:[%s192 + $0x1bc] sm:$0xff]
      %v274 = vld [vmem:[%s192 + $0x1c4] sm:$0xf]
      %v275 = vld [vmem:[%s192 + $0x1c8] sm:$0xff]
      %v276 = vld [vmem:[%s192 + $0x1d0] sm:$0xf]
      %v277 = vld [vmem:[%s192 + $0x1d4] sm:$0xff]
      %v278 = vld [vmem:[%s192 + $0x1dc] sm:$0xf]
      %v279 = vld [vmem:[%s192 + $0x1e0] sm:$0xff]
      %v280 = vld [vmem:[%s192 + $0x1e8] sm:$0xf]
      %v281 = vld [vmem:[%s192 + $0x1ec] sm:$0xff]
      %v282 = vld [vmem:[%s192 + $0x1f4] sm:$0xf]
      %v283 = vld [vmem:[%s192 + $0x1f8] sm:$0xff]
      %v284 = vld [vmem:[%s192 + $0x200] sm:$0xf]
      %v285 = vld [vmem:[%s192 + $0x204] sm:$0xff]
      %v286 = vld [vmem:[%s192 + $0x20c] sm:$0xf]
      %v287 = vld [vmem:[%s192 + $0x210] sm:$0xff]
      %v288 = vld [vmem:[%s192 + $0x218] sm:$0xf]
      %v289 = vld [vmem:[%s192 + $0x21c] sm:$0xff]
      %v290 = vld [vmem:[%s192 + $0x224] sm:$0xf]
      %v291 = vld [vmem:[%s192 + $0x228] sm:$0xff]
      %v292 = vld [vmem:[%s192 + $0x230] sm:$0xf]
      %v293 = vld [vmem:[%s192 + $0x234] sm:$0xff]
      %v294 = vld [vmem:[%s192 + $0x23c] sm:$0xf]
      %v295 = vld [vmem:[%s192 + $0x240] sm:$0xff]
      %v296 = vld [vmem:[%s192 + $0x248] sm:$0xf]
      %v297 = vld [vmem:[%s192 + $0x24c] sm:$0xff]
      %v298 = vld [vmem:[%s192 + $0x254] sm:$0xf]
      %v299 = vld [vmem:[%s192 + $0x258] sm:$0xff]
      %v300 = vld [vmem:[%s192 + $0x260] sm:$0xf]
      %v301 = vld [vmem:[%s192 + $0x264] sm:$0xff]
      %v302 = vld [vmem:[%s192 + $0x26c] sm:$0xf]
      %v303 = vld [vmem:[%s192 + $0x270] sm:$0xff]
      %v304 = vld [vmem:[%s192 + $0x278] sm:$0xf]
      %v305 = vld [vmem:[%s192 + $0x27c] sm:$0xff]
      %v306 = vld [vmem:[%s192 + $0x284] sm:$0xf]
      %v307 = vld [vmem:[%s192 + $0x288] sm:$0xff]
      %v308 = vld [vmem:[%s192 + $0x290] sm:$0xf]
      %v309 = vld [vmem:[%s192 + $0x294] sm:$0xff]
      %v310 = vld [vmem:[%s192 + $0x29c] sm:$0xf]
      %v311 = vld [vmem:[%s192 + $0x2a0] sm:$0xff]
      %v312 = vld [vmem:[%s192 + $0x2a8] sm:$0xf]
      %v313 = vld [vmem:[%s192 + $0x2ac] sm:$0xff]
      %v314 = vld [vmem:[%s192 + $0x2b4] sm:$0xf]
      %v315 = vld [vmem:[%s192 + $0x2b8] sm:$0xff]
      %v316 = vld [vmem:[%s192 + $0x2c0] sm:$0xf]
      %v317 = vld [vmem:[%s192 + $0x2c4] sm:$0xff]
      %v318 = vld [vmem:[%s192 + $0x2cc] sm:$0xf]
      %v319 = vld [vmem:[%s192 + $0x2d0] sm:$0xff]
      %v320 = vld [vmem:[%s192 + $0x2d8] sm:$0xf]
      %v321 = vld [vmem:[%s192 + $0x2dc] sm:$0xff]
      %v322 = vld [vmem:[%s192 + $0x2e4] sm:$0xf]
      %v323 = vld [vmem:[%s192 + $0x2e8] sm:$0xff]
      %v324 = vld [vmem:[%s192 + $0x2f0] sm:$0xf]
      %v325 = vld [vmem:[%s192 + $0x2f4] sm:$0xff]
      %v326 = vld [vmem:[%s192 + $0x2fc] sm:$0xf]
      %v327 = vld [vmem:[%s192 + $0x300] sm:$0xff]
      %v328 = vld [vmem:[%s192 + $0x308] sm:$0xf]
      %v329 = vld [vmem:[%s192 + $0x30c] sm:$0xff]
      %v330 = vld [vmem:[%s192 + $0x314] sm:$0xf]
      %v331 = vld [vmem:[%s192 + $0x318] sm:$0xff]
      %v332 = vld [vmem:[%s192 + $0x320] sm:$0xf]
      %v333 = vld [vmem:[%s192 + $0x324] sm:$0xff]
      %v334 = vld [vmem:[%s192 + $0x32c] sm:$0xf]
      %v335 = vld [vmem:[%s192 + $0x330] sm:$0xff]
      %v336 = vld [vmem:[%s192 + $0x338] sm:$0xf]
      %v337 = vld [vmem:[%s192 + $0x33c] sm:$0xff]
      %v338 = vld [vmem:[%s192 + $0x344] sm:$0xf]
      %v339 = vld [vmem:[%s192 + $0x348] sm:$0xff]
      %v340 = vld [vmem:[%s192 + $0x350] sm:$0xf]
      %v341 = vld [vmem:[%s192 + $0x354] sm:$0xff]
      %v342 = vld [vmem:[%s192 + $0x35c] sm:$0xf]
      %v343 = vld [vmem:[%s192 + $0x360] sm:$0xff]
      %v344 = vld [vmem:[%s192 + $0x368] sm:$0xf]
      %v345 = vld [vmem:[%s192 + $0x36c] sm:$0xff]
      %v346 = vld [vmem:[%s192 + $0x374] sm:$0xf]
      %v347 = vld [vmem:[%s192 + $0x378] sm:$0xff]
      %v348 = vld [vmem:[%s192 + $0x380] sm:$0xf]
      %v349 = vld [vmem:[%s192 + $0x384] sm:$0xff]
      %v350 = vld [vmem:[%s192 + $0x38c] sm:$0xf]
      %v351 = vld [vmem:[%s192 + $0x390] sm:$0xff]
      %v352 = vld [vmem:[%s192 + $0x398] sm:$0xf]
      %v353 = vld [vmem:[%s192 + $0x39c] sm:$0xff]
      %v354 = vld [vmem:[%s192 + $0x3a4] sm:$0xf]
      %v355 = vld [vmem:[%s192 + $0x3a8] sm:$0xff]
      %v356 = vld [vmem:[%s192 + $0x3b0] sm:$0xf]
      %v357 = vld [vmem:[%s192 + $0x3b4] sm:$0xff]
      %v358 = vld [vmem:[%s192 + $0x3bc] sm:$0xf]
      %v359 = vld [vmem:[%s192 + $0x3c0] sm:$0xff]
      %v360 = vld [vmem:[%s192 + $0x3c8] sm:$0xf]
      %v361 = vld [vmem:[%s192 + $0x3cc] sm:$0xff]
      %v362 = vld [vmem:[%s192 + $0x3d4] sm:$0xf]
      %v363 = vld [vmem:[%s192 + $0x3d8] sm:$0xff]
      %v364 = vld [vmem:[%s192 + $0x3e0] sm:$0xf]
      %v365 = vld [vmem:[%s192 + $0x3e4] sm:$0xff]
      %v366 = vld [vmem:[%s192 + $0x3ec] sm:$0xf]
      %v367 = vld [vmem:[%s192 + $0x3f0] sm:$0xff]
      %v368 = vld [vmem:[%s192 + $0x3f8] sm:$0xf]
      %v369 = vld [vmem:[%s192 + $0x3fc] sm:$0xff]
      %v370 = vld [vmem:[%s192 + $0x404] sm:$0xf]
      %v371 = vld [vmem:[%s192 + $0x408] sm:$0xff]
      %v372 = vld [vmem:[%s192 + $0x410] sm:$0xf]
      %v373 = vld [vmem:[%s192 + $0x414] sm:$0xff]
      %v374 = vld [vmem:[%s192 + $0x41c] sm:$0xf]
      %v375 = vld [vmem:[%s192 + $0x420] sm:$0xff]
      %v376 = vld [vmem:[%s192 + $0x428] sm:$0xf]
      %v377 = vld [vmem:[%s192 + $0x42c] sm:$0xff]
      %v378 = vld [vmem:[%s192 + $0x434] sm:$0xf]
      %v379 = vld [vmem:[%s192 + $0x438] sm:$0xff]
      %v380 = vld [vmem:[%s192 + $0x440] sm:$0xf]
      %v381 = vld [vmem:[%s192 + $0x444] sm:$0xff]
      %v382 = vld [vmem:[%s192 + $0x44c] sm:$0xf]
      %v383 = vld [vmem:[%s192 + $0x450] sm:$0xff]
      %v384 = vld [vmem:[%s192 + $0x458] sm:$0xf]
      %v385 = vld [vmem:[%s192 + $0x45c] sm:$0xff]
      %v386 = vld [vmem:[%s192 + $0x464] sm:$0xf]
      %v387 = vld [vmem:[%s192 + $0x468] sm:$0xff]
      %v388 = vld [vmem:[%s192 + $0x470] sm:$0xf]
      %v389 = vld [vmem:[%s192 + $0x474] sm:$0xff]
      %v390 = vld [vmem:[%s192 + $0x47c] sm:$0xf]
      %v391 = vld [vmem:[%s192 + $0x480] sm:$0xff]
      %v392 = vld [vmem:[%s192 + $0x488] sm:$0xf]
      %v393 = vld [vmem:[%s192 + $0x48c] sm:$0xff]
      %v394 = vld [vmem:[%s192 + $0x494] sm:$0xf]
      %v395 = vld [vmem:[%s192 + $0x498] sm:$0xff]
      %v396 = vld [vmem:[%s192 + $0x4a0] sm:$0xf]
      %v397 = vld [vmem:[%s192 + $0x4a4] sm:$0xff]
      %v398 = vld [vmem:[%s192 + $0x4ac] sm:$0xf]
      %v399 = vld [vmem:[%s192 + $0x4b0] sm:$0xff]
      %v400 = vld [vmem:[%s192 + $0x4b8] sm:$0xf]
      %v401 = vld [vmem:[%s192 + $0x4bc] sm:$0xff]
      %v402 = vld [vmem:[%s192 + $0x4c4] sm:$0xf]
      %v403 = vld [vmem:[%s192 + $0x4c8] sm:$0xff]
      %v404 = vld [vmem:[%s192 + $0x4d0] sm:$0xf]
      %v405 = vld [vmem:[%s192 + $0x4d4] sm:$0xff]
      %v406 = vld [vmem:[%s192 + $0x4dc] sm:$0xf]
      %v407 = vld [vmem:[%s192 + $0x4e0] sm:$0xff]
      %v408 = vld [vmem:[%s192 + $0x4e8] sm:$0xf]
      %v409 = vld [vmem:[%s192 + $0x4ec] sm:$0xff]
      %v410 = vld [vmem:[%s192 + $0x4f4] sm:$0xf]
      %v411 = vld [vmem:[%s192 + $0x4f8] sm:$0xff]
      %v412 = vld [vmem:[%s192 + $0x500] sm:$0xf]
      %v413 = vld [vmem:[%s192 + $0x504] sm:$0xff]
      %v414 = vld [vmem:[%s192 + $0x50c] sm:$0xf]
      %v415 = vld [vmem:[%s192 + $0x510] sm:$0xff]
      %v416 = vld [vmem:[%s192 + $0x518] sm:$0xf]
      %v417 = vld [vmem:[%s192 + $0x51c] sm:$0xff]
      %v418 = vld [vmem:[%s192 + $0x524] sm:$0xf]
      %v419 = vld [vmem:[%s192 + $0x528] sm:$0xff]
      %v420 = vld [vmem:[%s192 + $0x530] sm:$0xf]
      %v421 = vld [vmem:[%s192 + $0x534] sm:$0xff]
      %v422 = vld [vmem:[%s192 + $0x53c] sm:$0xf]
      %v423 = vld [vmem:[%s192 + $0x540] sm:$0xff]
      %v424 = vld [vmem:[%s192 + $0x548] sm:$0xf]
      %v425 = vld [vmem:[%s192 + $0x54c] sm:$0xff]
      %v426 = vld [vmem:[%s192 + $0x554] sm:$0xf]
      %v427 = vld [vmem:[%s192 + $0x558] sm:$0xff]
      %v428 = vld [vmem:[%s192 + $0x560] sm:$0xf]
      %v429 = vld [vmem:[%s192 + $0x564] sm:$0xff]
      %v430 = vld [vmem:[%s192 + $0x56c] sm:$0xf]
      %v431 = vld [vmem:[%s192 + $0x570] sm:$0xff]
      %v432 = vld [vmem:[%s192 + $0x578] sm:$0xf]
      %v433 = vld [vmem:[%s192 + $0x57c] sm:$0xff]
      %v434 = vld [vmem:[%s192 + $0x584] sm:$0xf]
      %v435 = vld [vmem:[%s192 + $0x588] sm:$0xff]
      %v436 = vld [vmem:[%s192 + $0x590] sm:$0xf]
      %v437 = vld [vmem:[%s192 + $0x594] sm:$0xff]
      %v438 = vld [vmem:[%s192 + $0x59c] sm:$0xf]
      %v439 = vld [vmem:[%s192 + $0x5a0] sm:$0xff]
      %v440 = vld [vmem:[%s192 + $0x5a8] sm:$0xf]
      %v441 = vld [vmem:[%s192 + $0x5ac] sm:$0xff]
      %v442 = vld [vmem:[%s192 + $0x5b4] sm:$0xf]
      %v443 = vld [vmem:[%s192 + $0x5b8] sm:$0xff]
      %v444 = vld [vmem:[%s192 + $0x5c0] sm:$0xf]
      %v445 = vld [vmem:[%s192 + $0x5c4] sm:$0xff]
      %v446 = vld [vmem:[%s192 + $0x5cc] sm:$0xf]
      %v447 = vld [vmem:[%s192 + $0x5d0] sm:$0xff]
      %v448 = vld [vmem:[%s192 + $0x5d8] sm:$0xf]
      %v449 = vld [vmem:[%s192 + $0x5dc] sm:$0xff]
      %v450 = vld [vmem:[%s192 + $0x5e4] sm:$0xf]
      %v451 = vld [vmem:[%s192 + $0x5e8] sm:$0xff]
      %v452 = vld [vmem:[%s192 + $0x5f0] sm:$0xf]
      %v453 = vld [vmem:[%s192 + $0x5f4] sm:$0xff]
      %v454 = vld [vmem:[%s192 + $0x5fc] sm:$0xf]
      %v455 = vld [vmem:[%s1] sm:$0xf]
      %v456 = vld [vmem:[%s1 + $0x4] sm:$0xf]
      %v457 = vld [vmem:[%s1 + $0x8] sm:$0xf]
      %v458 = vld [vmem:[%s1 + $0xc] sm:$0xf]
      %v459 = vld [vmem:[%s1 + $0x10] sm:$0xf]
      %v460 = vld [vmem:[%s1 + $0x14] sm:$0xf]
      %v461 = vld [vmem:[%s1 + $0x18] sm:$0xf]
      %v462 = vld [vmem:[%s1 + $0x1c] sm:$0xf]
      %v463 = vld [vmem:[%s1 + $0x20] sm:$0xf]
      %v464 = vld [vmem:[%s1 + $0x24] sm:$0xf]
      %v465 = vld [vmem:[%s1 + $0x28] sm:$0xf]
      %v466 = vld [vmem:[%s1 + $0x2c] sm:$0xf]
      %v467 = vld [vmem:[%s1 + $0x30] sm:$0xf]
      %v468 = vld [vmem:[%s1 + $0x34] sm:$0xf]
      %v469 = vld [vmem:[%s1 + $0x38] sm:$0xf]
      %v470 = vld [vmem:[%s1 + $0x3c] sm:$0xf]
      %v471 = vld [vmem:[%s1 + $0x40] sm:$0xf]
      %v472 = vld [vmem:[%s1 + $0x44] sm:$0xf]
      %v473 = vld [vmem:[%s1 + $0x48] sm:$0xf]
      %v474 = vld [vmem:[%s1 + $0x4c] sm:$0xf]
      %v475 = vld [vmem:[%s1 + $0x50] sm:$0xf]
      %v476 = vld [vmem:[%s1 + $0x54] sm:$0xf]
      %v477 = vld [vmem:[%s1 + $0x58] sm:$0xf]
      %v478 = vld [vmem:[%s1 + $0x5c] sm:$0xf]
      %v479 = vld [vmem:[%s1 + $0x60] sm:$0xf]
      %v480 = vld [vmem:[%s1 + $0x64] sm:$0xf]
      %v481 = vld [vmem:[%s1 + $0x68] sm:$0xf]
      %v482 = vld [vmem:[%s1 + $0x6c] sm:$0xf]
      %v483 = vld [vmem:[%s1 + $0x70] sm:$0xf]
      %v484 = vld [vmem:[%s1 + $0x74] sm:$0xf]
      %v485 = vld [vmem:[%s1 + $0x78] sm:$0xf]
      %v486 = vld [vmem:[%s1 + $0x7c] sm:$0xf]
      %v487 = vld [vmem:[%s1 + $0x80] sm:$0xf]
      %v488 = vld [vmem:[%s1 + $0x84] sm:$0xf]
      %v489 = vld [vmem:[%s1 + $0x88] sm:$0xf]
      %v490 = vld [vmem:[%s1 + $0x8c] sm:$0xf]
      %v747 = vunpack.c.l.b16 %v199
      %v748 = vunpack.c.h.b16 %v199
      %v749 = vunpack.c.l.b16 %v200
      %v750 = vunpack.c.l.b16 %v201
      %v751 = vunpack.c.h.b16 %v201
      %v752 = vunpack.c.l.b16 %v202
      %v753 = vunpack.c.l.b16 %v203
      %v754 = vunpack.c.h.b16 %v203
      %v755 = vunpack.c.l.b16 %v204
      %v756 = vunpack.c.l.b16 %v205
      %v757 = vunpack.c.h.b16 %v205
      %v758 = vunpack.c.l.b16 %v206
      %v759 = vunpack.c.l.b16 %v207
      %v760 = vunpack.c.h.b16 %v207
      %v761 = vunpack.c.l.b16 %v208
      %v762 = vunpack.c.l.b16 %v209
      %v763 = vunpack.c.h.b16 %v209
      %v764 = vunpack.c.l.b16 %v210
      %v765 = vunpack.c.l.b16 %v211
      %v766 = vunpack.c.h.b16 %v211
      %v767 = vunpack.c.l.b16 %v212
      %v768 = vunpack.c.l.b16 %v213
      %v769 = vunpack.c.h.b16 %v213
      %v770 = vunpack.c.l.b16 %v214
      %v771 = vunpack.c.l.b16 %v215
      %v772 = vunpack.c.h.b16 %v215
      %v773 = vunpack.c.l.b16 %v216
      %v774 = vunpack.c.l.b16 %v217
      %v775 = vunpack.c.h.b16 %v217
      %v776 = vunpack.c.l.b16 %v218
      %v777 = vunpack.c.l.b16 %v219
      %v778 = vunpack.c.h.b16 %v219
      %v779 = vunpack.c.l.b16 %v220
      %v780 = vunpack.c.l.b16 %v221
      %v781 = vunpack.c.h.b16 %v221
      %v782 = vunpack.c.l.b16 %v222
      %v783 = vunpack.c.l.b16 %v223
      %v784 = vunpack.c.h.b16 %v223
      %v785 = vunpack.c.l.b16 %v224
      %v786 = vunpack.c.l.b16 %v225
      %v787 = vunpack.c.h.b16 %v225
      %v788 = vunpack.c.l.b16 %v226
      %v789 = vunpack.c.l.b16 %v227
      %v790 = vunpack.c.h.b16 %v227
      %v791 = vunpack.c.l.b16 %v228
      %v792 = vunpack.c.l.b16 %v229
      %v793 = vunpack.c.h.b16 %v229
      %v794 = vunpack.c.l.b16 %v230
      %v795 = vunpack.c.l.b16 %v231
      %v796 = vunpack.c.h.b16 %v231
      %v797 = vunpack.c.l.b16 %v232
      %v798 = vunpack.c.l.b16 %v233
      %v799 = vunpack.c.h.b16 %v233
      %v800 = vunpack.c.l.b16 %v234
      %v801 = vunpack.c.l.b16 %v235
      %v802 = vunpack.c.h.b16 %v235
      %v803 = vunpack.c.l.b16 %v236
      %v804 = vunpack.c.l.b16 %v237
      %v805 = vunpack.c.h.b16 %v237
      %v806 = vunpack.c.l.b16 %v238
      %v807 = vunpack.c.l.b16 %v239
      %v808 = vunpack.c.h.b16 %v239
      %v809 = vunpack.c.l.b16 %v240
      %v810 = vunpack.c.l.b16 %v241
      %v811 = vunpack.c.h.b16 %v241
      %v812 = vunpack.c.l.b16 %v242
      %v813 = vunpack.c.l.b16 %v243
      %v814 = vunpack.c.h.b16 %v243
      %v815 = vunpack.c.l.b16 %v244
      %v816 = vunpack.c.l.b16 %v245
      %v817 = vunpack.c.h.b16 %v245
      %v818 = vunpack.c.l.b16 %v246
      %v819 = vunpack.c.l.b16 %v247
      %v820 = vunpack.c.h.b16 %v247
      %v821 = vunpack.c.l.b16 %v248
      %v822 = vunpack.c.l.b16 %v249
      %v823 = vunpack.c.h.b16 %v249
      %v824 = vunpack.c.l.b16 %v250
      %v825 = vunpack.c.l.b16 %v251
      %v826 = vunpack.c.h.b16 %v251
      %v827 = vunpack.c.l.b16 %v252
      %v828 = vunpack.c.l.b16 %v253
      %v829 = vunpack.c.h.b16 %v253
      %v830 = vunpack.c.l.b16 %v254
      %v831 = vunpack.c.l.b16 %v255
      %v832 = vunpack.c.h.b16 %v255
      %v833 = vunpack.c.l.b16 %v256
      %v834 = vunpack.c.l.b16 %v257
      %v835 = vunpack.c.h.b16 %v257
      %v836 = vunpack.c.l.b16 %v258
      %v837 = vunpack.c.l.b16 %v259
      %v838 = vunpack.c.h.b16 %v259
      %v839 = vunpack.c.l.b16 %v260
      %v840 = vunpack.c.l.b16 %v261
      %v841 = vunpack.c.h.b16 %v261
      %v842 = vunpack.c.l.b16 %v262
      %v843 = vunpack.c.l.b16 %v263
      %v844 = vunpack.c.h.b16 %v263
      %v845 = vunpack.c.l.b16 %v264
      %v846 = vunpack.c.l.b16 %v265
      %v847 = vunpack.c.h.b16 %v265
      %v848 = vunpack.c.l.b16 %v266
      %v849 = vunpack.c.l.b16 %v267
      %v850 = vunpack.c.h.b16 %v267
      %v851 = vunpack.c.l.b16 %v268
      %v852 = vunpack.c.l.b16 %v269
      %v853 = vunpack.c.h.b16 %v269
      %v854 = vunpack.c.l.b16 %v270
      %v855 = vunpack.c.l.b16 %v271
      %v856 = vunpack.c.h.b16 %v271
      %v857 = vunpack.c.l.b16 %v272
      %v858 = vunpack.c.l.b16 %v273
      %v859 = vunpack.c.h.b16 %v273
      %v860 = vunpack.c.l.b16 %v274
      %v861 = vunpack.c.l.b16 %v275
      %v862 = vunpack.c.h.b16 %v275
      %v863 = vunpack.c.l.b16 %v276
      %v864 = vunpack.c.l.b16 %v277
      %v865 = vunpack.c.h.b16 %v277
      %v866 = vunpack.c.l.b16 %v278
      %v867 = vunpack.c.l.b16 %v279
      %v868 = vunpack.c.h.b16 %v279
      %v869 = vunpack.c.l.b16 %v280
      %v870 = vunpack.c.l.b16 %v281
      %v871 = vunpack.c.h.b16 %v281
      %v872 = vunpack.c.l.b16 %v282
      %v873 = vunpack.c.l.b16 %v283
      %v874 = vunpack.c.h.b16 %v283
      %v875 = vunpack.c.l.b16 %v284
      %v876 = vunpack.c.l.b16 %v285
      %v877 = vunpack.c.h.b16 %v285
      %v878 = vunpack.c.l.b16 %v286
      %v879 = vunpack.c.l.b16 %v287
      %v880 = vunpack.c.h.b16 %v287
      %v881 = vunpack.c.l.b16 %v288
      %v882 = vunpack.c.l.b16 %v289
      %v883 = vunpack.c.h.b16 %v289
      %v884 = vunpack.c.l.b16 %v290
      %v885 = vunpack.c.l.b16 %v291
      %v886 = vunpack.c.h.b16 %v291
      %v887 = vunpack.c.l.b16 %v292
      %v888 = vunpack.c.l.b16 %v293
      %v889 = vunpack.c.h.b16 %v293
      %v890 = vunpack.c.l.b16 %v294
      %v891 = vunpack.c.l.b16 %v295
      %v892 = vunpack.c.h.b16 %v295
      %v893 = vunpack.c.l.b16 %v296
      %v894 = vunpack.c.l.b16 %v297
      %v895 = vunpack.c.h.b16 %v297
      %v896 = vunpack.c.l.b16 %v298
      %v897 = vunpack.c.l.b16 %v299
      %v898 = vunpack.c.h.b16 %v299
      %v899 = vunpack.c.l.b16 %v300
      %v900 = vunpack.c.l.b16 %v301
      %v901 = vunpack.c.h.b16 %v301
      %v902 = vunpack.c.l.b16 %v302
      %v903 = vunpack.c.l.b16 %v303
      %v904 = vunpack.c.h.b16 %v303
      %v905 = vunpack.c.l.b16 %v304
      %v906 = vunpack.c.l.b16 %v305
      %v907 = vunpack.c.h.b16 %v305
      %v908 = vunpack.c.l.b16 %v306
      %v909 = vunpack.c.l.b16 %v307
      %v910 = vunpack.c.h.b16 %v307
      %v911 = vunpack.c.l.b16 %v308
      %v912 = vunpack.c.l.b16 %v309
      %v913 = vunpack.c.h.b16 %v309
      %v914 = vunpack.c.l.b16 %v310
      %v915 = vunpack.c.l.b16 %v311
      %v916 = vunpack.c.h.b16 %v311
      %v917 = vunpack.c.l.b16 %v312
      %v918 = vunpack.c.l.b16 %v313
      %v919 = vunpack.c.h.b16 %v313
      %v920 = vunpack.c.l.b16 %v314
      %v921 = vunpack.c.l.b16 %v315
      %v922 = vunpack.c.h.b16 %v315
      %v923 = vunpack.c.l.b16 %v316
      %v924 = vunpack.c.l.b16 %v317
      %v925 = vunpack.c.h.b16 %v317
      %v926 = vunpack.c.l.b16 %v318
      %v927 = vunpack.c.l.b16 %v319
      %v928 = vunpack.c.h.b16 %v319
      %v929 = vunpack.c.l.b16 %v320
      %v930 = vunpack.c.l.b16 %v321
      %v931 = vunpack.c.h.b16 %v321
      %v932 = vunpack.c.l.b16 %v322
      %v933 = vunpack.c.l.b16 %v323
      %v934 = vunpack.c.h.b16 %v323
      %v935 = vunpack.c.l.b16 %v324
      %v936 = vunpack.c.l.b16 %v325
      %v937 = vunpack.c.h.b16 %v325
      %v938 = vunpack.c.l.b16 %v326
      %v939 = vunpack.c.l.b16 %v327
      %v940 = vunpack.c.h.b16 %v327
      %v941 = vunpack.c.l.b16 %v328
      %v942 = vunpack.c.l.b16 %v329
      %v943 = vunpack.c.h.b16 %v329
      %v944 = vunpack.c.l.b16 %v330
      %v945 = vunpack.c.l.b16 %v331
      %v946 = vunpack.c.h.b16 %v331
      %v947 = vunpack.c.l.b16 %v332
      %v948 = vunpack.c.l.b16 %v333
      %v949 = vunpack.c.h.b16 %v333
      %v950 = vunpack.c.l.b16 %v334
      %v951 = vunpack.c.l.b16 %v335
      %v952 = vunpack.c.h.b16 %v335
      %v953 = vunpack.c.l.b16 %v336
      %v954 = vunpack.c.l.b16 %v337
      %v955 = vunpack.c.h.b16 %v337
      %v956 = vunpack.c.l.b16 %v338
      %v957 = vunpack.c.l.b16 %v339
      %v958 = vunpack.c.h.b16 %v339
      %v959 = vunpack.c.l.b16 %v340
      %v960 = vunpack.c.l.b16 %v341
      %v961 = vunpack.c.h.b16 %v341
      %v962 = vunpack.c.l.b16 %v342
      %v963 = vunpack.c.l.b16 %v343
      %v964 = vunpack.c.h.b16 %v343
      %v965 = vunpack.c.l.b16 %v344
      %v966 = vunpack.c.l.b16 %v345
      %v967 = vunpack.c.h.b16 %v345
      %v968 = vunpack.c.l.b16 %v346
      %v969 = vunpack.c.l.b16 %v347
      %v970 = vunpack.c.h.b16 %v347
      %v971 = vunpack.c.l.b16 %v348
      %v972 = vunpack.c.l.b16 %v349
      %v973 = vunpack.c.h.b16 %v349
      %v974 = vunpack.c.l.b16 %v350
      %v975 = vunpack.c.l.b16 %v351
      %v976 = vunpack.c.h.b16 %v351
      %v977 = vunpack.c.l.b16 %v352
      %v978 = vunpack.c.l.b16 %v353
      %v979 = vunpack.c.h.b16 %v353
      %v980 = vunpack.c.l.b16 %v354
      %v981 = vunpack.c.l.b16 %v355
      %v982 = vunpack.c.h.b16 %v355
      %v983 = vunpack.c.l.b16 %v356
      %v984 = vunpack.c.l.b16 %v357
      %v985 = vunpack.c.h.b16 %v357
      %v986 = vunpack.c.l.b16 %v358
      %v987 = vunpack.c.l.b16 %v359
      %v988 = vunpack.c.h.b16 %v359
      %v989 = vunpack.c.l.b16 %v360
      %v990 = vunpack.c.l.b16 %v361
      %v991 = vunpack.c.h.b16 %v361
      %v992 = vunpack.c.l.b16 %v362
      %v993 = vunpack.c.l.b16 %v363
      %v994 = vunpack.c.h.b16 %v363
      %v995 = vunpack.c.l.b16 %v364
      %v996 = vunpack.c.l.b16 %v365
      %v997 = vunpack.c.h.b16 %v365
      %v998 = vunpack.c.l.b16 %v366
      %v999 = vunpack.c.l.b16 %v367
      %v1000 = vunpack.c.h.b16 %v367
      %v1001 = vunpack.c.l.b16 %v368
      %v1002 = vunpack.c.l.b16 %v369
      %v1003 = vunpack.c.h.b16 %v369
      %v1004 = vunpack.c.l.b16 %v370
      %v1005 = vunpack.c.l.b16 %v371
      %v1006 = vunpack.c.h.b16 %v371
      %v1007 = vunpack.c.l.b16 %v372
      %v1008 = vunpack.c.l.b16 %v373
      %v1009 = vunpack.c.h.b16 %v373
      %v1010 = vunpack.c.l.b16 %v374
      %v1011 = vunpack.c.l.b16 %v375
      %v1012 = vunpack.c.h.b16 %v375
      %v1013 = vunpack.c.l.b16 %v376
      %v1014 = vunpack.c.l.b16 %v377
      %v1015 = vunpack.c.h.b16 %v377
      %v1016 = vunpack.c.l.b16 %v378
      %v1017 = vunpack.c.l.b16 %v379
      %v1018 = vunpack.c.h.b16 %v379
      %v1019 = vunpack.c.l.b16 %v380
      %v1020 = vunpack.c.l.b16 %v381
      %v1021 = vunpack.c.h.b16 %v381
      %v1022 = vunpack.c.l.b16 %v382
      %v1023 = vunpack.c.l.b16 %v383
      %v1024 = vunpack.c.h.b16 %v383
      %v1025 = vunpack.c.l.b16 %v384
      %v1026 = vunpack.c.l.b16 %v385
      %v1027 = vunpack.c.h.b16 %v385
      %v1028 = vunpack.c.l.b16 %v386
      %v1029 = vunpack.c.l.b16 %v387
      %v1030 = vunpack.c.h.b16 %v387
      %v1031 = vunpack.c.l.b16 %v388
      %v1032 = vunpack.c.l.b16 %v389
      %v1033 = vunpack.c.h.b16 %v389
      %v1034 = vunpack.c.l.b16 %v390
      %v1035 = vunpack.c.l.b16 %v391
      %v1036 = vunpack.c.h.b16 %v391
      %v1037 = vunpack.c.l.b16 %v392
      %v1038 = vunpack.c.l.b16 %v393
      %v1039 = vunpack.c.h.b16 %v393
      %v1040 = vunpack.c.l.b16 %v394
      %v1041 = vunpack.c.l.b16 %v395
      %v1042 = vunpack.c.h.b16 %v395
      %v1043 = vunpack.c.l.b16 %v396
      %v1044 = vunpack.c.l.b16 %v397
      %v1045 = vunpack.c.h.b16 %v397
      %v1046 = vunpack.c.l.b16 %v398
      %v1047 = vunpack.c.l.b16 %v399
      %v1048 = vunpack.c.h.b16 %v399
      %v1049 = vunpack.c.l.b16 %v400
      %v1050 = vunpack.c.l.b16 %v401
      %v1051 = vunpack.c.h.b16 %v401
      %v1052 = vunpack.c.l.b16 %v402
      %v1053 = vunpack.c.l.b16 %v403
      %v1054 = vunpack.c.h.b16 %v403
      %v1055 = vunpack.c.l.b16 %v404
      %v1056 = vunpack.c.l.b16 %v405
      %v1057 = vunpack.c.h.b16 %v405
      %v1058 = vunpack.c.l.b16 %v406
      %v1059 = vunpack.c.l.b16 %v407
      %v1060 = vunpack.c.h.b16 %v407
      %v1061 = vunpack.c.l.b16 %v408
      %v1062 = vunpack.c.l.b16 %v409
      %v1063 = vunpack.c.h.b16 %v409
      %v1064 = vunpack.c.l.b16 %v410
      %v1065 = vunpack.c.l.b16 %v411
      %v1066 = vunpack.c.h.b16 %v411
      %v1067 = vunpack.c.l.b16 %v412
      %v1068 = vunpack.c.l.b16 %v413
      %v1069 = vunpack.c.h.b16 %v413
      %v1070 = vunpack.c.l.b16 %v414
      %v1071 = vunpack.c.l.b16 %v415
      %v1072 = vunpack.c.h.b16 %v415
      %v1073 = vunpack.c.l.b16 %v416
      %v1074 = vunpack.c.l.b16 %v417
      %v1075 = vunpack.c.h.b16 %v417
      %v1076 = vunpack.c.l.b16 %v418
      %v1077 = vunpack.c.l.b16 %v419
      %v1078 = vunpack.c.h.b16 %v419
      %v1079 = vunpack.c.l.b16 %v420
      %v1080 = vunpack.c.l.b16 %v421
      %v1081 = vunpack.c.h.b16 %v421
      %v1082 = vunpack.c.l.b16 %v422
      %v1083 = vunpack.c.l.b16 %v423
      %v1084 = vunpack.c.h.b16 %v423
      %v1085 = vunpack.c.l.b16 %v424
      %v1086 = vunpack.c.l.b16 %v425
      %v1087 = vunpack.c.h.b16 %v425
      %v1088 = vunpack.c.l.b16 %v426
      %v1089 = vunpack.c.l.b16 %v427
      %v1090 = vunpack.c.h.b16 %v427
      %v1091 = vunpack.c.l.b16 %v428
      %v1092 = vunpack.c.l.b16 %v429
      %v1093 = vunpack.c.h.b16 %v429
      %v1094 = vunpack.c.l.b16 %v430
      %v1095 = vunpack.c.l.b16 %v431
      %v1096 = vunpack.c.h.b16 %v431
      %v1097 = vunpack.c.l.b16 %v432
      %v1098 = vunpack.c.l.b16 %v433
      %v1099 = vunpack.c.h.b16 %v433
      %v1100 = vunpack.c.l.b16 %v434
      %v1101 = vunpack.c.l.b16 %v435
      %v1102 = vunpack.c.h.b16 %v435
      %v1103 = vunpack.c.l.b16 %v436
      %v1104 = vunpack.c.l.b16 %v437
      %v1105 = vunpack.c.h.b16 %v437
      %v1106 = vunpack.c.l.b16 %v438
      %v1107 = vunpack.c.l.b16 %v439
      %v1108 = vunpack.c.h.b16 %v439
      %v1109 = vunpack.c.l.b16 %v440
      %v1110 = vunpack.c.l.b16 %v441
      %v1111 = vunpack.c.h.b16 %v441
      %v1112 = vunpack.c.l.b16 %v442
      %v1113 = vunpack.c.l.b16 %v443
      %v1114 = vunpack.c.h.b16 %v443
      %v1115 = vunpack.c.l.b16 %v444
      %v1116 = vunpack.c.l.b16 %v445
      %v1117 = vunpack.c.h.b16 %v445
      %v1118 = vunpack.c.l.b16 %v446
      %v1119 = vunpack.c.l.b16 %v447
      %v1120 = vunpack.c.h.b16 %v447
      %v1121 = vunpack.c.l.b16 %v448
      %v1122 = vunpack.c.l.b16 %v449
      %v1123 = vunpack.c.h.b16 %v449
      %v1124 = vunpack.c.l.b16 %v450
      %v1125 = vunpack.c.l.b16 %v451
      %v1126 = vunpack.c.h.b16 %v451
      %v1127 = vunpack.c.l.b16 %v452
      %v1128 = vunpack.c.l.b16 %v453
      %v1129 = vunpack.c.h.b16 %v453
      %v1130 = vunpack.c.l.b16 %v454
      %v1131 = vpack.c.b16 %v750, %v747
      %v1132 = vpack.c.b16 %v751, %v748
      %v1133 = vpack.c.b16 %v752, %v749
      %v1134 = vpack.c.b16 %v756, %v753
      %v1135 = vpack.c.b16 %v757, %v754
      %v1136 = vpack.c.b16 %v758, %v755
      %v1137 = vpack.c.b16 %v762, %v759
      %v1138 = vpack.c.b16 %v763, %v760
      %v1139 = vpack.c.b16 %v764, %v761
      %v1140 = vpack.c.b16 %v768, %v765
      %v1141 = vpack.c.b16 %v769, %v766
      %v1142 = vpack.c.b16 %v770, %v767
      %v1143 = vpack.c.b16 %v774, %v771
      %v1144 = vpack.c.b16 %v775, %v772
      %v1145 = vpack.c.b16 %v776, %v773
      %v1146 = vpack.c.b16 %v780, %v777
      %v1147 = vpack.c.b16 %v781, %v778
      %v1148 = vpack.c.b16 %v782, %v779
      %v1149 = vpack.c.b16 %v786, %v783
      %v1150 = vpack.c.b16 %v787, %v784
      %v1151 = vpack.c.b16 %v788, %v785
      %v1152 = vpack.c.b16 %v792, %v789
      %v1153 = vpack.c.b16 %v793, %v790
      %v1154 = vpack.c.b16 %v794, %v791
      %v1155 = vpack.c.b16 %v798, %v795
      %v1156 = vpack.c.b16 %v799, %v796
      %v1157 = vpack.c.b16 %v800, %v797
      %v1158 = vpack.c.b16 %v804, %v801
      %v1159 = vpack.c.b16 %v805, %v802
      %v1160 = vpack.c.b16 %v806, %v803
      %v1161 = vpack.c.b16 %v810, %v807
      %v1162 = vpack.c.b16 %v811, %v808
      %v1163 = vpack.c.b16 %v812, %v809
      %v1164 = vpack.c.b16 %v816, %v813
      %v1165 = vpack.c.b16 %v817, %v814
      %v1166 = vpack.c.b16 %v818, %v815
      %v1167 = vpack.c.b16 %v822, %v819
      %v1168 = vpack.c.b16 %v823, %v820
      %v1169 = vpack.c.b16 %v824, %v821
      %v1170 = vpack.c.b16 %v828, %v825
      %v1171 = vpack.c.b16 %v829, %v826
      %v1172 = vpack.c.b16 %v830, %v827
      %v1173 = vpack.c.b16 %v834, %v831
      %v1174 = vpack.c.b16 %v835, %v832
      %v1175 = vpack.c.b16 %v836, %v833
      %v1176 = vpack.c.b16 %v840, %v837
      %v1177 = vpack.c.b16 %v841, %v838
      %v1178 = vpack.c.b16 %v842, %v839
      %v1179 = vpack.c.b16 %v846, %v843
      %v1180 = vpack.c.b16 %v847, %v844
      %v1181 = vpack.c.b16 %v848, %v845
      %v1182 = vpack.c.b16 %v852, %v849
      %v1183 = vpack.c.b16 %v853, %v850
      %v1184 = vpack.c.b16 %v854, %v851
      %v1185 = vpack.c.b16 %v858, %v855
      %v1186 = vpack.c.b16 %v859, %v856
      %v1187 = vpack.c.b16 %v860, %v857
      %v1188 = vpack.c.b16 %v864, %v861
      %v1189 = vpack.c.b16 %v865, %v862
      %v1190 = vpack.c.b16 %v866, %v863
      %v1191 = vpack.c.b16 %v870, %v867
      %v1192 = vpack.c.b16 %v871, %v868
      %v1193 = vpack.c.b16 %v872, %v869
      %v1194 = vpack.c.b16 %v876, %v873
      %v1195 = vpack.c.b16 %v877, %v874
      %v1196 = vpack.c.b16 %v878, %v875
      %v1197 = vpack.c.b16 %v882, %v879
      %v1198 = vpack.c.b16 %v883, %v880
      %v1199 = vpack.c.b16 %v884, %v881
      %v1200 = vpack.c.b16 %v888, %v885
      %v1201 = vpack.c.b16 %v889, %v886
      %v1202 = vpack.c.b16 %v890, %v887
      %v1203 = vpack.c.b16 %v894, %v891
      %v1204 = vpack.c.b16 %v895, %v892
      %v1205 = vpack.c.b16 %v896, %v893
      %v1206 = vpack.c.b16 %v900, %v897
      %v1207 = vpack.c.b16 %v901, %v898
      %v1208 = vpack.c.b16 %v902, %v899
      %v1209 = vpack.c.b16 %v906, %v903
      %v1210 = vpack.c.b16 %v907, %v904
      %v1211 = vpack.c.b16 %v908, %v905
      %v1212 = vpack.c.b16 %v912, %v909
      %v1213 = vpack.c.b16 %v913, %v910
      %v1214 = vpack.c.b16 %v914, %v911
      %v1215 = vpack.c.b16 %v918, %v915
      %v1216 = vpack.c.b16 %v919, %v916
      %v1217 = vpack.c.b16 %v920, %v917
      %v1218 = vpack.c.b16 %v924, %v921
      %v1219 = vpack.c.b16 %v925, %v922
      %v1220 = vpack.c.b16 %v926, %v923
      %v1221 = vpack.c.b16 %v930, %v927
      %v1222 = vpack.c.b16 %v931, %v928
      %v1223 = vpack.c.b16 %v932, %v929
      %v1224 = vpack.c.b16 %v936, %v933
      %v1225 = vpack.c.b16 %v937, %v934
      %v1226 = vpack.c.b16 %v938, %v935
      %v1227 = vpack.c.b16 %v942, %v939
      %v1228 = vpack.c.b16 %v943, %v940
      %v1229 = vpack.c.b16 %v944, %v941
      %v1230 = vpack.c.b16 %v948, %v945
      %v1231 = vpack.c.b16 %v949, %v946
      %v1232 = vpack.c.b16 %v950, %v947
      %v1233 = vpack.c.b16 %v954, %v951
      %v1234 = vpack.c.b16 %v955, %v952
      %v1235 = vpack.c.b16 %v956, %v953
      %v1236 = vpack.c.b16 %v960, %v957
      %v1237 = vpack.c.b16 %v961, %v958
      %v1238 = vpack.c.b16 %v962, %v959
      %v1239 = vpack.c.b16 %v966, %v963
      %v1240 = vpack.c.b16 %v967, %v964
      %v1241 = vpack.c.b16 %v968, %v965
      %v1242 = vpack.c.b16 %v972, %v969
      %v1243 = vpack.c.b16 %v973, %v970
      %v1244 = vpack.c.b16 %v974, %v971
      %v1245 = vpack.c.b16 %v978, %v975
      %v1246 = vpack.c.b16 %v979, %v976
      %v1247 = vpack.c.b16 %v980, %v977
      %v1248 = vpack.c.b16 %v984, %v981
      %v1249 = vpack.c.b16 %v985, %v982
      %v1250 = vpack.c.b16 %v986, %v983
      %v1251 = vpack.c.b16 %v990, %v987
      %v1252 = vpack.c.b16 %v991, %v988
      %v1253 = vpack.c.b16 %v992, %v989
      %v1254 = vpack.c.b16 %v996, %v993
      %v1255 = vpack.c.b16 %v997, %v994
      %v1256 = vpack.c.b16 %v998, %v995
      %v1257 = vpack.c.b16 %v1002, %v999
      %v1258 = vpack.c.b16 %v1003, %v1000
      %v1259 = vpack.c.b16 %v1004, %v1001
      %v1260 = vpack.c.b16 %v1008, %v1005
      %v1261 = vpack.c.b16 %v1009, %v1006
      %v1262 = vpack.c.b16 %v1010, %v1007
      %v1263 = vpack.c.b16 %v1014, %v1011
      %v1264 = vpack.c.b16 %v1015, %v1012
      %v1265 = vpack.c.b16 %v1016, %v1013
      %v1266 = vpack.c.b16 %v1020, %v1017
      %v1267 = vpack.c.b16 %v1021, %v1018
      %v1268 = vpack.c.b16 %v1022, %v1019
      %v1269 = vpack.c.b16 %v1026, %v1023
      %v1270 = vpack.c.b16 %v1027, %v1024
      %v1271 = vpack.c.b16 %v1028, %v1025
      %v1272 = vpack.c.b16 %v1032, %v1029
      %v1273 = vpack.c.b16 %v1033, %v1030
      %v1274 = vpack.c.b16 %v1034, %v1031
      %v1275 = vpack.c.b16 %v1038, %v1035
      %v1276 = vpack.c.b16 %v1039, %v1036
      %v1277 = vpack.c.b16 %v1040, %v1037
      %v1278 = vpack.c.b16 %v1044, %v1041
      %v1279 = vpack.c.b16 %v1045, %v1042
      %v1280 = vpack.c.b16 %v1046, %v1043
      %v1281 = vpack.c.b16 %v1050, %v1047
      %v1282 = vpack.c.b16 %v1051, %v1048
      %v1283 = vpack.c.b16 %v1052, %v1049
      %v1284 = vpack.c.b16 %v1056, %v1053
      %v1285 = vpack.c.b16 %v1057, %v1054
      %v1286 = vpack.c.b16 %v1058, %v1055
      %v1287 = vpack.c.b16 %v1062, %v1059
      %v1288 = vpack.c.b16 %v1063, %v1060
      %v1289 = vpack.c.b16 %v1064, %v1061
      %v1290 = vpack.c.b16 %v1068, %v1065
      %v1291 = vpack.c.b16 %v1069, %v1066
      %v1292 = vpack.c.b16 %v1070, %v1067
      %v1293 = vpack.c.b16 %v1074, %v1071
      %v1294 = vpack.c.b16 %v1075, %v1072
      %v1295 = vpack.c.b16 %v1076, %v1073
      %v1296 = vpack.c.b16 %v1080, %v1077
      %v1297 = vpack.c.b16 %v1081, %v1078
      %v1298 = vpack.c.b16 %v1082, %v1079
      %v1299 = vpack.c.b16 %v1086, %v1083
      %v1300 = vpack.c.b16 %v1087, %v1084
      %v1301 = vpack.c.b16 %v1088, %v1085
      %v1302 = vpack.c.b16 %v1092, %v1089
      %v1303 = vpack.c.b16 %v1093, %v1090
      %v1304 = vpack.c.b16 %v1094, %v1091
      %v1305 = vpack.c.b16 %v1098, %v1095
      %v1306 = vpack.c.b16 %v1099, %v1096
      %v1307 = vpack.c.b16 %v1100, %v1097
      %v1308 = vpack.c.b16 %v1104, %v1101
      %v1309 = vpack.c.b16 %v1105, %v1102
      %v1310 = vpack.c.b16 %v1106, %v1103
      %v1311 = vpack.c.b16 %v1110, %v1107
      %v1312 = vpack.c.b16 %v1111, %v1108
      %v1313 = vpack.c.b16 %v1112, %v1109
      %v1314 = vpack.c.b16 %v1116, %v1113
      %v1315 = vpack.c.b16 %v1117, %v1114
      %v1316 = vpack.c.b16 %v1118, %v1115
      %v1317 = vpack.c.b16 %v1122, %v1119
      %v1318 = vpack.c.b16 %v1123, %v1120
      %v1319 = vpack.c.b16 %v1124, %v1121
      %v1320 = vpack.c.b16 %v1128, %v1125
      %v1321 = vpack.c.b16 %v1129, %v1126
      %v1322 = vpack.c.b16 %v1130, %v1127
      %v1487 = vunpack.c.l.b16 %v455
      %v1488 = vunpack.c.l.b16 %v456
      %v1489 = vunpack.c.l.b16 %v457
      %v1490 = vunpack.c.l.b16 %v458
      %v1491 = vunpack.c.l.b16 %v459
      %v1492 = vunpack.c.l.b16 %v460
      %v1493 = vunpack.c.l.b16 %v461
      %v1494 = vunpack.c.l.b16 %v462
      %v1495 = vunpack.c.l.b16 %v463
      %v1496 = vunpack.c.l.b16 %v464
      %v1497 = vunpack.c.l.b16 %v465
      %v1498 = vunpack.c.l.b16 %v466
      %v1499 = vunpack.c.l.b16 %v467
      %v1500 = vunpack.c.l.b16 %v468
      %v1501 = vunpack.c.l.b16 %v469
      %v1502 = vunpack.c.l.b16 %v470
      %v1503 = vunpack.c.l.b16 %v471
      %v1504 = vunpack.c.l.b16 %v472
      %v1505 = vunpack.c.l.b16 %v473
      %v1506 = vunpack.c.l.b16 %v474
      %v1507 = vunpack.c.l.b16 %v475
      %v1508 = vunpack.c.l.b16 %v476
      %v1509 = vunpack.c.l.b16 %v477
      %v1510 = vunpack.c.l.b16 %v478
      %v1511 = vunpack.c.l.b16 %v479
      %v1512 = vunpack.c.l.b16 %v480
      %v1513 = vunpack.c.l.b16 %v481
      %v1514 = vunpack.c.l.b16 %v482
      %v1515 = vunpack.c.l.b16 %v483
      %v1516 = vunpack.c.l.b16 %v484
      %v1517 = vunpack.c.l.b16 %v485
      %v1518 = vunpack.c.l.b16 %v486
      %v1519 = vunpack.c.l.b16 %v487
      %v1520 = vunpack.c.l.b16 %v488
      %v1521 = vunpack.c.l.b16 %v489
      %v1522 = vunpack.c.l.b16 %v490
      %v1523 = vpack.c.b16 %v1488, %v1487
      %v1524 = vpack.c.b16 %v1490, %v1489
      %v1525 = vpack.c.b16 %v1492, %v1491
      %v1526 = vpack.c.b16 %v1494, %v1493
      %v1527 = vpack.c.b16 %v1496, %v1495
      %v1528 = vpack.c.b16 %v1498, %v1497
      %v1529 = vpack.c.b16 %v1500, %v1499
      %v1530 = vpack.c.b16 %v1502, %v1501
      %v1531 = vpack.c.b16 %v1504, %v1503
      %v1532 = vpack.c.b16 %v1506, %v1505
      %v1533 = vpack.c.b16 %v1508, %v1507
      %v1534 = vpack.c.b16 %v1510, %v1509
      %v1535 = vpack.c.b16 %v1512, %v1511
      %v1536 = vpack.c.b16 %v1514, %v1513
      %v1537 = vpack.c.b16 %v1516, %v1515
      %v1538 = vpack.c.b16 %v1518, %v1517
      %v1539 = vpack.c.b16 %v1520, %v1519
      %v1540 = vpack.c.b16 %v1522, %v1521
      %vm1559 = vcmask 261120
      %v1561 = vsel %vm1559, %v1133, 0
      %v1564 = vsel %vm1559, %v1136, 0
      %v1567 = vsel %vm1559, %v1139, 0
      %v1570 = vsel %vm1559, %v1142, 0
      %v1573 = vsel %vm1559, %v1145, 0
      %v1576 = vsel %vm1559, %v1148, 0
      %v1579 = vsel %vm1559, %v1151, 0
      %v1582 = vsel %vm1559, %v1154, 0
      %v1585 = vsel %vm1559, %v1157, 0
      %v1588 = vsel %vm1559, %v1160, 0
      %v1591 = vsel %vm1559, %v1163, 0
      %v1594 = vsel %vm1559, %v1166, 0
      %v1597 = vsel %vm1559, %v1169, 0
      %v1600 = vsel %vm1559, %v1172, 0
      %v1603 = vsel %vm1559, %v1175, 0
      %v1606 = vsel %vm1559, %v1178, 0
      %v1609 = vsel %vm1559, %v1181, 0
      %v1612 = vsel %vm1559, %v1184, 0
      %v1615 = vsel %vm1559, %v1187, 0
      %v1618 = vsel %vm1559, %v1190, 0
      %v1621 = vsel %vm1559, %v1193, 0
      %v1624 = vsel %vm1559, %v1196, 0
      %v1627 = vsel %vm1559, %v1199, 0
      %v1630 = vsel %vm1559, %v1202, 0
      %v1633 = vsel %vm1559, %v1205, 0
      %v1636 = vsel %vm1559, %v1208, 0
      %v1639 = vsel %vm1559, %v1211, 0
      %v1642 = vsel %vm1559, %v1214, 0
      %v1645 = vsel %vm1559, %v1217, 0
      %v1648 = vsel %vm1559, %v1220, 0
      %v1651 = vsel %vm1559, %v1223, 0
      %v1654 = vsel %vm1559, %v1226, 0
      %v1657 = vsel %vm1559, %v1229, 0
      %v1660 = vsel %vm1559, %v1232, 0
      %v1663 = vsel %vm1559, %v1235, 0
      %v1666 = vsel %vm1559, %v1238, 0
      %v1669 = vsel %vm1559, %v1241, 0
      %v1672 = vsel %vm1559, %v1244, 0
      %v1675 = vsel %vm1559, %v1247, 0
      %v1678 = vsel %vm1559, %v1250, 0
      %v1681 = vsel %vm1559, %v1253, 0
      %v1684 = vsel %vm1559, %v1256, 0
      %v1687 = vsel %vm1559, %v1259, 0
      %v1690 = vsel %vm1559, %v1262, 0
      %v1693 = vsel %vm1559, %v1265, 0
      %v1696 = vsel %vm1559, %v1268, 0
      %v1699 = vsel %vm1559, %v1271, 0
      %v1702 = vsel %vm1559, %v1274, 0
      %v1705 = vsel %vm1559, %v1277, 0
      %v1708 = vsel %vm1559, %v1280, 0
      %v1711 = vsel %vm1559, %v1283, 0
      %v1714 = vsel %vm1559, %v1286, 0
      %v1717 = vsel %vm1559, %v1289, 0
      %v1720 = vsel %vm1559, %v1292, 0
      %v1723 = vsel %vm1559, %v1295, 0
      %v1726 = vsel %vm1559, %v1298, 0
      %v1729 = vsel %vm1559, %v1301, 0
      %v1732 = vsel %vm1559, %v1304, 0
      %v1735 = vsel %vm1559, %v1307, 0
      %v1738 = vsel %vm1559, %v1310, 0
      %v1741 = vsel %vm1559, %v1313, 0
      %v1744 = vsel %vm1559, %v1316, 0
      %v1747 = vsel %vm1559, %v1319, 0
      %v1750 = vsel %vm1559, %v1322, 0
      %1752 = vmatpush.bf16.msra.mxu0 %v1530
      %1753 = vmatpush.bf16.msra.mxu0 %v1529
      %1754 = vmatpush.bf16.msra.mxu0 %v1528
      %1755 = vmatpush.bf16.msra.mxu0 %v1527
      %1756 = vmatpush.bf16.msra.mxu0 %v1526
      %1757 = vmatpush.bf16.msra.mxu0 %v1525
      %1758 = vmatpush.bf16.msra.mxu0 %v1524
      %1759 = vmatpush.bf16.msra.mxu0 %v1523
      %1760 = vmatmul.bf16.gmra.mxu0 %v1131
      %v1761 = vpop.f32.mrf.mxu0
      %v1762 = vadd.f32 0.0, %v1761
      %v1763 = vpop.f32.mrf.mxu0
      %v1764 = vadd.f32 0.0, %v1763
      %1765 = vmatmul.bf16.gmra.mxu0 %v1134
      %v1766 = vpop.f32.mrf.mxu0
      %v1767 = vadd.f32 0.0, %v1766
      %v1768 = vpop.f32.mrf.mxu0
      %v1769 = vadd.f32 0.0, %v1768
      %1770 = vmatmul.bf16.gmra.mxu0 %v1137
      %v1771 = vpop.f32.mrf.mxu0
      %v1772 = vadd.f32 0.0, %v1771
      %v1773 = vpop.f32.mrf.mxu0
      %v1774 = vadd.f32 0.0, %v1773
      %1775 = vmatmul.bf16.gmra.mxu0 %v1140
      %v1776 = vpop.f32.mrf.mxu0
      %v1777 = vadd.f32 0.0, %v1776
      %v1778 = vpop.f32.mrf.mxu0
      %v1779 = vadd.f32 0.0, %v1778
      %1780 = vmatmul.bf16.gmra.mxu0 %v1143
      %v1781 = vpop.f32.mrf.mxu0
      %v1782 = vadd.f32 0.0, %v1781
      %v1783 = vpop.f32.mrf.mxu0
      %v1784 = vadd.f32 0.0, %v1783
      %1785 = vmatmul.bf16.gmra.mxu0 %v1146
      %v1786 = vpop.f32.mrf.mxu0
      %v1787 = vadd.f32 0.0, %v1786
      %v1788 = vpop.f32.mrf.mxu0
      %v1789 = vadd.f32 0.0, %v1788
      %1790 = vmatmul.bf16.gmra.mxu0 %v1149
      %v1791 = vpop.f32.mrf.mxu0
      %v1792 = vadd.f32 0.0, %v1791
      %v1793 = vpop.f32.mrf.mxu0
      %v1794 = vadd.f32 0.0, %v1793
      %1795 = vmatmul.bf16.gmra.mxu0 %v1152
      %v1796 = vpop.f32.mrf.mxu0
      %v1797 = vadd.f32 0.0, %v1796
      %v1798 = vpop.f32.mrf.mxu0
      %v1799 = vadd.f32 0.0, %v1798
      %1800 = vmatmul.bf16.gmra.mxu0 %v1155
      %v1801 = vpop.f32.mrf.mxu0
      %v1802 = vadd.f32 0.0, %v1801
      %v1803 = vpop.f32.mrf.mxu0
      %v1804 = vadd.f32 0.0, %v1803
      %1805 = vmatmul.bf16.gmra.mxu0 %v1158
      %v1806 = vpop.f32.mrf.mxu0
      %v1807 = vadd.f32 0.0, %v1806
      %v1808 = vpop.f32.mrf.mxu0
      %v1809 = vadd.f32 0.0, %v1808
      %1810 = vmatmul.bf16.gmra.mxu0 %v1161
      %v1811 = vpop.f32.mrf.mxu0
      %v1812 = vadd.f32 0.0, %v1811
      %v1813 = vpop.f32.mrf.mxu0
      %v1814 = vadd.f32 0.0, %v1813
      %1815 = vmatmul.bf16.gmra.mxu0 %v1164
      %v1816 = vpop.f32.mrf.mxu0
      %v1817 = vadd.f32 0.0, %v1816
      %v1818 = vpop.f32.mrf.mxu0
      %v1819 = vadd.f32 0.0, %v1818
      %1820 = vmatmul.bf16.gmra.mxu0 %v1167
      %v1821 = vpop.f32.mrf.mxu0
      %v1822 = vadd.f32 0.0, %v1821
      %v1823 = vpop.f32.mrf.mxu0
      %v1824 = vadd.f32 0.0, %v1823
      %1825 = vmatmul.bf16.gmra.mxu0 %v1170
      %v1826 = vpop.f32.mrf.mxu0
      %v1827 = vadd.f32 0.0, %v1826
      %v1828 = vpop.f32.mrf.mxu0
      %v1829 = vadd.f32 0.0, %v1828
      %1830 = vmatmul.bf16.gmra.mxu0 %v1173
      %v1831 = vpop.f32.mrf.mxu0
      %v1832 = vadd.f32 0.0, %v1831
      %v1833 = vpop.f32.mrf.mxu0
      %v1834 = vadd.f32 0.0, %v1833
      %1835 = vmatmul.bf16.gmra.mxu0 %v1176
      %v1836 = vpop.f32.mrf.mxu0
      %v1837 = vadd.f32 0.0, %v1836
      %v1838 = vpop.f32.mrf.mxu0
      %v1839 = vadd.f32 0.0, %v1838
      %1840 = vmatmul.bf16.gmra.mxu0 %v1179
      %v1841 = vpop.f32.mrf.mxu0
      %v1842 = vadd.f32 0.0, %v1841
      %v1843 = vpop.f32.mrf.mxu0
      %v1844 = vadd.f32 0.0, %v1843
      %1845 = vmatmul.bf16.gmra.mxu0 %v1182
      %v1846 = vpop.f32.mrf.mxu0
      %v1847 = vadd.f32 0.0, %v1846
      %v1848 = vpop.f32.mrf.mxu0
      %v1849 = vadd.f32 0.0, %v1848
      %1850 = vmatmul.bf16.gmra.mxu0 %v1185
      %v1851 = vpop.f32.mrf.mxu0
      %v1852 = vadd.f32 0.0, %v1851
      %v1853 = vpop.f32.mrf.mxu0
      %v1854 = vadd.f32 0.0, %v1853
      %1855 = vmatmul.bf16.gmra.mxu0 %v1188
      %v1856 = vpop.f32.mrf.mxu0
      %v1857 = vadd.f32 0.0, %v1856
      %v1858 = vpop.f32.mrf.mxu0
      %v1859 = vadd.f32 0.0, %v1858
      %1860 = vmatmul.bf16.gmra.mxu0 %v1191
      %v1861 = vpop.f32.mrf.mxu0
      %v1862 = vadd.f32 0.0, %v1861
      %v1863 = vpop.f32.mrf.mxu0
      %v1864 = vadd.f32 0.0, %v1863
      %1865 = vmatmul.bf16.gmra.mxu0 %v1194
      %v1866 = vpop.f32.mrf.mxu0
      %v1867 = vadd.f32 0.0, %v1866
      %v1868 = vpop.f32.mrf.mxu0
      %v1869 = vadd.f32 0.0, %v1868
      %1870 = vmatmul.bf16.gmra.mxu0 %v1197
      %v1871 = vpop.f32.mrf.mxu0
      %v1872 = vadd.f32 0.0, %v1871
      %v1873 = vpop.f32.mrf.mxu0
      %v1874 = vadd.f32 0.0, %v1873
      %1875 = vmatmul.bf16.gmra.mxu0 %v1200
      %v1876 = vpop.f32.mrf.mxu0
      %v1877 = vadd.f32 0.0, %v1876
      %v1878 = vpop.f32.mrf.mxu0
      %v1879 = vadd.f32 0.0, %v1878
      %1880 = vmatmul.bf16.gmra.mxu0 %v1203
      %v1881 = vpop.f32.mrf.mxu0
      %v1882 = vadd.f32 0.0, %v1881
      %v1883 = vpop.f32.mrf.mxu0
      %v1884 = vadd.f32 0.0, %v1883
      %1885 = vmatmul.bf16.gmra.mxu0 %v1206
      %v1886 = vpop.f32.mrf.mxu0
      %v1887 = vadd.f32 0.0, %v1886
      %v1888 = vpop.f32.mrf.mxu0
      %v1889 = vadd.f32 0.0, %v1888
      %1890 = vmatmul.bf16.gmra.mxu0 %v1209
      %v1891 = vpop.f32.mrf.mxu0
      %v1892 = vadd.f32 0.0, %v1891
      %v1893 = vpop.f32.mrf.mxu0
      %v1894 = vadd.f32 0.0, %v1893
      %1895 = vmatmul.bf16.gmra.mxu0 %v1212
      %v1896 = vpop.f32.mrf.mxu0
      %v1897 = vadd.f32 0.0, %v1896
      %v1898 = vpop.f32.mrf.mxu0
      %v1899 = vadd.f32 0.0, %v1898
      %1900 = vmatmul.bf16.gmra.mxu0 %v1215
      %v1901 = vpop.f32.mrf.mxu0
      %v1902 = vadd.f32 0.0, %v1901
      %v1903 = vpop.f32.mrf.mxu0
      %v1904 = vadd.f32 0.0, %v1903
      %1905 = vmatmul.bf16.gmra.mxu0 %v1218
      %v1906 = vpop.f32.mrf.mxu0
      %v1907 = vadd.f32 0.0, %v1906
      %v1908 = vpop.f32.mrf.mxu0
      %v1909 = vadd.f32 0.0, %v1908
      %1910 = vmatmul.bf16.gmra.mxu0 %v1221
      %v1911 = vpop.f32.mrf.mxu0
      %v1912 = vadd.f32 0.0, %v1911
      %v1913 = vpop.f32.mrf.mxu0
      %v1914 = vadd.f32 0.0, %v1913
      %1915 = vmatmul.bf16.gmra.mxu0 %v1224
      %v1916 = vpop.f32.mrf.mxu0
      %v1917 = vadd.f32 0.0, %v1916
      %v1918 = vpop.f32.mrf.mxu0
      %v1919 = vadd.f32 0.0, %v1918
      %1920 = vmatmul.bf16.gmra.mxu0 %v1227
      %v1921 = vpop.f32.mrf.mxu0
      %v1922 = vadd.f32 0.0, %v1921
      %v1923 = vpop.f32.mrf.mxu0
      %v1924 = vadd.f32 0.0, %v1923
      %1925 = vmatmul.bf16.gmra.mxu0 %v1230
      %v1926 = vpop.f32.mrf.mxu0
      %v1927 = vadd.f32 0.0, %v1926
      %v1928 = vpop.f32.mrf.mxu0
      %v1929 = vadd.f32 0.0, %v1928
      %1930 = vmatmul.bf16.gmra.mxu0 %v1233
      %v1931 = vpop.f32.mrf.mxu0
      %v1932 = vadd.f32 0.0, %v1931
      %v1933 = vpop.f32.mrf.mxu0
      %v1934 = vadd.f32 0.0, %v1933
      %1935 = vmatmul.bf16.gmra.mxu0 %v1236
      %v1936 = vpop.f32.mrf.mxu0
      %v1937 = vadd.f32 0.0, %v1936
      %v1938 = vpop.f32.mrf.mxu0
      %v1939 = vadd.f32 0.0, %v1938
      %1940 = vmatmul.bf16.gmra.mxu0 %v1239
      %v1941 = vpop.f32.mrf.mxu0
      %v1942 = vadd.f32 0.0, %v1941
      %v1943 = vpop.f32.mrf.mxu0
      %v1944 = vadd.f32 0.0, %v1943
      %1945 = vmatmul.bf16.gmra.mxu0 %v1242
      %v1946 = vpop.f32.mrf.mxu0
      %v1947 = vadd.f32 0.0, %v1946
      %v1948 = vpop.f32.mrf.mxu0
      %v1949 = vadd.f32 0.0, %v1948
      %1950 = vmatmul.bf16.gmra.mxu0 %v1245
      %v1951 = vpop.f32.mrf.mxu0
      %v1952 = vadd.f32 0.0, %v1951
      %v1953 = vpop.f32.mrf.mxu0
      %v1954 = vadd.f32 0.0, %v1953
      %1955 = vmatmul.bf16.gmra.mxu0 %v1248
      %v1956 = vpop.f32.mrf.mxu0
      %v1957 = vadd.f32 0.0, %v1956
      %v1958 = vpop.f32.mrf.mxu0
      %v1959 = vadd.f32 0.0, %v1958
      %1960 = vmatmul.bf16.gmra.mxu0 %v1251
      %v1961 = vpop.f32.mrf.mxu0
      %v1962 = vadd.f32 0.0, %v1961
      %v1963 = vpop.f32.mrf.mxu0
      %v1964 = vadd.f32 0.0, %v1963
      %1965 = vmatmul.bf16.gmra.mxu0 %v1254
      %v1966 = vpop.f32.mrf.mxu0
      %v1967 = vadd.f32 0.0, %v1966
      %v1968 = vpop.f32.mrf.mxu0
      %v1969 = vadd.f32 0.0, %v1968
      %1970 = vmatmul.bf16.gmra.mxu0 %v1257
      %v1971 = vpop.f32.mrf.mxu0
      %v1972 = vadd.f32 0.0, %v1971
      %v1973 = vpop.f32.mrf.mxu0
      %v1974 = vadd.f32 0.0, %v1973
      %1975 = vmatmul.bf16.gmra.mxu0 %v1260
      %v1976 = vpop.f32.mrf.mxu0
      %v1977 = vadd.f32 0.0, %v1976
      %v1978 = vpop.f32.mrf.mxu0
      %v1979 = vadd.f32 0.0, %v1978
      %1980 = vmatmul.bf16.gmra.mxu0 %v1263
      %v1981 = vpop.f32.mrf.mxu0
      %v1982 = vadd.f32 0.0, %v1981
      %v1983 = vpop.f32.mrf.mxu0
      %v1984 = vadd.f32 0.0, %v1983
      %1985 = vmatmul.bf16.gmra.mxu0 %v1266
      %v1986 = vpop.f32.mrf.mxu0
      %v1987 = vadd.f32 0.0, %v1986
      %v1988 = vpop.f32.mrf.mxu0
      %v1989 = vadd.f32 0.0, %v1988
      %1990 = vmatmul.bf16.gmra.mxu0 %v1269
      %v1991 = vpop.f32.mrf.mxu0
      %v1992 = vadd.f32 0.0, %v1991
      %v1993 = vpop.f32.mrf.mxu0
      %v1994 = vadd.f32 0.0, %v1993
      %1995 = vmatmul.bf16.gmra.mxu0 %v1272
      %v1996 = vpop.f32.mrf.mxu0
      %v1997 = vadd.f32 0.0, %v1996
      %v1998 = vpop.f32.mrf.mxu0
      %v1999 = vadd.f32 0.0, %v1998
      %2000 = vmatmul.bf16.gmra.mxu0 %v1275
      %v2001 = vpop.f32.mrf.mxu0
      %v2002 = vadd.f32 0.0, %v2001
      %v2003 = vpop.f32.mrf.mxu0
      %v2004 = vadd.f32 0.0, %v2003
      %2005 = vmatmul.bf16.gmra.mxu0 %v1278
      %v2006 = vpop.f32.mrf.mxu0
      %v2007 = vadd.f32 0.0, %v2006
      %v2008 = vpop.f32.mrf.mxu0
      %v2009 = vadd.f32 0.0, %v2008
      %2010 = vmatmul.bf16.gmra.mxu0 %v1281
      %v2011 = vpop.f32.mrf.mxu0
      %v2012 = vadd.f32 0.0, %v2011
      %v2013 = vpop.f32.mrf.mxu0
      %v2014 = vadd.f32 0.0, %v2013
      %2015 = vmatmul.bf16.gmra.mxu0 %v1284
      %v2016 = vpop.f32.mrf.mxu0
      %v2017 = vadd.f32 0.0, %v2016
      %v2018 = vpop.f32.mrf.mxu0
      %v2019 = vadd.f32 0.0, %v2018
      %2020 = vmatmul.bf16.gmra.mxu0 %v1287
      %v2021 = vpop.f32.mrf.mxu0
      %v2022 = vadd.f32 0.0, %v2021
      %v2023 = vpop.f32.mrf.mxu0
      %v2024 = vadd.f32 0.0, %v2023
      %2025 = vmatmul.bf16.gmra.mxu0 %v1290
      %v2026 = vpop.f32.mrf.mxu0
      %v2027 = vadd.f32 0.0, %v2026
      %v2028 = vpop.f32.mrf.mxu0
      %v2029 = vadd.f32 0.0, %v2028
      %2030 = vmatmul.bf16.gmra.mxu0 %v1293
      %v2031 = vpop.f32.mrf.mxu0
      %v2032 = vadd.f32 0.0, %v2031
      %v2033 = vpop.f32.mrf.mxu0
      %v2034 = vadd.f32 0.0, %v2033
      %2035 = vmatmul.bf16.gmra.mxu0 %v1296
      %v2036 = vpop.f32.mrf.mxu0
      %v2037 = vadd.f32 0.0, %v2036
      %v2038 = vpop.f32.mrf.mxu0
      %v2039 = vadd.f32 0.0, %v2038
      %2040 = vmatmul.bf16.gmra.mxu0 %v1299
      %v2041 = vpop.f32.mrf.mxu0
      %v2042 = vadd.f32 0.0, %v2041
      %v2043 = vpop.f32.mrf.mxu0
      %v2044 = vadd.f32 0.0, %v2043
      %2045 = vmatmul.bf16.gmra.mxu0 %v1302
      %v2046 = vpop.f32.mrf.mxu0
      %v2047 = vadd.f32 0.0, %v2046
      %v2048 = vpop.f32.mrf.mxu0
      %v2049 = vadd.f32 0.0, %v2048
      %2050 = vmatmul.bf16.gmra.mxu0 %v1305
      %v2051 = vpop.f32.mrf.mxu0
      %v2052 = vadd.f32 0.0, %v2051
      %v2053 = vpop.f32.mrf.mxu0
      %v2054 = vadd.f32 0.0, %v2053
      %2055 = vmatmul.bf16.gmra.mxu0 %v1308
      %v2056 = vpop.f32.mrf.mxu0
      %v2057 = vadd.f32 0.0, %v2056
      %v2058 = vpop.f32.mrf.mxu0
      %v2059 = vadd.f32 0.0, %v2058
      %2060 = vmatmul.bf16.gmra.mxu0 %v1311
      %v2061 = vpop.f32.mrf.mxu0
      %v2062 = vadd.f32 0.0, %v2061
      %v2063 = vpop.f32.mrf.mxu0
      %v2064 = vadd.f32 0.0, %v2063
      %2065 = vmatmul.bf16.gmra.mxu0 %v1314
      %v2066 = vpop.f32.mrf.mxu0
      %v2067 = vadd.f32 0.0, %v2066
      %v2068 = vpop.f32.mrf.mxu0
      %v2069 = vadd.f32 0.0, %v2068
      %2070 = vmatmul.bf16.gmra.mxu0 %v1317
      %v2071 = vpop.f32.mrf.mxu0
      %v2072 = vadd.f32 0.0, %v2071
      %v2073 = vpop.f32.mrf.mxu0
      %v2074 = vadd.f32 0.0, %v2073
      %2075 = vmatmul.bf16.gmra.mxu0 %v1320
      %v2076 = vpop.f32.mrf.mxu0
      %v2077 = vadd.f32 0.0, %v2076
      %v2078 = vpop.f32.mrf.mxu0
      %v2079 = vadd.f32 0.0, %v2078
      %2080 = vdwg.mxu0
      %2081 = vmatpush.bf16.msra.mxu0 %v1538
      %2082 = vmatpush.bf16.msra.mxu0 %v1537
      %2083 = vmatpush.bf16.msra.mxu0 %v1536
      %2084 = vmatpush.bf16.msra.mxu0 %v1535
      %2085 = vmatpush.bf16.msra.mxu0 %v1534
      %2086 = vmatpush.bf16.msra.mxu0 %v1533
      %2087 = vmatpush.bf16.msra.mxu0 %v1532
      %2088 = vmatpush.bf16.msra.mxu0 %v1531
      %2089 = vmatmul.bf16.gmra.mxu0 %v1132
      %v2090 = vpop.f32.mrf.mxu0
      %v2091 = vadd.f32 %v1762, %v2090
      %v2092 = vpop.f32.mrf.mxu0
      %v2093 = vadd.f32 %v1764, %v2092
      %2094 = vmatmul.bf16.gmra.mxu0 %v1135
      %v2095 = vpop.f32.mrf.mxu0
      %v2096 = vadd.f32 %v1767, %v2095
      %v2097 = vpop.f32.mrf.mxu0
      %v2098 = vadd.f32 %v1769, %v2097
      %2099 = vmatmul.bf16.gmra.mxu0 %v1138
      %v2100 = vpop.f32.mrf.mxu0
      %v2101 = vadd.f32 %v1772, %v2100
      %v2102 = vpop.f32.mrf.mxu0
      %v2103 = vadd.f32 %v1774, %v2102
      %2104 = vmatmul.bf16.gmra.mxu0 %v1141
      %v2105 = vpop.f32.mrf.mxu0
      %v2106 = vadd.f32 %v1777, %v2105
      %v2107 = vpop.f32.mrf.mxu0
      %v2108 = vadd.f32 %v1779, %v2107
      %2109 = vmatmul.bf16.gmra.mxu0 %v1144
      %v2110 = vpop.f32.mrf.mxu0
      %v2111 = vadd.f32 %v1782, %v2110
      %v2112 = vpop.f32.mrf.mxu0
      %v2113 = vadd.f32 %v1784, %v2112
      %2114 = vmatmul.bf16.gmra.mxu0 %v1147
      %v2115 = vpop.f32.mrf.mxu0
      %v2116 = vadd.f32 %v1787, %v2115
      %v2117 = vpop.f32.mrf.mxu0
      %v2118 = vadd.f32 %v1789, %v2117
      %2119 = vmatmul.bf16.gmra.mxu0 %v1150
      %v2120 = vpop.f32.mrf.mxu0
      %v2121 = vadd.f32 %v1792, %v2120
      %v2122 = vpop.f32.mrf.mxu0
      %v2123 = vadd.f32 %v1794, %v2122
      %2124 = vmatmul.bf16.gmra.mxu0 %v1153
      %v2125 = vpop.f32.mrf.mxu0
      %v2126 = vadd.f32 %v1797, %v2125
      %v2127 = vpop.f32.mrf.mxu0
      %v2128 = vadd.f32 %v1799, %v2127
      %2129 = vmatmul.bf16.gmra.mxu0 %v1156
      %v2130 = vpop.f32.mrf.mxu0
      %v2131 = vadd.f32 %v1802, %v2130
      %v2132 = vpop.f32.mrf.mxu0
      %v2133 = vadd.f32 %v1804, %v2132
      %2134 = vmatmul.bf16.gmra.mxu0 %v1159
      %v2135 = vpop.f32.mrf.mxu0
      %v2136 = vadd.f32 %v1807, %v2135
      %v2137 = vpop.f32.mrf.mxu0
      %v2138 = vadd.f32 %v1809, %v2137
      %2139 = vmatmul.bf16.gmra.mxu0 %v1162
      %v2140 = vpop.f32.mrf.mxu0
      %v2141 = vadd.f32 %v1812, %v2140
      %v2142 = vpop.f32.mrf.mxu0
      %v2143 = vadd.f32 %v1814, %v2142
      %2144 = vmatmul.bf16.gmra.mxu0 %v1165
      %v2145 = vpop.f32.mrf.mxu0
      %v2146 = vadd.f32 %v1817, %v2145
      %v2147 = vpop.f32.mrf.mxu0
      %v2148 = vadd.f32 %v1819, %v2147
      %2149 = vmatmul.bf16.gmra.mxu0 %v1168
      %v2150 = vpop.f32.mrf.mxu0
      %v2151 = vadd.f32 %v1822, %v2150
      %v2152 = vpop.f32.mrf.mxu0
      %v2153 = vadd.f32 %v1824, %v2152
      %2154 = vmatmul.bf16.gmra.mxu0 %v1171
      %v2155 = vpop.f32.mrf.mxu0
      %v2156 = vadd.f32 %v1827, %v2155
      %v2157 = vpop.f32.mrf.mxu0
      %v2158 = vadd.f32 %v1829, %v2157
      %2159 = vmatmul.bf16.gmra.mxu0 %v1174
      %v2160 = vpop.f32.mrf.mxu0
      %v2161 = vadd.f32 %v1832, %v2160
      %v2162 = vpop.f32.mrf.mxu0
      %v2163 = vadd.f32 %v1834, %v2162
      %2164 = vmatmul.bf16.gmra.mxu0 %v1177
      %v2165 = vpop.f32.mrf.mxu0
      %v2166 = vadd.f32 %v1837, %v2165
      %v2167 = vpop.f32.mrf.mxu0
      %v2168 = vadd.f32 %v1839, %v2167
      %2169 = vmatmul.bf16.gmra.mxu0 %v1180
      %v2170 = vpop.f32.mrf.mxu0
      %v2171 = vadd.f32 %v1842, %v2170
      %v2172 = vpop.f32.mrf.mxu0
      %v2173 = vadd.f32 %v1844, %v2172
      %2174 = vmatmul.bf16.gmra.mxu0 %v1183
      %v2175 = vpop.f32.mrf.mxu0
      %v2176 = vadd.f32 %v1847, %v2175
      %v2177 = vpop.f32.mrf.mxu0
      %v2178 = vadd.f32 %v1849, %v2177
      %2179 = vmatmul.bf16.gmra.mxu0 %v1186
      %v2180 = vpop.f32.mrf.mxu0
      %v2181 = vadd.f32 %v1852, %v2180
      %v2182 = vpop.f32.mrf.mxu0
      %v2183 = vadd.f32 %v1854, %v2182
      %2184 = vmatmul.bf16.gmra.mxu0 %v1189
      %v2185 = vpop.f32.mrf.mxu0
      %v2186 = vadd.f32 %v1857, %v2185
      %v2187 = vpop.f32.mrf.mxu0
      %v2188 = vadd.f32 %v1859, %v2187
      %2189 = vmatmul.bf16.gmra.mxu0 %v1192
      %v2190 = vpop.f32.mrf.mxu0
      %v2191 = vadd.f32 %v1862, %v2190
      %v2192 = vpop.f32.mrf.mxu0
      %v2193 = vadd.f32 %v1864, %v2192
      %2194 = vmatmul.bf16.gmra.mxu0 %v1195
      %v2195 = vpop.f32.mrf.mxu0
      %v2196 = vadd.f32 %v1867, %v2195
      %v2197 = vpop.f32.mrf.mxu0
      %v2198 = vadd.f32 %v1869, %v2197
      %2199 = vmatmul.bf16.gmra.mxu0 %v1198
      %v2200 = vpop.f32.mrf.mxu0
      %v2201 = vadd.f32 %v1872, %v2200
      %v2202 = vpop.f32.mrf.mxu0
      %v2203 = vadd.f32 %v1874, %v2202
      %2204 = vmatmul.bf16.gmra.mxu0 %v1201
      %v2205 = vpop.f32.mrf.mxu0
      %v2206 = vadd.f32 %v1877, %v2205
      %v2207 = vpop.f32.mrf.mxu0
      %v2208 = vadd.f32 %v1879, %v2207
      %2209 = vmatmul.bf16.gmra.mxu0 %v1204
      %v2210 = vpop.f32.mrf.mxu0
      %v2211 = vadd.f32 %v1882, %v2210
      %v2212 = vpop.f32.mrf.mxu0
      %v2213 = vadd.f32 %v1884, %v2212
      %2214 = vmatmul.bf16.gmra.mxu0 %v1207
      %v2215 = vpop.f32.mrf.mxu0
      %v2216 = vadd.f32 %v1887, %v2215
      %v2217 = vpop.f32.mrf.mxu0
      %v2218 = vadd.f32 %v1889, %v2217
      %2219 = vmatmul.bf16.gmra.mxu0 %v1210
      %v2220 = vpop.f32.mrf.mxu0
      %v2221 = vadd.f32 %v1892, %v2220
      %v2222 = vpop.f32.mrf.mxu0
      %v2223 = vadd.f32 %v1894, %v2222
      %2224 = vmatmul.bf16.gmra.mxu0 %v1213
      %v2225 = vpop.f32.mrf.mxu0
      %v2226 = vadd.f32 %v1897, %v2225
      %v2227 = vpop.f32.mrf.mxu0
      %v2228 = vadd.f32 %v1899, %v2227
      %2229 = vmatmul.bf16.gmra.mxu0 %v1216
      %v2230 = vpop.f32.mrf.mxu0
      %v2231 = vadd.f32 %v1902, %v2230
      %v2232 = vpop.f32.mrf.mxu0
      %v2233 = vadd.f32 %v1904, %v2232
      %2234 = vmatmul.bf16.gmra.mxu0 %v1219
      %v2235 = vpop.f32.mrf.mxu0
      %v2236 = vadd.f32 %v1907, %v2235
      %v2237 = vpop.f32.mrf.mxu0
      %v2238 = vadd.f32 %v1909, %v2237
      %2239 = vmatmul.bf16.gmra.mxu0 %v1222
      %v2240 = vpop.f32.mrf.mxu0
      %v2241 = vadd.f32 %v1912, %v2240
      %v2242 = vpop.f32.mrf.mxu0
      %v2243 = vadd.f32 %v1914, %v2242
      %2244 = vmatmul.bf16.gmra.mxu0 %v1225
      %v2245 = vpop.f32.mrf.mxu0
      %v2246 = vadd.f32 %v1917, %v2245
      %v2247 = vpop.f32.mrf.mxu0
      %v2248 = vadd.f32 %v1919, %v2247
      %2249 = vmatmul.bf16.gmra.mxu0 %v1228
      %v2250 = vpop.f32.mrf.mxu0
      %v2251 = vadd.f32 %v1922, %v2250
      %v2252 = vpop.f32.mrf.mxu0
      %v2253 = vadd.f32 %v1924, %v2252
      %2254 = vmatmul.bf16.gmra.mxu0 %v1231
      %v2255 = vpop.f32.mrf.mxu0
      %v2256 = vadd.f32 %v1927, %v2255
      %v2257 = vpop.f32.mrf.mxu0
      %v2258 = vadd.f32 %v1929, %v2257
      %2259 = vmatmul.bf16.gmra.mxu0 %v1234
      %v2260 = vpop.f32.mrf.mxu0
      %v2261 = vadd.f32 %v1932, %v2260
      %v2262 = vpop.f32.mrf.mxu0
      %v2263 = vadd.f32 %v1934, %v2262
      %2264 = vmatmul.bf16.gmra.mxu0 %v1237
      %v2265 = vpop.f32.mrf.mxu0
      %v2266 = vadd.f32 %v1937, %v2265
      %v2267 = vpop.f32.mrf.mxu0
      %v2268 = vadd.f32 %v1939, %v2267
      %2269 = vmatmul.bf16.gmra.mxu0 %v1240
      %v2270 = vpop.f32.mrf.mxu0
      %v2271 = vadd.f32 %v1942, %v2270
      %v2272 = vpop.f32.mrf.mxu0
      %v2273 = vadd.f32 %v1944, %v2272
      %2274 = vmatmul.bf16.gmra.mxu0 %v1243
      %v2275 = vpop.f32.mrf.mxu0
      %v2276 = vadd.f32 %v1947, %v2275
      %v2277 = vpop.f32.mrf.mxu0
      %v2278 = vadd.f32 %v1949, %v2277
      %2279 = vmatmul.bf16.gmra.mxu0 %v1246
      %v2280 = vpop.f32.mrf.mxu0
      %v2281 = vadd.f32 %v1952, %v2280
      %v2282 = vpop.f32.mrf.mxu0
      %v2283 = vadd.f32 %v1954, %v2282
      %2284 = vmatmul.bf16.gmra.mxu0 %v1249
      %v2285 = vpop.f32.mrf.mxu0
      %v2286 = vadd.f32 %v1957, %v2285
      %v2287 = vpop.f32.mrf.mxu0
      %v2288 = vadd.f32 %v1959, %v2287
      %2289 = vmatmul.bf16.gmra.mxu0 %v1252
      %v2290 = vpop.f32.mrf.mxu0
      %v2291 = vadd.f32 %v1962, %v2290
      %v2292 = vpop.f32.mrf.mxu0
      %v2293 = vadd.f32 %v1964, %v2292
      %2294 = vmatmul.bf16.gmra.mxu0 %v1255
      %v2295 = vpop.f32.mrf.mxu0
      %v2296 = vadd.f32 %v1967, %v2295
      %v2297 = vpop.f32.mrf.mxu0
      %v2298 = vadd.f32 %v1969, %v2297
      %2299 = vmatmul.bf16.gmra.mxu0 %v1258
      %v2300 = vpop.f32.mrf.mxu0
      %v2301 = vadd.f32 %v1972, %v2300
      %v2302 = vpop.f32.mrf.mxu0
      %v2303 = vadd.f32 %v1974, %v2302
      %2304 = vmatmul.bf16.gmra.mxu0 %v1261
      %v2305 = vpop.f32.mrf.mxu0
      %v2306 = vadd.f32 %v1977, %v2305
      %v2307 = vpop.f32.mrf.mxu0
      %v2308 = vadd.f32 %v1979, %v2307
      %2309 = vmatmul.bf16.gmra.mxu0 %v1264
      %v2310 = vpop.f32.mrf.mxu0
      %v2311 = vadd.f32 %v1982, %v2310
      %v2312 = vpop.f32.mrf.mxu0
      %v2313 = vadd.f32 %v1984, %v2312
      %2314 = vmatmul.bf16.gmra.mxu0 %v1267
      %v2315 = vpop.f32.mrf.mxu0
      %v2316 = vadd.f32 %v1987, %v2315
      %v2317 = vpop.f32.mrf.mxu0
      %v2318 = vadd.f32 %v1989, %v2317
      %2319 = vmatmul.bf16.gmra.mxu0 %v1270
      %v2320 = vpop.f32.mrf.mxu0
      %v2321 = vadd.f32 %v1992, %v2320
      %v2322 = vpop.f32.mrf.mxu0
      %v2323 = vadd.f32 %v1994, %v2322
      %2324 = vmatmul.bf16.gmra.mxu0 %v1273
      %v2325 = vpop.f32.mrf.mxu0
      %v2326 = vadd.f32 %v1997, %v2325
      %v2327 = vpop.f32.mrf.mxu0
      %v2328 = vadd.f32 %v1999, %v2327
      %2329 = vmatmul.bf16.gmra.mxu0 %v1276
      %v2330 = vpop.f32.mrf.mxu0
      %v2331 = vadd.f32 %v2002, %v2330
      %v2332 = vpop.f32.mrf.mxu0
      %v2333 = vadd.f32 %v2004, %v2332
      %2334 = vmatmul.bf16.gmra.mxu0 %v1279
      %v2335 = vpop.f32.mrf.mxu0
      %v2336 = vadd.f32 %v2007, %v2335
      %v2337 = vpop.f32.mrf.mxu0
      %v2338 = vadd.f32 %v2009, %v2337
      %2339 = vmatmul.bf16.gmra.mxu0 %v1282
      %v2340 = vpop.f32.mrf.mxu0
      %v2341 = vadd.f32 %v2012, %v2340
      %v2342 = vpop.f32.mrf.mxu0
      %v2343 = vadd.f32 %v2014, %v2342
      %2344 = vmatmul.bf16.gmra.mxu0 %v1285
      %v2345 = vpop.f32.mrf.mxu0
      %v2346 = vadd.f32 %v2017, %v2345
      %v2347 = vpop.f32.mrf.mxu0
      %v2348 = vadd.f32 %v2019, %v2347
      %2349 = vmatmul.bf16.gmra.mxu0 %v1288
      %v2350 = vpop.f32.mrf.mxu0
      %v2351 = vadd.f32 %v2022, %v2350
      %v2352 = vpop.f32.mrf.mxu0
      %v2353 = vadd.f32 %v2024, %v2352
      %2354 = vmatmul.bf16.gmra.mxu0 %v1291
      %v2355 = vpop.f32.mrf.mxu0
      %v2356 = vadd.f32 %v2027, %v2355
      %v2357 = vpop.f32.mrf.mxu0
      %v2358 = vadd.f32 %v2029, %v2357
      %2359 = vmatmul.bf16.gmra.mxu0 %v1294
      %v2360 = vpop.f32.mrf.mxu0
      %v2361 = vadd.f32 %v2032, %v2360
      %v2362 = vpop.f32.mrf.mxu0
      %v2363 = vadd.f32 %v2034, %v2362
      %2364 = vmatmul.bf16.gmra.mxu0 %v1297
      %v2365 = vpop.f32.mrf.mxu0
      %v2366 = vadd.f32 %v2037, %v2365
      %v2367 = vpop.f32.mrf.mxu0
      %v2368 = vadd.f32 %v2039, %v2367
      %2369 = vmatmul.bf16.gmra.mxu0 %v1300
      %v2370 = vpop.f32.mrf.mxu0
      %v2371 = vadd.f32 %v2042, %v2370
      %v2372 = vpop.f32.mrf.mxu0
      %v2373 = vadd.f32 %v2044, %v2372
      %2374 = vmatmul.bf16.gmra.mxu0 %v1303
      %v2375 = vpop.f32.mrf.mxu0
      %v2376 = vadd.f32 %v2047, %v2375
      %v2377 = vpop.f32.mrf.mxu0
      %v2378 = vadd.f32 %v2049, %v2377
      %2379 = vmatmul.bf16.gmra.mxu0 %v1306
      %v2380 = vpop.f32.mrf.mxu0
      %v2381 = vadd.f32 %v2052, %v2380
      %v2382 = vpop.f32.mrf.mxu0
      %v2383 = vadd.f32 %v2054, %v2382
      %2384 = vmatmul.bf16.gmra.mxu0 %v1309
      %v2385 = vpop.f32.mrf.mxu0
      %v2386 = vadd.f32 %v2057, %v2385
      %v2387 = vpop.f32.mrf.mxu0
      %v2388 = vadd.f32 %v2059, %v2387
      %2389 = vmatmul.bf16.gmra.mxu0 %v1312
      %v2390 = vpop.f32.mrf.mxu0
      %v2391 = vadd.f32 %v2062, %v2390
      %v2392 = vpop.f32.mrf.mxu0
      %v2393 = vadd.f32 %v2064, %v2392
      %2394 = vmatmul.bf16.gmra.mxu0 %v1315
      %v2395 = vpop.f32.mrf.mxu0
      %v2396 = vadd.f32 %v2067, %v2395
      %v2397 = vpop.f32.mrf.mxu0
      %v2398 = vadd.f32 %v2069, %v2397
      %2399 = vmatmul.bf16.gmra.mxu0 %v1318
      %v2400 = vpop.f32.mrf.mxu0
      %v2401 = vadd.f32 %v2072, %v2400
      %v2402 = vpop.f32.mrf.mxu0
      %v2403 = vadd.f32 %v2074, %v2402
      %2404 = vmatmul.bf16.gmra.mxu0 %v1321
      %v2405 = vpop.f32.mrf.mxu0
      %v2406 = vadd.f32 %v2077, %v2405
      %v2407 = vpop.f32.mrf.mxu0
      %v2408 = vadd.f32 %v2079, %v2407
      %2409 = vdwg.mxu0
      %2410 = vmatpush.bf16.msra.mxu0 0
      %2411 = vmatpush.bf16.msra.mxu0 0
      %2412 = vmatpush.bf16.msra.mxu0 0
      %2413 = vmatpush.bf16.msra.mxu0 0
      %2414 = vmatpush.bf16.msra.mxu0 0
      %2415 = vmatpush.bf16.msra.mxu0 0
      %2416 = vmatpush.bf16.msra.mxu0 %v1540
      %2417 = vmatpush.bf16.msra.mxu0 %v1539
      %2418 = vmatmul.bf16.gmra.mxu0 %v1561
      %v2419 = vpop.f32.mrf.mxu0
      %v2420 = vadd.f32 %v2091, %v2419
      %v2421 = vpop.f32.mrf.mxu0
      %v2422 = vadd.f32 %v2093, %v2421
      %2423 = vmatmul.bf16.gmra.mxu0 %v1564
      %v2424 = vpop.f32.mrf.mxu0
      %v2425 = vadd.f32 %v2096, %v2424
      %v2426 = vpop.f32.mrf.mxu0
      %v2427 = vadd.f32 %v2098, %v2426
      %2428 = vmatmul.bf16.gmra.mxu0 %v1567
      %v2429 = vpop.f32.mrf.mxu0
      %v2430 = vadd.f32 %v2101, %v2429
      %v2431 = vpop.f32.mrf.mxu0
      %v2432 = vadd.f32 %v2103, %v2431
      %2433 = vmatmul.bf16.gmra.mxu0 %v1570
      %v2434 = vpop.f32.mrf.mxu0
      %v2435 = vadd.f32 %v2106, %v2434
      %v2436 = vpop.f32.mrf.mxu0
      %v2437 = vadd.f32 %v2108, %v2436
      %2438 = vmatmul.bf16.gmra.mxu0 %v1573
      %v2439 = vpop.f32.mrf.mxu0
      %v2440 = vadd.f32 %v2111, %v2439
      %v2441 = vpop.f32.mrf.mxu0
      %v2442 = vadd.f32 %v2113, %v2441
      %2443 = vmatmul.bf16.gmra.mxu0 %v1576
      %v2444 = vpop.f32.mrf.mxu0
      %v2445 = vadd.f32 %v2116, %v2444
      %v2446 = vpop.f32.mrf.mxu0
      %v2447 = vadd.f32 %v2118, %v2446
      %2448 = vmatmul.bf16.gmra.mxu0 %v1579
      %v2449 = vpop.f32.mrf.mxu0
      %v2450 = vadd.f32 %v2121, %v2449
      %v2451 = vpop.f32.mrf.mxu0
      %v2452 = vadd.f32 %v2123, %v2451
      %2453 = vmatmul.bf16.gmra.mxu0 %v1582
      %v2454 = vpop.f32.mrf.mxu0
      %v2455 = vadd.f32 %v2126, %v2454
      %v2456 = vpop.f32.mrf.mxu0
      %v2457 = vadd.f32 %v2128, %v2456
      %2458 = vmatmul.bf16.gmra.mxu0 %v1585
      %v2459 = vpop.f32.mrf.mxu0
      %v2460 = vadd.f32 %v2131, %v2459
      %v2461 = vpop.f32.mrf.mxu0
      %v2462 = vadd.f32 %v2133, %v2461
      %2463 = vmatmul.bf16.gmra.mxu0 %v1588
      %v2464 = vpop.f32.mrf.mxu0
      %v2465 = vadd.f32 %v2136, %v2464
      %v2466 = vpop.f32.mrf.mxu0
      %v2467 = vadd.f32 %v2138, %v2466
      %2468 = vmatmul.bf16.gmra.mxu0 %v1591
      %v2469 = vpop.f32.mrf.mxu0
      %v2470 = vadd.f32 %v2141, %v2469
      %v2471 = vpop.f32.mrf.mxu0
      %v2472 = vadd.f32 %v2143, %v2471
      %2473 = vmatmul.bf16.gmra.mxu0 %v1594
      %v2474 = vpop.f32.mrf.mxu0
      %v2475 = vadd.f32 %v2146, %v2474
      %v2476 = vpop.f32.mrf.mxu0
      %v2477 = vadd.f32 %v2148, %v2476
      %2478 = vmatmul.bf16.gmra.mxu0 %v1597
      %v2479 = vpop.f32.mrf.mxu0
      %v2480 = vadd.f32 %v2151, %v2479
      %v2481 = vpop.f32.mrf.mxu0
      %v2482 = vadd.f32 %v2153, %v2481
      %2483 = vmatmul.bf16.gmra.mxu0 %v1600
      %v2484 = vpop.f32.mrf.mxu0
      %v2485 = vadd.f32 %v2156, %v2484
      %v2486 = vpop.f32.mrf.mxu0
      %v2487 = vadd.f32 %v2158, %v2486
      %2488 = vmatmul.bf16.gmra.mxu0 %v1603
      %v2489 = vpop.f32.mrf.mxu0
      %v2490 = vadd.f32 %v2161, %v2489
      %v2491 = vpop.f32.mrf.mxu0
      %v2492 = vadd.f32 %v2163, %v2491
      %2493 = vmatmul.bf16.gmra.mxu0 %v1606
      %v2494 = vpop.f32.mrf.mxu0
      %v2495 = vadd.f32 %v2166, %v2494
      %v2496 = vpop.f32.mrf.mxu0
      %v2497 = vadd.f32 %v2168, %v2496
      %2498 = vmatmul.bf16.gmra.mxu0 %v1609
      %v2499 = vpop.f32.mrf.mxu0
      %v2500 = vadd.f32 %v2171, %v2499
      %v2501 = vpop.f32.mrf.mxu0
      %v2502 = vadd.f32 %v2173, %v2501
      %2503 = vmatmul.bf16.gmra.mxu0 %v1612
      %v2504 = vpop.f32.mrf.mxu0
      %v2505 = vadd.f32 %v2176, %v2504
      %v2506 = vpop.f32.mrf.mxu0
      %v2507 = vadd.f32 %v2178, %v2506
      %2508 = vmatmul.bf16.gmra.mxu0 %v1615
      %v2509 = vpop.f32.mrf.mxu0
      %v2510 = vadd.f32 %v2181, %v2509
      %v2511 = vpop.f32.mrf.mxu0
      %v2512 = vadd.f32 %v2183, %v2511
      %2513 = vmatmul.bf16.gmra.mxu0 %v1618
      %v2514 = vpop.f32.mrf.mxu0
      %v2515 = vadd.f32 %v2186, %v2514
      %v2516 = vpop.f32.mrf.mxu0
      %v2517 = vadd.f32 %v2188, %v2516
      %2518 = vmatmul.bf16.gmra.mxu0 %v1621
      %v2519 = vpop.f32.mrf.mxu0
      %v2520 = vadd.f32 %v2191, %v2519
      %v2521 = vpop.f32.mrf.mxu0
      %v2522 = vadd.f32 %v2193, %v2521
      %2523 = vmatmul.bf16.gmra.mxu0 %v1624
      %v2524 = vpop.f32.mrf.mxu0
      %v2525 = vadd.f32 %v2196, %v2524
      %v2526 = vpop.f32.mrf.mxu0
      %v2527 = vadd.f32 %v2198, %v2526
      %2528 = vmatmul.bf16.gmra.mxu0 %v1627
      %v2529 = vpop.f32.mrf.mxu0
      %v2530 = vadd.f32 %v2201, %v2529
      %v2531 = vpop.f32.mrf.mxu0
      %v2532 = vadd.f32 %v2203, %v2531
      %2533 = vmatmul.bf16.gmra.mxu0 %v1630
      %v2534 = vpop.f32.mrf.mxu0
      %v2535 = vadd.f32 %v2206, %v2534
      %v2536 = vpop.f32.mrf.mxu0
      %v2537 = vadd.f32 %v2208, %v2536
      %2538 = vmatmul.bf16.gmra.mxu0 %v1633
      %v2539 = vpop.f32.mrf.mxu0
      %v2540 = vadd.f32 %v2211, %v2539
      %v2541 = vpop.f32.mrf.mxu0
      %v2542 = vadd.f32 %v2213, %v2541
      %2543 = vmatmul.bf16.gmra.mxu0 %v1636
      %v2544 = vpop.f32.mrf.mxu0
      %v2545 = vadd.f32 %v2216, %v2544
      %v2546 = vpop.f32.mrf.mxu0
      %v2547 = vadd.f32 %v2218, %v2546
      %2548 = vmatmul.bf16.gmra.mxu0 %v1639
      %v2549 = vpop.f32.mrf.mxu0
      %v2550 = vadd.f32 %v2221, %v2549
      %v2551 = vpop.f32.mrf.mxu0
      %v2552 = vadd.f32 %v2223, %v2551
      %2553 = vmatmul.bf16.gmra.mxu0 %v1642
      %v2554 = vpop.f32.mrf.mxu0
      %v2555 = vadd.f32 %v2226, %v2554
      %v2556 = vpop.f32.mrf.mxu0
      %v2557 = vadd.f32 %v2228, %v2556
      %2558 = vmatmul.bf16.gmra.mxu0 %v1645
      %v2559 = vpop.f32.mrf.mxu0
      %v2560 = vadd.f32 %v2231, %v2559
      %v2561 = vpop.f32.mrf.mxu0
      %v2562 = vadd.f32 %v2233, %v2561
      %2563 = vmatmul.bf16.gmra.mxu0 %v1648
      %v2564 = vpop.f32.mrf.mxu0
      %v2565 = vadd.f32 %v2236, %v2564
      %v2566 = vpop.f32.mrf.mxu0
      %v2567 = vadd.f32 %v2238, %v2566
      %2568 = vmatmul.bf16.gmra.mxu0 %v1651
      %v2569 = vpop.f32.mrf.mxu0
      %v2570 = vadd.f32 %v2241, %v2569
      %v2571 = vpop.f32.mrf.mxu0
      %v2572 = vadd.f32 %v2243, %v2571
      %2573 = vmatmul.bf16.gmra.mxu0 %v1654
      %v2574 = vpop.f32.mrf.mxu0
      %v2575 = vadd.f32 %v2246, %v2574
      %v2576 = vpop.f32.mrf.mxu0
      %v2577 = vadd.f32 %v2248, %v2576
      %2578 = vmatmul.bf16.gmra.mxu0 %v1657
      %v2579 = vpop.f32.mrf.mxu0
      %v2580 = vadd.f32 %v2251, %v2579
      %v2581 = vpop.f32.mrf.mxu0
      %v2582 = vadd.f32 %v2253, %v2581
      %2583 = vmatmul.bf16.gmra.mxu0 %v1660
      %v2584 = vpop.f32.mrf.mxu0
      %v2585 = vadd.f32 %v2256, %v2584
      %v2586 = vpop.f32.mrf.mxu0
      %v2587 = vadd.f32 %v2258, %v2586
      %2588 = vmatmul.bf16.gmra.mxu0 %v1663
      %v2589 = vpop.f32.mrf.mxu0
      %v2590 = vadd.f32 %v2261, %v2589
      %v2591 = vpop.f32.mrf.mxu0
      %v2592 = vadd.f32 %v2263, %v2591
      %2593 = vmatmul.bf16.gmra.mxu0 %v1666
      %v2594 = vpop.f32.mrf.mxu0
      %v2595 = vadd.f32 %v2266, %v2594
      %v2596 = vpop.f32.mrf.mxu0
      %v2597 = vadd.f32 %v2268, %v2596
      %2598 = vmatmul.bf16.gmra.mxu0 %v1669
      %v2599 = vpop.f32.mrf.mxu0
      %v2600 = vadd.f32 %v2271, %v2599
      %v2601 = vpop.f32.mrf.mxu0
      %v2602 = vadd.f32 %v2273, %v2601
      %2603 = vmatmul.bf16.gmra.mxu0 %v1672
      %v2604 = vpop.f32.mrf.mxu0
      %v2605 = vadd.f32 %v2276, %v2604
      %v2606 = vpop.f32.mrf.mxu0
      %v2607 = vadd.f32 %v2278, %v2606
      %2608 = vmatmul.bf16.gmra.mxu0 %v1675
      %v2609 = vpop.f32.mrf.mxu0
      %v2610 = vadd.f32 %v2281, %v2609
      %v2611 = vpop.f32.mrf.mxu0
      %v2612 = vadd.f32 %v2283, %v2611
      %2613 = vmatmul.bf16.gmra.mxu0 %v1678
      %v2614 = vpop.f32.mrf.mxu0
      %v2615 = vadd.f32 %v2286, %v2614
      %v2616 = vpop.f32.mrf.mxu0
      %v2617 = vadd.f32 %v2288, %v2616
      %2618 = vmatmul.bf16.gmra.mxu0 %v1681
      %v2619 = vpop.f32.mrf.mxu0
      %v2620 = vadd.f32 %v2291, %v2619
      %v2621 = vpop.f32.mrf.mxu0
      %v2622 = vadd.f32 %v2293, %v2621
      %2623 = vmatmul.bf16.gmra.mxu0 %v1684
      %v2624 = vpop.f32.mrf.mxu0
      %v2625 = vadd.f32 %v2296, %v2624
      %v2626 = vpop.f32.mrf.mxu0
      %v2627 = vadd.f32 %v2298, %v2626
      %2628 = vmatmul.bf16.gmra.mxu0 %v1687
      %v2629 = vpop.f32.mrf.mxu0
      %v2630 = vadd.f32 %v2301, %v2629
      %v2631 = vpop.f32.mrf.mxu0
      %v2632 = vadd.f32 %v2303, %v2631
      %2633 = vmatmul.bf16.gmra.mxu0 %v1690
      %v2634 = vpop.f32.mrf.mxu0
      %v2635 = vadd.f32 %v2306, %v2634
      %v2636 = vpop.f32.mrf.mxu0
      %v2637 = vadd.f32 %v2308, %v2636
      %2638 = vmatmul.bf16.gmra.mxu0 %v1693
      %v2639 = vpop.f32.mrf.mxu0
      %v2640 = vadd.f32 %v2311, %v2639
      %v2641 = vpop.f32.mrf.mxu0
      %v2642 = vadd.f32 %v2313, %v2641
      %2643 = vmatmul.bf16.gmra.mxu0 %v1696
      %v2644 = vpop.f32.mrf.mxu0
      %v2645 = vadd.f32 %v2316, %v2644
      %v2646 = vpop.f32.mrf.mxu0
      %v2647 = vadd.f32 %v2318, %v2646
      %2648 = vmatmul.bf16.gmra.mxu0 %v1699
      %v2649 = vpop.f32.mrf.mxu0
      %v2650 = vadd.f32 %v2321, %v2649
      %v2651 = vpop.f32.mrf.mxu0
      %v2652 = vadd.f32 %v2323, %v2651
      %2653 = vmatmul.bf16.gmra.mxu0 %v1702
      %v2654 = vpop.f32.mrf.mxu0
      %v2655 = vadd.f32 %v2326, %v2654
      %v2656 = vpop.f32.mrf.mxu0
      %v2657 = vadd.f32 %v2328, %v2656
      %2658 = vmatmul.bf16.gmra.mxu0 %v1705
      %v2659 = vpop.f32.mrf.mxu0
      %v2660 = vadd.f32 %v2331, %v2659
      %v2661 = vpop.f32.mrf.mxu0
      %v2662 = vadd.f32 %v2333, %v2661
      %2663 = vmatmul.bf16.gmra.mxu0 %v1708
      %v2664 = vpop.f32.mrf.mxu0
      %v2665 = vadd.f32 %v2336, %v2664
      %v2666 = vpop.f32.mrf.mxu0
      %v2667 = vadd.f32 %v2338, %v2666
      %2668 = vmatmul.bf16.gmra.mxu0 %v1711
      %v2669 = vpop.f32.mrf.mxu0
      %v2670 = vadd.f32 %v2341, %v2669
      %v2671 = vpop.f32.mrf.mxu0
      %v2672 = vadd.f32 %v2343, %v2671
      %2673 = vmatmul.bf16.gmra.mxu0 %v1714
      %v2674 = vpop.f32.mrf.mxu0
      %v2675 = vadd.f32 %v2346, %v2674
      %v2676 = vpop.f32.mrf.mxu0
      %v2677 = vadd.f32 %v2348, %v2676
      %2678 = vmatmul.bf16.gmra.mxu0 %v1717
      %v2679 = vpop.f32.mrf.mxu0
      %v2680 = vadd.f32 %v2351, %v2679
      %v2681 = vpop.f32.mrf.mxu0
      %v2682 = vadd.f32 %v2353, %v2681
      %2683 = vmatmul.bf16.gmra.mxu0 %v1720
      %v2684 = vpop.f32.mrf.mxu0
      %v2685 = vadd.f32 %v2356, %v2684
      %v2686 = vpop.f32.mrf.mxu0
      %v2687 = vadd.f32 %v2358, %v2686
      %2688 = vmatmul.bf16.gmra.mxu0 %v1723
      %v2689 = vpop.f32.mrf.mxu0
      %v2690 = vadd.f32 %v2361, %v2689
      %v2691 = vpop.f32.mrf.mxu0
      %v2692 = vadd.f32 %v2363, %v2691
      %2693 = vmatmul.bf16.gmra.mxu0 %v1726
      %v2694 = vpop.f32.mrf.mxu0
      %v2695 = vadd.f32 %v2366, %v2694
      %v2696 = vpop.f32.mrf.mxu0
      %v2697 = vadd.f32 %v2368, %v2696
      %2698 = vmatmul.bf16.gmra.mxu0 %v1729
      %v2699 = vpop.f32.mrf.mxu0
      %v2700 = vadd.f32 %v2371, %v2699
      %v2701 = vpop.f32.mrf.mxu0
      %v2702 = vadd.f32 %v2373, %v2701
      %2703 = vmatmul.bf16.gmra.mxu0 %v1732
      %v2704 = vpop.f32.mrf.mxu0
      %v2705 = vadd.f32 %v2376, %v2704
      %v2706 = vpop.f32.mrf.mxu0
      %v2707 = vadd.f32 %v2378, %v2706
      %2708 = vmatmul.bf16.gmra.mxu0 %v1735
      %v2709 = vpop.f32.mrf.mxu0
      %v2710 = vadd.f32 %v2381, %v2709
      %v2711 = vpop.f32.mrf.mxu0
      %v2712 = vadd.f32 %v2383, %v2711
      %2713 = vmatmul.bf16.gmra.mxu0 %v1738
      %v2714 = vpop.f32.mrf.mxu0
      %v2715 = vadd.f32 %v2386, %v2714
      %v2716 = vpop.f32.mrf.mxu0
      %v2717 = vadd.f32 %v2388, %v2716
      %2718 = vmatmul.bf16.gmra.mxu0 %v1741
      %v2719 = vpop.f32.mrf.mxu0
      %v2720 = vadd.f32 %v2391, %v2719
      %v2721 = vpop.f32.mrf.mxu0
      %v2722 = vadd.f32 %v2393, %v2721
      %2723 = vmatmul.bf16.gmra.mxu0 %v1744
      %v2724 = vpop.f32.mrf.mxu0
      %v2725 = vadd.f32 %v2396, %v2724
      %v2726 = vpop.f32.mrf.mxu0
      %v2727 = vadd.f32 %v2398, %v2726
      %2728 = vmatmul.bf16.gmra.mxu0 %v1747
      %v2729 = vpop.f32.mrf.mxu0
      %v2730 = vadd.f32 %v2401, %v2729
      %v2731 = vpop.f32.mrf.mxu0
      %v2732 = vadd.f32 %v2403, %v2731
      %2733 = vmatmul.bf16.gmra.mxu0 %v1750
      %v2734 = vpop.f32.mrf.mxu0
      %v2735 = vadd.f32 %v2406, %v2734
      %v2736 = vpop.f32.mrf.mxu0
      %v2737 = vadd.f32 %v2408, %v2736
      %2738 = vdwg.mxu0
      %v2739 = vld [vmem:[%s2] sm:$0x1]
      %v2741 = vperm.slane %v2739, 0
      %v2743 = vmul.f32 %v2420, %v2741
      %v2744 = vmul.f32 %v2422, %v2741
      %v2745 = vmul.f32 %v2425, %v2741
      %v2746 = vmul.f32 %v2427, %v2741
      %v2747 = vmul.f32 %v2430, %v2741
      %v2748 = vmul.f32 %v2432, %v2741
      %v2749 = vmul.f32 %v2435, %v2741
      %v2750 = vmul.f32 %v2437, %v2741
      %v2751 = vmul.f32 %v2440, %v2741
      %v2752 = vmul.f32 %v2442, %v2741
      %v2753 = vmul.f32 %v2445, %v2741
      %v2754 = vmul.f32 %v2447, %v2741
      %v2755 = vmul.f32 %v2450, %v2741
      %v2756 = vmul.f32 %v2452, %v2741
      %v2757 = vmul.f32 %v2455, %v2741
      %v2758 = vmul.f32 %v2457, %v2741
      %v2759 = vmul.f32 %v2460, %v2741
      %v2760 = vmul.f32 %v2462, %v2741
      %v2761 = vmul.f32 %v2465, %v2741
      %v2762 = vmul.f32 %v2467, %v2741
      %v2763 = vmul.f32 %v2470, %v2741
      %v2764 = vmul.f32 %v2472, %v2741
      %v2765 = vmul.f32 %v2475, %v2741
      %v2766 = vmul.f32 %v2477, %v2741
      %v2767 = vmul.f32 %v2480, %v2741
      %v2768 = vmul.f32 %v2482, %v2741
      %v2769 = vmul.f32 %v2485, %v2741
      %v2770 = vmul.f32 %v2487, %v2741
      %v2771 = vmul.f32 %v2490, %v2741
      %v2772 = vmul.f32 %v2492, %v2741
      %v2773 = vmul.f32 %v2495, %v2741
      %v2774 = vmul.f32 %v2497, %v2741
      %v2775 = vmul.f32 %v2500, %v2741
      %v2776 = vmul.f32 %v2502, %v2741
      %v2777 = vmul.f32 %v2505, %v2741
      %v2778 = vmul.f32 %v2507, %v2741
      %v2779 = vmul.f32 %v2510, %v2741
      %v2780 = vmul.f32 %v2512, %v2741
      %v2781 = vmul.f32 %v2515, %v2741
      %v2782 = vmul.f32 %v2517, %v2741
      %v2783 = vmul.f32 %v2520, %v2741
      %v2784 = vmul.f32 %v2522, %v2741
      %v2785 = vmul.f32 %v2525, %v2741
      %v2786 = vmul.f32 %v2527, %v2741
      %v2787 = vmul.f32 %v2530, %v2741
      %v2788 = vmul.f32 %v2532, %v2741
      %v2789 = vmul.f32 %v2535, %v2741
      %v2790 = vmul.f32 %v2537, %v2741
      %v2791 = vmul.f32 %v2540, %v2741
      %v2792 = vmul.f32 %v2542, %v2741
      %v2793 = vmul.f32 %v2545, %v2741
      %v2794 = vmul.f32 %v2547, %v2741
      %v2795 = vmul.f32 %v2550, %v2741
      %v2796 = vmul.f32 %v2552, %v2741
      %v2797 = vmul.f32 %v2555, %v2741
      %v2798 = vmul.f32 %v2557, %v2741
      %v2799 = vmul.f32 %v2560, %v2741
      %v2800 = vmul.f32 %v2562, %v2741
      %v2801 = vmul.f32 %v2565, %v2741
      %v2802 = vmul.f32 %v2567, %v2741
      %v2803 = vmul.f32 %v2570, %v2741
      %v2804 = vmul.f32 %v2572, %v2741
      %v2805 = vmul.f32 %v2575, %v2741
      %v2806 = vmul.f32 %v2577, %v2741
      %v2807 = vmul.f32 %v2580, %v2741
      %v2808 = vmul.f32 %v2582, %v2741
      %v2809 = vmul.f32 %v2585, %v2741
      %v2810 = vmul.f32 %v2587, %v2741
      %v2811 = vmul.f32 %v2590, %v2741
      %v2812 = vmul.f32 %v2592, %v2741
      %v2813 = vmul.f32 %v2595, %v2741
      %v2814 = vmul.f32 %v2597, %v2741
      %v2815 = vmul.f32 %v2600, %v2741
      %v2816 = vmul.f32 %v2602, %v2741
      %v2817 = vmul.f32 %v2605, %v2741
      %v2818 = vmul.f32 %v2607, %v2741
      %v2819 = vmul.f32 %v2610, %v2741
      %v2820 = vmul.f32 %v2612, %v2741
      %v2821 = vmul.f32 %v2615, %v2741
      %v2822 = vmul.f32 %v2617, %v2741
      %v2823 = vmul.f32 %v2620, %v2741
      %v2824 = vmul.f32 %v2622, %v2741
      %v2825 = vmul.f32 %v2625, %v2741
      %v2826 = vmul.f32 %v2627, %v2741
      %v2827 = vmul.f32 %v2630, %v2741
      %v2828 = vmul.f32 %v2632, %v2741
      %v2829 = vmul.f32 %v2635, %v2741
      %v2830 = vmul.f32 %v2637, %v2741
      %v2831 = vmul.f32 %v2640, %v2741
      %v2832 = vmul.f32 %v2642, %v2741
      %v2833 = vmul.f32 %v2645, %v2741
      %v2834 = vmul.f32 %v2647, %v2741
      %v2835 = vmul.f32 %v2650, %v2741
      %v2836 = vmul.f32 %v2652, %v2741
      %v2837 = vmul.f32 %v2655, %v2741
      %v2838 = vmul.f32 %v2657, %v2741
      %v2839 = vmul.f32 %v2660, %v2741
      %v2840 = vmul.f32 %v2662, %v2741
      %v2841 = vmul.f32 %v2665, %v2741
      %v2842 = vmul.f32 %v2667, %v2741
      %v2843 = vmul.f32 %v2670, %v2741
      %v2844 = vmul.f32 %v2672, %v2741
      %v2845 = vmul.f32 %v2675, %v2741
      %v2846 = vmul.f32 %v2677, %v2741
      %v2847 = vmul.f32 %v2680, %v2741
      %v2848 = vmul.f32 %v2682, %v2741
      %v2849 = vmul.f32 %v2685, %v2741
      %v2850 = vmul.f32 %v2687, %v2741
      %v2851 = vmul.f32 %v2690, %v2741
      %v2852 = vmul.f32 %v2692, %v2741
      %v2853 = vmul.f32 %v2695, %v2741
      %v2854 = vmul.f32 %v2697, %v2741
      %v2855 = vmul.f32 %v2700, %v2741
      %v2856 = vmul.f32 %v2702, %v2741
      %v2857 = vmul.f32 %v2705, %v2741
      %v2858 = vmul.f32 %v2707, %v2741
      %v2859 = vmul.f32 %v2710, %v2741
      %v2860 = vmul.f32 %v2712, %v2741
      %v2861 = vmul.f32 %v2715, %v2741
      %v2862 = vmul.f32 %v2717, %v2741
      %v2863 = vmul.f32 %v2720, %v2741
      %v2864 = vmul.f32 %v2722, %v2741
      %v2865 = vmul.f32 %v2725, %v2741
      %v2866 = vmul.f32 %v2727, %v2741
      %v2867 = vmul.f32 %v2730, %v2741
      %v2868 = vmul.f32 %v2732, %v2741
      %v2869 = vmul.f32 %v2735, %v2741
      %v2870 = vmul.f32 %v2737, %v2741
      %v2871 = vld [vmem:[%s3] sm:$0x1]
      %v2873 = vperm.slane %v2871, 0
      %v2875 = vadd.f32 %v2743, %v2873
      %v2876 = vadd.f32 %v2744, %v2873
      %v2877 = vadd.f32 %v2745, %v2873
      %v2878 = vadd.f32 %v2746, %v2873
      %v2879 = vadd.f32 %v2747, %v2873
      %v2880 = vadd.f32 %v2748, %v2873
      %v2881 = vadd.f32 %v2749, %v2873
      %v2882 = vadd.f32 %v2750, %v2873
      %v2883 = vadd.f32 %v2751, %v2873
      %v2884 = vadd.f32 %v2752, %v2873
      %v2885 = vadd.f32 %v2753, %v2873
      %v2886 = vadd.f32 %v2754, %v2873
      %v2887 = vadd.f32 %v2755, %v2873
      %v2888 = vadd.f32 %v2756, %v2873
      %v2889 = vadd.f32 %v2757, %v2873
      %v2890 = vadd.f32 %v2758, %v2873
      %v2891 = vadd.f32 %v2759, %v2873
      %v2892 = vadd.f32 %v2760, %v2873
      %v2893 = vadd.f32 %v2761, %v2873
      %v2894 = vadd.f32 %v2762, %v2873
      %v2895 = vadd.f32 %v2763, %v2873
      %v2896 = vadd.f32 %v2764, %v2873
      %v2897 = vadd.f32 %v2765, %v2873
      %v2898 = vadd.f32 %v2766, %v2873
      %v2899 = vadd.f32 %v2767, %v2873
      %v2900 = vadd.f32 %v2768, %v2873
      %v2901 = vadd.f32 %v2769, %v2873
      %v2902 = vadd.f32 %v2770, %v2873
      %v2903 = vadd.f32 %v2771, %v2873
      %v2904 = vadd.f32 %v2772, %v2873
      %v2905 = vadd.f32 %v2773, %v2873
      %v2906 = vadd.f32 %v2774, %v2873
      %v2907 = vadd.f32 %v2775, %v2873
      %v2908 = vadd.f32 %v2776, %v2873
      %v2909 = vadd.f32 %v2777, %v2873
      %v2910 = vadd.f32 %v2778, %v2873
      %v2911 = vadd.f32 %v2779, %v2873
      %v2912 = vadd.f32 %v2780, %v2873
      %v2913 = vadd.f32 %v2781, %v2873
      %v2914 = vadd.f32 %v2782, %v2873
      %v2915 = vadd.f32 %v2783, %v2873
      %v2916 = vadd.f32 %v2784, %v2873
      %v2917 = vadd.f32 %v2785, %v2873
      %v2918 = vadd.f32 %v2786, %v2873
      %v2919 = vadd.f32 %v2787, %v2873
      %v2920 = vadd.f32 %v2788, %v2873
      %v2921 = vadd.f32 %v2789, %v2873
      %v2922 = vadd.f32 %v2790, %v2873
      %v2923 = vadd.f32 %v2791, %v2873
      %v2924 = vadd.f32 %v2792, %v2873
      %v2925 = vadd.f32 %v2793, %v2873
      %v2926 = vadd.f32 %v2794, %v2873
      %v2927 = vadd.f32 %v2795, %v2873
      %v2928 = vadd.f32 %v2796, %v2873
      %v2929 = vadd.f32 %v2797, %v2873
      %v2930 = vadd.f32 %v2798, %v2873
      %v2931 = vadd.f32 %v2799, %v2873
      %v2932 = vadd.f32 %v2800, %v2873
      %v2933 = vadd.f32 %v2801, %v2873
      %v2934 = vadd.f32 %v2802, %v2873
      %v2935 = vadd.f32 %v2803, %v2873
      %v2936 = vadd.f32 %v2804, %v2873
      %v2937 = vadd.f32 %v2805, %v2873
      %v2938 = vadd.f32 %v2806, %v2873
      %v2939 = vadd.f32 %v2807, %v2873
      %v2940 = vadd.f32 %v2808, %v2873
      %v2941 = vadd.f32 %v2809, %v2873
      %v2942 = vadd.f32 %v2810, %v2873
      %v2943 = vadd.f32 %v2811, %v2873
      %v2944 = vadd.f32 %v2812, %v2873
      %v2945 = vadd.f32 %v2813, %v2873
      %v2946 = vadd.f32 %v2814, %v2873
      %v2947 = vadd.f32 %v2815, %v2873
      %v2948 = vadd.f32 %v2816, %v2873
      %v2949 = vadd.f32 %v2817, %v2873
      %v2950 = vadd.f32 %v2818, %v2873
      %v2951 = vadd.f32 %v2819, %v2873
      %v2952 = vadd.f32 %v2820, %v2873
      %v2953 = vadd.f32 %v2821, %v2873
      %v2954 = vadd.f32 %v2822, %v2873
      %v2955 = vadd.f32 %v2823, %v2873
      %v2956 = vadd.f32 %v2824, %v2873
      %v2957 = vadd.f32 %v2825, %v2873
      %v2958 = vadd.f32 %v2826, %v2873
      %v2959 = vadd.f32 %v2827, %v2873
      %v2960 = vadd.f32 %v2828, %v2873
      %v2961 = vadd.f32 %v2829, %v2873
      %v2962 = vadd.f32 %v2830, %v2873
      %v2963 = vadd.f32 %v2831, %v2873
      %v2964 = vadd.f32 %v2832, %v2873
      %v2965 = vadd.f32 %v2833, %v2873
      %v2966 = vadd.f32 %v2834, %v2873
      %v2967 = vadd.f32 %v2835, %v2873
      %v2968 = vadd.f32 %v2836, %v2873
      %v2969 = vadd.f32 %v2837, %v2873
      %v2970 = vadd.f32 %v2838, %v2873
      %v2971 = vadd.f32 %v2839, %v2873
      %v2972 = vadd.f32 %v2840, %v2873
      %v2973 = vadd.f32 %v2841, %v2873
      %v2974 = vadd.f32 %v2842, %v2873
      %v2975 = vadd.f32 %v2843, %v2873
      %v2976 = vadd.f32 %v2844, %v2873
      %v2977 = vadd.f32 %v2845, %v2873
      %v2978 = vadd.f32 %v2846, %v2873
      %v2979 = vadd.f32 %v2847, %v2873
      %v2980 = vadd.f32 %v2848, %v2873
      %v2981 = vadd.f32 %v2849, %v2873
      %v2982 = vadd.f32 %v2850, %v2873
      %v2983 = vadd.f32 %v2851, %v2873
      %v2984 = vadd.f32 %v2852, %v2873
      %v2985 = vadd.f32 %v2853, %v2873
      %v2986 = vadd.f32 %v2854, %v2873
      %v2987 = vadd.f32 %v2855, %v2873
      %v2988 = vadd.f32 %v2856, %v2873
      %v2989 = vadd.f32 %v2857, %v2873
      %v2990 = vadd.f32 %v2858, %v2873
      %v2991 = vadd.f32 %v2859, %v2873
      %v2992 = vadd.f32 %v2860, %v2873
      %v2993 = vadd.f32 %v2861, %v2873
      %v2994 = vadd.f32 %v2862, %v2873
      %v2995 = vadd.f32 %v2863, %v2873
      %v2996 = vadd.f32 %v2864, %v2873
      %v2997 = vadd.f32 %v2865, %v2873
      %v2998 = vadd.f32 %v2866, %v2873
      %v2999 = vadd.f32 %v2867, %v2873
      %v3000 = vadd.f32 %v2868, %v2873
      %v3001 = vadd.f32 %v2869, %v2873
      %v3002 = vadd.f32 %v2870, %v2873
      %v3003 = vmax.f32 %v2875, 0.0
      %v3004 = vmax.f32 %v2876, 0.0
      %v3005 = vmax.f32 %v2877, 0.0
      %v3006 = vmax.f32 %v2878, 0.0
      %v3007 = vmax.f32 %v2879, 0.0
      %v3008 = vmax.f32 %v2880, 0.0
      %v3009 = vmax.f32 %v2881, 0.0
      %v3010 = vmax.f32 %v2882, 0.0
      %v3011 = vmax.f32 %v2883, 0.0
      %v3012 = vmax.f32 %v2884, 0.0
      %v3013 = vmax.f32 %v2885, 0.0
      %v3014 = vmax.f32 %v2886, 0.0
      %v3015 = vmax.f32 %v2887, 0.0
      %v3016 = vmax.f32 %v2888, 0.0
      %v3017 = vmax.f32 %v2889, 0.0
      %v3018 = vmax.f32 %v2890, 0.0
      %v3019 = vmax.f32 %v2891, 0.0
      %v3020 = vmax.f32 %v2892, 0.0
      %v3021 = vmax.f32 %v2893, 0.0
      %v3022 = vmax.f32 %v2894, 0.0
      %v3023 = vmax.f32 %v2895, 0.0
      %v3024 = vmax.f32 %v2896, 0.0
      %v3025 = vmax.f32 %v2897, 0.0
      %v3026 = vmax.f32 %v2898, 0.0
      %v3027 = vmax.f32 %v2899, 0.0
      %v3028 = vmax.f32 %v2900, 0.0
      %v3029 = vmax.f32 %v2901, 0.0
      %v3030 = vmax.f32 %v2902, 0.0
      %v3031 = vmax.f32 %v2903, 0.0
      %v3032 = vmax.f32 %v2904, 0.0
      %v3033 = vmax.f32 %v2905, 0.0
      %v3034 = vmax.f32 %v2906, 0.0
      %v3035 = vmax.f32 %v2907, 0.0
      %v3036 = vmax.f32 %v2908, 0.0
      %v3037 = vmax.f32 %v2909, 0.0
      %v3038 = vmax.f32 %v2910, 0.0
      %v3039 = vmax.f32 %v2911, 0.0
      %v3040 = vmax.f32 %v2912, 0.0
      %v3041 = vmax.f32 %v2913, 0.0
      %v3042 = vmax.f32 %v2914, 0.0
      %v3043 = vmax.f32 %v2915, 0.0
      %v3044 = vmax.f32 %v2916, 0.0
      %v3045 = vmax.f32 %v2917, 0.0
      %v3046 = vmax.f32 %v2918, 0.0
      %v3047 = vmax.f32 %v2919, 0.0
      %v3048 = vmax.f32 %v2920, 0.0
      %v3049 = vmax.f32 %v2921, 0.0
      %v3050 = vmax.f32 %v2922, 0.0
      %v3051 = vmax.f32 %v2923, 0.0
      %v3052 = vmax.f32 %v2924, 0.0
      %v3053 = vmax.f32 %v2925, 0.0
      %v3054 = vmax.f32 %v2926, 0.0
      %v3055 = vmax.f32 %v2927, 0.0
      %v3056 = vmax.f32 %v2928, 0.0
      %v3057 = vmax.f32 %v2929, 0.0
      %v3058 = vmax.f32 %v2930, 0.0
      %v3059 = vmax.f32 %v2931, 0.0
      %v3060 = vmax.f32 %v2932, 0.0
      %v3061 = vmax.f32 %v2933, 0.0
      %v3062 = vmax.f32 %v2934, 0.0
      %v3063 = vmax.f32 %v2935, 0.0
      %v3064 = vmax.f32 %v2936, 0.0
      %v3065 = vmax.f32 %v2937, 0.0
      %v3066 = vmax.f32 %v2938, 0.0
      %v3067 = vmax.f32 %v2939, 0.0
      %v3068 = vmax.f32 %v2940, 0.0
      %v3069 = vmax.f32 %v2941, 0.0
      %v3070 = vmax.f32 %v2942, 0.0
      %v3071 = vmax.f32 %v2943, 0.0
      %v3072 = vmax.f32 %v2944, 0.0
      %v3073 = vmax.f32 %v2945, 0.0
      %v3074 = vmax.f32 %v2946, 0.0
      %v3075 = vmax.f32 %v2947, 0.0
      %v3076 = vmax.f32 %v2948, 0.0
      %v3077 = vmax.f32 %v2949, 0.0
      %v3078 = vmax.f32 %v2950, 0.0
      %v3079 = vmax.f32 %v2951, 0.0
      %v3080 = vmax.f32 %v2952, 0.0
      %v3081 = vmax.f32 %v2953, 0.0
      %v3082 = vmax.f32 %v2954, 0.0
      %v3083 = vmax.f32 %v2955, 0.0
      %v3084 = vmax.f32 %v2956, 0.0
      %v3085 = vmax.f32 %v2957, 0.0
      %v3086 = vmax.f32 %v2958, 0.0
      %v3087 = vmax.f32 %v2959, 0.0
      %v3088 = vmax.f32 %v2960, 0.0
      %v3089 = vmax.f32 %v2961, 0.0
      %v3090 = vmax.f32 %v2962, 0.0
      %v3091 = vmax.f32 %v2963, 0.0
      %v3092 = vmax.f32 %v2964, 0.0
      %v3093 = vmax.f32 %v2965, 0.0
      %v3094 = vmax.f32 %v2966, 0.0
      %v3095 = vmax.f32 %v2967, 0.0
      %v3096 = vmax.f32 %v2968, 0.0
      %v3097 = vmax.f32 %v2969, 0.0
      %v3098 = vmax.f32 %v2970, 0.0
      %v3099 = vmax.f32 %v2971, 0.0
      %v3100 = vmax.f32 %v2972, 0.0
      %v3101 = vmax.f32 %v2973, 0.0
      %v3102 = vmax.f32 %v2974, 0.0
      %v3103 = vmax.f32 %v2975, 0.0
      %v3104 = vmax.f32 %v2976, 0.0
      %v3105 = vmax.f32 %v2977, 0.0
      %v3106 = vmax.f32 %v2978, 0.0
      %v3107 = vmax.f32 %v2979, 0.0
      %v3108 = vmax.f32 %v2980, 0.0
      %v3109 = vmax.f32 %v2981, 0.0
      %v3110 = vmax.f32 %v2982, 0.0
      %v3111 = vmax.f32 %v2983, 0.0
      %v3112 = vmax.f32 %v2984, 0.0
      %v3113 = vmax.f32 %v2985, 0.0
      %v3114 = vmax.f32 %v2986, 0.0
      %v3115 = vmax.f32 %v2987, 0.0
      %v3116 = vmax.f32 %v2988, 0.0
      %v3117 = vmax.f32 %v2989, 0.0
      %v3118 = vmax.f32 %v2990, 0.0
      %v3119 = vmax.f32 %v2991, 0.0
      %v3120 = vmax.f32 %v2992, 0.0
      %v3121 = vmax.f32 %v2993, 0.0
      %v3122 = vmax.f32 %v2994, 0.0
      %v3123 = vmax.f32 %v2995, 0.0
      %v3124 = vmax.f32 %v2996, 0.0
      %v3125 = vmax.f32 %v2997, 0.0
      %v3126 = vmax.f32 %v2998, 0.0
      %v3127 = vmax.f32 %v2999, 0.0
      %v3128 = vmax.f32 %v3000, 0.0
      %v3129 = vmax.f32 %v3001, 0.0
      %v3130 = vmax.f32 %v3002, 0.0
      %v3131 = vmax.f32 %v3003, %v3035
      %v3132 = vmax.f32 %v3004, %v3036
      %v3133 = vmax.f32 %v3005, %v3037
      %v3134 = vmax.f32 %v3006, %v3038
      %v3135 = vmax.f32 %v3007, %v3039
      %v3136 = vmax.f32 %v3008, %v3040
      %v3137 = vmax.f32 %v3009, %v3041
      %v3138 = vmax.f32 %v3010, %v3042
      %v3139 = vmax.f32 %v3011, %v3043
      %v3140 = vmax.f32 %v3012, %v3044
      %v3141 = vmax.f32 %v3013, %v3045
      %v3142 = vmax.f32 %v3014, %v3046
      %v3143 = vmax.f32 %v3015, %v3047
      %v3144 = vmax.f32 %v3016, %v3048
      %v3145 = vmax.f32 %v3017, %v3049
      %v3146 = vmax.f32 %v3018, %v3050
      %v3147 = vmax.f32 %v3019, %v3051
      %v3148 = vmax.f32 %v3020, %v3052
      %v3149 = vmax.f32 %v3021, %v3053
      %v3150 = vmax.f32 %v3022, %v3054
      %v3151 = vmax.f32 %v3023, %v3055
      %v3152 = vmax.f32 %v3024, %v3056
      %v3153 = vmax.f32 %v3025, %v3057
      %v3154 = vmax.f32 %v3026, %v3058
      %v3155 = vmax.f32 %v3027, %v3059
      %v3156 = vmax.f32 %v3028, %v3060
      %v3157 = vmax.f32 %v3029, %v3061
      %v3158 = vmax.f32 %v3030, %v3062
      %v3159 = vmax.f32 %v3031, %v3063
      %v3160 = vmax.f32 %v3032, %v3064
      %v3161 = vmax.f32 %v3033, %v3065
      %v3162 = vmax.f32 %v3034, %v3066
      %v3163 = vmax.f32 %v3067, %v3099
      %v3164 = vmax.f32 %v3068, %v3100
      %v3165 = vmax.f32 %v3069, %v3101
      %v3166 = vmax.f32 %v3070, %v3102
      %v3167 = vmax.f32 %v3071, %v3103
      %v3168 = vmax.f32 %v3072, %v3104
      %v3169 = vmax.f32 %v3073, %v3105
      %v3170 = vmax.f32 %v3074, %v3106
      %v3171 = vmax.f32 %v3075, %v3107
      %v3172 = vmax.f32 %v3076, %v3108
      %v3173 = vmax.f32 %v3077, %v3109
      %v3174 = vmax.f32 %v3078, %v3110
      %v3175 = vmax.f32 %v3079, %v3111
      %v3176 = vmax.f32 %v3080, %v3112
      %v3177 = vmax.f32 %v3081, %v3113
      %v3178 = vmax.f32 %v3082, %v3114
      %v3179 = vmax.f32 %v3083, %v3115
      %v3180 = vmax.f32 %v3084, %v3116
      %v3181 = vmax.f32 %v3085, %v3117
      %v3182 = vmax.f32 %v3086, %v3118
      %v3183 = vmax.f32 %v3087, %v3119
      %v3184 = vmax.f32 %v3088, %v3120
      %v3185 = vmax.f32 %v3089, %v3121
      %v3186 = vmax.f32 %v3090, %v3122
      %v3187 = vmax.f32 %v3091, %v3123
      %v3188 = vmax.f32 %v3092, %v3124
      %v3189 = vmax.f32 %v3093, %v3125
      %v3190 = vmax.f32 %v3094, %v3126
      %v3191 = vmax.f32 %v3095, %v3127
      %v3192 = vmax.f32 %v3096, %v3128
      %v3193 = vmax.f32 %v3097, %v3129
      %v3194 = vmax.f32 %v3098, %v3130
      %v3195 = vmax.f32 %v3131, %v3163
      %v3196 = vmax.f32 %v3132, %v3164
      %v3197 = vmax.f32 %v3133, %v3165
      %v3198 = vmax.f32 %v3134, %v3166
      %v3199 = vmax.f32 %v3135, %v3167
      %v3200 = vmax.f32 %v3136, %v3168
      %v3201 = vmax.f32 %v3137, %v3169
      %v3202 = vmax.f32 %v3138, %v3170
      %v3203 = vmax.f32 %v3139, %v3171
      %v3204 = vmax.f32 %v3140, %v3172
      %v3205 = vmax.f32 %v3141, %v3173
      %v3206 = vmax.f32 %v3142, %v3174
      %v3207 = vmax.f32 %v3143, %v3175
      %v3208 = vmax.f32 %v3144, %v3176
      %v3209 = vmax.f32 %v3145, %v3177
      %v3210 = vmax.f32 %v3146, %v3178
      %v3211 = vmax.f32 %v3147, %v3179
      %v3212 = vmax.f32 %v3148, %v3180
      %v3213 = vmax.f32 %v3149, %v3181
      %v3214 = vmax.f32 %v3150, %v3182
      %v3215 = vmax.f32 %v3151, %v3183
      %v3216 = vmax.f32 %v3152, %v3184
      %v3217 = vmax.f32 %v3153, %v3185
      %v3218 = vmax.f32 %v3154, %v3186
      %v3219 = vmax.f32 %v3155, %v3187
      %v3220 = vmax.f32 %v3156, %v3188
      %v3221 = vmax.f32 %v3157, %v3189
      %v3222 = vmax.f32 %v3158, %v3190
      %v3223 = vmax.f32 %v3159, %v3191
      %v3224 = vmax.f32 %v3160, %v3192
      %v3225 = vmax.f32 %v3161, %v3193
      %v3226 = vmax.f32 %v3162, %v3194
      %v3227 = vpack.c.bf16 %v3195, %v3195
      %v3228 = vpack.c.bf16 %v3196, %v3196
      %v3229 = vpack.c.bf16 %v3197, %v3197
      %v3230 = vpack.c.bf16 %v3198, %v3198
      %v3231 = vpack.c.bf16 %v3199, %v3199
      %v3232 = vpack.c.bf16 %v3200, %v3200
      %v3233 = vpack.c.bf16 %v3201, %v3201
      %v3234 = vpack.c.bf16 %v3202, %v3202
      %v3235 = vpack.c.bf16 %v3203, %v3203
      %v3236 = vpack.c.bf16 %v3204, %v3204
      %v3237 = vpack.c.bf16 %v3205, %v3205
      %v3238 = vpack.c.bf16 %v3206, %v3206
      %v3239 = vpack.c.bf16 %v3207, %v3207
      %v3240 = vpack.c.bf16 %v3208, %v3208
      %v3241 = vpack.c.bf16 %v3209, %v3209
      %v3242 = vpack.c.bf16 %v3210, %v3210
      %v3243 = vpack.c.bf16 %v3211, %v3211
      %v3244 = vpack.c.bf16 %v3212, %v3212
      %v3245 = vpack.c.bf16 %v3213, %v3213
      %v3246 = vpack.c.bf16 %v3214, %v3214
      %v3247 = vpack.c.bf16 %v3215, %v3215
      %v3248 = vpack.c.bf16 %v3216, %v3216
      %v3249 = vpack.c.bf16 %v3217, %v3217
      %v3250 = vpack.c.bf16 %v3218, %v3218
      %v3251 = vpack.c.bf16 %v3219, %v3219
      %v3252 = vpack.c.bf16 %v3220, %v3220
      %v3253 = vpack.c.bf16 %v3221, %v3221
      %v3254 = vpack.c.bf16 %v3222, %v3222
      %v3255 = vpack.c.bf16 %v3223, %v3223
      %v3256 = vpack.c.bf16 %v3224, %v3224
      %v3257 = vpack.c.bf16 %v3225, %v3225
      %v3258 = vpack.c.bf16 %v3226, %v3226
      %vm3259 = vcmask 519168
      %3260 = vst.msk [vmem:[%s197] sm:$0xf] %vm3259, %v3227
      %3261 = vst.msk [vmem:[%s197 + $0x4] sm:$0xf] %vm3259, %v3228
      %3262 = vst.msk [vmem:[%s197 + $0x8] sm:$0xf] %vm3259, %v3229
      %3263 = vst.msk [vmem:[%s197 + $0xc] sm:$0xf] %vm3259, %v3230
      %3264 = vst.msk [vmem:[%s197 + $0x10] sm:$0xf] %vm3259, %v3231
      %3265 = vst.msk [vmem:[%s197 + $0x14] sm:$0xf] %vm3259, %v3232
      %3266 = vst.msk [vmem:[%s197 + $0x18] sm:$0xf] %vm3259, %v3233
      %3267 = vst.msk [vmem:[%s197 + $0x1c] sm:$0xf] %vm3259, %v3234
      %3268 = vst.msk [vmem:[%s197 + $0x20] sm:$0xf] %vm3259, %v3235
      %3269 = vst.msk [vmem:[%s197 + $0x24] sm:$0xf] %vm3259, %v3236
      %3270 = vst.msk [vmem:[%s197 + $0x28] sm:$0xf] %vm3259, %v3237
      %3271 = vst.msk [vmem:[%s197 + $0x2c] sm:$0xf] %vm3259, %v3238
      %3272 = vst.msk [vmem:[%s197 + $0x30] sm:$0xf] %vm3259, %v3239
      %3273 = vst.msk [vmem:[%s197 + $0x34] sm:$0xf] %vm3259, %v3240
      %3274 = vst.msk [vmem:[%s197 + $0x38] sm:$0xf] %vm3259, %v3241
      %3275 = vst.msk [vmem:[%s197 + $0x3c] sm:$0xf] %vm3259, %v3242
      %3276 = vst.msk [vmem:[%s197 + $0x40] sm:$0xf] %vm3259, %v3243
      %3277 = vst.msk [vmem:[%s197 + $0x44] sm:$0xf] %vm3259, %v3244
      %3278 = vst.msk [vmem:[%s197 + $0x48] sm:$0xf] %vm3259, %v3245
      %3279 = vst.msk [vmem:[%s197 + $0x4c] sm:$0xf] %vm3259, %v3246
      %3280 = vst.msk [vmem:[%s197 + $0x50] sm:$0xf] %vm3259, %v3247
      %3281 = vst.msk [vmem:[%s197 + $0x54] sm:$0xf] %vm3259, %v3248
      %3282 = vst.msk [vmem:[%s197 + $0x58] sm:$0xf] %vm3259, %v3249
      %3283 = vst.msk [vmem:[%s197 + $0x5c] sm:$0xf] %vm3259, %v3250
      %3284 = vst.msk [vmem:[%s197 + $0x60] sm:$0xf] %vm3259, %v3251
      %3285 = vst.msk [vmem:[%s197 + $0x64] sm:$0xf] %vm3259, %v3252
      %3286 = vst.msk [vmem:[%s197 + $0x68] sm:$0xf] %vm3259, %v3253
      %3287 = vst.msk [vmem:[%s197 + $0x6c] sm:$0xf] %vm3259, %v3254
      %3288 = vst.msk [vmem:[%s197 + $0x70] sm:$0xf] %vm3259, %v3255
      %3289 = vst.msk [vmem:[%s197 + $0x74] sm:$0xf] %vm3259, %v3256
      %3290 = vst.msk [vmem:[%s197 + $0x78] sm:$0xf] %vm3259, %v3257
      %3291 = vst.msk [vmem:[%s197 + $0x7c] sm:$0xf] %vm3259, %v3258
      %p3292 = scmp.lt.s32.totalorder %s15, 1
      %s3293 = scalar_select %p3292, %s15, 1
      %s3294 = smul.addr %s3293, 32
      %s3295 = smul.addr %s3294, 4
      %s3296 = scalar_lea.vmem %s4, %s3295
      // Predicated region
      $region37: #{chess_cnn_forward.4} parent=35 // pred_check
        %p3297 = pneg %p122
      $region38: #{chess_cnn_forward.4} parent=35 // pred_check_branch
        %3299 = sbr.rel (%p3297) target = $region40
      $region39: #{chess_cnn_forward.4} parent=35 // pred_region
        _
      $region40: #{chess_cnn_forward.4} parent=35 // pred_fallthru
        _
    $region36: #{chess_cnn_forward.4} parent=5 // pred_fallthru
      _
    %p3300 = scmp.le.s32.totalorder 2, %s10
    // Predicated region
    $region41: #{chess_cnn_forward.4} parent=5 // pred_check
      %p3301 = pneg %p3300
    $region42: #{chess_cnn_forward.4} parent=5 // pred_check_branch
      %3303 = sbr.rel (%p3301) target = $region44
    $region43: #{chess_cnn_forward.4} parent=5 // pred_region
      %s3304 = ssub.s32 %s10, 2
      // Predicated region
      $region45: #{chess_cnn_forward.4} parent=43 // pred_check
        %p3305 = pneg %p128
      $region46: #{chess_cnn_forward.4} parent=43 // pred_check_branch
        %3307 = sbr.rel (%p3305) target = $region48
      $region47: #{chess_cnn_forward.4} parent=43 // pred_region
        %p3308 = scmp.lt.s32.totalorder %s16, 1
        %s3309 = scalar_select %p3308, %s16, 1
        %s3310 = smul.addr %s3309, 32
        %s3311 = smul.addr %s3310, 4
        %s3312 = scalar_lea.vmem %s4, %s3311
      $region48: #{chess_cnn_forward.4} parent=43 // pred_fallthru
        _
    $region44: #{chess_cnn_forward.4} parent=5 // pred_fallthru
      _
  $region6: #{chess_cnn_forward.4} parent=0 // loop_footer
    %s14 = sadd.s32 1, %s10
  $region7: #{chess_cnn_forward.4} parent=0 // loop_footer_branch
    %9 = sbr.rel target = $region3
  $region8: #{chess_cnn_forward.4} parent=0 // loop_exit
    _

</llo_original>
